<compile_context>
chip_gen: v7x
topology: tpu7x:2x2x1
jax: 0.10.0
libtpu: 0.0.40
codegen_flags: <defaults>
</compile_context>

<pallas_src>
import functools
import math

import jax
import jax.numpy as jnp
from jax.experimental import pallas as pl
from jax.experimental.pallas import tpu as pltpu


# ----------------------------------------------------------------------------
# Pallas kernel 1: fused per-pixel transformer block
# ----------------------------------------------------------------------------
def _layer_norm(x, g, b, eps=1e-5):
    mu = jnp.mean(x, axis=-1, keepdims=True)
    var = jnp.mean(jnp.square(x - mu), axis=-1, keepdims=True)
    return (x - mu) * jax.lax.rsqrt(var + eps) * g + b


def _transformer_kernel(L, dh,
                        q_ref, kv_ref, qpe_ref,
                        ln_ref, wsa_ref, wq2_ref, wk2_ref, wv2_ref, wo2_ref,
                        pool_ref, bcast_ref, battn_ref,
                        wff1a_ref, bff1a_ref, wff1g_ref, bff1g_ref,
                        wff2_ref, bff2_ref,
                        o_ref):
    x = q_ref[...].astype(jnp.float32)                 # (TN, C)
    ln = ln_ref[...]                                   # (6, C): g1,b1,g2,b2,g3,b3
    qpe = qpe_ref[...]                                 # (1, C)
    batt = battn_ref[...]                              # (2, C)
    bo1 = batt[0:1]
    bo2 = batt[1:2]

    # --- self-attention: query length is 1, so softmax weight == 1 and the
    #     whole attention collapses to h1 @ (Wv1 @ Wo1) + b  (folded host-side).
    h1 = _layer_norm(x, ln[0:1], ln[1:2])
    x = x + jnp.dot(h1.astype(jnp.bfloat16), wsa_ref[...],
                    preferred_element_type=jnp.float32) + bo1

    # --- cross-attention over the L warped neighbour key/value tokens.
    #     kv_ref already holds (features + pe) * mask (pre-fused, bf16).
    #     NOTE: masked tokens are zeroed, not -inf masked (reference semantics).
    h2 = _layer_norm(x, ln[2:3], ln[3:4])
    qproj = jnp.dot((h2 + qpe).astype(jnp.bfloat16), wq2_ref[...],
                    preferred_element_type=jnp.float32)            # (TN, C) f32

    scale = 1.0 / math.sqrt(dh)
    pool = pool_ref[...]                                           # (C, heads) bf16
    bcast = bcast_ref[...]                                         # (heads, C) f32
    scores = []   # (TN, heads) f32: one score per head (softmax in head space)
    values = []   # (TN, C) f32
    for l in range(L):
        kv_l = kv_ref[l]                                           # (TN, C) bf16
        k_l = jnp.dot(kv_l, wk2_ref[...], preferred_element_type=jnp.float32)
        v_l = jnp.dot(kv_l, wv2_ref[...], preferred_element_type=jnp.float32)
        s_l = jnp.dot((qproj * k_l).astype(jnp.bfloat16), pool,
                      preferred_element_type=jnp.float32) * scale  # (TN, heads)
        scores.append(s_l)
        values.append(v_l)

    if L == 2:
        # exact 2-way softmax in head space: p0 = sigmoid(s0 - s1)
        p0h = jax.nn.sigmoid(scores[0] - scores[1])                # (TN, heads)
        p0 = jnp.dot(p0h, bcast, preferred_element_type=jnp.float32)  # (TN, C)
        attn = p0 * values[0] + (1.0 - p0) * values[1]
    else:
        m = scores[0]
        for l in range(1, L):
            m = jnp.maximum(m, scores[l])
        exps = []
        den = jnp.zeros_like(m)
        for l in range(L):
            e = jnp.exp(scores[l] - m)
            exps.append(e)
            den = den + e
        inv = pl.reciprocal(den, approx=True)
        attn = jnp.zeros_like(values[0])
        for l in range(L):
            p = jnp.dot(exps[l] * inv, bcast, preferred_element_type=jnp.float32)
            attn = attn + p * values[l]

    x = x + jnp.dot(attn.astype(jnp.bfloat16), wo2_ref[...],
                    preferred_element_type=jnp.float32) + bo2

    # --- GEGLU feed-forward, split host-side into value / gate halves so no
    #     (tn, 8C) f32 intermediate is ever live or sliced.
    # TODO(synk): PyTorch GEGLU uses exact erf GELU; tanh approximation kept
    # here for guaranteed Mosaic lowering (small systematic drift).
    h3 = _layer_norm(x, ln[4:5], ln[5:6]).astype(jnp.bfloat16)
    g = jnp.dot(h3, wff1g_ref[...],
                preferred_element_type=jnp.float32) + bff1g_ref[...]
    g = jax.nn.gelu(g, approximate=True)
    a = jnp.dot(h3, wff1a_ref[...],
                preferred_element_type=jnp.float32) + bff1a_ref[...]
    ff = a * g
    x = x + jnp.dot(ff.astype(jnp.bfloat16), wff2_ref[...],
                    preferred_element_type=jnp.float32) + bff2_ref[...]

    o_ref[...] = x.astype(o_ref.dtype)


def transformer_block(q, kv, qpe, params, *, dh, tn=256):
    """q: (N, C) bf16, kv: (L, N, C) bf16 (already (feat+pe)*mask)."""
    N, C = q.shape
    L = kv.shape[0]
    # Pad the token axis up to a multiple of tn instead of shrinking the tile.
    Np = ((N + tn - 1) // tn) * tn
    if Np != N:
        q = jnp.pad(q, ((0, Np - N), (0, 0)))
        kv = jnp.pad(kv, ((0, 0), (0, Np - N), (0, 0)))

    def full(a):
        return pl.BlockSpec(a.shape, lambda i, _r=a.ndim: (0,) * _r)

    # TODO(synk): for C>=512 on v7x, single-buffer the constant weight specs
    # (pipeline_mode=pl.Buffered(1)) and/or split the GEGLU inner dim over an
    # extra 'arbitrary' grid axis; weights are kept fully resident here.
    weight_names = ["ln", "w_sa", "wq2", "wk2", "wv2", "wo2", "p_pool",
                    "p_bcast", "battn", "wff1a", "bff1a", "wff1g", "bff1g",
                    "wff2", "bff2"]
    weights = [params[n] for n in weight_names]

    kernel = functools.partial(_transformer_kernel, L, dh)
    out = pl.pallas_call(
        kernel,
        out_shape=jax.ShapeDtypeStruct((Np, C), jnp.bfloat16),
        grid=(Np // tn,),
        in_specs=[pl.BlockSpec((tn, C), lambda i: (i, 0)),
                  pl.BlockSpec((L, tn, C), lambda i: (0, i, 0)),
                  full(qpe)] + [full(w) for w in weights],
        out_specs=pl.BlockSpec((tn, C), lambda i: (i, 0)),
        compiler_params=pltpu.CompilerParams(
            dimension_semantics=("parallel",),
            vmem_limit_bytes=64 * 1024 * 1024),
    )(q, kv, qpe, *weights)
    return out[:N]


# ----------------------------------------------------------------------------
# Pallas kernel 2: fused BasicResNetBlock (GroupNorm / SiLU / 3x3 conv x2 + skip)
# ----------------------------------------------------------------------------
def _resnet_kernel(H, W, F, eps,
                   x_ref, cmask_ref, pool_ref, bcast_ref, gn_ref,
                   w1_ref, b1_ref, w2_ref, b2_ref, o_ref, pad_ref):
    HW, C = x_ref.shape
    x = x_ref[...].astype(jnp.float32)            # (H*W, C) -- one image per block
    gn = gn_ref[...]                              # (4, C): g1,b1,g2,b2
    pool = pool_ref[...]                          # (C, G) intra-group averaging
    bcast = bcast_ref[...]                        # (G, C) group -> channel broadcast
    mL = cmask_ref[:, 0:1]                        # (HW, 1) valid when col-1 exists
    mR = cmask_ref[:, 1:2]                        # (HW, 1) valid when col+1 exists

    # Zero halo rows of the row-padded scratch once; shared by both convs.
    pad_ref[pl.ds(0, F), :] = jnp.zeros((F, C), jnp.float32)
    pad_ref[pl.ds(F + HW, W + 1), :] = jnp.zeros((W + 1, C), jnp.float32)

    def group_norm(v, gamma, beta):
        inv_n = 1.0 / v.shape[0]
        ch_mean = jnp.sum(v, axis=0, keepdims=True) * inv_n          # (1, C)
        ch_msq = jnp.sum(v * v, axis=0, keepdims=True) * inv_n
        g_mean = jnp.dot(jnp.dot(ch_mean, pool, preferred_element_type=jnp.float32),
                         bcast, preferred_element_type=jnp.float32)   # (1, C)
        g_msq = jnp.dot(jnp.dot(ch_msq, pool, preferred_element_type=jnp.float32),
                        bcast, preferred_element_type=jnp.float32)
        var = jnp.maximum(g_msq - g_mean * g_mean, 0.0)               # clamp >= 0
        return (v - g_mean) * jax.lax.rsqrt(var + eps) * gamma + beta

    def silu(v):
        return v * jax.nn.sigmoid(v)

    def conv3x3(v, w_ref, b_ref):
        # "same" 3x3 conv (zero padding, matches nn.Conv2d(padding=1)):
        # copy v once into the interior of the row-padded scratch, then feed
        # the 9 taps as statically-offset slices; only the 6 dj!=0 taps need a
        # column mask (row wrap is handled by the zero halo rows).
        pad_ref[pl.ds(F, HW), :] = v
        acc = jnp.dot(v.astype(jnp.bfloat16), w_ref[1, 1],
                      preferred_element_type=jnp.float32) + b_ref[...]
        for di in (-1, 0, 1):
            for dj in (-1, 0, 1):
                if di == 0 and dj == 0:
                    continue
                tap = pad_ref[pl.ds(F + di * W + dj, HW), :]
                if dj == -1:
                    tap = tap * mL
                elif dj == 1:
                    tap = tap * mR
                acc = acc + jnp.dot(tap.astype(jnp.bfloat16),
                                    w_ref[di + 1, dj + 1],
                                    preferred_element_type=jnp.float32)
        return acc

    h = conv3x3(silu(group_norm(x, gn[0:1], gn[1:2])), w1_ref, b1_ref)
    h = conv3x3(silu(group_norm(h, gn[2:3], gn[3:4])), w2_ref, b2_ref)
    o_ref[...] = (x + h).astype(o_ref.dtype)


def resnet_block(x, params, *, H, W):
    """x: (BM*H*W, C) (bf16 or f32). Returns f32 (BM*H*W, C)."""
    NHW, C = x.shape
    HW = H * W
    BM = NHW // HW
    F = ((W + 1 + 7) // 8) * 8            # 8-aligned interior start of the scratch
    pad_len = F + HW + W + 1

    # Column-validity masks hoisted out of the kernel (same for every image).
    col = jnp.arange(HW, dtype=jnp.int32) % W
    cmask = jnp.stack([(col >= 1), (col <= W - 2)], axis=-1).astype(jnp.float32)

    def full(a):
        return pl.BlockSpec(a.shape, lambda i, _r=a.ndim: (0,) * _r)

    # TODO(synk): for large feature maps (H=W>=64, C>=512) on v7x (64 MiB VMEM)
    # this should tile over image row blocks with a 1-row halo (manual DMA)
    # instead of one whole image per grid step.
    kernel = functools.partial(_resnet_kernel, H, W, F, 1e-5)
    return pl.pallas_call(
        kernel,
        out_shape=jax.ShapeDtypeStruct((NHW, C), jnp.float32),
        grid=(BM,),
        in_specs=[
            pl.BlockSpec((HW, C), lambda i: (i, 0)),
            full(cmask),
            full(params["gn_pool"]),
            full(params["gn_bcast"]),
            full(params["gn"]),
            full(params["w1"]),
            full(params["b1"]),
            full(params["w2"]),
            full(params["b2"]),
        ],
        out_specs=pl.BlockSpec((HW, C), lambda i: (i, 0)),
        scratch_shapes=[pltpu.VMEM((pad_len, C), jnp.float32)],
        compiler_params=pltpu.CompilerParams(
            dimension_semantics=("parallel",),
            vmem_limit_bytes=64 * 1024 * 1024),
    )(x, cmask, params["gn_pool"], params["gn_bcast"], params["gn"],
      params["w1"], params["b1"], params["w2"], params["b2"])


# ----------------------------------------------------------------------------
# Plain-JAX glue: parameters, positional embedding, correspondence warping
# ----------------------------------------------------------------------------
def init_params(key, dim):
    assert dim % 32 == 0, "dim must be divisible by 32 (heads & GroupNorm groups)"
    heads, dh = dim // 32, 32
    ks = jax.random.split(key, 12)
    s = 0.02

    # transformer attention weights (big matrices stored bf16 for the MXU)
    wv1 = jax.random.normal(ks[0], (dim, dim), jnp.float32) * s
    wo1 = jax.random.normal(ks[1], (dim, dim), jnp.float32) * s
    w_sa = (wv1 @ wo1).astype(jnp.bfloat16)        # folded seq-len-1 self-attention
    wq2 = (jax.random.normal(ks[2], (dim, dim), jnp.float32) * s).astype(jnp.bfloat16)
    wk2 = (jax.random.normal(ks[3], (dim, dim), jnp.float32) * s).astype(jnp.bfloat16)
    wv2 = (jax.random.normal(ks[4], (dim, dim), jnp.float32) * s).astype(jnp.bfloat16)
    wo2 = (jax.random.normal(ks[5], (dim, dim), jnp.float32) * s).astype(jnp.bfloat16)
    battn = jnp.zeros((2, dim), jnp.float32)                          # [b_out1, b_out2]

    # per-head score pooling (C, heads) and probability broadcast (heads, C)
    hid = jnp.arange(dim) // dh
    p_pool = (hid[:, None] == jnp.arange(heads)[None, :]).astype(jnp.bfloat16)
    p_bcast = (jnp.arange(heads)[:, None] == hid[None, :]).astype(jnp.float32)

    ln = jnp.concatenate([jnp.ones((1, dim)), jnp.zeros((1, dim))] * 3,
                         axis=0).astype(jnp.float32)

    inner = 4 * dim
    wff1a = (jax.random.normal(ks[6], (dim, inner), jnp.float32) * s
             ).astype(jnp.bfloat16)                                   # GEGLU value half
    wff1g = (jax.random.normal(ks[7], (dim, inner), jnp.float32) * s
             ).astype(jnp.bfloat16)                                   # GEGLU gate half
    bff1a = jnp.zeros((1, inner), jnp.float32)
    bff1g = jnp.zeros((1, inner), jnp.float32)
    wff2 = (jax.random.normal(ks[8], (inner, dim), jnp.float32) * s
            ).astype(jnp.bfloat16)
    bff2 = jnp.zeros((1, dim), jnp.float32)

    # PosEmbedding(2, dim // 2): Fourier features sin/cos(2*pi * xy @ B) -> dim
    pe_B = jax.random.normal(ks[9], (2, dim // 2), jnp.float32)
    # query_pe = PE(zeros) = [sin(0)... | cos(0)...] = [0...0 | 1...1]
    qpe = jnp.concatenate([jnp.zeros((1, dim // 2)), jnp.ones((1, dim // 2))],
                          axis=-1).astype(jnp.float32)

    # BasicResNetBlock(dim, dim, zero_init=True)
    groups = 32
    gs = dim // groups
    gid = jnp.arange(dim) // gs
    gn_pool = (gid[:, None] == jnp.arange(groups)[None, :]).astype(jnp.float32) / gs
    gn_bcast = (jnp.arange(groups)[:, None] == gid[None, :]).astype(jnp.float32)
    gn = jnp.concatenate([jnp.ones((1, dim)), jnp.zeros((1, dim))] * 2,
                         axis=0).astype(jnp.float32)
    w1 = (jax.random.normal(ks[10], (3, 3, dim, dim), jnp.float32) * s
          ).astype(jnp.bfloat16)                                      # (kh,kw,Cin,Cout)
    b1 = jax.random.normal(ks[11], (1, dim), jnp.float32) * s
    w2 = jnp.zeros((3, 3, dim, dim), jnp.bfloat16)                    # zero_init=True
    b2 = jnp.zeros((1, dim), jnp.float32)

    return dict(heads=heads, dh=dh, w_sa=w_sa, wq2=wq2, wk2=wk2, wv2=wv2,
                wo2=wo2, p_pool=p_pool, p_bcast=p_bcast, battn=battn, ln=ln,
                wff1a=wff1a, bff1a=bff1a, wff1g=wff1g, bff1g=bff1g,
                wff2=wff2, bff2=bff2, pe_B=pe_B, qpe=qpe,
                gn_pool=gn_pool, gn_bcast=gn_bcast, gn=gn,
                w1=w1, b1=b1, w2=w2, b2=b2)


def pos_embedding(xy, pe_B):
    proj = 2.0 * jnp.pi * (xy @ pe_B)
    return jnp.concatenate([jnp.sin(proj), jnp.cos(proj)], axis=-1)


def cp_attn_preprocess(x_nchw, reso, cp_package, m, params):
    # TODO(synk): get_query_value's depth/pose reprojection (torch.inverse, K) is
    # unavailable; neighbour features are warped with the provided per-pixel
    # correspondence (nearest neighbour) and masked by in-bounds & overlap_mask.
    del reso  # latent-resolution correspondence is used directly here
    BM, C, H, W = x_nchw.shape
    B = BM // m
    x = x_nchw.reshape(B, m, C, H, W).transpose(0, 1, 3, 4, 2)   # (B, m, H, W, C)

    corr = cp_package["correspondence"]       # (B, m, m, H, W, 2) pixel coords (x, y)
    overlap = cp_package["overlap_mask"]      # (B, m, m) bool

    # TODO(synk): fixed L=2 ring neighbours replace the variable-length `indexs`.
    L = 2
    nbr = jnp.stack([(jnp.arange(m) - 1) % m, (jnp.arange(m) + 1) % m], axis=-1)

    bi = jnp.arange(B)[:, None, None]
    ii = jnp.arange(m)[None, :, None]
    jj = nbr[None, :, :]                                          # (1, m, L)

    cxy = corr[bi, ii, jj]                                        # (B, m, L, H, W, 2)
    cx = jnp.round(cxy[..., 0]).astype(jnp.int32)
    cy = jnp.round(cxy[..., 1]).astype(jnp.int32)
    inb = (cx >= 0) & (cx < W) & (cy >= 0) & (cy < H)
    cxc = jnp.clip(cx, 0, W - 1)
    cyc = jnp.clip(cy, 0, H - 1)

    b5 = jnp.arange(B)[:, None, None, None, None]
    j5 = nbr[None, :, :, None, None]
    kv_feat = x[b5, j5, cyc, cxc]                                 # (B, m, L, H, W, C)

    ov = overlap[bi, ii, jj].astype(jnp.float32)                  # (B, m, L)
    mask = inb.astype(jnp.float32) * ov[..., None, None]          # (B, m, L, H, W)

    xy_norm = jnp.stack([cxc.astype(jnp.float32) / (W - 1) * 2.0 - 1.0,
                         cyc.astype(jnp.float32) / (H - 1) * 2.0 - 1.0], axis=-1)
    kv_pe = pos_embedding(xy_norm, params["pe_B"])                # (B, m, L, H, W, C)

    # Pre-fused KV stream: key_value = (features + pe) * mask, stored bf16.
    kv = (kv_feat + kv_pe) * mask[..., None]                      # (B, m, L, H, W, C)

    N = B * m * H * W
    # TODO(synk): longer term, fuse this gather+PE+mask into the kernel via
    # scalar-prefetched indices to avoid the (L, N, C) HBM round trip.
    q = x.reshape(N, C).astype(jnp.bfloat16)                      # bf16 query stream
    kv = kv.transpose(2, 0, 1, 3, 4, 5).reshape(L, N, C).astype(jnp.bfloat16)
    return q, kv


def cp_block_forward(x_nchw, reso, cp_package, m, params):
    BM, C, H, W = x_nchw.shape
    q, kv = cp_attn_preprocess(x_nchw, reso, cp_package, m, params)
    attn_out = transformer_block(q, kv, params["qpe"], params,
                                 dh=params["dh"])                 # (BM*H*W, C) bf16
    res_out = resnet_block(attn_out, params, H=H, W=W)            # (BM*H*W, C) f32
    return res_out.reshape(BM, H, W, C).transpose(0, 3, 1, 2)     # back to NCHW


# ----------------------------------------------------------------------------
if __name__ == "__main__":
    key = jax.random.PRNGKey(0)
    k_x, k_corr, k_p = jax.random.split(key, 3)

    B, m, dim, H, W = 1, 4, 64, 16, 16
    x = jax.random.normal(k_x, (B * m, dim, H, W), jnp.float32)

    ids = jnp.arange(m)
    d = (ids[:, None] - ids[None, :]) % m
    overlap_mask = jnp.broadcast_to((d == 1) | (d == m - 1), (B, m, m))
    correspondence = jax.random.uniform(k_corr, (B, m, m, H, W, 2),
                                        minval=-1.0, maxval=float(W))
    cp_package = dict(
        K=jnp.broadcast_to(jnp.eye(3, dtype=jnp.float32), (B, 3, 3)),
        poses=jnp.broadcast_to(jnp.eye(4, dtype=jnp.float32), (B, m, 4, 4)),
        depths=jnp.ones((B, m, H, W), jnp.float32),
        overlap_mask=overlap_mask,
        correspondence=correspondence,
    )

    params = init_params(k_p, dim)
    out = cp_block_forward(x, (H, W), cp_package, m, params)
    out = jax.block_until_ready(out)
    assert out.shape == x.shape and out.dtype == jnp.float32
    assert bool(jnp.all(jnp.isfinite(out)))
    print("KERNEL_OK")
</pallas_src>

<mosaic_0001>
module attributes {stable_mosaic.version = 11 : i64} {
  func.func @_transformer_kernel(%arg0: i32, %arg1: memref<256x64xbf16, #tpu.memory_space<vmem>>, %arg2: memref<2x256x64xbf16, #tpu.memory_space<vmem>>, %arg3: memref<1x64xf32, #tpu.memory_space<vmem>>, %arg4: memref<6x64xf32, #tpu.memory_space<vmem>>, %arg5: memref<64x64xbf16, #tpu.memory_space<vmem>>, %arg6: memref<64x64xbf16, #tpu.memory_space<vmem>>, %arg7: memref<64x64xbf16, #tpu.memory_space<vmem>>, %arg8: memref<64x64xbf16, #tpu.memory_space<vmem>>, %arg9: memref<64x64xbf16, #tpu.memory_space<vmem>>, %arg10: memref<64x2xbf16, #tpu.memory_space<vmem>>, %arg11: memref<2x64xf32, #tpu.memory_space<vmem>>, %arg12: memref<2x64xf32, #tpu.memory_space<vmem>>, %arg13: memref<64x256xbf16, #tpu.memory_space<vmem>>, %arg14: memref<1x256xf32, #tpu.memory_space<vmem>>, %arg15: memref<64x256xbf16, #tpu.memory_space<vmem>>, %arg16: memref<1x256xf32, #tpu.memory_space<vmem>>, %arg17: memref<256x64xbf16, #tpu.memory_space<vmem>>, %arg18: memref<1x64xf32, #tpu.memory_space<vmem>>, %arg19: memref<256x64xbf16, #tpu.memory_space<vmem>>) attributes {dimension_semantics = [#tpu.dimension_semantics<parallel>], iteration_bounds = array<i64: 4>, scalar_prefetch = 0 : i64, scratch_operands = 0 : i64, tpu.core_type = #tpu.core_type<tc>, window_params = [{transform_indices = @transform_0, window_bounds = array<i64: 256, 64>}, {transform_indices = @transform_1, window_bounds = array<i64: 2, 256, 64>}, {pipeline_mode = #tpu.pipeline_mode<synchronous>, transform_indices = @transform_2, window_bounds = array<i64: 1, 64>}, {pipeline_mode = #tpu.pipeline_mode<synchronous>, transform_indices = @transform_3, window_bounds = array<i64: 6, 64>}, {pipeline_mode = #tpu.pipeline_mode<synchronous>, transform_indices = @transform_4, window_bounds = array<i64: 64, 64>}, {pipeline_mode = #tpu.pipeline_mode<synchronous>, transform_indices = @transform_5, window_bounds = array<i64: 64, 64>}, {pipeline_mode = #tpu.pipeline_mode<synchronous>, transform_indices = @transform_6, window_bounds = array<i64: 64, 64>}, {pipeline_mode = #tpu.pipeline_mode<synchronous>, transform_indices = @transform_7, window_bounds = array<i64: 64, 64>}, {pipeline_mode = #tpu.pipeline_mode<synchronous>, transform_indices = @transform_8, window_bounds = array<i64: 64, 64>}, {pipeline_mode = #tpu.pipeline_mode<synchronous>, transform_indices = @transform_9, window_bounds = array<i64: 64, 2>}, {pipeline_mode = #tpu.pipeline_mode<synchronous>, transform_indices = @transform_10, window_bounds = array<i64: 2, 64>}, {pipeline_mode = #tpu.pipeline_mode<synchronous>, transform_indices = @transform_11, window_bounds = array<i64: 2, 64>}, {pipeline_mode = #tpu.pipeline_mode<synchronous>, transform_indices = @transform_12, window_bounds = array<i64: 64, 256>}, {pipeline_mode = #tpu.pipeline_mode<synchronous>, transform_indices = @transform_13, window_bounds = array<i64: 1, 256>}, {pipeline_mode = #tpu.pipeline_mode<synchronous>, transform_indices = @transform_14, window_bounds = array<i64: 64, 256>}, {pipeline_mode = #tpu.pipeline_mode<synchronous>, transform_indices = @transform_15, window_bounds = array<i64: 1, 256>}, {pipeline_mode = #tpu.pipeline_mode<synchronous>, transform_indices = @transform_16, window_bounds = array<i64: 256, 64>}, {pipeline_mode = #tpu.pipeline_mode<synchronous>, transform_indices = @transform_17, window_bounds = array<i64: 1, 64>}, {transform_indices = @transform_18, window_bounds = array<i64: 256, 64>}]} {
    %c0 = arith.constant 0 : index
    %c0_0 = arith.constant 0 : index
    %0 = vector.load %arg1[%c0, %c0_0] : memref<256x64xbf16, #tpu.memory_space<vmem>>, vector<256x64xbf16>
    %1 = arith.extf %0 : vector<256x64xbf16> to vector<256x64xf32>
    %c0_1 = arith.constant 0 : index
    %c0_2 = arith.constant 0 : index
    %2 = vector.load %arg4[%c0_1, %c0_2] : memref<6x64xf32, #tpu.memory_space<vmem>>, vector<6x64xf32>
    %c0_3 = arith.constant 0 : index
    %c0_4 = arith.constant 0 : index
    %3 = vector.load %arg3[%c0_3, %c0_4] : memref<1x64xf32, #tpu.memory_space<vmem>>, vector<1x64xf32>
    %c0_5 = arith.constant 0 : index
    %c0_6 = arith.constant 0 : index
    %4 = vector.load %arg12[%c0_5, %c0_6] : memref<2x64xf32, #tpu.memory_space<vmem>>, vector<2x64xf32>
    %5 = vector.extract_strided_slice %4 {offsets = [0, 0], sizes = [1, 64], strides = [1, 1]} : vector<2x64xf32> to vector<1x64xf32>
    %6 = vector.extract_strided_slice %4 {offsets = [1, 0], sizes = [1, 64], strides = [1, 1]} : vector<2x64xf32> to vector<1x64xf32>
    %7 = vector.extract_strided_slice %2 {offsets = [0, 0], sizes = [1, 64], strides = [1, 1]} : vector<6x64xf32> to vector<1x64xf32>
    %8 = vector.extract_strided_slice %2 {offsets = [1, 0], sizes = [1, 64], strides = [1, 1]} : vector<6x64xf32> to vector<1x64xf32>
    %cst = arith.constant dense<0.000000e+00> : vector<256xf32>
    %9 = vector.multi_reduction <add>, %1, %cst [1] : vector<256x64xf32> to vector<256xf32>
    %10 = vector.shape_cast %9 : vector<256xf32> to vector<256x1xf32>
    %cst_7 = arith.constant 6.400000e+01 : f32
    %11 = vector.broadcast %cst_7 : f32 to vector<256x1xf32>
    %12 = arith.divf %10, %11 : vector<256x1xf32>
    %13 = vector.broadcast %12 : vector<256x1xf32> to vector<256x64xf32>
    %14 = arith.subf %1, %13 : vector<256x64xf32>
    %15 = arith.mulf %14, %14 : vector<256x64xf32>
    %cst_8 = arith.constant dense<0.000000e+00> : vector<256xf32>
    %16 = vector.multi_reduction <add>, %15, %cst_8 [1] : vector<256x64xf32> to vector<256xf32>
    %17 = vector.shape_cast %16 : vector<256xf32> to vector<256x1xf32>
    %cst_9 = arith.constant 6.400000e+01 : f32
    %18 = vector.broadcast %cst_9 : f32 to vector<256x1xf32>
    %19 = arith.divf %17, %18 : vector<256x1xf32>
    %20 = vector.broadcast %12 : vector<256x1xf32> to vector<256x64xf32>
    %21 = arith.subf %1, %20 : vector<256x64xf32>
    %cst_10 = arith.constant 9.99999974E-6 : f32
    %22 = vector.broadcast %cst_10 : f32 to vector<256x1xf32>
    %23 = arith.addf %19, %22 : vector<256x1xf32>
    %24 = math.rsqrt %23 : vector<256x1xf32>
    %25 = vector.broadcast %24 : vector<256x1xf32> to vector<256x64xf32>
    %26 = arith.mulf %21, %25 : vector<256x64xf32>
    %27 = vector.broadcast %7 : vector<1x64xf32> to vector<256x64xf32>
    %28 = arith.mulf %26, %27 : vector<256x64xf32>
    %29 = vector.broadcast %8 : vector<1x64xf32> to vector<256x64xf32>
    %30 = arith.addf %28, %29 : vector<256x64xf32>
    %31 = arith.truncf %30 : vector<256x64xf32> to vector<256x64xbf16>
    %c0_11 = arith.constant 0 : index
    %c0_12 = arith.constant 0 : index
    %32 = vector.load %arg5[%c0_11, %c0_12] : memref<64x64xbf16, #tpu.memory_space<vmem>>, vector<64x64xbf16>
    %cst_13 = arith.constant dense<0.000000e+00> : vector<256x64xf32>
    %33 = tpu.matmul %31, %32, %cst_13 {dimension_numbers = #tpu.dot_dimension_numbers<[1], [0], [0], [1], [0, 0, 1, 1], [], []>} : vector<256x64xbf16>, vector<64x64xbf16>, vector<256x64xf32> -> vector<256x64xf32>
    %34 = arith.addf %1, %33 : vector<256x64xf32>
    %35 = vector.broadcast %5 : vector<1x64xf32> to vector<256x64xf32>
    %36 = arith.addf %34, %35 : vector<256x64xf32>
    %37 = vector.extract_strided_slice %2 {offsets = [2, 0], sizes = [1, 64], strides = [1, 1]} : vector<6x64xf32> to vector<1x64xf32>
    %38 = vector.extract_strided_slice %2 {offsets = [3, 0], sizes = [1, 64], strides = [1, 1]} : vector<6x64xf32> to vector<1x64xf32>
    %cst_14 = arith.constant dense<0.000000e+00> : vector<256xf32>
    %39 = vector.multi_reduction <add>, %36, %cst_14 [1] : vector<256x64xf32> to vector<256xf32>
    %40 = vector.shape_cast %39 : vector<256xf32> to vector<256x1xf32>
    %cst_15 = arith.constant 6.400000e+01 : f32
    %41 = vector.broadcast %cst_15 : f32 to vector<256x1xf32>
    %42 = arith.divf %40, %41 : vector<256x1xf32>
    %43 = vector.broadcast %42 : vector<256x1xf32> to vector<256x64xf32>
    %44 = arith.subf %36, %43 : vector<256x64xf32>
    %45 = arith.mulf %44, %44 : vector<256x64xf32>
    %cst_16 = arith.constant dense<0.000000e+00> : vector<256xf32>
    %46 = vector.multi_reduction <add>, %45, %cst_16 [1] : vector<256x64xf32> to vector<256xf32>
    %47 = vector.shape_cast %46 : vector<256xf32> to vector<256x1xf32>
    %cst_17 = arith.constant 6.400000e+01 : f32
    %48 = vector.broadcast %cst_17 : f32 to vector<256x1xf32>
    %49 = arith.divf %47, %48 : vector<256x1xf32>
    %50 = vector.broadcast %42 : vector<256x1xf32> to vector<256x64xf32>
    %51 = arith.subf %36, %50 : vector<256x64xf32>
    %cst_18 = arith.constant 9.99999974E-6 : f32
    %52 = vector.broadcast %cst_18 : f32 to vector<256x1xf32>
    %53 = arith.addf %49, %52 : vector<256x1xf32>
    %54 = math.rsqrt %53 : vector<256x1xf32>
    %55 = vector.broadcast %54 : vector<256x1xf32> to vector<256x64xf32>
    %56 = arith.mulf %51, %55 : vector<256x64xf32>
    %57 = vector.broadcast %37 : vector<1x64xf32> to vector<256x64xf32>
    %58 = arith.mulf %56, %57 : vector<256x64xf32>
    %59 = vector.broadcast %38 : vector<1x64xf32> to vector<256x64xf32>
    %60 = arith.addf %58, %59 : vector<256x64xf32>
    %61 = vector.broadcast %3 : vector<1x64xf32> to vector<256x64xf32>
    %62 = arith.addf %60, %61 : vector<256x64xf32>
    %63 = arith.truncf %62 : vector<256x64xf32> to vector<256x64xbf16>
    %c0_19 = arith.constant 0 : index
    %c0_20 = arith.constant 0 : index
    %64 = vector.load %arg6[%c0_19, %c0_20] : memref<64x64xbf16, #tpu.memory_space<vmem>>, vector<64x64xbf16>
    %cst_21 = arith.constant dense<0.000000e+00> : vector<256x64xf32>
    %65 = tpu.matmul %63, %64, %cst_21 {dimension_numbers = #tpu.dot_dimension_numbers<[1], [0], [0], [1], [0, 0, 1, 1], [], []>} : vector<256x64xbf16>, vector<64x64xbf16>, vector<256x64xf32> -> vector<256x64xf32>
    %c0_22 = arith.constant 0 : index
    %c0_23 = arith.constant 0 : index
    %66 = vector.load %arg10[%c0_22, %c0_23] : memref<64x2xbf16, #tpu.memory_space<vmem>>, vector<64x2xbf16>
    %c0_24 = arith.constant 0 : index
    %c0_25 = arith.constant 0 : index
    %67 = vector.load %arg11[%c0_24, %c0_25] : memref<2x64xf32, #tpu.memory_space<vmem>>, vector<2x64xf32>
    %c0_26 = arith.constant 0 : index
    %c0_27 = arith.constant 0 : index
    %c0_28 = arith.constant 0 : index
    %68 = vector.load %arg2[%c0_26, %c0_27, %c0_28] : memref<2x256x64xbf16, #tpu.memory_space<vmem>>, vector<1x256x64xbf16>
    %69 = vector.shape_cast %68 : vector<1x256x64xbf16> to vector<256x64xbf16>
    %c0_29 = arith.constant 0 : index
    %c0_30 = arith.constant 0 : index
    %70 = vector.load %arg7[%c0_29, %c0_30] : memref<64x64xbf16, #tpu.memory_space<vmem>>, vector<64x64xbf16>
    %cst_31 = arith.constant dense<0.000000e+00> : vector<256x64xf32>
    %71 = tpu.matmul %69, %70, %cst_31 {dimension_numbers = #tpu.dot_dimension_numbers<[1], [0], [0], [1], [0, 0, 1, 1], [], []>} : vector<256x64xbf16>, vector<64x64xbf16>, vector<256x64xf32> -> vector<256x64xf32>
    %c0_32 = arith.constant 0 : index
    %c0_33 = arith.constant 0 : index
    %72 = vector.load %arg8[%c0_32, %c0_33] : memref<64x64xbf16, #tpu.memory_space<vmem>>, vector<64x64xbf16>
    %cst_34 = arith.constant dense<0.000000e+00> : vector<256x64xf32>
    %73 = tpu.matmul %69, %72, %cst_34 {dimension_numbers = #tpu.dot_dimension_numbers<[1], [0], [0], [1], [0, 0, 1, 1], [], []>} : vector<256x64xbf16>, vector<64x64xbf16>, vector<256x64xf32> -> vector<256x64xf32>
    %74 = arith.mulf %65, %71 : vector<256x64xf32>
    %75 = arith.truncf %74 : vector<256x64xf32> to vector<256x64xbf16>
    %cst_35 = arith.constant dense<0.000000e+00> : vector<256x2xf32>
    %76 = tpu.matmul %75, %66, %cst_35 {dimension_numbers = #tpu.dot_dimension_numbers<[1], [0], [0], [1], [0, 0, 1, 1], [], []>} : vector<256x64xbf16>, vector<64x2xbf16>, vector<256x2xf32> -> vector<256x2xf32>
    %cst_36 = arith.constant 0.176776692 : f32
    %77 = vector.broadcast %cst_36 : f32 to vector<256x2xf32>
    %78 = arith.mulf %76, %77 : vector<256x2xf32>
    %c1 = arith.constant 1 : index
    %c0_37 = arith.constant 0 : index
    %c0_38 = arith.constant 0 : index
    %79 = vector.load %arg2[%c1, %c0_37, %c0_38] : memref<2x256x64xbf16, #tpu.memory_space<vmem>>, vector<1x256x64xbf16>
    %80 = vector.shape_cast %79 : vector<1x256x64xbf16> to vector<256x64xbf16>
    %c0_39 = arith.constant 0 : index
    %c0_40 = arith.constant 0 : index
    %81 = vector.load %arg7[%c0_39, %c0_40] : memref<64x64xbf16, #tpu.memory_space<vmem>>, vector<64x64xbf16>
    %cst_41 = arith.constant dense<0.000000e+00> : vector<256x64xf32>
    %82 = tpu.matmul %80, %81, %cst_41 {dimension_numbers = #tpu.dot_dimension_numbers<[1], [0], [0], [1], [0, 0, 1, 1], [], []>} : vector<256x64xbf16>, vector<64x64xbf16>, vector<256x64xf32> -> vector<256x64xf32>
    %c0_42 = arith.constant 0 : index
    %c0_43 = arith.constant 0 : index
    %83 = vector.load %arg8[%c0_42, %c0_43] : memref<64x64xbf16, #tpu.memory_space<vmem>>, vector<64x64xbf16>
    %cst_44 = arith.constant dense<0.000000e+00> : vector<256x64xf32>
    %84 = tpu.matmul %80, %83, %cst_44 {dimension_numbers = #tpu.dot_dimension_numbers<[1], [0], [0], [1], [0, 0, 1, 1], [], []>} : vector<256x64xbf16>, vector<64x64xbf16>, vector<256x64xf32> -> vector<256x64xf32>
    %85 = arith.mulf %65, %82 : vector<256x64xf32>
    %86 = arith.truncf %85 : vector<256x64xf32> to vector<256x64xbf16>
    %cst_45 = arith.constant dense<0.000000e+00> : vector<256x2xf32>
    %87 = tpu.matmul %86, %66, %cst_45 {dimension_numbers = #tpu.dot_dimension_numbers<[1], [0], [0], [1], [0, 0, 1, 1], [], []>} : vector<256x64xbf16>, vector<64x2xbf16>, vector<256x2xf32> -> vector<256x2xf32>
    %cst_46 = arith.constant 0.176776692 : f32
    %88 = vector.broadcast %cst_46 : f32 to vector<256x2xf32>
    %89 = arith.mulf %87, %88 : vector<256x2xf32>
    %90 = arith.subf %78, %89 : vector<256x2xf32>
    %91 = arith.negf %90 : vector<256x2xf32>
    %92 = math.exp %91 : vector<256x2xf32>
    %cst_47 = arith.constant 1.000000e+00 : f32
    %93 = vector.broadcast %cst_47 : f32 to vector<256x2xf32>
    %94 = arith.addf %93, %92 : vector<256x2xf32>
    %95 = arith.divf %93, %94 : vector<256x2xf32>
    %cst_48 = arith.constant dense<0.000000e+00> : vector<256x64xf32>
    %96 = tpu.matmul %95, %67, %cst_48 {dimension_numbers = #tpu.dot_dimension_numbers<[1], [0], [0], [1], [0, 0, 1, 1], [], []>} : vector<256x2xf32>, vector<2x64xf32>, vector<256x64xf32> -> vector<256x64xf32>
    %97 = arith.mulf %96, %73 : vector<256x64xf32>
    %cst_49 = arith.constant 1.000000e+00 : f32
    %98 = vector.broadcast %cst_49 : f32 to vector<256x64xf32>
    %99 = arith.subf %98, %96 : vector<256x64xf32>
    %100 = arith.mulf %99, %84 : vector<256x64xf32>
    %101 = arith.addf %97, %100 : vector<256x64xf32>
    %102 = arith.truncf %101 : vector<256x64xf32> to vector<256x64xbf16>
    %c0_50 = arith.constant 0 : index
    %c0_51 = arith.constant 0 : index
    %103 = vector.load %arg9[%c0_50, %c0_51] : memref<64x64xbf16, #tpu.memory_space<vmem>>, vector<64x64xbf16>
    %cst_52 = arith.constant dense<0.000000e+00> : vector<256x64xf32>
    %104 = tpu.matmul %102, %103, %cst_52 {dimension_numbers = #tpu.dot_dimension_numbers<[1], [0], [0], [1], [0, 0, 1, 1], [], []>} : vector<256x64xbf16>, vector<64x64xbf16>, vector<256x64xf32> -> vector<256x64xf32>
    %105 = arith.addf %36, %104 : vector<256x64xf32>
    %106 = vector.broadcast %6 : vector<1x64xf32> to vector<256x64xf32>
    %107 = arith.addf %105, %106 : vector<256x64xf32>
    %108 = vector.extract_strided_slice %2 {offsets = [4, 0], sizes = [1, 64], strides = [1, 1]} : vector<6x64xf32> to vector<1x64xf32>
    %109 = vector.extract_strided_slice %2 {offsets = [5, 0], sizes = [1, 64], strides = [1, 1]} : vector<6x64xf32> to vector<1x64xf32>
    %cst_53 = arith.constant dense<0.000000e+00> : vector<256xf32>
    %110 = vector.multi_reduction <add>, %107, %cst_53 [1] : vector<256x64xf32> to vector<256xf32>
    %111 = vector.shape_cast %110 : vector<256xf32> to vector<256x1xf32>
    %cst_54 = arith.constant 6.400000e+01 : f32
    %112 = vector.broadcast %cst_54 : f32 to vector<256x1xf32>
    %113 = arith.divf %111, %112 : vector<256x1xf32>
    %114 = vector.broadcast %113 : vector<256x1xf32> to vector<256x64xf32>
    %115 = arith.subf %107, %114 : vector<256x64xf32>
    %116 = arith.mulf %115, %115 : vector<256x64xf32>
    %cst_55 = arith.constant dense<0.000000e+00> : vector<256xf32>
    %117 = vector.multi_reduction <add>, %116, %cst_55 [1] : vector<256x64xf32> to vector<256xf32>
    %118 = vector.shape_cast %117 : vector<256xf32> to vector<256x1xf32>
    %cst_56 = arith.constant 6.400000e+01 : f32
    %119 = vector.broadcast %cst_56 : f32 to vector<256x1xf32>
    %120 = arith.divf %118, %119 : vector<256x1xf32>
    %121 = vector.broadcast %113 : vector<256x1xf32> to vector<256x64xf32>
    %122 = arith.subf %107, %121 : vector<256x64xf32>
    %cst_57 = arith.constant 9.99999974E-6 : f32
    %123 = vector.broadcast %cst_57 : f32 to vector<256x1xf32>
    %124 = arith.addf %120, %123 : vector<256x1xf32>
    %125 = math.rsqrt %124 : vector<256x1xf32>
    %126 = vector.broadcast %125 : vector<256x1xf32> to vector<256x64xf32>
    %127 = arith.mulf %122, %126 : vector<256x64xf32>
    %128 = vector.broadcast %108 : vector<1x64xf32> to vector<256x64xf32>
    %129 = arith.mulf %127, %128 : vector<256x64xf32>
    %130 = vector.broadcast %109 : vector<1x64xf32> to vector<256x64xf32>
    %131 = arith.addf %129, %130 : vector<256x64xf32>
    %132 = arith.truncf %131 : vector<256x64xf32> to vector<256x64xbf16>
    %c0_58 = arith.constant 0 : index
    %c0_59 = arith.constant 0 : index
    %133 = vector.load %arg15[%c0_58, %c0_59] : memref<64x256xbf16, #tpu.memory_space<vmem>>, vector<64x256xbf16>
    %cst_60 = arith.constant dense<0.000000e+00> : vector<256x256xf32>
    %134 = tpu.matmul %132, %133, %cst_60 {dimension_numbers = #tpu.dot_dimension_numbers<[1], [0], [0], [1], [0, 0, 1, 1], [], []>} : vector<256x64xbf16>, vector<64x256xbf16>, vector<256x256xf32> -> vector<256x256xf32>
    %c0_61 = arith.constant 0 : index
    %c0_62 = arith.constant 0 : index
    %135 = vector.load %arg16[%c0_61, %c0_62] : memref<1x256xf32, #tpu.memory_space<vmem>>, vector<1x256xf32>
    %136 = vector.broadcast %135 : vector<1x256xf32> to vector<256x256xf32>
    %137 = arith.addf %134, %136 : vector<256x256xf32>
    %138 = arith.mulf %137, %137 : vector<256x256xf32>
    %139 = arith.mulf %137, %138 : vector<256x256xf32>
    %cst_63 = arith.constant 4.471500e-02 : f32
    %140 = vector.broadcast %cst_63 : f32 to vector<256x256xf32>
    %141 = arith.mulf %140, %139 : vector<256x256xf32>
    %142 = arith.addf %137, %141 : vector<256x256xf32>
    %cst_64 = arith.constant 0.797884583 : f32
    %143 = vector.broadcast %cst_64 : f32 to vector<256x256xf32>
    %144 = arith.mulf %143, %142 : vector<256x256xf32>
    %145 = math.tanh %144 : vector<256x256xf32>
    %cst_65 = arith.constant 1.000000e+00 : f32
    %146 = vector.broadcast %cst_65 : f32 to vector<256x256xf32>
    %147 = arith.addf %146, %145 : vector<256x256xf32>
    %cst_66 = arith.constant 5.000000e-01 : f32
    %148 = vector.broadcast %cst_66 : f32 to vector<256x256xf32>
    %149 = arith.mulf %148, %147 : vector<256x256xf32>
    %150 = arith.mulf %137, %149 : vector<256x256xf32>
    %c0_67 = arith.constant 0 : index
    %c0_68 = arith.constant 0 : index
    %151 = vector.load %arg13[%c0_67, %c0_68] : memref<64x256xbf16, #tpu.memory_space<vmem>>, vector<64x256xbf16>
    %cst_69 = arith.constant dense<0.000000e+00> : vector<256x256xf32>
    %152 = tpu.matmul %132, %151, %cst_69 {dimension_numbers = #tpu.dot_dimension_numbers<[1], [0], [0], [1], [0, 0, 1, 1], [], []>} : vector<256x64xbf16>, vector<64x256xbf16>, vector<256x256xf32> -> vector<256x256xf32>
    %c0_70 = arith.constant 0 : index
    %c0_71 = arith.constant 0 : index
    %153 = vector.load %arg14[%c0_70, %c0_71] : memref<1x256xf32, #tpu.memory_space<vmem>>, vector<1x256xf32>
    %154 = vector.broadcast %153 : vector<1x256xf32> to vector<256x256xf32>
    %155 = arith.addf %152, %154 : vector<256x256xf32>
    %156 = arith.mulf %155, %150 : vector<256x256xf32>
    %157 = arith.truncf %156 : vector<256x256xf32> to vector<256x256xbf16>
    %c0_72 = arith.constant 0 : index
    %c0_73 = arith.constant 0 : index
    %158 = vector.load %arg17[%c0_72, %c0_73] : memref<256x64xbf16, #tpu.memory_space<vmem>>, vector<256x64xbf16>
    %cst_74 = arith.constant dense<0.000000e+00> : vector<256x64xf32>
    %159 = tpu.matmul %157, %158, %cst_74 {dimension_numbers = #tpu.dot_dimension_numbers<[1], [0], [0], [1], [0, 0, 1, 1], [], []>} : vector<256x256xbf16>, vector<256x64xbf16>, vector<256x64xf32> -> vector<256x64xf32>
    %160 = arith.addf %107, %159 : vector<256x64xf32>
    %c0_75 = arith.constant 0 : index
    %c0_76 = arith.constant 0 : index
    %161 = vector.load %arg18[%c0_75, %c0_76] : memref<1x64xf32, #tpu.memory_space<vmem>>, vector<1x64xf32>
    %162 = vector.broadcast %161 : vector<1x64xf32> to vector<256x64xf32>
    %163 = arith.addf %160, %162 : vector<256x64xf32>
    %164 = arith.truncf %163 : vector<256x64xf32> to vector<256x64xbf16>
    %c0_77 = arith.constant 0 : index
    %c0_78 = arith.constant 0 : index
    %165 = vector.load %arg19[%c0_77, %c0_78] : memref<256x64xbf16, #tpu.memory_space<vmem>>, vector<256x64xbf16>
    tpu.vector_store %arg19[%c0_77, %c0_78], %164 {strides = array<i32>} : memref<256x64xbf16, #tpu.memory_space<vmem>>, vector<256x64xbf16>,
    return
  }
  func.func @transform_0(%arg0: i32) -> (i32, i32) {
    %c0_i32 = arith.constant 0 : i32
    %c0_i32_0 = arith.constant 0 : i32
    return %arg0, %c0_i32 : i32, i32
  }
  func.func @transform_1(%arg0: i32) -> (i32, i32, i32) {
    %c0_i32 = arith.constant 0 : i32
    %c0_i32_0 = arith.constant 0 : i32
    %c0_i32_1 = arith.constant 0 : i32
    return %c0_i32, %arg0, %c0_i32_0 : i32, i32, i32
  }
  func.func @transform_2(%arg0: i32) -> (i32, i32) {
    %c0_i32 = arith.constant 0 : i32
    %c0_i32_0 = arith.constant 0 : i32
    %c0_i32_1 = arith.constant 0 : i32
    return %c0_i32, %c0_i32_0 : i32, i32
  }
  func.func @transform_3(%arg0: i32) -> (i32, i32) {
    %c0_i32 = arith.constant 0 : i32
    %c0_i32_0 = arith.constant 0 : i32
    %c0_i32_1 = arith.constant 0 : i32
    return %c0_i32, %c0_i32_0 : i32, i32
  }
  func.func @transform_4(%arg0: i32) -> (i32, i32) {
    %c0_i32 = arith.constant 0 : i32
    %c0_i32_0 = arith.constant 0 : i32
    %c0_i32_1 = arith.constant 0 : i32
    return %c0_i32, %c0_i32_0 : i32, i32
  }
  func.func @transform_5(%arg0: i32) -> (i32, i32) {
    %c0_i32 = arith.constant 0 : i32
    %c0_i32_0 = arith.constant 0 : i32
    %c0_i32_1 = arith.constant 0 : i32
    return %c0_i32, %c0_i32_0 : i32, i32
  }
  func.func @transform_6(%arg0: i32) -> (i32, i32) {
    %c0_i32 = arith.constant 0 : i32
    %c0_i32_0 = arith.constant 0 : i32
    %c0_i32_1 = arith.constant 0 : i32
    return %c0_i32, %c0_i32_0 : i32, i32
  }
  func.func @transform_7(%arg0: i32) -> (i32, i32) {
    %c0_i32 = arith.constant 0 : i32
    %c0_i32_0 = arith.constant 0 : i32
    %c0_i32_1 = arith.constant 0 : i32
    return %c0_i32, %c0_i32_0 : i32, i32
  }
  func.func @transform_8(%arg0: i32) -> (i32, i32) {
    %c0_i32 = arith.constant 0 : i32
    %c0_i32_0 = arith.constant 0 : i32
    %c0_i32_1 = arith.constant 0 : i32
    return %c0_i32, %c0_i32_0 : i32, i32
  }
  func.func @transform_9(%arg0: i32) -> (i32, i32) {
    %c0_i32 = arith.constant 0 : i32
    %c0_i32_0 = arith.constant 0 : i32
    %c0_i32_1 = arith.constant 0 : i32
    return %c0_i32, %c0_i32_0 : i32, i32
  }
  func.func @transform_10(%arg0: i32) -> (i32, i32) {
    %c0_i32 = arith.constant 0 : i32
    %c0_i32_0 = arith.constant 0 : i32
    %c0_i32_1 = arith.constant 0 : i32
    return %c0_i32, %c0_i32_0 : i32, i32
  }
  func.func @transform_11(%arg0: i32) -> (i32, i32) {
    %c0_i32 = arith.constant 0 : i32
    %c0_i32_0 = arith.constant 0 : i32
    %c0_i32_1 = arith.constant 0 : i32
    return %c0_i32, %c0_i32_0 : i32, i32
  }
  func.func @transform_12(%arg0: i32) -> (i32, i32) {
    %c0_i32 = arith.constant 0 : i32
    %c0_i32_0 = arith.constant 0 : i32
    %c0_i32_1 = arith.constant 0 : i32
    return %c0_i32, %c0_i32_0 : i32, i32
  }
  func.func @transform_13(%arg0: i32) -> (i32, i32) {
    %c0_i32 = arith.constant 0 : i32
    %c0_i32_0 = arith.constant 0 : i32
    %c0_i32_1 = arith.constant 0 : i32
    return %c0_i32, %c0_i32_0 : i32, i32
  }
  func.func @transform_14(%arg0: i32) -> (i32, i32) {
    %c0_i32 = arith.constant 0 : i32
    %c0_i32_0 = arith.constant 0 : i32
    %c0_i32_1 = arith.constant 0 : i32
    return %c0_i32, %c0_i32_0 : i32, i32
  }
  func.func @transform_15(%arg0: i32) -> (i32, i32) {
    %c0_i32 = arith.constant 0 : i32
    %c0_i32_0 = arith.constant 0 : i32
    %c0_i32_1 = arith.constant 0 : i32
    return %c0_i32, %c0_i32_0 : i32, i32
  }
  func.func @transform_16(%arg0: i32) -> (i32, i32) {
    %c0_i32 = arith.constant 0 : i32
    %c0_i32_0 = arith.constant 0 : i32
    %c0_i32_1 = arith.constant 0 : i32
    return %c0_i32, %c0_i32_0 : i32, i32
  }
  func.func @transform_17(%arg0: i32) -> (i32, i32) {
    %c0_i32 = arith.constant 0 : i32
    %c0_i32_0 = arith.constant 0 : i32
    %c0_i32_1 = arith.constant 0 : i32
    return %c0_i32, %c0_i32_0 : i32, i32
  }
  func.func @transform_18(%arg0: i32) -> (i32, i32) {
    %c0_i32 = arith.constant 0 : i32
    %c0_i32_0 = arith.constant 0 : i32
    return %arg0, %c0_i32 : i32, i32
  }
}

</mosaic_0001>

<llo_original>
// kernel: tpu_custom_call.1
$region0: #{tpu_custom_call.1}
  #allocation0 [shape = 'u32[]', space=smem, size = 0x4, offset = 0x4, fixed_abs, tag = 'smem constant byte address 0x4 - core index']
  #allocation1 [shape = 'u32[144,128]{1,0:T(1,128)}', space=vmem, size = 0x12000, scoped, tag = 'internal scratch']
  #allocation32 [shape = 's32[]', space=sflag, size = 0x4, offset = 0, fixed_abs, tag = 'sflag constant byte address 0x0 - dummy sync flag']
  %s0 = inlined_call_operand.hbm [shape: bf16[1024,64], index: 0, kind: input, shape index: {}]
  %s1 = inlined_call_operand.hbm [shape: bf16[2,1024,64], index: 1, kind: input, shape index: {}]
  %s2 = inlined_call_operand.hbm [shape: f32[1,64], index: 2, kind: input, shape index: {}]
  %s3 = inlined_call_operand.hbm [shape: f32[6,64], index: 3, kind: input, shape index: {}]
  %s4 = inlined_call_operand.hbm [shape: bf16[64,64], index: 4, kind: input, shape index: {}]
  %s5 = inlined_call_operand.hbm [shape: bf16[64,64], index: 5, kind: input, shape index: {}]
  %s6 = inlined_call_operand.hbm [shape: bf16[64,64], index: 6, kind: input, shape index: {}]
  %s7 = inlined_call_operand.hbm [shape: bf16[64,64], index: 7, kind: input, shape index: {}]
  %s8 = inlined_call_operand.hbm [shape: bf16[64,64], index: 8, kind: input, shape index: {}]
  %s9 = inlined_call_operand.hbm [shape: bf16[64,2], index: 9, kind: input, shape index: {}]
  %s10 = inlined_call_operand.hbm [shape: f32[2,64], index: 10, kind: input, shape index: {}]
  %s11 = inlined_call_operand.hbm [shape: f32[2,64], index: 11, kind: input, shape index: {}]
  %s12 = inlined_call_operand.hbm [shape: bf16[64,256], index: 12, kind: input, shape index: {}]
  %s13 = inlined_call_operand.hbm [shape: f32[1,256], index: 13, kind: input, shape index: {}]
  %s14 = inlined_call_operand.hbm [shape: bf16[64,256], index: 14, kind: input, shape index: {}]
  %s15 = inlined_call_operand.hbm [shape: f32[1,256], index: 15, kind: input, shape index: {}]
  %s16 = inlined_call_operand.hbm [shape: bf16[256,64], index: 16, kind: input, shape index: {}]
  %s17 = inlined_call_operand.hbm [shape: f32[1,64], index: 17, kind: input, shape index: {}]
  %s18 = inlined_call_operand.hbm [shape: bf16[1024,64], index: 18, kind: output, shape index: {}]
  %s19 = sld [smem:[#allocation0]]
  $region177: #{tpu_custom_call.1} parent=0
    _
  %s21 = ssub.s32 1, %s19
  %s22 = scalar_select 0, %s21, %s19
  $region1: #{tpu_custom_call.1} parent=0
    #allocation2 [shape = 'u8[131072]{0}', space=vmem, size = 0x20000, scoped, tag = 'input window, operand 0']
    #allocation3 [shape = 's32[2]{0}', space=sflag, size = 0x8, scoped, tag = 'scoped memory for tpu_custom_call.1']
    #allocation4 [shape = 's32[2]{0}', space=sflag, size = 0x8, scoped, tag = 'scoped memory for tpu_custom_call.1']
    #allocation5 [shape = 'u8[262144]{0}', space=vmem, size = 0x40000, scoped, tag = 'input window, operand 1']
    #allocation6 [shape = 's32[2]{0}', space=sflag, size = 0x8, scoped, tag = 'scoped memory for tpu_custom_call.1']
    #allocation7 [shape = 'u8[512]{0}', space=vmem, size = 0x400, scoped, tag = 'input window, operand 2, single buffered']
    #allocation8 [shape = 'u8[4096]{0}', space=vmem, size = 0x1000, scoped, tag = 'input window, operand 3, single buffered']
    #allocation9 [shape = 's32[1]{0}', space=sflag, size = 0x4, scoped, tag = 'scoped memory for tpu_custom_call.1']
    #allocation10 [shape = 'u8[16384]{0}', space=vmem, size = 0x4000, scoped, tag = 'input window, operand 4, single buffered']
    #allocation11 [shape = 'u8[16384]{0}', space=vmem, size = 0x4000, scoped, tag = 'input window, operand 5, single buffered']
    #allocation12 [shape = 's32[1]{0}', space=sflag, size = 0x4, scoped, tag = 'scoped memory for tpu_custom_call.1']
    #allocation13 [shape = 'u8[16384]{0}', space=vmem, size = 0x4000, scoped, tag = 'input window, operand 6, single buffered']
    #allocation14 [shape = 'u8[16384]{0}', space=vmem, size = 0x4000, scoped, tag = 'input window, operand 7, single buffered']
    #allocation15 [shape = 's32[1]{0}', space=sflag, size = 0x4, scoped, tag = 'scoped memory for tpu_custom_call.1']
    #allocation16 [shape = 'u8[16384]{0}', space=vmem, size = 0x4000, scoped, tag = 'input window, operand 8, single buffered']
    #allocation17 [shape = 'u8[16384]{0}', space=vmem, size = 0x4000, scoped, tag = 'input window, operand 9, single buffered']
    #allocation18 [shape = 's32[1]{0}', space=sflag, size = 0x4, scoped, tag = 'scoped memory for tpu_custom_call.1']
    #allocation19 [shape = 'u8[1024]{0}', space=vmem, size = 0x400, scoped, tag = 'input window, operand 10, single buffered']
    #allocation20 [shape = 'u8[1024]{0}', space=vmem, size = 0x400, scoped, tag = 'input window, operand 11, single buffered']
    #allocation21 [shape = 's32[1]{0}', space=sflag, size = 0x4, scoped, tag = 'scoped memory for tpu_custom_call.1']
    #allocation22 [shape = 'u8[32768]{0}', space=vmem, size = 0x8000, scoped, tag = 'input window, operand 12, single buffered']
    #allocation23 [shape = 'u8[1024]{0}', space=vmem, size = 0x400, scoped, tag = 'input window, operand 13, single buffered']
    #allocation24 [shape = 's32[1]{0}', space=sflag, size = 0x4, scoped, tag = 'scoped memory for tpu_custom_call.1']
    #allocation25 [shape = 'u8[32768]{0}', space=vmem, size = 0x8000, scoped, tag = 'input window, operand 14, single buffered']
    #allocation26 [shape = 'u8[1024]{0}', space=vmem, size = 0x400, scoped, tag = 'input window, operand 15, single buffered']
    #allocation27 [shape = 's32[1]{0}', space=sflag, size = 0x4, scoped, tag = 'scoped memory for tpu_custom_call.1']
    #allocation28 [shape = 'u8[65536]{0}', space=vmem, size = 0x10000, scoped, tag = 'input window, operand 16, single buffered']
    #allocation29 [shape = 'u8[512]{0}', space=vmem, size = 0x400, scoped, tag = 'input window, operand 17, single buffered']
    #allocation30 [shape = 's32[1]{0}', space=sflag, size = 0x4, scoped, tag = 'scoped memory for tpu_custom_call.1']
    #allocation31 [shape = 'u8[131072]{0}', space=vmem, size = 0x20000, scoped, tag = 'output window, operand 0']
    %23 = vsyncpa [#allocation3], 0
    %s24 = scalar_lea.sflag [#allocation3], 1
    %25 = vsyncpa %s24, 0
    %26 = vsyncpa [#allocation6], 0
    %s27 = scalar_lea.sflag [#allocation6], 1
    %28 = vsyncpa %s27, 0
    %29 = vsyncpa [#allocation9], 0
    %30 = vsyncpa [#allocation12], 0
    %31 = vsyncpa [#allocation15], 0
    %32 = vsyncpa [#allocation18], 0
    %33 = vsyncpa [#allocation21], 0
    %34 = vsyncpa [#allocation24], 0
    %35 = vsyncpa [#allocation27], 0
    %36 = vsyncpa [#allocation30], 0
    %37 = vsyncpa [#allocation4], 0
    %s38 = scalar_lea.sflag [#allocation4], 1
    %39 = vsyncpa %s38, 0
    loop: start=0, step=1, limit=6
    $region2: #{tpu_custom_call.1} parent=1 // loop_pre_header
      _
    $region3: #{tpu_custom_call.1} parent=1 // loop_header
      %s41 = sphi 0, %s45
      %p42 = scmp.ge.s32.totalorder %s41, 6
      %s51 = sphi 0, %s53
      %s54 = sphi 0, %s51
      %s55 = sphi 0, %s54
      %s71 = sphi 0, %s55
      %s77 = sphi 0, %s79
      %s80 = sphi 0, %s77
      %s81 = sphi 0, %s80
      %s97 = sphi 0, %s81
      %s101 = sphi 0, %s101
      %s103 = sphi 0, %s101
      %s104 = sphi 0, %s103
      %s118 = sphi 0, %s104
      %s122 = sphi 0, %s122
      %s124 = sphi 0, %s122
      %s125 = sphi 0, %s124
      %s139 = sphi 0, %s125
      %s143 = sphi 0, %s143
      %s145 = sphi 0, %s143
      %s146 = sphi 0, %s145
      %s160 = sphi 0, %s146
      %s164 = sphi 0, %s164
      %s166 = sphi 0, %s164
      %s167 = sphi 0, %s166
      %s181 = sphi 0, %s167
      %s185 = sphi 0, %s185
      %s187 = sphi 0, %s185
      %s188 = sphi 0, %s187
      %s202 = sphi 0, %s188
      %s206 = sphi 0, %s206
      %s208 = sphi 0, %s206
      %s209 = sphi 0, %s208
      %s223 = sphi 0, %s209
      %s227 = sphi 0, %s227
      %s229 = sphi 0, %s227
      %s230 = sphi 0, %s229
      %s244 = sphi 0, %s230
      %s248 = sphi 0, %s248
      %s250 = sphi 0, %s248
      %s251 = sphi 0, %s250
      %s265 = sphi 0, %s251
      %s269 = sphi 0, %s269
      %s271 = sphi 0, %s269
      %s272 = sphi 0, %s271
      %s286 = sphi 0, %s272
      %s290 = sphi 0, %s290
      %s292 = sphi 0, %s290
      %s293 = sphi 0, %s292
      %s307 = sphi 0, %s293
      %s311 = sphi 0, %s311
      %s313 = sphi 0, %s311
      %s314 = sphi 0, %s313
      %s328 = sphi 0, %s314
      %s332 = sphi 0, %s332
      %s334 = sphi 0, %s332
      %s335 = sphi 0, %s334
      %s349 = sphi 0, %s335
      %s353 = sphi 0, %s353
      %s355 = sphi 0, %s353
      %s356 = sphi 0, %s355
      %s370 = sphi 0, %s356
      %s374 = sphi 0, %s374
      %s376 = sphi 0, %s374
      %s377 = sphi 0, %s376
      %s391 = sphi 0, %s377
      %s395 = sphi 0, %s395
      %s397 = sphi 0, %s395
      %s398 = sphi 0, %s397
      %s412 = sphi 0, %s398
      %s416 = sphi 0, %s416
      %s418 = sphi 0, %s416
      %s419 = sphi 0, %s418
      %s433 = sphi 0, %s419
      %s439 = sphi 0, %s441
      %s442 = sphi 0, %s439
      %s443 = sphi 0, %s442
      %s459 = sphi 0, %s443
    $region4: #{tpu_custom_call.1} parent=1 // loop_header_branch
      %44 = sbr.rel (%p42) target = $region8
    $region5: #{tpu_custom_call.1} parent=1 // loop_body
      %s46 = ssub.s32 %s41, 1
      %s47 = ssub.s32 %s41, 2
      %s48 = sadd.s32 %s41, 1
      %s49 = ssub.s32 %s41, %s48
      %p50 = scmp.eq.s32.totalorder %s49, 0
      %s52 = sadd.s32 %s51, 1
      %s53 = scalar_select %p50, %s51, %s52
      %p56 = pneg %p50
      %p57 = scmp.eq.s32.totalorder %s41, 3
      %p58 = por %p56, %p57
      %p59 = scmp.ne.s32.totalorder %s51, %s54
      %p60 = scmp.eq.s32.totalorder %s41, 0
      %p61 = por %p59, %p60
      %p62 = scmp.ne.s32.totalorder %s51, %s54
      %p63 = scmp.eq.s32.totalorder %s46, 3
      %p64 = por %p62, %p63
      %p65 = scmp.ne.s32.totalorder %s54, %s55
      %p66 = scmp.eq.s32.totalorder %s46, 0
      %p67 = por %p65, %p66
      %p68 = scmp.ne.s32.totalorder %s54, %s55
      %p69 = scmp.eq.s32.totalorder %s47, 3
      %p70 = por %p68, %p69
      %p72 = scmp.ne.s32.totalorder %s55, %s71
      %p73 = scmp.eq.s32.totalorder %s47, 0
      %p74 = por %p72, %p73
      %s75 = ssub.s32 %s41, %s48
      %p76 = scmp.eq.s32.totalorder %s75, 0
      %s78 = sadd.s32 %s77, 1
      %s79 = scalar_select %p76, %s77, %s78
      %p82 = pneg %p76
      %p83 = scmp.eq.s32.totalorder %s41, 3
      %p84 = por %p82, %p83
      %p85 = scmp.ne.s32.totalorder %s77, %s80
      %p86 = scmp.eq.s32.totalorder %s41, 0
      %p87 = por %p85, %p86
      %p88 = scmp.ne.s32.totalorder %s77, %s80
      %p89 = scmp.eq.s32.totalorder %s46, 3
      %p90 = por %p88, %p89
      %p91 = scmp.ne.s32.totalorder %s80, %s81
      %p92 = scmp.eq.s32.totalorder %s46, 0
      %p93 = por %p91, %p92
      %p94 = scmp.ne.s32.totalorder %s80, %s81
      %p95 = scmp.eq.s32.totalorder %s47, 3
      %p96 = por %p94, %p95
      %p98 = scmp.ne.s32.totalorder %s81, %s97
      %p99 = scmp.eq.s32.totalorder %s47, 0
      %p100 = por %p98, %p99
      %s102 = sadd.s32 %s101, 1
      %p105 = scmp.eq.s32.totalorder %s41, 3
      %p106 = scmp.ne.s32.totalorder %s101, %s103
      %p107 = scmp.eq.s32.totalorder %s41, 0
      %p108 = por %p106, %p107
      %p109 = scmp.ne.s32.totalorder %s101, %s103
      %p110 = scmp.eq.s32.totalorder %s46, 3
      %p111 = por %p109, %p110
      %p112 = scmp.ne.s32.totalorder %s103, %s104
      %p113 = scmp.eq.s32.totalorder %s46, 0
      %p114 = por %p112, %p113
      %p115 = scmp.ne.s32.totalorder %s103, %s104
      %p116 = scmp.eq.s32.totalorder %s47, 3
      %p117 = por %p115, %p116
      %p119 = scmp.ne.s32.totalorder %s104, %s118
      %p120 = scmp.eq.s32.totalorder %s47, 0
      %p121 = por %p119, %p120
      %s123 = sadd.s32 %s122, 1
      %p126 = scmp.eq.s32.totalorder %s41, 3
      %p127 = scmp.ne.s32.totalorder %s122, %s124
      %p128 = scmp.eq.s32.totalorder %s41, 0
      %p129 = por %p127, %p128
      %p130 = scmp.ne.s32.totalorder %s122, %s124
      %p131 = scmp.eq.s32.totalorder %s46, 3
      %p132 = por %p130, %p131
      %p133 = scmp.ne.s32.totalorder %s124, %s125
      %p134 = scmp.eq.s32.totalorder %s46, 0
      %p135 = por %p133, %p134
      %p136 = scmp.ne.s32.totalorder %s124, %s125
      %p137 = scmp.eq.s32.totalorder %s47, 3
      %p138 = por %p136, %p137
      %p140 = scmp.ne.s32.totalorder %s125, %s139
      %p141 = scmp.eq.s32.totalorder %s47, 0
      %p142 = por %p140, %p141
      %s144 = sadd.s32 %s143, 1
      %p147 = scmp.eq.s32.totalorder %s41, 3
      %p148 = scmp.ne.s32.totalorder %s143, %s145
      %p149 = scmp.eq.s32.totalorder %s41, 0
      %p150 = por %p148, %p149
      %p151 = scmp.ne.s32.totalorder %s143, %s145
      %p152 = scmp.eq.s32.totalorder %s46, 3
      %p153 = por %p151, %p152
      %p154 = scmp.ne.s32.totalorder %s145, %s146
      %p155 = scmp.eq.s32.totalorder %s46, 0
      %p156 = por %p154, %p155
      %p157 = scmp.ne.s32.totalorder %s145, %s146
      %p158 = scmp.eq.s32.totalorder %s47, 3
      %p159 = por %p157, %p158
      %p161 = scmp.ne.s32.totalorder %s146, %s160
      %p162 = scmp.eq.s32.totalorder %s47, 0
      %p163 = por %p161, %p162
      %s165 = sadd.s32 %s164, 1
      %p168 = scmp.eq.s32.totalorder %s41, 3
      %p169 = scmp.ne.s32.totalorder %s164, %s166
      %p170 = scmp.eq.s32.totalorder %s41, 0
      %p171 = por %p169, %p170
      %p172 = scmp.ne.s32.totalorder %s164, %s166
      %p173 = scmp.eq.s32.totalorder %s46, 3
      %p174 = por %p172, %p173
      %p175 = scmp.ne.s32.totalorder %s166, %s167
      %p176 = scmp.eq.s32.totalorder %s46, 0
      %p177 = por %p175, %p176
      %p178 = scmp.ne.s32.totalorder %s166, %s167
      %p179 = scmp.eq.s32.totalorder %s47, 3
      %p180 = por %p178, %p179
      %p182 = scmp.ne.s32.totalorder %s167, %s181
      %p183 = scmp.eq.s32.totalorder %s47, 0
      %p184 = por %p182, %p183
      %s186 = sadd.s32 %s185, 1
      %p189 = scmp.eq.s32.totalorder %s41, 3
      %p190 = scmp.ne.s32.totalorder %s185, %s187
      %p191 = scmp.eq.s32.totalorder %s41, 0
      %p192 = por %p190, %p191
      %p193 = scmp.ne.s32.totalorder %s185, %s187
      %p194 = scmp.eq.s32.totalorder %s46, 3
      %p195 = por %p193, %p194
      %p196 = scmp.ne.s32.totalorder %s187, %s188
      %p197 = scmp.eq.s32.totalorder %s46, 0
      %p198 = por %p196, %p197
      %p199 = scmp.ne.s32.totalorder %s187, %s188
      %p200 = scmp.eq.s32.totalorder %s47, 3
      %p201 = por %p199, %p200
      %p203 = scmp.ne.s32.totalorder %s188, %s202
      %p204 = scmp.eq.s32.totalorder %s47, 0
      %p205 = por %p203, %p204
      %s207 = sadd.s32 %s206, 1
      %p210 = scmp.eq.s32.totalorder %s41, 3
      %p211 = scmp.ne.s32.totalorder %s206, %s208
      %p212 = scmp.eq.s32.totalorder %s41, 0
      %p213 = por %p211, %p212
      %p214 = scmp.ne.s32.totalorder %s206, %s208
      %p215 = scmp.eq.s32.totalorder %s46, 3
      %p216 = por %p214, %p215
      %p217 = scmp.ne.s32.totalorder %s208, %s209
      %p218 = scmp.eq.s32.totalorder %s46, 0
      %p219 = por %p217, %p218
      %p220 = scmp.ne.s32.totalorder %s208, %s209
      %p221 = scmp.eq.s32.totalorder %s47, 3
      %p222 = por %p220, %p221
      %p224 = scmp.ne.s32.totalorder %s209, %s223
      %p225 = scmp.eq.s32.totalorder %s47, 0
      %p226 = por %p224, %p225
      %s228 = sadd.s32 %s227, 1
      %p231 = scmp.eq.s32.totalorder %s41, 3
      %p232 = scmp.ne.s32.totalorder %s227, %s229
      %p233 = scmp.eq.s32.totalorder %s41, 0
      %p234 = por %p232, %p233
      %p235 = scmp.ne.s32.totalorder %s227, %s229
      %p236 = scmp.eq.s32.totalorder %s46, 3
      %p237 = por %p235, %p236
      %p238 = scmp.ne.s32.totalorder %s229, %s230
      %p239 = scmp.eq.s32.totalorder %s46, 0
      %p240 = por %p238, %p239
      %p241 = scmp.ne.s32.totalorder %s229, %s230
      %p242 = scmp.eq.s32.totalorder %s47, 3
      %p243 = por %p241, %p242
      %p245 = scmp.ne.s32.totalorder %s230, %s244
      %p246 = scmp.eq.s32.totalorder %s47, 0
      %p247 = por %p245, %p246
      %s249 = sadd.s32 %s248, 1
      %p252 = scmp.eq.s32.totalorder %s41, 3
      %p253 = scmp.ne.s32.totalorder %s248, %s250
      %p254 = scmp.eq.s32.totalorder %s41, 0
      %p255 = por %p253, %p254
      %p256 = scmp.ne.s32.totalorder %s248, %s250
      %p257 = scmp.eq.s32.totalorder %s46, 3
      %p258 = por %p256, %p257
      %p259 = scmp.ne.s32.totalorder %s250, %s251
      %p260 = scmp.eq.s32.totalorder %s46, 0
      %p261 = por %p259, %p260
      %p262 = scmp.ne.s32.totalorder %s250, %s251
      %p263 = scmp.eq.s32.totalorder %s47, 3
      %p264 = por %p262, %p263
      %p266 = scmp.ne.s32.totalorder %s251, %s265
      %p267 = scmp.eq.s32.totalorder %s47, 0
      %p268 = por %p266, %p267
      %s270 = sadd.s32 %s269, 1
      %p273 = scmp.eq.s32.totalorder %s41, 3
      %p274 = scmp.ne.s32.totalorder %s269, %s271
      %p275 = scmp.eq.s32.totalorder %s41, 0
      %p276 = por %p274, %p275
      %p277 = scmp.ne.s32.totalorder %s269, %s271
      %p278 = scmp.eq.s32.totalorder %s46, 3
      %p279 = por %p277, %p278
      %p280 = scmp.ne.s32.totalorder %s271, %s272
      %p281 = scmp.eq.s32.totalorder %s46, 0
      %p282 = por %p280, %p281
      %p283 = scmp.ne.s32.totalorder %s271, %s272
      %p284 = scmp.eq.s32.totalorder %s47, 3
      %p285 = por %p283, %p284
      %p287 = scmp.ne.s32.totalorder %s272, %s286
      %p288 = scmp.eq.s32.totalorder %s47, 0
      %p289 = por %p287, %p288
      %s291 = sadd.s32 %s290, 1
      %p294 = scmp.eq.s32.totalorder %s41, 3
      %p295 = scmp.ne.s32.totalorder %s290, %s292
      %p296 = scmp.eq.s32.totalorder %s41, 0
      %p297 = por %p295, %p296
      %p298 = scmp.ne.s32.totalorder %s290, %s292
      %p299 = scmp.eq.s32.totalorder %s46, 3
      %p300 = por %p298, %p299
      %p301 = scmp.ne.s32.totalorder %s292, %s293
      %p302 = scmp.eq.s32.totalorder %s46, 0
      %p303 = por %p301, %p302
      %p304 = scmp.ne.s32.totalorder %s292, %s293
      %p305 = scmp.eq.s32.totalorder %s47, 3
      %p306 = por %p304, %p305
      %p308 = scmp.ne.s32.totalorder %s293, %s307
      %p309 = scmp.eq.s32.totalorder %s47, 0
      %p310 = por %p308, %p309
      %s312 = sadd.s32 %s311, 1
      %p315 = scmp.eq.s32.totalorder %s41, 3
      %p316 = scmp.ne.s32.totalorder %s311, %s313
      %p317 = scmp.eq.s32.totalorder %s41, 0
      %p318 = por %p316, %p317
      %p319 = scmp.ne.s32.totalorder %s311, %s313
      %p320 = scmp.eq.s32.totalorder %s46, 3
      %p321 = por %p319, %p320
      %p322 = scmp.ne.s32.totalorder %s313, %s314
      %p323 = scmp.eq.s32.totalorder %s46, 0
      %p324 = por %p322, %p323
      %p325 = scmp.ne.s32.totalorder %s313, %s314
      %p326 = scmp.eq.s32.totalorder %s47, 3
      %p327 = por %p325, %p326
      %p329 = scmp.ne.s32.totalorder %s314, %s328
      %p330 = scmp.eq.s32.totalorder %s47, 0
      %p331 = por %p329, %p330
      %s333 = sadd.s32 %s332, 1
      %p336 = scmp.eq.s32.totalorder %s41, 3
      %p337 = scmp.ne.s32.totalorder %s332, %s334
      %p338 = scmp.eq.s32.totalorder %s41, 0
      %p339 = por %p337, %p338
      %p340 = scmp.ne.s32.totalorder %s332, %s334
      %p341 = scmp.eq.s32.totalorder %s46, 3
      %p342 = por %p340, %p341
      %p343 = scmp.ne.s32.totalorder %s334, %s335
      %p344 = scmp.eq.s32.totalorder %s46, 0
      %p345 = por %p343, %p344
      %p346 = scmp.ne.s32.totalorder %s334, %s335
      %p347 = scmp.eq.s32.totalorder %s47, 3
      %p348 = por %p346, %p347
      %p350 = scmp.ne.s32.totalorder %s335, %s349
      %p351 = scmp.eq.s32.totalorder %s47, 0
      %p352 = por %p350, %p351
      %s354 = sadd.s32 %s353, 1
      %p357 = scmp.eq.s32.totalorder %s41, 3
      %p358 = scmp.ne.s32.totalorder %s353, %s355
      %p359 = scmp.eq.s32.totalorder %s41, 0
      %p360 = por %p358, %p359
      %p361 = scmp.ne.s32.totalorder %s353, %s355
      %p362 = scmp.eq.s32.totalorder %s46, 3
      %p363 = por %p361, %p362
      %p364 = scmp.ne.s32.totalorder %s355, %s356
      %p365 = scmp.eq.s32.totalorder %s46, 0
      %p366 = por %p364, %p365
      %p367 = scmp.ne.s32.totalorder %s355, %s356
      %p368 = scmp.eq.s32.totalorder %s47, 3
      %p369 = por %p367, %p368
      %p371 = scmp.ne.s32.totalorder %s356, %s370
      %p372 = scmp.eq.s32.totalorder %s47, 0
      %p373 = por %p371, %p372
      %s375 = sadd.s32 %s374, 1
      %p378 = scmp.eq.s32.totalorder %s41, 3
      %p379 = scmp.ne.s32.totalorder %s374, %s376
      %p380 = scmp.eq.s32.totalorder %s41, 0
      %p381 = por %p379, %p380
      %p382 = scmp.ne.s32.totalorder %s374, %s376
      %p383 = scmp.eq.s32.totalorder %s46, 3
      %p384 = por %p382, %p383
      %p385 = scmp.ne.s32.totalorder %s376, %s377
      %p386 = scmp.eq.s32.totalorder %s46, 0
      %p387 = por %p385, %p386
      %p388 = scmp.ne.s32.totalorder %s376, %s377
      %p389 = scmp.eq.s32.totalorder %s47, 3
      %p390 = por %p388, %p389
      %p392 = scmp.ne.s32.totalorder %s377, %s391
      %p393 = scmp.eq.s32.totalorder %s47, 0
      %p394 = por %p392, %p393
      %s396 = sadd.s32 %s395, 1
      %p399 = scmp.eq.s32.totalorder %s41, 3
      %p400 = scmp.ne.s32.totalorder %s395, %s397
      %p401 = scmp.eq.s32.totalorder %s41, 0
      %p402 = por %p400, %p401
      %p403 = scmp.ne.s32.totalorder %s395, %s397
      %p404 = scmp.eq.s32.totalorder %s46, 3
      %p405 = por %p403, %p404
      %p406 = scmp.ne.s32.totalorder %s397, %s398
      %p407 = scmp.eq.s32.totalorder %s46, 0
      %p408 = por %p406, %p407
      %p409 = scmp.ne.s32.totalorder %s397, %s398
      %p410 = scmp.eq.s32.totalorder %s47, 3
      %p411 = por %p409, %p410
      %p413 = scmp.ne.s32.totalorder %s398, %s412
      %p414 = scmp.eq.s32.totalorder %s47, 0
      %p415 = por %p413, %p414
      %s417 = sadd.s32 %s416, 1
      %p420 = scmp.eq.s32.totalorder %s41, 3
      %p421 = scmp.ne.s32.totalorder %s416, %s418
      %p422 = scmp.eq.s32.totalorder %s41, 0
      %p423 = por %p421, %p422
      %p424 = scmp.ne.s32.totalorder %s416, %s418
      %p425 = scmp.eq.s32.totalorder %s46, 3
      %p426 = por %p424, %p425
      %p427 = scmp.ne.s32.totalorder %s418, %s419
      %p428 = scmp.eq.s32.totalorder %s46, 0
      %p429 = por %p427, %p428
      %p430 = scmp.ne.s32.totalorder %s418, %s419
      %p431 = scmp.eq.s32.totalorder %s47, 3
      %p432 = por %p430, %p431
      %p434 = scmp.ne.s32.totalorder %s419, %s433
      %p435 = scmp.eq.s32.totalorder %s47, 0
      %p436 = por %p434, %p435
      %s437 = ssub.s32 %s41, %s48
      %p438 = scmp.eq.s32.totalorder %s437, 0
      %s440 = sadd.s32 %s439, 1
      %s441 = scalar_select %p438, %s439, %s440
      %p444 = pneg %p438
      %p445 = scmp.eq.s32.totalorder %s41, 3
      %p446 = por %p444, %p445
      %p447 = scmp.ne.s32.totalorder %s439, %s442
      %p448 = scmp.eq.s32.totalorder %s41, 0
      %p449 = por %p447, %p448
      %p450 = scmp.ne.s32.totalorder %s439, %s442
      %p451 = scmp.eq.s32.totalorder %s46, 3
      %p452 = por %p450, %p451
      %p453 = scmp.ne.s32.totalorder %s442, %s443
      %p454 = scmp.eq.s32.totalorder %s46, 0
      %p455 = por %p453, %p454
      %p456 = scmp.ne.s32.totalorder %s442, %s443
      %p457 = scmp.eq.s32.totalorder %s47, 3
      %p458 = por %p456, %p457
      %p460 = scmp.ne.s32.totalorder %s443, %s459
      %p461 = scmp.eq.s32.totalorder %s47, 0
      %p462 = por %p460, %p461
      %p463 = scmp.le.s32.totalorder 1, %s41
      %p464 = scmp.lt.s32.totalorder %s41, 5
      %p465 = pnand %p463, %p464
      %p466 = pneg %p465
      // Predicated region
      $region9: #{tpu_custom_call.1} parent=5 // pred_check
        _
      $region10: #{tpu_custom_call.1} parent=5 // pred_check_branch
        %468 = sbr.rel (%p465) target = $region12
      $region11: #{tpu_custom_call.1} parent=5 // pred_region
        %s469 = ssub.s32 %s41, 1
        // Predicated region
        $region13: #{tpu_custom_call.1} parent=11 // pred_check
          %p470 = pneg %p114
        $region14: #{tpu_custom_call.1} parent=11 // pred_check_branch
          %472 = sbr.rel (%p470) target = $region16
        $region15: #{tpu_custom_call.1} parent=11 // pred_region
          %s474 = ssub.s32 16, 16
          %475 = vsyncadd [#allocation6], %s474
          %s477 = sshll.u32 [#allocation7], 4
          %s478 = int_to_ptr.vmem [resolvable:$true] %s477
          %480 = dma.hbm_to_vmem [thread:$0]  %s2, 16, %s478, [#allocation6]
        $region16: #{tpu_custom_call.1} parent=11 // pred_fallthru
          _
        // Predicated region
        $region17: #{tpu_custom_call.1} parent=11 // pred_check
          %p481 = pneg %p135
        $region18: #{tpu_custom_call.1} parent=11 // pred_check_branch
          %483 = sbr.rel (%p481) target = $region20
        $region19: #{tpu_custom_call.1} parent=11 // pred_region
          %s485 = ssub.s32 128, 128
          %486 = vsyncadd [#allocation9], %s485
          %s488 = sshll.u32 [#allocation8], 4
          %s489 = int_to_ptr.vmem [resolvable:$true] %s488
          %491 = dma.hbm_to_vmem [thread:$0]  %s3, 128, %s489, [#allocation9]
        $region20: #{tpu_custom_call.1} parent=11 // pred_fallthru
          _
        // Predicated region
        $region21: #{tpu_custom_call.1} parent=11 // pred_check
          %p492 = pneg %p156
        $region22: #{tpu_custom_call.1} parent=11 // pred_check_branch
          %494 = sbr.rel (%p492) target = $region24
        $region23: #{tpu_custom_call.1} parent=11 // pred_region
          %s496 = ssub.s32 512, 512
          %497 = vsyncadd [#allocation9], %s496
          %s498 = sshll.u32 [#allocation10], 4
          %s499 = int_to_ptr.vmem [resolvable:$true] %s498
          %504 = dma.hbm_to_vmem [thread:$0]  %s4, 512, %s499, [#allocation9], 64, 64, 4
        $region24: #{tpu_custom_call.1} parent=11 // pred_fallthru
          _
        // Predicated region
        $region25: #{tpu_custom_call.1} parent=11 // pred_check
          %p505 = pneg %p177
        $region26: #{tpu_custom_call.1} parent=11 // pred_check_branch
          %507 = sbr.rel (%p505) target = $region28
        $region27: #{tpu_custom_call.1} parent=11 // pred_region
          %s509 = ssub.s32 512, 512
          %510 = vsyncadd [#allocation12], %s509
          %s511 = sshll.u32 [#allocation11], 4
          %s512 = int_to_ptr.vmem [resolvable:$true] %s511
          %517 = dma.hbm_to_vmem [thread:$0]  %s5, 512, %s512, [#allocation12], 64, 64, 4
        $region28: #{tpu_custom_call.1} parent=11 // pred_fallthru
          _
        // Predicated region
        $region29: #{tpu_custom_call.1} parent=11 // pred_check
          %p518 = pneg %p198
        $region30: #{tpu_custom_call.1} parent=11 // pred_check_branch
          %520 = sbr.rel (%p518) target = $region32
        $region31: #{tpu_custom_call.1} parent=11 // pred_region
          %s522 = ssub.s32 512, 512
          %523 = vsyncadd [#allocation12], %s522
          %s524 = sshll.u32 [#allocation13], 4
          %s525 = int_to_ptr.vmem [resolvable:$true] %s524
          %530 = dma.hbm_to_vmem [thread:$0]  %s6, 512, %s525, [#allocation12], 64, 64, 4
        $region32: #{tpu_custom_call.1} parent=11 // pred_fallthru
          _
        // Predicated region
        $region33: #{tpu_custom_call.1} parent=11 // pred_check
          %p531 = pneg %p219
        $region34: #{tpu_custom_call.1} parent=11 // pred_check_branch
          %533 = sbr.rel (%p531) target = $region36
        $region35: #{tpu_custom_call.1} parent=11 // pred_region
          %s535 = ssub.s32 512, 512
          %536 = vsyncadd [#allocation15], %s535
          %s537 = sshll.u32 [#allocation14], 4
          %s538 = int_to_ptr.vmem [resolvable:$true] %s537
          %543 = dma.hbm_to_vmem [thread:$0]  %s7, 512, %s538, [#allocation15], 64, 64, 4
        $region36: #{tpu_custom_call.1} parent=11 // pred_fallthru
          _
        // Predicated region
        $region37: #{tpu_custom_call.1} parent=11 // pred_check
          %p544 = pneg %p240
        $region38: #{tpu_custom_call.1} parent=11 // pred_check_branch
          %546 = sbr.rel (%p544) target = $region40
        $region39: #{tpu_custom_call.1} parent=11 // pred_region
          %s548 = ssub.s32 512, 512
          %549 = vsyncadd [#allocation15], %s548
          %s550 = sshll.u32 [#allocation16], 4
          %s551 = int_to_ptr.vmem [resolvable:$true] %s550
          %556 = dma.hbm_to_vmem [thread:$0]  %s8, 512, %s551, [#allocation15], 64, 64, 4
        $region40: #{tpu_custom_call.1} parent=11 // pred_fallthru
          _
        // Predicated region
        $region41: #{tpu_custom_call.1} parent=11 // pred_check
          %p557 = pneg %p261
        $region42: #{tpu_custom_call.1} parent=11 // pred_check_branch
          %559 = sbr.rel (%p557) target = $region44
        $region43: #{tpu_custom_call.1} parent=11 // pred_region
          %s561 = ssub.s32 512, 512
          %562 = vsyncadd [#allocation18], %s561
          %s563 = sshll.u32 [#allocation17], 4
          %s564 = int_to_ptr.vmem [resolvable:$true] %s563
          %569 = dma.hbm_to_vmem [thread:$0]  %s9, 512, %s564, [#allocation18], 64, 64, 4
        $region44: #{tpu_custom_call.1} parent=11 // pred_fallthru
          _
        // Predicated region
        $region45: #{tpu_custom_call.1} parent=11 // pred_check
          %p570 = pneg %p282
        $region46: #{tpu_custom_call.1} parent=11 // pred_check_branch
          %572 = sbr.rel (%p570) target = $region48
        $region47: #{tpu_custom_call.1} parent=11 // pred_region
          %s574 = ssub.s32 32, 32
          %575 = vsyncadd [#allocation18], %s574
          %s577 = sshll.u32 [#allocation19], 4
          %s578 = int_to_ptr.vmem [resolvable:$true] %s577
          %580 = dma.hbm_to_vmem [thread:$0]  %s10, 32, %s578, [#allocation18]
        $region48: #{tpu_custom_call.1} parent=11 // pred_fallthru
          _
        // Predicated region
        $region49: #{tpu_custom_call.1} parent=11 // pred_check
          %p581 = pneg %p303
        $region50: #{tpu_custom_call.1} parent=11 // pred_check_branch
          %583 = sbr.rel (%p581) target = $region52
        $region51: #{tpu_custom_call.1} parent=11 // pred_region
          %s585 = ssub.s32 32, 32
          %586 = vsyncadd [#allocation21], %s585
          %s588 = sshll.u32 [#allocation20], 4
          %s589 = int_to_ptr.vmem [resolvable:$true] %s588
          %591 = dma.hbm_to_vmem [thread:$0]  %s11, 32, %s589, [#allocation21]
        $region52: #{tpu_custom_call.1} parent=11 // pred_fallthru
          _
        // Predicated region
        $region53: #{tpu_custom_call.1} parent=11 // pred_check
          %p592 = pneg %p324
        $region54: #{tpu_custom_call.1} parent=11 // pred_check_branch
          %594 = sbr.rel (%p592) target = $region56
        $region55: #{tpu_custom_call.1} parent=11 // pred_region
          %s596 = ssub.s32 1024, 1024
          %597 = vsyncadd [#allocation21], %s596
          %s598 = sshll.u32 [#allocation22], 4
          %s599 = int_to_ptr.vmem [resolvable:$true] %s598
          %604 = dma.hbm_to_vmem [thread:$0]  %s12, 1024, %s599, [#allocation21], 128, 128, 8
        $region56: #{tpu_custom_call.1} parent=11 // pred_fallthru
          _
        // Predicated region
        $region57: #{tpu_custom_call.1} parent=11 // pred_check
          %p605 = pneg %p345
        $region58: #{tpu_custom_call.1} parent=11 // pred_check_branch
          %607 = sbr.rel (%p605) target = $region60
        $region59: #{tpu_custom_call.1} parent=11 // pred_region
          %s609 = ssub.s32 32, 32
          %610 = vsyncadd [#allocation24], %s609
          %s612 = sshll.u32 [#allocation23], 4
          %s613 = int_to_ptr.vmem [resolvable:$true] %s612
          %615 = dma.hbm_to_vmem [thread:$0]  %s13, 32, %s613, [#allocation24]
        $region60: #{tpu_custom_call.1} parent=11 // pred_fallthru
          _
        // Predicated region
        $region61: #{tpu_custom_call.1} parent=11 // pred_check
          %p616 = pneg %p366
        $region62: #{tpu_custom_call.1} parent=11 // pred_check_branch
          %618 = sbr.rel (%p616) target = $region64
        $region63: #{tpu_custom_call.1} parent=11 // pred_region
          %s620 = ssub.s32 1024, 1024
          %621 = vsyncadd [#allocation24], %s620
          %s622 = sshll.u32 [#allocation25], 4
          %s623 = int_to_ptr.vmem [resolvable:$true] %s622
          %628 = dma.hbm_to_vmem [thread:$0]  %s14, 1024, %s623, [#allocation24], 128, 128, 8
        $region64: #{tpu_custom_call.1} parent=11 // pred_fallthru
          _
        // Predicated region
        $region65: #{tpu_custom_call.1} parent=11 // pred_check
          %p629 = pneg %p387
        $region66: #{tpu_custom_call.1} parent=11 // pred_check_branch
          %631 = sbr.rel (%p629) target = $region68
        $region67: #{tpu_custom_call.1} parent=11 // pred_region
          %s633 = ssub.s32 32, 32
          %634 = vsyncadd [#allocation27], %s633
          %s636 = sshll.u32 [#allocation26], 4
          %s637 = int_to_ptr.vmem [resolvable:$true] %s636
          %639 = dma.hbm_to_vmem [thread:$0]  %s15, 32, %s637, [#allocation27]
        $region68: #{tpu_custom_call.1} parent=11 // pred_fallthru
          _
        // Predicated region
        $region69: #{tpu_custom_call.1} parent=11 // pred_check
          %p640 = pneg %p408
        $region70: #{tpu_custom_call.1} parent=11 // pred_check_branch
          %642 = sbr.rel (%p640) target = $region72
        $region71: #{tpu_custom_call.1} parent=11 // pred_region
          %s644 = ssub.s32 2048, 2048
          %645 = vsyncadd [#allocation27], %s644
          %s646 = sshll.u32 [#allocation28], 4
          %s647 = int_to_ptr.vmem [resolvable:$true] %s646
          %652 = dma.hbm_to_vmem [thread:$0]  %s16, 2048, %s647, [#allocation27], 64, 64, 4
        $region72: #{tpu_custom_call.1} parent=11 // pred_fallthru
          _
        // Predicated region
        $region73: #{tpu_custom_call.1} parent=11 // pred_check
          %p653 = pneg %p429
        $region74: #{tpu_custom_call.1} parent=11 // pred_check_branch
          %655 = sbr.rel (%p653) target = $region76
        $region75: #{tpu_custom_call.1} parent=11 // pred_region
          %s657 = ssub.s32 16, 16
          %658 = vsyncadd [#allocation30], %s657
          %s660 = sshll.u32 [#allocation29], 4
          %s661 = int_to_ptr.vmem [resolvable:$true] %s660
          %663 = dma.hbm_to_vmem [thread:$0]  %s17, 16, %s661, [#allocation30]
        $region76: #{tpu_custom_call.1} parent=11 // pred_fallthru
          _
      $region12: #{tpu_custom_call.1} parent=5 // pred_fallthru
        _
      %p664 = scmp.lt.s32.totalorder %s41, 4
      // Predicated region
      $region77: #{tpu_custom_call.1} parent=5 // pred_check
        %p665 = pneg %p664
      $region78: #{tpu_custom_call.1} parent=5 // pred_check_branch
        %667 = sbr.rel (%p665) target = $region80
      $region79: #{tpu_custom_call.1} parent=5 // pred_region
        // Predicated region
        $region81: #{tpu_custom_call.1} parent=79 // pred_check
          %p668 = pneg %p61
        $region82: #{tpu_custom_call.1} parent=79 // pred_check_branch
          %670 = sbr.rel (%p668) target = $region84
        $region83: #{tpu_custom_call.1} parent=79 // pred_region
          %s671 = sand.u32 %s51, 1
          %s672 = scalar_lea.sflag [#allocation3], %s671
          %s673 = sand.u32 %s51, 1
          %s674 = smul.addr %s673, 128
          %s675 = scalar_lea.vmem [#allocation2], %s674
          %s676 = smul.u32 32, %s41
          %s678 = ssub.s32 2048, 2048
          %679 = vsyncadd %s672, %s678
          %s680 = smul.addr %s676, 64
          %s681 = scalar_lea.hbm %s0, %s680
          %s682 = sshll.u32 %s675, 4
          %s683 = int_to_ptr.vmem [resolvable:$true] %s682
          %688 = dma.hbm_to_vmem [thread:$0]  %s681, 2048, %s683, %s672, 64, 64, 4
        $region84: #{tpu_custom_call.1} parent=79 // pred_fallthru
          _
        // Predicated region
        $region85: #{tpu_custom_call.1} parent=79 // pred_check
          %p689 = pneg %p87
        $region86: #{tpu_custom_call.1} parent=79 // pred_check_branch
          %691 = sbr.rel (%p689) target = $region88
        $region87: #{tpu_custom_call.1} parent=79 // pred_region
          #allocation33 [shape = 'u32[6]{0}', space=smem, size = 0x18, scoped, tag = 'DMA stride descriptor']
          %s692 = sand.u32 %s41, 1
          %s693 = scalar_lea.sflag [#allocation6], %s692
          %s694 = sand.u32 %s77, 1
          %s695 = smul.addr %s694, 256
          %s696 = scalar_lea.vmem [#allocation5], %s695
          %s697 = smul.u32 32, %s41
          %s699 = ssub.s32 4096, 4096
          %700 = vsyncadd %s693, %s699
          %s701 = smul.addr %s697, 64
          %s702 = scalar_lea.hbm %s1, %s701
          %s704 = sshll.u32 1, 14
          %s705 = sxor.u32 4294967295, %s704
          %s707 = sld [smem:[#allocation0]]
          %s708 = sadd.s32 2, %s707
          %s710 = sshll.u32 7, 26
          %s711 = sxor.u32 4294967295, %s710
          %s712 = sand.u32 0, %s711
          %s713 = sshll.u32 %s708, 26
          %s714 = sor.u32 %s712, %s713
          %s715 = sshll.u32 %s696, 4
          %s716 = int_to_ptr.vmem [resolvable:$true] %s715
          %722 = sst [smem:[#allocation33]] 8192
          %s723 = scalar_lea.smem [#allocation33], 1
          %724 = sst [smem:[%s723]] 2048
          %s725 = scalar_lea.smem [#allocation33], 2
          %726 = sst [smem:[%s725]] 32
          %s727 = scalar_lea.smem [#allocation33], 3
          %728 = sst [smem:[%s727]] 64
          %s729 = scalar_lea.smem [#allocation33], 4
          %730 = sst [smem:[%s729]] 64
          %s731 = scalar_lea.smem [#allocation33], 5
          %732 = sst [smem:[%s731]] 4
          %734 = dma.general %s702, 4096, %s716, %s693, [#allocation32], [#allocation33], %s714, 0
        $region88: #{tpu_custom_call.1} parent=79 // pred_fallthru
          _
      $region80: #{tpu_custom_call.1} parent=5 // pred_fallthru
        _
      %p735 = scmp.le.s32.totalorder 1, %s41
      %p736 = scmp.lt.s32.totalorder %s41, 5
      %p737 = pnand %p735, %p736
      %p738 = pneg %p737
      // Predicated region
      $region89: #{tpu_custom_call.1} parent=5 // pred_check
        _
      $region90: #{tpu_custom_call.1} parent=5 // pred_check_branch
        %740 = sbr.rel (%p737) target = $region92
      $region91: #{tpu_custom_call.1} parent=5 // pred_region
        %s741 = ssub.s32 %s41, 1
        %s742 = sand.u32 %s54, 1
        %s743 = scalar_lea.sflag [#allocation3], %s742
        %s744 = sand.u32 %s54, 1
        %s745 = smul.addr %s744, 128
        %s746 = scalar_lea.vmem [#allocation2], %s745
        // Predicated region
        $region93: #{tpu_custom_call.1} parent=91 // pred_check
          %p747 = pneg %p67
        $region94: #{tpu_custom_call.1} parent=91 // pred_check_branch
          %749 = sbr.rel (%p747) target = $region96
        $region95: #{tpu_custom_call.1} parent=91 // pred_region
          %750 = dma.done %s743, 2048
        $region96: #{tpu_custom_call.1} parent=91 // pred_fallthru
          _
        %s751 = sand.u32 %s46, 1
        %s752 = scalar_lea.sflag [#allocation6], %s751
        %s753 = sand.u32 %s80, 1
        %s754 = smul.addr %s753, 256
        %s755 = scalar_lea.vmem [#allocation5], %s754
        // Predicated region
        $region97: #{tpu_custom_call.1} parent=91 // pred_check
          %p756 = pneg %p93
        $region98: #{tpu_custom_call.1} parent=91 // pred_check_branch
          %758 = sbr.rel (%p756) target = $region100
        $region99: #{tpu_custom_call.1} parent=91 // pred_region
          %759 = dma.done %s752, 4096
        $region100: #{tpu_custom_call.1} parent=91 // pred_fallthru
          _
        // Predicated region
        $region101: #{tpu_custom_call.1} parent=91 // pred_check
          %p760 = pneg %p114
        $region102: #{tpu_custom_call.1} parent=91 // pred_check_branch
          %762 = sbr.rel (%p760) target = $region104
        $region103: #{tpu_custom_call.1} parent=91 // pred_region
          %763 = dma.done [#allocation6], 16
        $region104: #{tpu_custom_call.1} parent=91 // pred_fallthru
          _
        // Predicated region
        $region105: #{tpu_custom_call.1} parent=91 // pred_check
          %p764 = pneg %p135
        $region106: #{tpu_custom_call.1} parent=91 // pred_check_branch
          %766 = sbr.rel (%p764) target = $region108
        $region107: #{tpu_custom_call.1} parent=91 // pred_region
          %767 = dma.done [#allocation9], 128
        $region108: #{tpu_custom_call.1} parent=91 // pred_fallthru
          _
        // Predicated region
        $region109: #{tpu_custom_call.1} parent=91 // pred_check
          %p768 = pneg %p156
        $region110: #{tpu_custom_call.1} parent=91 // pred_check_branch
          %770 = sbr.rel (%p768) target = $region112
        $region111: #{tpu_custom_call.1} parent=91 // pred_region
          %771 = dma.done [#allocation9], 512
        $region112: #{tpu_custom_call.1} parent=91 // pred_fallthru
          _
        // Predicated region
        $region113: #{tpu_custom_call.1} parent=91 // pred_check
          %p772 = pneg %p177
        $region114: #{tpu_custom_call.1} parent=91 // pred_check_branch
          %774 = sbr.rel (%p772) target = $region116
        $region115: #{tpu_custom_call.1} parent=91 // pred_region
          %775 = dma.done [#allocation12], 512
        $region116: #{tpu_custom_call.1} parent=91 // pred_fallthru
          _
        // Predicated region
        $region117: #{tpu_custom_call.1} parent=91 // pred_check
          %p776 = pneg %p198
        $region118: #{tpu_custom_call.1} parent=91 // pred_check_branch
          %778 = sbr.rel (%p776) target = $region120
        $region119: #{tpu_custom_call.1} parent=91 // pred_region
          %779 = dma.done [#allocation12], 512
        $region120: #{tpu_custom_call.1} parent=91 // pred_fallthru
          _
        // Predicated region
        $region121: #{tpu_custom_call.1} parent=91 // pred_check
          %p780 = pneg %p219
        $region122: #{tpu_custom_call.1} parent=91 // pred_check_branch
          %782 = sbr.rel (%p780) target = $region124
        $region123: #{tpu_custom_call.1} parent=91 // pred_region
          %783 = dma.done [#allocation15], 512
        $region124: #{tpu_custom_call.1} parent=91 // pred_fallthru
          _
        // Predicated region
        $region125: #{tpu_custom_call.1} parent=91 // pred_check
          %p784 = pneg %p240
        $region126: #{tpu_custom_call.1} parent=91 // pred_check_branch
          %786 = sbr.rel (%p784) target = $region128
        $region127: #{tpu_custom_call.1} parent=91 // pred_region
          %787 = dma.done [#allocation15], 512
        $region128: #{tpu_custom_call.1} parent=91 // pred_fallthru
          _
        // Predicated region
        $region129: #{tpu_custom_call.1} parent=91 // pred_check
          %p788 = pneg %p261
        $region130: #{tpu_custom_call.1} parent=91 // pred_check_branch
          %790 = sbr.rel (%p788) target = $region132
        $region131: #{tpu_custom_call.1} parent=91 // pred_region
          %791 = dma.done [#allocation18], 512
        $region132: #{tpu_custom_call.1} parent=91 // pred_fallthru
          _
        // Predicated region
        $region133: #{tpu_custom_call.1} parent=91 // pred_check
          %p792 = pneg %p282
        $region134: #{tpu_custom_call.1} parent=91 // pred_check_branch
          %794 = sbr.rel (%p792) target = $region136
        $region135: #{tpu_custom_call.1} parent=91 // pred_region
          %795 = dma.done [#allocation18], 32
        $region136: #{tpu_custom_call.1} parent=91 // pred_fallthru
          _
        // Predicated region
        $region137: #{tpu_custom_call.1} parent=91 // pred_check
          %p796 = pneg %p303
        $region138: #{tpu_custom_call.1} parent=91 // pred_check_branch
          %798 = sbr.rel (%p796) target = $region140
        $region139: #{tpu_custom_call.1} parent=91 // pred_region
          %799 = dma.done [#allocation21], 32
        $region140: #{tpu_custom_call.1} parent=91 // pred_fallthru
          _
        // Predicated region
        $region141: #{tpu_custom_call.1} parent=91 // pred_check
          %p800 = pneg %p324
        $region142: #{tpu_custom_call.1} parent=91 // pred_check_branch
          %802 = sbr.rel (%p800) target = $region144
        $region143: #{tpu_custom_call.1} parent=91 // pred_region
          %803 = dma.done [#allocation21], 1024
        $region144: #{tpu_custom_call.1} parent=91 // pred_fallthru
          _
        // Predicated region
        $region145: #{tpu_custom_call.1} parent=91 // pred_check
          %p804 = pneg %p345
        $region146: #{tpu_custom_call.1} parent=91 // pred_check_branch
          %806 = sbr.rel (%p804) target = $region148
        $region147: #{tpu_custom_call.1} parent=91 // pred_region
          %807 = dma.done [#allocation24], 32
        $region148: #{tpu_custom_call.1} parent=91 // pred_fallthru
          _
        // Predicated region
        $region149: #{tpu_custom_call.1} parent=91 // pred_check
          %p808 = pneg %p366
        $region150: #{tpu_custom_call.1} parent=91 // pred_check_branch
          %810 = sbr.rel (%p808) target = $region152
        $region151: #{tpu_custom_call.1} parent=91 // pred_region
          %811 = dma.done [#allocation24], 1024
        $region152: #{tpu_custom_call.1} parent=91 // pred_fallthru
          _
        // Predicated region
        $region153: #{tpu_custom_call.1} parent=91 // pred_check
          %p812 = pneg %p387
        $region154: #{tpu_custom_call.1} parent=91 // pred_check_branch
          %814 = sbr.rel (%p812) target = $region156
        $region155: #{tpu_custom_call.1} parent=91 // pred_region
          %815 = dma.done [#allocation27], 32
        $region156: #{tpu_custom_call.1} parent=91 // pred_fallthru
          _
        // Predicated region
        $region157: #{tpu_custom_call.1} parent=91 // pred_check
          %p816 = pneg %p408
        $region158: #{tpu_custom_call.1} parent=91 // pred_check_branch
          %818 = sbr.rel (%p816) target = $region160
        $region159: #{tpu_custom_call.1} parent=91 // pred_region
          %819 = dma.done [#allocation27], 2048
        $region160: #{tpu_custom_call.1} parent=91 // pred_fallthru
          _
        // Predicated region
        $region161: #{tpu_custom_call.1} parent=91 // pred_check
          %p820 = pneg %p429
        $region162: #{tpu_custom_call.1} parent=91 // pred_check_branch
          %822 = sbr.rel (%p820) target = $region164
        $region163: #{tpu_custom_call.1} parent=91 // pred_region
          %823 = dma.done [#allocation30], 16
        $region164: #{tpu_custom_call.1} parent=91 // pred_fallthru
          _
        %s824 = sand.u32 %s54, 1
        %s825 = scalar_lea.sflag [#allocation3], %s824
        %s826 = sand.u32 %s54, 1
        %s827 = smul.addr %s826, 128
        %s828 = scalar_lea.vmem [#allocation2], %s827
        %p829 = pneg %p67
        %p830 = pneg %p64
        %s831 = sand.u32 %s46, 1
        %s832 = scalar_lea.sflag [#allocation6], %s831
        %s833 = sand.u32 %s80, 1
        %s834 = smul.addr %s833, 256
        %s835 = scalar_lea.vmem [#allocation5], %s834
        %p836 = pneg %p93
        %p837 = pneg %p90
        %p838 = pneg %p114
        %p839 = pneg %p111
        %p840 = pneg %p135
        %p841 = pneg %p132
        %p842 = pneg %p156
        %p843 = pneg %p153
        %p844 = pneg %p177
        %p845 = pneg %p174
        %p846 = pneg %p198
        %p847 = pneg %p195
        %p848 = pneg %p219
        %p849 = pneg %p216
        %p850 = pneg %p240
        %p851 = pneg %p237
        %p852 = pneg %p261
        %p853 = pneg %p258
        %p854 = pneg %p282
        %p855 = pneg %p279
        %p856 = pneg %p303
        %p857 = pneg %p300
        %p858 = pneg %p324
        %p859 = pneg %p321
        %p860 = pneg %p345
        %p861 = pneg %p342
        %p862 = pneg %p366
        %p863 = pneg %p363
        %p864 = pneg %p387
        %p865 = pneg %p384
        %p866 = pneg %p408
        %p867 = pneg %p405
        %p868 = pneg %p429
        %p869 = pneg %p426
        %p870 = pneg %p455
        %p871 = pneg %p452
        %s872 = sand.u32 %s442, 1
        %s873 = scalar_lea.sflag [#allocation4], %s872
        %s874 = sand.u32 %s442, 1
        %s875 = smul.addr %s874, 128
        %s876 = scalar_lea.vmem [#allocation31], %s875
        %s877 = smul.u32 32, %s46
        %s878 = smul.u32 32, %s46
        %s879 = smul.u32 32, %s46
        %v881 = vld [vmem:[%s746] sm:$0xf]
        %v882 = vld [vmem:[%s746 + $0x4] sm:$0xf]
        %v883 = vld [vmem:[%s746 + $0x8] sm:$0xf]
        %v884 = vld [vmem:[%s746 + $0xc] sm:$0xf]
        %v885 = vld [vmem:[%s746 + $0x10] sm:$0xf]
        %v886 = vld [vmem:[%s746 + $0x14] sm:$0xf]
        %v887 = vld [vmem:[%s746 + $0x18] sm:$0xf]
        %v888 = vld [vmem:[%s746 + $0x1c] sm:$0xf]
        %v889 = vld [vmem:[%s746 + $0x20] sm:$0xf]
        %v890 = vld [vmem:[%s746 + $0x24] sm:$0xf]
        %v891 = vld [vmem:[%s746 + $0x28] sm:$0xf]
        %v892 = vld [vmem:[%s746 + $0x2c] sm:$0xf]
        %v893 = vld [vmem:[%s746 + $0x30] sm:$0xf]
        %v894 = vld [vmem:[%s746 + $0x34] sm:$0xf]
        %v895 = vld [vmem:[%s746 + $0x38] sm:$0xf]
        %v896 = vld [vmem:[%s746 + $0x3c] sm:$0xf]
        %v897 = vld [vmem:[%s746 + $0x40] sm:$0xf]
        %v898 = vld [vmem:[%s746 + $0x44] sm:$0xf]
        %v899 = vld [vmem:[%s746 + $0x48] sm:$0xf]
        %v900 = vld [vmem:[%s746 + $0x4c] sm:$0xf]
        %v901 = vld [vmem:[%s746 + $0x50] sm:$0xf]
        %v902 = vld [vmem:[%s746 + $0x54] sm:$0xf]
        %v903 = vld [vmem:[%s746 + $0x58] sm:$0xf]
        %v904 = vld [vmem:[%s746 + $0x5c] sm:$0xf]
        %v905 = vld [vmem:[%s746 + $0x60] sm:$0xf]
        %v906 = vld [vmem:[%s746 + $0x64] sm:$0xf]
        %v907 = vld [vmem:[%s746 + $0x68] sm:$0xf]
        %v908 = vld [vmem:[%s746 + $0x6c] sm:$0xf]
        %v909 = vld [vmem:[%s746 + $0x70] sm:$0xf]
        %v910 = vld [vmem:[%s746 + $0x74] sm:$0xf]
        %v911 = vld [vmem:[%s746 + $0x78] sm:$0xf]
        %v912 = vld [vmem:[%s746 + $0x7c] sm:$0xf]
        %v913 = vunpack.c.l.bf16 %v881
        %v914 = vunpack.c.l.bf16 %v882
        %v915 = vunpack.c.l.bf16 %v883
        %v916 = vunpack.c.l.bf16 %v884
        %v917 = vunpack.c.l.bf16 %v885
        %v918 = vunpack.c.l.bf16 %v886
        %v919 = vunpack.c.l.bf16 %v887
        %v920 = vunpack.c.l.bf16 %v888
        %v921 = vunpack.c.l.bf16 %v889
        %v922 = vunpack.c.l.bf16 %v890
        %v923 = vunpack.c.l.bf16 %v891
        %v924 = vunpack.c.l.bf16 %v892
        %v925 = vunpack.c.l.bf16 %v893
        %v926 = vunpack.c.l.bf16 %v894
        %v927 = vunpack.c.l.bf16 %v895
        %v928 = vunpack.c.l.bf16 %v896
        %v929 = vunpack.c.l.bf16 %v897
        %v930 = vunpack.c.l.bf16 %v898
        %v931 = vunpack.c.l.bf16 %v899
        %v932 = vunpack.c.l.bf16 %v900
        %v933 = vunpack.c.l.bf16 %v901
        %v934 = vunpack.c.l.bf16 %v902
        %v935 = vunpack.c.l.bf16 %v903
        %v936 = vunpack.c.l.bf16 %v904
        %v937 = vunpack.c.l.bf16 %v905
        %v938 = vunpack.c.l.bf16 %v906
        %v939 = vunpack.c.l.bf16 %v907
        %v940 = vunpack.c.l.bf16 %v908
        %v941 = vunpack.c.l.bf16 %v909
        %v942 = vunpack.c.l.bf16 %v910
        %v943 = vunpack.c.l.bf16 %v911
        %v944 = vunpack.c.l.bf16 %v912
        %v945 = vld [vmem:[#allocation8] sm:$0x3f]
        %v946 = vld [vmem:[#allocation7] sm:$0x1]
        %v947 = vld [vmem:[#allocation20] sm:$0x3]
        %vm948 = vcmask 523264
        %v949 = vsel %vm948, %v913, 0.0
        %950 = vadd.xlane.f32.xlu0 %v949
        %v951 = vpop.xlane.xlu0 %950
        %v952 = vsel %vm948, %v914, 0.0
        %953 = vadd.xlane.f32.xlu0 %v952
        %v954 = vpop.xlane.xlu0 %953
        %v955 = vsel %vm948, %v915, 0.0
        %956 = vadd.xlane.f32.xlu0 %v955
        %v957 = vpop.xlane.xlu0 %956
        %v958 = vsel %vm948, %v916, 0.0
        %959 = vadd.xlane.f32.xlu0 %v958
        %v960 = vpop.xlane.xlu0 %959
        %v961 = vsel %vm948, %v917, 0.0
        %962 = vadd.xlane.f32.xlu0 %v961
        %v963 = vpop.xlane.xlu0 %962
        %v964 = vsel %vm948, %v918, 0.0
        %965 = vadd.xlane.f32.xlu0 %v964
        %v966 = vpop.xlane.xlu0 %965
        %v967 = vsel %vm948, %v919, 0.0
        %968 = vadd.xlane.f32.xlu0 %v967
        %v969 = vpop.xlane.xlu0 %968
        %v970 = vsel %vm948, %v920, 0.0
        %971 = vadd.xlane.f32.xlu0 %v970
        %v972 = vpop.xlane.xlu0 %971
        %v973 = vsel %vm948, %v921, 0.0
        %974 = vadd.xlane.f32.xlu0 %v973
        %v975 = vpop.xlane.xlu0 %974
        %v976 = vsel %vm948, %v922, 0.0
        %977 = vadd.xlane.f32.xlu0 %v976
        %v978 = vpop.xlane.xlu0 %977
        %v979 = vsel %vm948, %v923, 0.0
        %980 = vadd.xlane.f32.xlu0 %v979
        %v981 = vpop.xlane.xlu0 %980
        %v982 = vsel %vm948, %v924, 0.0
        %983 = vadd.xlane.f32.xlu0 %v982
        %v984 = vpop.xlane.xlu0 %983
        %v985 = vsel %vm948, %v925, 0.0
        %986 = vadd.xlane.f32.xlu0 %v985
        %v987 = vpop.xlane.xlu0 %986
        %v988 = vsel %vm948, %v926, 0.0
        %989 = vadd.xlane.f32.xlu0 %v988
        %v990 = vpop.xlane.xlu0 %989
        %v991 = vsel %vm948, %v927, 0.0
        %992 = vadd.xlane.f32.xlu0 %v991
        %v993 = vpop.xlane.xlu0 %992
        %v994 = vsel %vm948, %v928, 0.0
        %995 = vadd.xlane.f32.xlu0 %v994
        %v996 = vpop.xlane.xlu0 %995
        %v997 = vsel %vm948, %v929, 0.0
        %998 = vadd.xlane.f32.xlu0 %v997
        %v999 = vpop.xlane.xlu0 %998
        %v1000 = vsel %vm948, %v930, 0.0
        %1001 = vadd.xlane.f32.xlu0 %v1000
        %v1002 = vpop.xlane.xlu0 %1001
        %v1003 = vsel %vm948, %v931, 0.0
        %1004 = vadd.xlane.f32.xlu0 %v1003
        %v1005 = vpop.xlane.xlu0 %1004
        %v1006 = vsel %vm948, %v932, 0.0
        %1007 = vadd.xlane.f32.xlu0 %v1006
        %v1008 = vpop.xlane.xlu0 %1007
        %v1009 = vsel %vm948, %v933, 0.0
        %1010 = vadd.xlane.f32.xlu0 %v1009
        %v1011 = vpop.xlane.xlu0 %1010
        %v1012 = vsel %vm948, %v934, 0.0
        %1013 = vadd.xlane.f32.xlu0 %v1012
        %v1014 = vpop.xlane.xlu0 %1013
        %v1015 = vsel %vm948, %v935, 0.0
        %1016 = vadd.xlane.f32.xlu0 %v1015
        %v1017 = vpop.xlane.xlu0 %1016
        %v1018 = vsel %vm948, %v936, 0.0
        %1019 = vadd.xlane.f32.xlu0 %v1018
        %v1020 = vpop.xlane.xlu0 %1019
        %v1021 = vsel %vm948, %v937, 0.0
        %1022 = vadd.xlane.f32.xlu0 %v1021
        %v1023 = vpop.xlane.xlu0 %1022
        %v1024 = vsel %vm948, %v938, 0.0
        %1025 = vadd.xlane.f32.xlu0 %v1024
        %v1026 = vpop.xlane.xlu0 %1025
        %v1027 = vsel %vm948, %v939, 0.0
        %1028 = vadd.xlane.f32.xlu0 %v1027
        %v1029 = vpop.xlane.xlu0 %1028
        %v1030 = vsel %vm948, %v940, 0.0
        %1031 = vadd.xlane.f32.xlu0 %v1030
        %v1032 = vpop.xlane.xlu0 %1031
        %v1033 = vsel %vm948, %v941, 0.0
        %1034 = vadd.xlane.f32.xlu0 %v1033
        %v1035 = vpop.xlane.xlu0 %1034
        %v1036 = vsel %vm948, %v942, 0.0
        %1037 = vadd.xlane.f32.xlu0 %v1036
        %v1038 = vpop.xlane.xlu0 %1037
        %v1039 = vsel %vm948, %v943, 0.0
        %1040 = vadd.xlane.f32.xlu0 %v1039
        %v1041 = vpop.xlane.xlu0 %1040
        %v1042 = vsel %vm948, %v944, 0.0
        %1043 = vadd.xlane.f32.xlu0 %v1042
        %v1044 = vpop.xlane.xlu0 %1043
        %v1045 = vrcp.pop 64.0
        %v1046 = vmul.f32 %v951, %v1045
        %v1047 = vmul.f32 %v954, %v1045
        %v1048 = vmul.f32 %v957, %v1045
        %v1049 = vmul.f32 %v960, %v1045
        %v1050 = vmul.f32 %v963, %v1045
        %v1051 = vmul.f32 %v966, %v1045
        %v1052 = vmul.f32 %v969, %v1045
        %v1053 = vmul.f32 %v972, %v1045
        %v1054 = vmul.f32 %v975, %v1045
        %v1055 = vmul.f32 %v978, %v1045
        %v1056 = vmul.f32 %v981, %v1045
        %v1057 = vmul.f32 %v984, %v1045
        %v1058 = vmul.f32 %v987, %v1045
        %v1059 = vmul.f32 %v990, %v1045
        %v1060 = vmul.f32 %v993, %v1045
        %v1061 = vmul.f32 %v996, %v1045
        %v1062 = vmul.f32 %v999, %v1045
        %v1063 = vmul.f32 %v1002, %v1045
        %v1064 = vmul.f32 %v1005, %v1045
        %v1065 = vmul.f32 %v1008, %v1045
        %v1066 = vmul.f32 %v1011, %v1045
        %v1067 = vmul.f32 %v1014, %v1045
        %v1068 = vmul.f32 %v1017, %v1045
        %v1069 = vmul.f32 %v1020, %v1045
        %v1070 = vmul.f32 %v1023, %v1045
        %v1071 = vmul.f32 %v1026, %v1045
        %v1072 = vmul.f32 %v1029, %v1045
        %v1073 = vmul.f32 %v1032, %v1045
        %v1074 = vmul.f32 %v1035, %v1045
        %v1075 = vmul.f32 %v1038, %v1045
        %v1076 = vmul.f32 %v1041, %v1045
        %v1077 = vmul.f32 %v1044, %v1045
        %v1078 = vsub.f32 %v913, %v1046
        %v1079 = vsub.f32 %v914, %v1047
        %v1080 = vsub.f32 %v915, %v1048
        %v1081 = vsub.f32 %v916, %v1049
        %v1082 = vsub.f32 %v917, %v1050
        %v1083 = vsub.f32 %v918, %v1051
        %v1084 = vsub.f32 %v919, %v1052
        %v1085 = vsub.f32 %v920, %v1053
        %v1086 = vsub.f32 %v921, %v1054
        %v1087 = vsub.f32 %v922, %v1055
        %v1088 = vsub.f32 %v923, %v1056
        %v1089 = vsub.f32 %v924, %v1057
        %v1090 = vsub.f32 %v925, %v1058
        %v1091 = vsub.f32 %v926, %v1059
        %v1092 = vsub.f32 %v927, %v1060
        %v1093 = vsub.f32 %v928, %v1061
        %v1094 = vsub.f32 %v929, %v1062
        %v1095 = vsub.f32 %v930, %v1063
        %v1096 = vsub.f32 %v931, %v1064
        %v1097 = vsub.f32 %v932, %v1065
        %v1098 = vsub.f32 %v933, %v1066
        %v1099 = vsub.f32 %v934, %v1067
        %v1100 = vsub.f32 %v935, %v1068
        %v1101 = vsub.f32 %v936, %v1069
        %v1102 = vsub.f32 %v937, %v1070
        %v1103 = vsub.f32 %v938, %v1071
        %v1104 = vsub.f32 %v939, %v1072
        %v1105 = vsub.f32 %v940, %v1073
        %v1106 = vsub.f32 %v941, %v1074
        %v1107 = vsub.f32 %v942, %v1075
        %v1108 = vsub.f32 %v943, %v1076
        %v1109 = vsub.f32 %v944, %v1077
        %v1110 = vmul.f32 %v1078, %v1078
        %v1111 = vmul.f32 %v1079, %v1079
        %v1112 = vmul.f32 %v1080, %v1080
        %v1113 = vmul.f32 %v1081, %v1081
        %v1114 = vmul.f32 %v1082, %v1082
        %v1115 = vmul.f32 %v1083, %v1083
        %v1116 = vmul.f32 %v1084, %v1084
        %v1117 = vmul.f32 %v1085, %v1085
        %v1118 = vmul.f32 %v1086, %v1086
        %v1119 = vmul.f32 %v1087, %v1087
        %v1120 = vmul.f32 %v1088, %v1088
        %v1121 = vmul.f32 %v1089, %v1089
        %v1122 = vmul.f32 %v1090, %v1090
        %v1123 = vmul.f32 %v1091, %v1091
        %v1124 = vmul.f32 %v1092, %v1092
        %v1125 = vmul.f32 %v1093, %v1093
        %v1126 = vmul.f32 %v1094, %v1094
        %v1127 = vmul.f32 %v1095, %v1095
        %v1128 = vmul.f32 %v1096, %v1096
        %v1129 = vmul.f32 %v1097, %v1097
        %v1130 = vmul.f32 %v1098, %v1098
        %v1131 = vmul.f32 %v1099, %v1099
        %v1132 = vmul.f32 %v1100, %v1100
        %v1133 = vmul.f32 %v1101, %v1101
        %v1134 = vmul.f32 %v1102, %v1102
        %v1135 = vmul.f32 %v1103, %v1103
        %v1136 = vmul.f32 %v1104, %v1104
        %v1137 = vmul.f32 %v1105, %v1105
        %v1138 = vmul.f32 %v1106, %v1106
        %v1139 = vmul.f32 %v1107, %v1107
        %v1140 = vmul.f32 %v1108, %v1108
        %v1141 = vmul.f32 %v1109, %v1109
        %v1142 = vsel %vm948, %v1110, 0.0
        %1143 = vadd.xlane.f32.xlu0 %v1142
        %v1144 = vpop.xlane.xlu0 %1143
        %v1145 = vsel %vm948, %v1111, 0.0
        %1146 = vadd.xlane.f32.xlu0 %v1145
        %v1147 = vpop.xlane.xlu0 %1146
        %v1148 = vsel %vm948, %v1112, 0.0
        %1149 = vadd.xlane.f32.xlu0 %v1148
        %v1150 = vpop.xlane.xlu0 %1149
        %v1151 = vsel %vm948, %v1113, 0.0
        %1152 = vadd.xlane.f32.xlu0 %v1151
        %v1153 = vpop.xlane.xlu0 %1152
        %v1154 = vsel %vm948, %v1114, 0.0
        %1155 = vadd.xlane.f32.xlu0 %v1154
        %v1156 = vpop.xlane.xlu0 %1155
        %v1157 = vsel %vm948, %v1115, 0.0
        %1158 = vadd.xlane.f32.xlu0 %v1157
        %v1159 = vpop.xlane.xlu0 %1158
        %v1160 = vsel %vm948, %v1116, 0.0
        %1161 = vadd.xlane.f32.xlu0 %v1160
        %v1162 = vpop.xlane.xlu0 %1161
        %v1163 = vsel %vm948, %v1117, 0.0
        %1164 = vadd.xlane.f32.xlu0 %v1163
        %v1165 = vpop.xlane.xlu0 %1164
        %v1166 = vsel %vm948, %v1118, 0.0
        %1167 = vadd.xlane.f32.xlu0 %v1166
        %v1168 = vpop.xlane.xlu0 %1167
        %v1169 = vsel %vm948, %v1119, 0.0
        %1170 = vadd.xlane.f32.xlu0 %v1169
        %v1171 = vpop.xlane.xlu0 %1170
        %v1172 = vsel %vm948, %v1120, 0.0
        %1173 = vadd.xlane.f32.xlu0 %v1172
        %v1174 = vpop.xlane.xlu0 %1173
        %v1175 = vsel %vm948, %v1121, 0.0
        %1176 = vadd.xlane.f32.xlu0 %v1175
        %v1177 = vpop.xlane.xlu0 %1176
        %v1178 = vsel %vm948, %v1122, 0.0
        %1179 = vadd.xlane.f32.xlu0 %v1178
        %v1180 = vpop.xlane.xlu0 %1179
        %v1181 = vsel %vm948, %v1123, 0.0
        %1182 = vadd.xlane.f32.xlu0 %v1181
        %v1183 = vpop.xlane.xlu0 %1182
        %v1184 = vsel %vm948, %v1124, 0.0
        %1185 = vadd.xlane.f32.xlu0 %v1184
        %v1186 = vpop.xlane.xlu0 %1185
        %v1187 = vsel %vm948, %v1125, 0.0
        %1188 = vadd.xlane.f32.xlu0 %v1187
        %v1189 = vpop.xlane.xlu0 %1188
        %v1190 = vsel %vm948, %v1126, 0.0
        %1191 = vadd.xlane.f32.xlu0 %v1190
        %v1192 = vpop.xlane.xlu0 %1191
        %v1193 = vsel %vm948, %v1127, 0.0
        %1194 = vadd.xlane.f32.xlu0 %v1193
        %v1195 = vpop.xlane.xlu0 %1194
        %v1196 = vsel %vm948, %v1128, 0.0
        %1197 = vadd.xlane.f32.xlu0 %v1196
        %v1198 = vpop.xlane.xlu0 %1197
        %v1199 = vsel %vm948, %v1129, 0.0
        %1200 = vadd.xlane.f32.xlu0 %v1199
        %v1201 = vpop.xlane.xlu0 %1200
        %v1202 = vsel %vm948, %v1130, 0.0
        %1203 = vadd.xlane.f32.xlu0 %v1202
        %v1204 = vpop.xlane.xlu0 %1203
        %v1205 = vsel %vm948, %v1131, 0.0
        %1206 = vadd.xlane.f32.xlu0 %v1205
        %v1207 = vpop.xlane.xlu0 %1206
        %v1208 = vsel %vm948, %v1132, 0.0
        %1209 = vadd.xlane.f32.xlu0 %v1208
        %v1210 = vpop.xlane.xlu0 %1209
        %v1211 = vsel %vm948, %v1133, 0.0
        %1212 = vadd.xlane.f32.xlu0 %v1211
        %v1213 = vpop.xlane.xlu0 %1212
        %v1214 = vsel %vm948, %v1134, 0.0
        %1215 = vadd.xlane.f32.xlu0 %v1214
        %v1216 = vpop.xlane.xlu0 %1215
        %v1217 = vsel %vm948, %v1135, 0.0
        %1218 = vadd.xlane.f32.xlu0 %v1217
        %v1219 = vpop.xlane.xlu0 %1218
        %v1220 = vsel %vm948, %v1136, 0.0
        %1221 = vadd.xlane.f32.xlu0 %v1220
        %v1222 = vpop.xlane.xlu0 %1221
        %v1223 = vsel %vm948, %v1137, 0.0
        %1224 = vadd.xlane.f32.xlu0 %v1223
        %v1225 = vpop.xlane.xlu0 %1224
        %v1226 = vsel %vm948, %v1138, 0.0
        %1227 = vadd.xlane.f32.xlu0 %v1226
        %v1228 = vpop.xlane.xlu0 %1227
        %v1229 = vsel %vm948, %v1139, 0.0
        %1230 = vadd.xlane.f32.xlu0 %v1229
        %v1231 = vpop.xlane.xlu0 %1230
        %v1232 = vsel %vm948, %v1140, 0.0
        %1233 = vadd.xlane.f32.xlu0 %v1232
        %v1234 = vpop.xlane.xlu0 %1233
        %v1235 = vsel %vm948, %v1141, 0.0
        %1236 = vadd.xlane.f32.xlu0 %v1235
        %v1237 = vpop.xlane.xlu0 %1236
        %v1238 = vmul.f32 %v1144, %v1045
        %v1239 = vmul.f32 %v1147, %v1045
        %v1240 = vmul.f32 %v1150, %v1045
        %v1241 = vmul.f32 %v1153, %v1045
        %v1242 = vmul.f32 %v1156, %v1045
        %v1243 = vmul.f32 %v1159, %v1045
        %v1244 = vmul.f32 %v1162, %v1045
        %v1245 = vmul.f32 %v1165, %v1045
        %v1246 = vmul.f32 %v1168, %v1045
        %v1247 = vmul.f32 %v1171, %v1045
        %v1248 = vmul.f32 %v1174, %v1045
        %v1249 = vmul.f32 %v1177, %v1045
        %v1250 = vmul.f32 %v1180, %v1045
        %v1251 = vmul.f32 %v1183, %v1045
        %v1252 = vmul.f32 %v1186, %v1045
        %v1253 = vmul.f32 %v1189, %v1045
        %v1254 = vmul.f32 %v1192, %v1045
        %v1255 = vmul.f32 %v1195, %v1045
        %v1256 = vmul.f32 %v1198, %v1045
        %v1257 = vmul.f32 %v1201, %v1045
        %v1258 = vmul.f32 %v1204, %v1045
        %v1259 = vmul.f32 %v1207, %v1045
        %v1260 = vmul.f32 %v1210, %v1045
        %v1261 = vmul.f32 %v1213, %v1045
        %v1262 = vmul.f32 %v1216, %v1045
        %v1263 = vmul.f32 %v1219, %v1045
        %v1264 = vmul.f32 %v1222, %v1045
        %v1265 = vmul.f32 %v1225, %v1045
        %v1266 = vmul.f32 %v1228, %v1045
        %v1267 = vmul.f32 %v1231, %v1045
        %v1268 = vmul.f32 %v1234, %v1045
        %v1269 = vmul.f32 %v1237, %v1045
        %v1270 = vadd.f32 %v1238, 1e-05
        %v1271 = vadd.f32 %v1239, 1e-05
        %v1272 = vadd.f32 %v1240, 1e-05
        %v1273 = vadd.f32 %v1241, 1e-05
        %v1274 = vadd.f32 %v1242, 1e-05
        %v1275 = vadd.f32 %v1243, 1e-05
        %v1276 = vadd.f32 %v1244, 1e-05
        %v1277 = vadd.f32 %v1245, 1e-05
        %v1278 = vadd.f32 %v1246, 1e-05
        %v1279 = vadd.f32 %v1247, 1e-05
        %v1280 = vadd.f32 %v1248, 1e-05
        %v1281 = vadd.f32 %v1249, 1e-05
        %v1282 = vadd.f32 %v1250, 1e-05
        %v1283 = vadd.f32 %v1251, 1e-05
        %v1284 = vadd.f32 %v1252, 1e-05
        %v1285 = vadd.f32 %v1253, 1e-05
        %v1286 = vadd.f32 %v1254, 1e-05
        %v1287 = vadd.f32 %v1255, 1e-05
        %v1288 = vadd.f32 %v1256, 1e-05
        %v1289 = vadd.f32 %v1257, 1e-05
        %v1290 = vadd.f32 %v1258, 1e-05
        %v1291 = vadd.f32 %v1259, 1e-05
        %v1292 = vadd.f32 %v1260, 1e-05
        %v1293 = vadd.f32 %v1261, 1e-05
        %v1294 = vadd.f32 %v1262, 1e-05
        %v1295 = vadd.f32 %v1263, 1e-05
        %v1296 = vadd.f32 %v1264, 1e-05
        %v1297 = vadd.f32 %v1265, 1e-05
        %v1298 = vadd.f32 %v1266, 1e-05
        %v1299 = vadd.f32 %v1267, 1e-05
        %v1300 = vadd.f32 %v1268, 1e-05
        %v1301 = vadd.f32 %v1269, 1e-05
        %v1302 = vrsqrt.pop %v1270
        %v1303 = vrsqrt.pop %v1271
        %v1304 = vrsqrt.pop %v1272
        %v1305 = vrsqrt.pop %v1273
        %v1306 = vrsqrt.pop %v1274
        %v1307 = vrsqrt.pop %v1275
        %v1308 = vrsqrt.pop %v1276
        %v1309 = vrsqrt.pop %v1277
        %v1310 = vrsqrt.pop %v1278
        %v1311 = vrsqrt.pop %v1279
        %v1312 = vrsqrt.pop %v1280
        %v1313 = vrsqrt.pop %v1281
        %v1314 = vrsqrt.pop %v1282
        %v1315 = vrsqrt.pop %v1283
        %v1316 = vrsqrt.pop %v1284
        %v1317 = vrsqrt.pop %v1285
        %v1318 = vrsqrt.pop %v1286
        %v1319 = vrsqrt.pop %v1287
        %v1320 = vrsqrt.pop %v1288
        %v1321 = vrsqrt.pop %v1289
        %v1322 = vrsqrt.pop %v1290
        %v1323 = vrsqrt.pop %v1291
        %v1324 = vrsqrt.pop %v1292
        %v1325 = vrsqrt.pop %v1293
        %v1326 = vrsqrt.pop %v1294
        %v1327 = vrsqrt.pop %v1295
        %v1328 = vrsqrt.pop %v1296
        %v1329 = vrsqrt.pop %v1297
        %v1330 = vrsqrt.pop %v1298
        %v1331 = vrsqrt.pop %v1299
        %v1332 = vrsqrt.pop %v1300
        %v1333 = vrsqrt.pop %v1301
        %v1334 = vmul.f32 %v1078, %v1302
        %v1335 = vmul.f32 %v1079, %v1303
        %v1336 = vmul.f32 %v1080, %v1304
        %v1337 = vmul.f32 %v1081, %v1305
        %v1338 = vmul.f32 %v1082, %v1306
        %v1339 = vmul.f32 %v1083, %v1307
        %v1340 = vmul.f32 %v1084, %v1308
        %v1341 = vmul.f32 %v1085, %v1309
        %v1342 = vmul.f32 %v1086, %v1310
        %v1343 = vmul.f32 %v1087, %v1311
        %v1344 = vmul.f32 %v1088, %v1312
        %v1345 = vmul.f32 %v1089, %v1313
        %v1346 = vmul.f32 %v1090, %v1314
        %v1347 = vmul.f32 %v1091, %v1315
        %v1348 = vmul.f32 %v1092, %v1316
        %v1349 = vmul.f32 %v1093, %v1317
        %v1350 = vmul.f32 %v1094, %v1318
        %v1351 = vmul.f32 %v1095, %v1319
        %v1352 = vmul.f32 %v1096, %v1320
        %v1353 = vmul.f32 %v1097, %v1321
        %v1354 = vmul.f32 %v1098, %v1322
        %v1355 = vmul.f32 %v1099, %v1323
        %v1356 = vmul.f32 %v1100, %v1324
        %v1357 = vmul.f32 %v1101, %v1325
        %v1358 = vmul.f32 %v1102, %v1326
        %v1359 = vmul.f32 %v1103, %v1327
        %v1360 = vmul.f32 %v1104, %v1328
        %v1361 = vmul.f32 %v1105, %v1329
        %v1362 = vmul.f32 %v1106, %v1330
        %v1363 = vmul.f32 %v1107, %v1331
        %v1364 = vmul.f32 %v1108, %v1332
        %v1365 = vmul.f32 %v1109, %v1333
        %v1366 = vlaneseq
        %v1367 = vshrl.u32 %v1366, 7
        %v1368 = vsub.s32 0, %v1367
        %v1369 = vrot.slane %v945, %v1368
        %v1370 = vmul.f32 %v1334, %v1369
        %v1371 = vmul.f32 %v1335, %v1369
        %v1372 = vmul.f32 %v1336, %v1369
        %v1373 = vmul.f32 %v1337, %v1369
        %v1374 = vmul.f32 %v1338, %v1369
        %v1375 = vmul.f32 %v1339, %v1369
        %v1376 = vmul.f32 %v1340, %v1369
        %v1377 = vmul.f32 %v1341, %v1369
        %v1378 = vmul.f32 %v1342, %v1369
        %v1379 = vmul.f32 %v1343, %v1369
        %v1380 = vmul.f32 %v1344, %v1369
        %v1381 = vmul.f32 %v1345, %v1369
        %v1382 = vmul.f32 %v1346, %v1369
        %v1383 = vmul.f32 %v1347, %v1369
        %v1384 = vmul.f32 %v1348, %v1369
        %v1385 = vmul.f32 %v1349, %v1369
        %v1386 = vmul.f32 %v1350, %v1369
        %v1387 = vmul.f32 %v1351, %v1369
        %v1388 = vmul.f32 %v1352, %v1369
        %v1389 = vmul.f32 %v1353, %v1369
        %v1390 = vmul.f32 %v1354, %v1369
        %v1391 = vmul.f32 %v1355, %v1369
        %v1392 = vmul.f32 %v1356, %v1369
        %v1393 = vmul.f32 %v1357, %v1369
        %v1394 = vmul.f32 %v1358, %v1369
        %v1395 = vmul.f32 %v1359, %v1369
        %v1396 = vmul.f32 %v1360, %v1369
        %v1397 = vmul.f32 %v1361, %v1369
        %v1398 = vmul.f32 %v1362, %v1369
        %v1399 = vmul.f32 %v1363, %v1369
        %v1400 = vmul.f32 %v1364, %v1369
        %v1401 = vmul.f32 %v1365, %v1369
        %v1402 = vlaneseq
        %v1403 = vshrl.u32 %v1402, 7
        %v1404 = vsub.s32 1, %v1403
        %v1405 = vrot.slane %v945, %v1404
        %v1406 = vadd.f32 %v1370, %v1405
        %v1407 = vadd.f32 %v1371, %v1405
        %v1408 = vadd.f32 %v1372, %v1405
        %v1409 = vadd.f32 %v1373, %v1405
        %v1410 = vadd.f32 %v1374, %v1405
        %v1411 = vadd.f32 %v1375, %v1405
        %v1412 = vadd.f32 %v1376, %v1405
        %v1413 = vadd.f32 %v1377, %v1405
        %v1414 = vadd.f32 %v1378, %v1405
        %v1415 = vadd.f32 %v1379, %v1405
        %v1416 = vadd.f32 %v1380, %v1405
        %v1417 = vadd.f32 %v1381, %v1405
        %v1418 = vadd.f32 %v1382, %v1405
        %v1419 = vadd.f32 %v1383, %v1405
        %v1420 = vadd.f32 %v1384, %v1405
        %v1421 = vadd.f32 %v1385, %v1405
        %v1422 = vadd.f32 %v1386, %v1405
        %v1423 = vadd.f32 %v1387, %v1405
        %v1424 = vadd.f32 %v1388, %v1405
        %v1425 = vadd.f32 %v1389, %v1405
        %v1426 = vadd.f32 %v1390, %v1405
        %v1427 = vadd.f32 %v1391, %v1405
        %v1428 = vadd.f32 %v1392, %v1405
        %v1429 = vadd.f32 %v1393, %v1405
        %v1430 = vadd.f32 %v1394, %v1405
        %v1431 = vadd.f32 %v1395, %v1405
        %v1432 = vadd.f32 %v1396, %v1405
        %v1433 = vadd.f32 %v1397, %v1405
        %v1434 = vadd.f32 %v1398, %v1405
        %v1435 = vadd.f32 %v1399, %v1405
        %v1436 = vadd.f32 %v1400, %v1405
        %v1437 = vadd.f32 %v1401, %v1405
        %v1438 = vpack.c.bf16 %v1407, %v1406
        %v1439 = vpack.c.bf16 %v1409, %v1408
        %v1440 = vpack.c.bf16 %v1411, %v1410
        %v1441 = vpack.c.bf16 %v1413, %v1412
        %v1442 = vpack.c.bf16 %v1415, %v1414
        %v1443 = vpack.c.bf16 %v1417, %v1416
        %v1444 = vpack.c.bf16 %v1419, %v1418
        %v1445 = vpack.c.bf16 %v1421, %v1420
        %v1446 = vpack.c.bf16 %v1423, %v1422
        %v1447 = vpack.c.bf16 %v1425, %v1424
        %v1448 = vpack.c.bf16 %v1427, %v1426
        %v1449 = vpack.c.bf16 %v1429, %v1428
        %v1450 = vpack.c.bf16 %v1431, %v1430
        %v1451 = vpack.c.bf16 %v1433, %v1432
        %v1452 = vpack.c.bf16 %v1435, %v1434
        %v1453 = vpack.c.bf16 %v1437, %v1436
        %v1454 = vld [vmem:[#allocation10] sm:$0xf]
        %v1455 = vld [vmem:[#allocation10 + $0x4] sm:$0xf]
        %v1456 = vld [vmem:[#allocation10 + $0x8] sm:$0xf]
        %v1457 = vld [vmem:[#allocation10 + $0xc] sm:$0xf]
        %v1458 = vld [vmem:[#allocation10 + $0x10] sm:$0xf]
        %v1459 = vld [vmem:[#allocation10 + $0x14] sm:$0xf]
        %v1460 = vld [vmem:[#allocation10 + $0x18] sm:$0xf]
        %v1461 = vld [vmem:[#allocation10 + $0x1c] sm:$0xf]
        %v1470 = vunpack.c.l.b16 %v1454
        %v1471 = vunpack.c.l.b16 %v1455
        %v1472 = vunpack.c.l.b16 %v1456
        %v1473 = vunpack.c.l.b16 %v1457
        %v1474 = vunpack.c.l.b16 %v1458
        %v1475 = vunpack.c.l.b16 %v1459
        %v1476 = vunpack.c.l.b16 %v1460
        %v1477 = vunpack.c.l.b16 %v1461
        %v1478 = vpack.c.b16 %v1471, %v1470
        %v1479 = vpack.c.b16 %v1473, %v1472
        %v1480 = vpack.c.b16 %v1475, %v1474
        %v1481 = vpack.c.b16 %v1477, %v1476
        %v1487 = vsel %vm948, %v1438, 0
        %v1490 = vsel %vm948, %v1439, 0
        %v1493 = vsel %vm948, %v1440, 0
        %v1496 = vsel %vm948, %v1441, 0
        %v1499 = vsel %vm948, %v1442, 0
        %v1502 = vsel %vm948, %v1443, 0
        %v1505 = vsel %vm948, %v1444, 0
        %v1508 = vsel %vm948, %v1445, 0
        %v1511 = vsel %vm948, %v1446, 0
        %v1514 = vsel %vm948, %v1447, 0
        %v1517 = vsel %vm948, %v1448, 0
        %v1520 = vsel %vm948, %v1449, 0
        %v1523 = vsel %vm948, %v1450, 0
        %v1526 = vsel %vm948, %v1451, 0
        %v1529 = vsel %vm948, %v1452, 0
        %v1532 = vsel %vm948, %v1453, 0
        %1534 = vmatprep.subr.bf16.mxu0 0
        %1535 = vmatpush1.bf16.msra.mxu0 %v1478
        %1536 = vmatprep.subr.bf16.mxu0 0
        %1537 = vmatpush1.bf16.msra.mxu0 %v1479
        %1538 = vmatprep.subr.bf16.mxu0 0
        %1539 = vmatpush1.bf16.msra.mxu0 %v1480
        %1540 = vmatprep.subr.bf16.mxu0 0
        %1541 = vmatpush1.bf16.msra.mxu0 %v1481
        %1542 = vmatprep.subr.bf16.mxu0 0
        %1543 = vmatpush1.bf16.msra.mxu0 0
        %1544 = vmatprep.subr.bf16.mxu0 0
        %1545 = vmatpush1.bf16.msra.mxu0 0
        %1546 = vmatprep.subr.bf16.mxu0 0
        %1547 = vmatpush1.bf16.msra.mxu0 0
        %1548 = vmatprep.subr.bf16.mxu0 0
        %1549 = vmatpush1.bf16.msra.mxu0 0
        %1550 = vmatprep.subr.bf16.mxu0 0
        %1551 = vmatpush1.bf16.msra.mxu0 0
        %1552 = vmatprep.subr.bf16.mxu0 0
        %1553 = vmatpush1.bf16.msra.mxu0 0
        %1554 = vmatprep.subr.bf16.mxu0 0
        %1555 = vmatpush1.bf16.msra.mxu0 0
        %1556 = vmatprep.subr.bf16.mxu0 0
        %1557 = vmatpush1.bf16.msra.mxu0 0
        %1558 = vmatprep.subr.bf16.mxu0 0
        %1559 = vmatpush1.bf16.msra.mxu0 0
        %1560 = vmatprep.subr.bf16.mxu0 0
        %1561 = vmatpush1.bf16.msra.mxu0 0
        %1562 = vmatprep.subr.bf16.mxu0 0
        %1563 = vmatpush1.bf16.msra.mxu0 0
        %1564 = vmatprep.subr.bf16.mxu0 0
        %1565 = vmatpush1.bf16.msra.mxu0 0
        %1566 = vmatprep.mubr.bf16.mxu0 0
        %1567 = vmatmul.mubr.bf16.gmra.mrb[0].mxu0 %v1487
        %v1568 = vpop.f32.mrb[0].mxu0
        %v1569 = vadd.f32 0.0, %v1568
        %v1570 = vpop.f32.mrb[0].mxu0
        %v1571 = vpop.f32.mrb[0].mxu0
        %v1572 = vadd.f32 0.0, %v1571
        %v1573 = vpop.f32.mrb[0].mxu0
        %1574 = vmatprep.mubr.bf16.mxu0 0
        %1575 = vmatmul.mubr.bf16.gmra.mrb[0].mxu0 %v1490
        %v1576 = vpop.f32.mrb[0].mxu0
        %v1577 = vadd.f32 0.0, %v1576
        %v1578 = vpop.f32.mrb[0].mxu0
        %v1579 = vpop.f32.mrb[0].mxu0
        %v1580 = vadd.f32 0.0, %v1579
        %v1581 = vpop.f32.mrb[0].mxu0
        %1582 = vmatprep.mubr.bf16.mxu0 0
        %1583 = vmatmul.mubr.bf16.gmra.mrb[0].mxu0 %v1493
        %v1584 = vpop.f32.mrb[0].mxu0
        %v1585 = vadd.f32 0.0, %v1584
        %v1586 = vpop.f32.mrb[0].mxu0
        %v1587 = vpop.f32.mrb[0].mxu0
        %v1588 = vadd.f32 0.0, %v1587
        %v1589 = vpop.f32.mrb[0].mxu0
        %1590 = vmatprep.mubr.bf16.mxu0 0
        %1591 = vmatmul.mubr.bf16.gmra.mrb[0].mxu0 %v1496
        %v1592 = vpop.f32.mrb[0].mxu0
        %v1593 = vadd.f32 0.0, %v1592
        %v1594 = vpop.f32.mrb[0].mxu0
        %v1595 = vpop.f32.mrb[0].mxu0
        %v1596 = vadd.f32 0.0, %v1595
        %v1597 = vpop.f32.mrb[0].mxu0
        %1598 = vmatprep.mubr.bf16.mxu0 0
        %1599 = vmatmul.mubr.bf16.gmra.mrb[0].mxu0 %v1499
        %v1600 = vpop.f32.mrb[0].mxu0
        %v1601 = vadd.f32 0.0, %v1600
        %v1602 = vpop.f32.mrb[0].mxu0
        %v1603 = vpop.f32.mrb[0].mxu0
        %v1604 = vadd.f32 0.0, %v1603
        %v1605 = vpop.f32.mrb[0].mxu0
        %1606 = vmatprep.mubr.bf16.mxu0 0
        %1607 = vmatmul.mubr.bf16.gmra.mrb[0].mxu0 %v1502
        %v1608 = vpop.f32.mrb[0].mxu0
        %v1609 = vadd.f32 0.0, %v1608
        %v1610 = vpop.f32.mrb[0].mxu0
        %v1611 = vpop.f32.mrb[0].mxu0
        %v1612 = vadd.f32 0.0, %v1611
        %v1613 = vpop.f32.mrb[0].mxu0
        %1614 = vmatprep.mubr.bf16.mxu0 0
        %1615 = vmatmul.mubr.bf16.gmra.mrb[0].mxu0 %v1505
        %v1616 = vpop.f32.mrb[0].mxu0
        %v1617 = vadd.f32 0.0, %v1616
        %v1618 = vpop.f32.mrb[0].mxu0
        %v1619 = vpop.f32.mrb[0].mxu0
        %v1620 = vadd.f32 0.0, %v1619
        %v1621 = vpop.f32.mrb[0].mxu0
        %1622 = vmatprep.mubr.bf16.mxu0 0
        %1623 = vmatmul.mubr.bf16.gmra.mrb[0].mxu0 %v1508
        %v1624 = vpop.f32.mrb[0].mxu0
        %v1625 = vadd.f32 0.0, %v1624
        %v1626 = vpop.f32.mrb[0].mxu0
        %v1627 = vpop.f32.mrb[0].mxu0
        %v1628 = vadd.f32 0.0, %v1627
        %v1629 = vpop.f32.mrb[0].mxu0
        %1630 = vmatprep.mubr.bf16.mxu0 0
        %1631 = vmatmul.mubr.bf16.gmra.mrb[0].mxu0 %v1511
        %v1632 = vpop.f32.mrb[0].mxu0
        %v1633 = vadd.f32 0.0, %v1632
        %v1634 = vpop.f32.mrb[0].mxu0
        %v1635 = vpop.f32.mrb[0].mxu0
        %v1636 = vadd.f32 0.0, %v1635
        %v1637 = vpop.f32.mrb[0].mxu0
        %1638 = vmatprep.mubr.bf16.mxu0 0
        %1639 = vmatmul.mubr.bf16.gmra.mrb[0].mxu0 %v1514
        %v1640 = vpop.f32.mrb[0].mxu0
        %v1641 = vadd.f32 0.0, %v1640
        %v1642 = vpop.f32.mrb[0].mxu0
        %v1643 = vpop.f32.mrb[0].mxu0
        %v1644 = vadd.f32 0.0, %v1643
        %v1645 = vpop.f32.mrb[0].mxu0
        %1646 = vmatprep.mubr.bf16.mxu0 0
        %1647 = vmatmul.mubr.bf16.gmra.mrb[0].mxu0 %v1517
        %v1648 = vpop.f32.mrb[0].mxu0
        %v1649 = vadd.f32 0.0, %v1648
        %v1650 = vpop.f32.mrb[0].mxu0
        %v1651 = vpop.f32.mrb[0].mxu0
        %v1652 = vadd.f32 0.0, %v1651
        %v1653 = vpop.f32.mrb[0].mxu0
        %1654 = vmatprep.mubr.bf16.mxu0 0
        %1655 = vmatmul.mubr.bf16.gmra.mrb[0].mxu0 %v1520
        %v1656 = vpop.f32.mrb[0].mxu0
        %v1657 = vadd.f32 0.0, %v1656
        %v1658 = vpop.f32.mrb[0].mxu0
        %v1659 = vpop.f32.mrb[0].mxu0
        %v1660 = vadd.f32 0.0, %v1659
        %v1661 = vpop.f32.mrb[0].mxu0
        %1662 = vmatprep.mubr.bf16.mxu0 0
        %1663 = vmatmul.mubr.bf16.gmra.mrb[0].mxu0 %v1523
        %v1664 = vpop.f32.mrb[0].mxu0
        %v1665 = vadd.f32 0.0, %v1664
        %v1666 = vpop.f32.mrb[0].mxu0
        %v1667 = vpop.f32.mrb[0].mxu0
        %v1668 = vadd.f32 0.0, %v1667
        %v1669 = vpop.f32.mrb[0].mxu0
        %1670 = vmatprep.mubr.bf16.mxu0 0
        %1671 = vmatmul.mubr.bf16.gmra.mrb[0].mxu0 %v1526
        %v1672 = vpop.f32.mrb[0].mxu0
        %v1673 = vadd.f32 0.0, %v1672
        %v1674 = vpop.f32.mrb[0].mxu0
        %v1675 = vpop.f32.mrb[0].mxu0
        %v1676 = vadd.f32 0.0, %v1675
        %v1677 = vpop.f32.mrb[0].mxu0
        %1678 = vmatprep.mubr.bf16.mxu0 0
        %1679 = vmatmul.mubr.bf16.gmra.mrb[0].mxu0 %v1529
        %v1680 = vpop.f32.mrb[0].mxu0
        %v1681 = vadd.f32 0.0, %v1680
        %v1682 = vpop.f32.mrb[0].mxu0
        %v1683 = vpop.f32.mrb[0].mxu0
        %v1684 = vadd.f32 0.0, %v1683
        %v1685 = vpop.f32.mrb[0].mxu0
        %1686 = vmatprep.mubr.bf16.mxu0 0
        %1687 = vmatmul.mubr.bf16.gmra.mrb[0].mxu0 %v1532
        %v1688 = vpop.f32.mrb[0].mxu0
        %v1689 = vadd.f32 0.0, %v1688
        %v1690 = vpop.f32.mrb[0].mxu0
        %v1691 = vpop.f32.mrb[0].mxu0
        %v1692 = vadd.f32 0.0, %v1691
        %v1693 = vpop.f32.mrb[0].mxu0
        %1694 = vdwg.mxu0
        %v1695 = vadd.f32 %v913, %v1569
        %v1696 = vadd.f32 %v914, %v1572
        %v1697 = vadd.f32 %v915, %v1577
        %v1698 = vadd.f32 %v916, %v1580
        %v1699 = vadd.f32 %v917, %v1585
        %v1700 = vadd.f32 %v918, %v1588
        %v1701 = vadd.f32 %v919, %v1593
        %v1702 = vadd.f32 %v920, %v1596
        %v1703 = vadd.f32 %v921, %v1601
        %v1704 = vadd.f32 %v922, %v1604
        %v1705 = vadd.f32 %v923, %v1609
        %v1706 = vadd.f32 %v924, %v1612
        %v1707 = vadd.f32 %v925, %v1617
        %v1708 = vadd.f32 %v926, %v1620
        %v1709 = vadd.f32 %v927, %v1625
        %v1710 = vadd.f32 %v928, %v1628
        %v1711 = vadd.f32 %v929, %v1633
        %v1712 = vadd.f32 %v930, %v1636
        %v1713 = vadd.f32 %v931, %v1641
        %v1714 = vadd.f32 %v932, %v1644
        %v1715 = vadd.f32 %v933, %v1649
        %v1716 = vadd.f32 %v934, %v1652
        %v1717 = vadd.f32 %v935, %v1657
        %v1718 = vadd.f32 %v936, %v1660
        %v1719 = vadd.f32 %v937, %v1665
        %v1720 = vadd.f32 %v938, %v1668
        %v1721 = vadd.f32 %v939, %v1673
        %v1722 = vadd.f32 %v940, %v1676
        %v1723 = vadd.f32 %v941, %v1681
        %v1724 = vadd.f32 %v942, %v1684
        %v1725 = vadd.f32 %v943, %v1689
        %v1726 = vadd.f32 %v944, %v1692
        %v1727 = vlaneseq
        %v1728 = vshrl.u32 %v1727, 7
        %v1729 = vsub.s32 0, %v1728
        %v1730 = vrot.slane %v947, %v1729
        %v1731 = vadd.f32 %v1695, %v1730
        %v1732 = vadd.f32 %v1696, %v1730
        %v1733 = vadd.f32 %v1697, %v1730
        %v1734 = vadd.f32 %v1698, %v1730
        %v1735 = vadd.f32 %v1699, %v1730
        %v1736 = vadd.f32 %v1700, %v1730
        %v1737 = vadd.f32 %v1701, %v1730
        %v1738 = vadd.f32 %v1702, %v1730
        %v1739 = vadd.f32 %v1703, %v1730
        %v1740 = vadd.f32 %v1704, %v1730
        %v1741 = vadd.f32 %v1705, %v1730
        %v1742 = vadd.f32 %v1706, %v1730
        %v1743 = vadd.f32 %v1707, %v1730
        %v1744 = vadd.f32 %v1708, %v1730
        %v1745 = vadd.f32 %v1709, %v1730
        %v1746 = vadd.f32 %v1710, %v1730
        %v1747 = vadd.f32 %v1711, %v1730
        %v1748 = vadd.f32 %v1712, %v1730
        %v1749 = vadd.f32 %v1713, %v1730
        %v1750 = vadd.f32 %v1714, %v1730
        %v1751 = vadd.f32 %v1715, %v1730
        %v1752 = vadd.f32 %v1716, %v1730
        %v1753 = vadd.f32 %v1717, %v1730
        %v1754 = vadd.f32 %v1718, %v1730
        %v1755 = vadd.f32 %v1719, %v1730
        %v1756 = vadd.f32 %v1720, %v1730
        %v1757 = vadd.f32 %v1721, %v1730
        %v1758 = vadd.f32 %v1722, %v1730
        %v1759 = vadd.f32 %v1723, %v1730
        %v1760 = vadd.f32 %v1724, %v1730
        %v1761 = vadd.f32 %v1725, %v1730
        %v1762 = vadd.f32 %v1726, %v1730
        %v1763 = vsel %vm948, %v1731, 0.0
        %1764 = vadd.xlane.f32.xlu0 %v1763
        %v1765 = vpop.xlane.xlu0 %1764
        %v1766 = vsel %vm948, %v1732, 0.0
        %1767 = vadd.xlane.f32.xlu0 %v1766
        %v1768 = vpop.xlane.xlu0 %1767
        %v1769 = vsel %vm948, %v1733, 0.0
        %1770 = vadd.xlane.f32.xlu0 %v1769
        %v1771 = vpop.xlane.xlu0 %1770
        %v1772 = vsel %vm948, %v1734, 0.0
        %1773 = vadd.xlane.f32.xlu0 %v1772
        %v1774 = vpop.xlane.xlu0 %1773
        %v1775 = vsel %vm948, %v1735, 0.0
        %1776 = vadd.xlane.f32.xlu0 %v1775
        %v1777 = vpop.xlane.xlu0 %1776
        %v1778 = vsel %vm948, %v1736, 0.0
        %1779 = vadd.xlane.f32.xlu0 %v1778
        %v1780 = vpop.xlane.xlu0 %1779
        %v1781 = vsel %vm948, %v1737, 0.0
        %1782 = vadd.xlane.f32.xlu0 %v1781
        %v1783 = vpop.xlane.xlu0 %1782
        %v1784 = vsel %vm948, %v1738, 0.0
        %1785 = vadd.xlane.f32.xlu0 %v1784
        %v1786 = vpop.xlane.xlu0 %1785
        %v1787 = vsel %vm948, %v1739, 0.0
        %1788 = vadd.xlane.f32.xlu0 %v1787
        %v1789 = vpop.xlane.xlu0 %1788
        %v1790 = vsel %vm948, %v1740, 0.0
        %1791 = vadd.xlane.f32.xlu0 %v1790
        %v1792 = vpop.xlane.xlu0 %1791
        %v1793 = vsel %vm948, %v1741, 0.0
        %1794 = vadd.xlane.f32.xlu0 %v1793
        %v1795 = vpop.xlane.xlu0 %1794
        %v1796 = vsel %vm948, %v1742, 0.0
        %1797 = vadd.xlane.f32.xlu0 %v1796
        %v1798 = vpop.xlane.xlu0 %1797
        %v1799 = vsel %vm948, %v1743, 0.0
        %1800 = vadd.xlane.f32.xlu0 %v1799
        %v1801 = vpop.xlane.xlu0 %1800
        %v1802 = vsel %vm948, %v1744, 0.0
        %1803 = vadd.xlane.f32.xlu0 %v1802
        %v1804 = vpop.xlane.xlu0 %1803
        %v1805 = vsel %vm948, %v1745, 0.0
        %1806 = vadd.xlane.f32.xlu0 %v1805
        %v1807 = vpop.xlane.xlu0 %1806
        %v1808 = vsel %vm948, %v1746, 0.0
        %1809 = vadd.xlane.f32.xlu0 %v1808
        %v1810 = vpop.xlane.xlu0 %1809
        %v1811 = vsel %vm948, %v1747, 0.0
        %1812 = vadd.xlane.f32.xlu0 %v1811
        %v1813 = vpop.xlane.xlu0 %1812
        %v1814 = vsel %vm948, %v1748, 0.0
        %1815 = vadd.xlane.f32.xlu0 %v1814
        %v1816 = vpop.xlane.xlu0 %1815
        %v1817 = vsel %vm948, %v1749, 0.0
        %1818 = vadd.xlane.f32.xlu0 %v1817
        %v1819 = vpop.xlane.xlu0 %1818
        %v1820 = vsel %vm948, %v1750, 0.0
        %1821 = vadd.xlane.f32.xlu0 %v1820
        %v1822 = vpop.xlane.xlu0 %1821
        %v1823 = vsel %vm948, %v1751, 0.0
        %1824 = vadd.xlane.f32.xlu0 %v1823
        %v1825 = vpop.xlane.xlu0 %1824
        %v1826 = vsel %vm948, %v1752, 0.0
        %1827 = vadd.xlane.f32.xlu0 %v1826
        %v1828 = vpop.xlane.xlu0 %1827
        %v1829 = vsel %vm948, %v1753, 0.0
        %1830 = vadd.xlane.f32.xlu0 %v1829
        %v1831 = vpop.xlane.xlu0 %1830
        %v1832 = vsel %vm948, %v1754, 0.0
        %1833 = vadd.xlane.f32.xlu0 %v1832
        %v1834 = vpop.xlane.xlu0 %1833
        %v1835 = vsel %vm948, %v1755, 0.0
        %1836 = vadd.xlane.f32.xlu0 %v1835
        %v1837 = vpop.xlane.xlu0 %1836
        %v1838 = vsel %vm948, %v1756, 0.0
        %1839 = vadd.xlane.f32.xlu0 %v1838
        %v1840 = vpop.xlane.xlu0 %1839
        %v1841 = vsel %vm948, %v1757, 0.0
        %1842 = vadd.xlane.f32.xlu0 %v1841
        %v1843 = vpop.xlane.xlu0 %1842
        %v1844 = vsel %vm948, %v1758, 0.0
        %1845 = vadd.xlane.f32.xlu0 %v1844
        %v1846 = vpop.xlane.xlu0 %1845
        %v1847 = vsel %vm948, %v1759, 0.0
        %1848 = vadd.xlane.f32.xlu0 %v1847
        %v1849 = vpop.xlane.xlu0 %1848
        %v1850 = vsel %vm948, %v1760, 0.0
        %1851 = vadd.xlane.f32.xlu0 %v1850
        %v1852 = vpop.xlane.xlu0 %1851
        %v1853 = vsel %vm948, %v1761, 0.0
        %1854 = vadd.xlane.f32.xlu0 %v1853
        %v1855 = vpop.xlane.xlu0 %1854
        %v1856 = vsel %vm948, %v1762, 0.0
        %1857 = vadd.xlane.f32.xlu0 %v1856
        %v1858 = vpop.xlane.xlu0 %1857
        %v1859 = vmul.f32 %v1765, %v1045
        %v1860 = vmul.f32 %v1768, %v1045
        %v1861 = vmul.f32 %v1771, %v1045
        %v1862 = vmul.f32 %v1774, %v1045
        %v1863 = vmul.f32 %v1777, %v1045
        %v1864 = vmul.f32 %v1780, %v1045
        %v1865 = vmul.f32 %v1783, %v1045
        %v1866 = vmul.f32 %v1786, %v1045
        %v1867 = vmul.f32 %v1789, %v1045
        %v1868 = vmul.f32 %v1792, %v1045
        %v1869 = vmul.f32 %v1795, %v1045
        %v1870 = vmul.f32 %v1798, %v1045
        %v1871 = vmul.f32 %v1801, %v1045
        %v1872 = vmul.f32 %v1804, %v1045
        %v1873 = vmul.f32 %v1807, %v1045
        %v1874 = vmul.f32 %v1810, %v1045
        %v1875 = vmul.f32 %v1813, %v1045
        %v1876 = vmul.f32 %v1816, %v1045
        %v1877 = vmul.f32 %v1819, %v1045
        %v1878 = vmul.f32 %v1822, %v1045
        %v1879 = vmul.f32 %v1825, %v1045
        %v1880 = vmul.f32 %v1828, %v1045
        %v1881 = vmul.f32 %v1831, %v1045
        %v1882 = vmul.f32 %v1834, %v1045
        %v1883 = vmul.f32 %v1837, %v1045
        %v1884 = vmul.f32 %v1840, %v1045
        %v1885 = vmul.f32 %v1843, %v1045
        %v1886 = vmul.f32 %v1846, %v1045
        %v1887 = vmul.f32 %v1849, %v1045
        %v1888 = vmul.f32 %v1852, %v1045
        %v1889 = vmul.f32 %v1855, %v1045
        %v1890 = vmul.f32 %v1858, %v1045
        %v1891 = vsub.f32 %v1731, %v1859
        %v1892 = vsub.f32 %v1732, %v1860
        %v1893 = vsub.f32 %v1733, %v1861
        %v1894 = vsub.f32 %v1734, %v1862
        %v1895 = vsub.f32 %v1735, %v1863
        %v1896 = vsub.f32 %v1736, %v1864
        %v1897 = vsub.f32 %v1737, %v1865
        %v1898 = vsub.f32 %v1738, %v1866
        %v1899 = vsub.f32 %v1739, %v1867
        %v1900 = vsub.f32 %v1740, %v1868
        %v1901 = vsub.f32 %v1741, %v1869
        %v1902 = vsub.f32 %v1742, %v1870
        %v1903 = vsub.f32 %v1743, %v1871
        %v1904 = vsub.f32 %v1744, %v1872
        %v1905 = vsub.f32 %v1745, %v1873
        %v1906 = vsub.f32 %v1746, %v1874
        %v1907 = vsub.f32 %v1747, %v1875
        %v1908 = vsub.f32 %v1748, %v1876
        %v1909 = vsub.f32 %v1749, %v1877
        %v1910 = vsub.f32 %v1750, %v1878
        %v1911 = vsub.f32 %v1751, %v1879
        %v1912 = vsub.f32 %v1752, %v1880
        %v1913 = vsub.f32 %v1753, %v1881
        %v1914 = vsub.f32 %v1754, %v1882
        %v1915 = vsub.f32 %v1755, %v1883
        %v1916 = vsub.f32 %v1756, %v1884
        %v1917 = vsub.f32 %v1757, %v1885
        %v1918 = vsub.f32 %v1758, %v1886
        %v1919 = vsub.f32 %v1759, %v1887
        %v1920 = vsub.f32 %v1760, %v1888
        %v1921 = vsub.f32 %v1761, %v1889
        %v1922 = vsub.f32 %v1762, %v1890
        %v1923 = vmul.f32 %v1891, %v1891
        %v1924 = vmul.f32 %v1892, %v1892
        %v1925 = vmul.f32 %v1893, %v1893
        %v1926 = vmul.f32 %v1894, %v1894
        %v1927 = vmul.f32 %v1895, %v1895
        %v1928 = vmul.f32 %v1896, %v1896
        %v1929 = vmul.f32 %v1897, %v1897
        %v1930 = vmul.f32 %v1898, %v1898
        %v1931 = vmul.f32 %v1899, %v1899
        %v1932 = vmul.f32 %v1900, %v1900
        %v1933 = vmul.f32 %v1901, %v1901
        %v1934 = vmul.f32 %v1902, %v1902
        %v1935 = vmul.f32 %v1903, %v1903
        %v1936 = vmul.f32 %v1904, %v1904
        %v1937 = vmul.f32 %v1905, %v1905
        %v1938 = vmul.f32 %v1906, %v1906
        %v1939 = vmul.f32 %v1907, %v1907
        %v1940 = vmul.f32 %v1908, %v1908
        %v1941 = vmul.f32 %v1909, %v1909
        %v1942 = vmul.f32 %v1910, %v1910
        %v1943 = vmul.f32 %v1911, %v1911
        %v1944 = vmul.f32 %v1912, %v1912
        %v1945 = vmul.f32 %v1913, %v1913
        %v1946 = vmul.f32 %v1914, %v1914
        %v1947 = vmul.f32 %v1915, %v1915
        %v1948 = vmul.f32 %v1916, %v1916
        %v1949 = vmul.f32 %v1917, %v1917
        %v1950 = vmul.f32 %v1918, %v1918
        %v1951 = vmul.f32 %v1919, %v1919
        %v1952 = vmul.f32 %v1920, %v1920
        %v1953 = vmul.f32 %v1921, %v1921
        %v1954 = vmul.f32 %v1922, %v1922
        %v1955 = vsel %vm948, %v1923, 0.0
        %1956 = vadd.xlane.f32.xlu0 %v1955
        %v1957 = vpop.xlane.xlu0 %1956
        %v1958 = vsel %vm948, %v1924, 0.0
        %1959 = vadd.xlane.f32.xlu0 %v1958
        %v1960 = vpop.xlane.xlu0 %1959
        %v1961 = vsel %vm948, %v1925, 0.0
        %1962 = vadd.xlane.f32.xlu0 %v1961
        %v1963 = vpop.xlane.xlu0 %1962
        %v1964 = vsel %vm948, %v1926, 0.0
        %1965 = vadd.xlane.f32.xlu0 %v1964
        %v1966 = vpop.xlane.xlu0 %1965
        %v1967 = vsel %vm948, %v1927, 0.0
        %1968 = vadd.xlane.f32.xlu0 %v1967
        %v1969 = vpop.xlane.xlu0 %1968
        %v1970 = vsel %vm948, %v1928, 0.0
        %1971 = vadd.xlane.f32.xlu0 %v1970
        %v1972 = vpop.xlane.xlu0 %1971
        %v1973 = vsel %vm948, %v1929, 0.0
        %1974 = vadd.xlane.f32.xlu0 %v1973
        %v1975 = vpop.xlane.xlu0 %1974
        %v1976 = vsel %vm948, %v1930, 0.0
        %1977 = vadd.xlane.f32.xlu0 %v1976
        %v1978 = vpop.xlane.xlu0 %1977
        %v1979 = vsel %vm948, %v1931, 0.0
        %1980 = vadd.xlane.f32.xlu0 %v1979
        %v1981 = vpop.xlane.xlu0 %1980
        %v1982 = vsel %vm948, %v1932, 0.0
        %1983 = vadd.xlane.f32.xlu0 %v1982
        %v1984 = vpop.xlane.xlu0 %1983
        %v1985 = vsel %vm948, %v1933, 0.0
        %1986 = vadd.xlane.f32.xlu0 %v1985
        %v1987 = vpop.xlane.xlu0 %1986
        %v1988 = vsel %vm948, %v1934, 0.0
        %1989 = vadd.xlane.f32.xlu0 %v1988
        %v1990 = vpop.xlane.xlu0 %1989
        %v1991 = vsel %vm948, %v1935, 0.0
        %1992 = vadd.xlane.f32.xlu0 %v1991
        %v1993 = vpop.xlane.xlu0 %1992
        %v1994 = vsel %vm948, %v1936, 0.0
        %1995 = vadd.xlane.f32.xlu0 %v1994
        %v1996 = vpop.xlane.xlu0 %1995
        %v1997 = vsel %vm948, %v1937, 0.0
        %1998 = vadd.xlane.f32.xlu0 %v1997
        %v1999 = vpop.xlane.xlu0 %1998
        %v2000 = vsel %vm948, %v1938, 0.0
        %2001 = vadd.xlane.f32.xlu0 %v2000
        %v2002 = vpop.xlane.xlu0 %2001
        %v2003 = vsel %vm948, %v1939, 0.0
        %2004 = vadd.xlane.f32.xlu0 %v2003
        %v2005 = vpop.xlane.xlu0 %2004
        %v2006 = vsel %vm948, %v1940, 0.0
        %2007 = vadd.xlane.f32.xlu0 %v2006
        %v2008 = vpop.xlane.xlu0 %2007
        %v2009 = vsel %vm948, %v1941, 0.0
        %2010 = vadd.xlane.f32.xlu0 %v2009
        %v2011 = vpop.xlane.xlu0 %2010
        %v2012 = vsel %vm948, %v1942, 0.0
        %2013 = vadd.xlane.f32.xlu0 %v2012
        %v2014 = vpop.xlane.xlu0 %2013
        %v2015 = vsel %vm948, %v1943, 0.0
        %2016 = vadd.xlane.f32.xlu0 %v2015
        %v2017 = vpop.xlane.xlu0 %2016
        %v2018 = vsel %vm948, %v1944, 0.0
        %2019 = vadd.xlane.f32.xlu0 %v2018
        %v2020 = vpop.xlane.xlu0 %2019
        %v2021 = vsel %vm948, %v1945, 0.0
        %2022 = vadd.xlane.f32.xlu0 %v2021
        %v2023 = vpop.xlane.xlu0 %2022
        %v2024 = vsel %vm948, %v1946, 0.0
        %2025 = vadd.xlane.f32.xlu0 %v2024
        %v2026 = vpop.xlane.xlu0 %2025
        %v2027 = vsel %vm948, %v1947, 0.0
        %2028 = vadd.xlane.f32.xlu0 %v2027
        %v2029 = vpop.xlane.xlu0 %2028
        %v2030 = vsel %vm948, %v1948, 0.0
        %2031 = vadd.xlane.f32.xlu0 %v2030
        %v2032 = vpop.xlane.xlu0 %2031
        %v2033 = vsel %vm948, %v1949, 0.0
        %2034 = vadd.xlane.f32.xlu0 %v2033
        %v2035 = vpop.xlane.xlu0 %2034
        %v2036 = vsel %vm948, %v1950, 0.0
        %2037 = vadd.xlane.f32.xlu0 %v2036
        %v2038 = vpop.xlane.xlu0 %2037
        %v2039 = vsel %vm948, %v1951, 0.0
        %2040 = vadd.xlane.f32.xlu0 %v2039
        %v2041 = vpop.xlane.xlu0 %2040
        %v2042 = vsel %vm948, %v1952, 0.0
        %2043 = vadd.xlane.f32.xlu0 %v2042
        %v2044 = vpop.xlane.xlu0 %2043
        %v2045 = vsel %vm948, %v1953, 0.0
        %2046 = vadd.xlane.f32.xlu0 %v2045
        %v2047 = vpop.xlane.xlu0 %2046
        %v2048 = vsel %vm948, %v1954, 0.0
        %2049 = vadd.xlane.f32.xlu0 %v2048
        %v2050 = vpop.xlane.xlu0 %2049
        %v2051 = vmul.f32 %v1957, %v1045
        %v2052 = vmul.f32 %v1960, %v1045
        %v2053 = vmul.f32 %v1963, %v1045
        %v2054 = vmul.f32 %v1966, %v1045
        %v2055 = vmul.f32 %v1969, %v1045
        %v2056 = vmul.f32 %v1972, %v1045
        %v2057 = vmul.f32 %v1975, %v1045
        %v2058 = vmul.f32 %v1978, %v1045
        %v2059 = vmul.f32 %v1981, %v1045
        %v2060 = vmul.f32 %v1984, %v1045
        %v2061 = vmul.f32 %v1987, %v1045
        %v2062 = vmul.f32 %v1990, %v1045
        %v2063 = vmul.f32 %v1993, %v1045
        %v2064 = vmul.f32 %v1996, %v1045
        %v2065 = vmul.f32 %v1999, %v1045
        %v2066 = vmul.f32 %v2002, %v1045
        %v2067 = vmul.f32 %v2005, %v1045
        %v2068 = vmul.f32 %v2008, %v1045
        %v2069 = vmul.f32 %v2011, %v1045
        %v2070 = vmul.f32 %v2014, %v1045
        %v2071 = vmul.f32 %v2017, %v1045
        %v2072 = vmul.f32 %v2020, %v1045
        %v2073 = vmul.f32 %v2023, %v1045
        %v2074 = vmul.f32 %v2026, %v1045
        %v2075 = vmul.f32 %v2029, %v1045
        %v2076 = vmul.f32 %v2032, %v1045
        %v2077 = vmul.f32 %v2035, %v1045
        %v2078 = vmul.f32 %v2038, %v1045
        %v2079 = vmul.f32 %v2041, %v1045
        %v2080 = vmul.f32 %v2044, %v1045
        %v2081 = vmul.f32 %v2047, %v1045
        %v2082 = vmul.f32 %v2050, %v1045
        %v2083 = vadd.f32 %v2051, 1e-05
        %v2084 = vadd.f32 %v2052, 1e-05
        %v2085 = vadd.f32 %v2053, 1e-05
        %v2086 = vadd.f32 %v2054, 1e-05
        %v2087 = vadd.f32 %v2055, 1e-05
        %v2088 = vadd.f32 %v2056, 1e-05
        %v2089 = vadd.f32 %v2057, 1e-05
        %v2090 = vadd.f32 %v2058, 1e-05
        %v2091 = vadd.f32 %v2059, 1e-05
        %v2092 = vadd.f32 %v2060, 1e-05
        %v2093 = vadd.f32 %v2061, 1e-05
        %v2094 = vadd.f32 %v2062, 1e-05
        %v2095 = vadd.f32 %v2063, 1e-05
        %v2096 = vadd.f32 %v2064, 1e-05
        %v2097 = vadd.f32 %v2065, 1e-05
        %v2098 = vadd.f32 %v2066, 1e-05
        %v2099 = vadd.f32 %v2067, 1e-05
        %v2100 = vadd.f32 %v2068, 1e-05
        %v2101 = vadd.f32 %v2069, 1e-05
        %v2102 = vadd.f32 %v2070, 1e-05
        %v2103 = vadd.f32 %v2071, 1e-05
        %v2104 = vadd.f32 %v2072, 1e-05
        %v2105 = vadd.f32 %v2073, 1e-05
        %v2106 = vadd.f32 %v2074, 1e-05
        %v2107 = vadd.f32 %v2075, 1e-05
        %v2108 = vadd.f32 %v2076, 1e-05
        %v2109 = vadd.f32 %v2077, 1e-05
        %v2110 = vadd.f32 %v2078, 1e-05
        %v2111 = vadd.f32 %v2079, 1e-05
        %v2112 = vadd.f32 %v2080, 1e-05
        %v2113 = vadd.f32 %v2081, 1e-05
        %v2114 = vadd.f32 %v2082, 1e-05
        %v2115 = vrsqrt.pop %v2083
        %v2116 = vrsqrt.pop %v2084
        %v2117 = vrsqrt.pop %v2085
        %v2118 = vrsqrt.pop %v2086
        %v2119 = vrsqrt.pop %v2087
        %v2120 = vrsqrt.pop %v2088
        %v2121 = vrsqrt.pop %v2089
        %v2122 = vrsqrt.pop %v2090
        %v2123 = vrsqrt.pop %v2091
        %v2124 = vrsqrt.pop %v2092
        %v2125 = vrsqrt.pop %v2093
        %v2126 = vrsqrt.pop %v2094
        %v2127 = vrsqrt.pop %v2095
        %v2128 = vrsqrt.pop %v2096
        %v2129 = vrsqrt.pop %v2097
        %v2130 = vrsqrt.pop %v2098
        %v2131 = vrsqrt.pop %v2099
        %v2132 = vrsqrt.pop %v2100
        %v2133 = vrsqrt.pop %v2101
        %v2134 = vrsqrt.pop %v2102
        %v2135 = vrsqrt.pop %v2103
        %v2136 = vrsqrt.pop %v2104
        %v2137 = vrsqrt.pop %v2105
        %v2138 = vrsqrt.pop %v2106
        %v2139 = vrsqrt.pop %v2107
        %v2140 = vrsqrt.pop %v2108
        %v2141 = vrsqrt.pop %v2109
        %v2142 = vrsqrt.pop %v2110
        %v2143 = vrsqrt.pop %v2111
        %v2144 = vrsqrt.pop %v2112
        %v2145 = vrsqrt.pop %v2113
        %v2146 = vrsqrt.pop %v2114
        %v2147 = vmul.f32 %v1891, %v2115
        %v2148 = vmul.f32 %v1892, %v2116
        %v2149 = vmul.f32 %v1893, %v2117
        %v2150 = vmul.f32 %v1894, %v2118
        %v2151 = vmul.f32 %v1895, %v2119
        %v2152 = vmul.f32 %v1896, %v2120
        %v2153 = vmul.f32 %v1897, %v2121
        %v2154 = vmul.f32 %v1898, %v2122
        %v2155 = vmul.f32 %v1899, %v2123
        %v2156 = vmul.f32 %v1900, %v2124
        %v2157 = vmul.f32 %v1901, %v2125
        %v2158 = vmul.f32 %v1902, %v2126
        %v2159 = vmul.f32 %v1903, %v2127
        %v2160 = vmul.f32 %v1904, %v2128
        %v2161 = vmul.f32 %v1905, %v2129
        %v2162 = vmul.f32 %v1906, %v2130
        %v2163 = vmul.f32 %v1907, %v2131
        %v2164 = vmul.f32 %v1908, %v2132
        %v2165 = vmul.f32 %v1909, %v2133
        %v2166 = vmul.f32 %v1910, %v2134
        %v2167 = vmul.f32 %v1911, %v2135
        %v2168 = vmul.f32 %v1912, %v2136
        %v2169 = vmul.f32 %v1913, %v2137
        %v2170 = vmul.f32 %v1914, %v2138
        %v2171 = vmul.f32 %v1915, %v2139
        %v2172 = vmul.f32 %v1916, %v2140
        %v2173 = vmul.f32 %v1917, %v2141
        %v2174 = vmul.f32 %v1918, %v2142
        %v2175 = vmul.f32 %v1919, %v2143
        %v2176 = vmul.f32 %v1920, %v2144
        %v2177 = vmul.f32 %v1921, %v2145
        %v2178 = vmul.f32 %v1922, %v2146
        %v2179 = vlaneseq
        %v2180 = vshrl.u32 %v2179, 7
        %v2181 = vsub.s32 2, %v2180
        %v2182 = vrot.slane %v945, %v2181
        %v2183 = vmul.f32 %v2147, %v2182
        %v2184 = vmul.f32 %v2148, %v2182
        %v2185 = vmul.f32 %v2149, %v2182
        %v2186 = vmul.f32 %v2150, %v2182
        %v2187 = vmul.f32 %v2151, %v2182
        %v2188 = vmul.f32 %v2152, %v2182
        %v2189 = vmul.f32 %v2153, %v2182
        %v2190 = vmul.f32 %v2154, %v2182
        %v2191 = vmul.f32 %v2155, %v2182
        %v2192 = vmul.f32 %v2156, %v2182
        %v2193 = vmul.f32 %v2157, %v2182
        %v2194 = vmul.f32 %v2158, %v2182
        %v2195 = vmul.f32 %v2159, %v2182
        %v2196 = vmul.f32 %v2160, %v2182
        %v2197 = vmul.f32 %v2161, %v2182
        %v2198 = vmul.f32 %v2162, %v2182
        %v2199 = vmul.f32 %v2163, %v2182
        %v2200 = vmul.f32 %v2164, %v2182
        %v2201 = vmul.f32 %v2165, %v2182
        %v2202 = vmul.f32 %v2166, %v2182
        %v2203 = vmul.f32 %v2167, %v2182
        %v2204 = vmul.f32 %v2168, %v2182
        %v2205 = vmul.f32 %v2169, %v2182
        %v2206 = vmul.f32 %v2170, %v2182
        %v2207 = vmul.f32 %v2171, %v2182
        %v2208 = vmul.f32 %v2172, %v2182
        %v2209 = vmul.f32 %v2173, %v2182
        %v2210 = vmul.f32 %v2174, %v2182
        %v2211 = vmul.f32 %v2175, %v2182
        %v2212 = vmul.f32 %v2176, %v2182
        %v2213 = vmul.f32 %v2177, %v2182
        %v2214 = vmul.f32 %v2178, %v2182
        %v2215 = vlaneseq
        %v2216 = vshrl.u32 %v2215, 7
        %v2217 = vsub.s32 3, %v2216
        %v2218 = vrot.slane %v945, %v2217
        %v2219 = vadd.f32 %v2183, %v2218
        %v2220 = vadd.f32 %v2184, %v2218
        %v2221 = vadd.f32 %v2185, %v2218
        %v2222 = vadd.f32 %v2186, %v2218
        %v2223 = vadd.f32 %v2187, %v2218
        %v2224 = vadd.f32 %v2188, %v2218
        %v2225 = vadd.f32 %v2189, %v2218
        %v2226 = vadd.f32 %v2190, %v2218
        %v2227 = vadd.f32 %v2191, %v2218
        %v2228 = vadd.f32 %v2192, %v2218
        %v2229 = vadd.f32 %v2193, %v2218
        %v2230 = vadd.f32 %v2194, %v2218
        %v2231 = vadd.f32 %v2195, %v2218
        %v2232 = vadd.f32 %v2196, %v2218
        %v2233 = vadd.f32 %v2197, %v2218
        %v2234 = vadd.f32 %v2198, %v2218
        %v2235 = vadd.f32 %v2199, %v2218
        %v2236 = vadd.f32 %v2200, %v2218
        %v2237 = vadd.f32 %v2201, %v2218
        %v2238 = vadd.f32 %v2202, %v2218
        %v2239 = vadd.f32 %v2203, %v2218
        %v2240 = vadd.f32 %v2204, %v2218
        %v2241 = vadd.f32 %v2205, %v2218
        %v2242 = vadd.f32 %v2206, %v2218
        %v2243 = vadd.f32 %v2207, %v2218
        %v2244 = vadd.f32 %v2208, %v2218
        %v2245 = vadd.f32 %v2209, %v2218
        %v2246 = vadd.f32 %v2210, %v2218
        %v2247 = vadd.f32 %v2211, %v2218
        %v2248 = vadd.f32 %v2212, %v2218
        %v2249 = vadd.f32 %v2213, %v2218
        %v2250 = vadd.f32 %v2214, %v2218
        %v2252 = vlaneseq
        %v2253 = vshrl.u32 %v2252, 7
        %v2254 = vsub.s32 0, %v2253
        %v2255 = vrot.slane %v946, %v2254
        %v2257 = vadd.f32 %v2219, %v2255
        %v2258 = vadd.f32 %v2220, %v2255
        %v2259 = vadd.f32 %v2221, %v2255
        %v2260 = vadd.f32 %v2222, %v2255
        %v2261 = vadd.f32 %v2223, %v2255
        %v2262 = vadd.f32 %v2224, %v2255
        %v2263 = vadd.f32 %v2225, %v2255
        %v2264 = vadd.f32 %v2226, %v2255
        %v2265 = vadd.f32 %v2227, %v2255
        %v2266 = vadd.f32 %v2228, %v2255
        %v2267 = vadd.f32 %v2229, %v2255
        %v2268 = vadd.f32 %v2230, %v2255
        %v2269 = vadd.f32 %v2231, %v2255
        %v2270 = vadd.f32 %v2232, %v2255
        %v2271 = vadd.f32 %v2233, %v2255
        %v2272 = vadd.f32 %v2234, %v2255
        %v2273 = vadd.f32 %v2235, %v2255
        %v2274 = vadd.f32 %v2236, %v2255
        %v2275 = vadd.f32 %v2237, %v2255
        %v2276 = vadd.f32 %v2238, %v2255
        %v2277 = vadd.f32 %v2239, %v2255
        %v2278 = vadd.f32 %v2240, %v2255
        %v2279 = vadd.f32 %v2241, %v2255
        %v2280 = vadd.f32 %v2242, %v2255
        %v2281 = vadd.f32 %v2243, %v2255
        %v2282 = vadd.f32 %v2244, %v2255
        %v2283 = vadd.f32 %v2245, %v2255
        %v2284 = vadd.f32 %v2246, %v2255
        %v2285 = vadd.f32 %v2247, %v2255
        %v2286 = vadd.f32 %v2248, %v2255
        %v2287 = vadd.f32 %v2249, %v2255
        %v2288 = vadd.f32 %v2250, %v2255
        %v2289 = vpack.c.bf16 %v2258, %v2257
        %v2290 = vpack.c.bf16 %v2260, %v2259
        %v2291 = vpack.c.bf16 %v2262, %v2261
        %v2292 = vpack.c.bf16 %v2264, %v2263
        %v2293 = vpack.c.bf16 %v2266, %v2265
        %v2294 = vpack.c.bf16 %v2268, %v2267
        %v2295 = vpack.c.bf16 %v2270, %v2269
        %v2296 = vpack.c.bf16 %v2272, %v2271
        %v2297 = vpack.c.bf16 %v2274, %v2273
        %v2298 = vpack.c.bf16 %v2276, %v2275
        %v2299 = vpack.c.bf16 %v2278, %v2277
        %v2300 = vpack.c.bf16 %v2280, %v2279
        %v2301 = vpack.c.bf16 %v2282, %v2281
        %v2302 = vpack.c.bf16 %v2284, %v2283
        %v2303 = vpack.c.bf16 %v2286, %v2285
        %v2304 = vpack.c.bf16 %v2288, %v2287
        %v2305 = vld [vmem:[#allocation11] sm:$0xf]
        %v2306 = vld [vmem:[#allocation11 + $0x4] sm:$0xf]
        %v2307 = vld [vmem:[#allocation11 + $0x8] sm:$0xf]
        %v2308 = vld [vmem:[#allocation11 + $0xc] sm:$0xf]
        %v2309 = vld [vmem:[#allocation11 + $0x10] sm:$0xf]
        %v2310 = vld [vmem:[#allocation11 + $0x14] sm:$0xf]
        %v2311 = vld [vmem:[#allocation11 + $0x18] sm:$0xf]
        %v2312 = vld [vmem:[#allocation11 + $0x1c] sm:$0xf]
        %v2321 = vunpack.c.l.b16 %v2305
        %v2322 = vunpack.c.l.b16 %v2306
        %v2323 = vunpack.c.l.b16 %v2307
        %v2324 = vunpack.c.l.b16 %v2308
        %v2325 = vunpack.c.l.b16 %v2309
        %v2326 = vunpack.c.l.b16 %v2310
        %v2327 = vunpack.c.l.b16 %v2311
        %v2328 = vunpack.c.l.b16 %v2312
        %v2329 = vpack.c.b16 %v2322, %v2321
        %v2330 = vpack.c.b16 %v2324, %v2323
        %v2331 = vpack.c.b16 %v2326, %v2325
        %v2332 = vpack.c.b16 %v2328, %v2327
        %v2338 = vsel %vm948, %v2289, 0
        %v2341 = vsel %vm948, %v2290, 0
        %v2344 = vsel %vm948, %v2291, 0
        %v2347 = vsel %vm948, %v2292, 0
        %v2350 = vsel %vm948, %v2293, 0
        %v2353 = vsel %vm948, %v2294, 0
        %v2356 = vsel %vm948, %v2295, 0
        %v2359 = vsel %vm948, %v2296, 0
        %v2362 = vsel %vm948, %v2297, 0
        %v2365 = vsel %vm948, %v2298, 0
        %v2368 = vsel %vm948, %v2299, 0
        %v2371 = vsel %vm948, %v2300, 0
        %v2374 = vsel %vm948, %v2301, 0
        %v2377 = vsel %vm948, %v2302, 0
        %v2380 = vsel %vm948, %v2303, 0
        %v2383 = vsel %vm948, %v2304, 0
        %2385 = vmatprep.subr.bf16.mxu0 0
        %2386 = vmatpush1.bf16.msra.mxu0 %v2329
        %2387 = vmatprep.subr.bf16.mxu0 0
        %2388 = vmatpush1.bf16.msra.mxu0 %v2330
        %2389 = vmatprep.subr.bf16.mxu0 0
        %2390 = vmatpush1.bf16.msra.mxu0 %v2331
        %2391 = vmatprep.subr.bf16.mxu0 0
        %2392 = vmatpush1.bf16.msra.mxu0 %v2332
        %2393 = vmatprep.subr.bf16.mxu0 0
        %2394 = vmatpush1.bf16.msra.mxu0 0
        %2395 = vmatprep.subr.bf16.mxu0 0
        %2396 = vmatpush1.bf16.msra.mxu0 0
        %2397 = vmatprep.subr.bf16.mxu0 0
        %2398 = vmatpush1.bf16.msra.mxu0 0
        %2399 = vmatprep.subr.bf16.mxu0 0
        %2400 = vmatpush1.bf16.msra.mxu0 0
        %2401 = vmatprep.subr.bf16.mxu0 0
        %2402 = vmatpush1.bf16.msra.mxu0 0
        %2403 = vmatprep.subr.bf16.mxu0 0
        %2404 = vmatpush1.bf16.msra.mxu0 0
        %2405 = vmatprep.subr.bf16.mxu0 0
        %2406 = vmatpush1.bf16.msra.mxu0 0
        %2407 = vmatprep.subr.bf16.mxu0 0
        %2408 = vmatpush1.bf16.msra.mxu0 0
        %2409 = vmatprep.subr.bf16.mxu0 0
        %2410 = vmatpush1.bf16.msra.mxu0 0
        %2411 = vmatprep.subr.bf16.mxu0 0
        %2412 = vmatpush1.bf16.msra.mxu0 0
        %2413 = vmatprep.subr.bf16.mxu0 0
        %2414 = vmatpush1.bf16.msra.mxu0 0
        %2415 = vmatprep.subr.bf16.mxu0 0
        %2416 = vmatpush1.bf16.msra.mxu0 0
        %2417 = vmatprep.mubr.bf16.mxu0 0
        %2418 = vmatmul.mubr.bf16.gmra.mrb[0].mxu0 %v2338
        %v2419 = vpop.f32.mrb[0].mxu0
        %v2420 = vadd.f32 0.0, %v2419
        %v2421 = vpop.f32.mrb[0].mxu0
        %v2422 = vpop.f32.mrb[0].mxu0
        %v2423 = vadd.f32 0.0, %v2422
        %v2424 = vpop.f32.mrb[0].mxu0
        %2425 = vmatprep.mubr.bf16.mxu0 0
        %2426 = vmatmul.mubr.bf16.gmra.mrb[0].mxu0 %v2341
        %v2427 = vpop.f32.mrb[0].mxu0
        %v2428 = vadd.f32 0.0, %v2427
        %v2429 = vpop.f32.mrb[0].mxu0
        %v2430 = vpop.f32.mrb[0].mxu0
        %v2431 = vadd.f32 0.0, %v2430
        %v2432 = vpop.f32.mrb[0].mxu0
        %2433 = vmatprep.mubr.bf16.mxu0 0
        %2434 = vmatmul.mubr.bf16.gmra.mrb[0].mxu0 %v2344
        %v2435 = vpop.f32.mrb[0].mxu0
        %v2436 = vadd.f32 0.0, %v2435
        %v2437 = vpop.f32.mrb[0].mxu0
        %v2438 = vpop.f32.mrb[0].mxu0
        %v2439 = vadd.f32 0.0, %v2438
        %v2440 = vpop.f32.mrb[0].mxu0
        %2441 = vmatprep.mubr.bf16.mxu0 0
        %2442 = vmatmul.mubr.bf16.gmra.mrb[0].mxu0 %v2347
        %v2443 = vpop.f32.mrb[0].mxu0
        %v2444 = vadd.f32 0.0, %v2443
        %v2445 = vpop.f32.mrb[0].mxu0
        %v2446 = vpop.f32.mrb[0].mxu0
        %v2447 = vadd.f32 0.0, %v2446
        %v2448 = vpop.f32.mrb[0].mxu0
        %2449 = vmatprep.mubr.bf16.mxu0 0
        %2450 = vmatmul.mubr.bf16.gmra.mrb[0].mxu0 %v2350
        %v2451 = vpop.f32.mrb[0].mxu0
        %v2452 = vadd.f32 0.0, %v2451
        %v2453 = vpop.f32.mrb[0].mxu0
        %v2454 = vpop.f32.mrb[0].mxu0
        %v2455 = vadd.f32 0.0, %v2454
        %v2456 = vpop.f32.mrb[0].mxu0
        %2457 = vmatprep.mubr.bf16.mxu0 0
        %2458 = vmatmul.mubr.bf16.gmra.mrb[0].mxu0 %v2353
        %v2459 = vpop.f32.mrb[0].mxu0
        %v2460 = vadd.f32 0.0, %v2459
        %v2461 = vpop.f32.mrb[0].mxu0
        %v2462 = vpop.f32.mrb[0].mxu0
        %v2463 = vadd.f32 0.0, %v2462
        %v2464 = vpop.f32.mrb[0].mxu0
        %2465 = vmatprep.mubr.bf16.mxu0 0
        %2466 = vmatmul.mubr.bf16.gmra.mrb[0].mxu0 %v2356
        %v2467 = vpop.f32.mrb[0].mxu0
        %v2468 = vadd.f32 0.0, %v2467
        %v2469 = vpop.f32.mrb[0].mxu0
        %v2470 = vpop.f32.mrb[0].mxu0
        %v2471 = vadd.f32 0.0, %v2470
        %v2472 = vpop.f32.mrb[0].mxu0
        %2473 = vmatprep.mubr.bf16.mxu0 0
        %2474 = vmatmul.mubr.bf16.gmra.mrb[0].mxu0 %v2359
        %v2475 = vpop.f32.mrb[0].mxu0
        %v2476 = vadd.f32 0.0, %v2475
        %v2477 = vpop.f32.mrb[0].mxu0
        %v2478 = vpop.f32.mrb[0].mxu0
        %v2479 = vadd.f32 0.0, %v2478
        %v2480 = vpop.f32.mrb[0].mxu0
        %2481 = vmatprep.mubr.bf16.mxu0 0
        %2482 = vmatmul.mubr.bf16.gmra.mrb[0].mxu0 %v2362
        %v2483 = vpop.f32.mrb[0].mxu0
        %v2484 = vadd.f32 0.0, %v2483
        %v2485 = vpop.f32.mrb[0].mxu0
        %v2486 = vpop.f32.mrb[0].mxu0
        %v2487 = vadd.f32 0.0, %v2486
        %v2488 = vpop.f32.mrb[0].mxu0
        %2489 = vmatprep.mubr.bf16.mxu0 0
        %2490 = vmatmul.mubr.bf16.gmra.mrb[0].mxu0 %v2365
        %v2491 = vpop.f32.mrb[0].mxu0
        %v2492 = vadd.f32 0.0, %v2491
        %v2493 = vpop.f32.mrb[0].mxu0
        %v2494 = vpop.f32.mrb[0].mxu0
        %v2495 = vadd.f32 0.0, %v2494
        %v2496 = vpop.f32.mrb[0].mxu0
        %2497 = vmatprep.mubr.bf16.mxu0 0
        %2498 = vmatmul.mubr.bf16.gmra.mrb[0].mxu0 %v2368
        %v2499 = vpop.f32.mrb[0].mxu0
        %v2500 = vadd.f32 0.0, %v2499
        %v2501 = vpop.f32.mrb[0].mxu0
        %v2502 = vpop.f32.mrb[0].mxu0
        %v2503 = vadd.f32 0.0, %v2502
        %v2504 = vpop.f32.mrb[0].mxu0
        %2505 = vmatprep.mubr.bf16.mxu0 0
        %2506 = vmatmul.mubr.bf16.gmra.mrb[0].mxu0 %v2371
        %v2507 = vpop.f32.mrb[0].mxu0
        %v2508 = vadd.f32 0.0, %v2507
        %v2509 = vpop.f32.mrb[0].mxu0
        %v2510 = vpop.f32.mrb[0].mxu0
        %v2511 = vadd.f32 0.0, %v2510
        %v2512 = vpop.f32.mrb[0].mxu0
        %2513 = vmatprep.mubr.bf16.mxu0 0
        %2514 = vmatmul.mubr.bf16.gmra.mrb[0].mxu0 %v2374
        %v2515 = vpop.f32.mrb[0].mxu0
        %v2516 = vadd.f32 0.0, %v2515
        %v2517 = vpop.f32.mrb[0].mxu0
        %v2518 = vpop.f32.mrb[0].mxu0
        %v2519 = vadd.f32 0.0, %v2518
        %v2520 = vpop.f32.mrb[0].mxu0
        %2521 = vmatprep.mubr.bf16.mxu0 0
        %2522 = vmatmul.mubr.bf16.gmra.mrb[0].mxu0 %v2377
        %v2523 = vpop.f32.mrb[0].mxu0
        %v2524 = vadd.f32 0.0, %v2523
        %v2525 = vpop.f32.mrb[0].mxu0
        %v2526 = vpop.f32.mrb[0].mxu0
        %v2527 = vadd.f32 0.0, %v2526
        %v2528 = vpop.f32.mrb[0].mxu0
        %2529 = vmatprep.mubr.bf16.mxu0 0
        %2530 = vmatmul.mubr.bf16.gmra.mrb[0].mxu0 %v2380
        %v2531 = vpop.f32.mrb[0].mxu0
        %v2532 = vadd.f32 0.0, %v2531
        %v2533 = vpop.f32.mrb[0].mxu0
        %v2534 = vpop.f32.mrb[0].mxu0
        %v2535 = vadd.f32 0.0, %v2534
        %v2536 = vpop.f32.mrb[0].mxu0
        %2537 = vmatprep.mubr.bf16.mxu0 0
        %2538 = vmatmul.mubr.bf16.gmra.mrb[0].mxu0 %v2383
        %v2539 = vpop.f32.mrb[0].mxu0
        %v2540 = vadd.f32 0.0, %v2539
        %v2541 = vpop.f32.mrb[0].mxu0
        %v2542 = vpop.f32.mrb[0].mxu0
        %v2543 = vadd.f32 0.0, %v2542
        %v2544 = vpop.f32.mrb[0].mxu0
        %2545 = vdwg.mxu0
        %v2546 = vld [vmem:[#allocation17] sm:$0xf]
        %v2547 = vld [vmem:[#allocation17 + $0x4] sm:$0xf]
        %v2548 = vld [vmem:[#allocation17 + $0x8] sm:$0xf]
        %v2549 = vld [vmem:[#allocation17 + $0xc] sm:$0xf]
        %v2550 = vld [vmem:[#allocation17 + $0x10] sm:$0xf]
        %v2551 = vld [vmem:[#allocation17 + $0x14] sm:$0xf]
        %v2552 = vld [vmem:[#allocation17 + $0x18] sm:$0xf]
        %v2553 = vld [vmem:[#allocation17 + $0x1c] sm:$0xf]
        %v2554 = vld [vmem:[#allocation19] sm:$0x3]
        %v2555 = vld [vmem:[%s755] sm:$0xf]
        %v2556 = vld [vmem:[%s755 + $0x4] sm:$0xf]
        %v2557 = vld [vmem:[%s755 + $0x8] sm:$0xf]
        %v2558 = vld [vmem:[%s755 + $0xc] sm:$0xf]
        %v2559 = vld [vmem:[%s755 + $0x10] sm:$0xf]
        %v2560 = vld [vmem:[%s755 + $0x14] sm:$0xf]
        %v2561 = vld [vmem:[%s755 + $0x18] sm:$0xf]
        %v2562 = vld [vmem:[%s755 + $0x1c] sm:$0xf]
        %v2563 = vld [vmem:[%s755 + $0x20] sm:$0xf]
        %v2564 = vld [vmem:[%s755 + $0x24] sm:$0xf]
        %v2565 = vld [vmem:[%s755 + $0x28] sm:$0xf]
        %v2566 = vld [vmem:[%s755 + $0x2c] sm:$0xf]
        %v2567 = vld [vmem:[%s755 + $0x30] sm:$0xf]
        %v2568 = vld [vmem:[%s755 + $0x34] sm:$0xf]
        %v2569 = vld [vmem:[%s755 + $0x38] sm:$0xf]
        %v2570 = vld [vmem:[%s755 + $0x3c] sm:$0xf]
        %v2571 = vld [vmem:[%s755 + $0x40] sm:$0xf]
        %v2572 = vld [vmem:[%s755 + $0x44] sm:$0xf]
        %v2573 = vld [vmem:[%s755 + $0x48] sm:$0xf]
        %v2574 = vld [vmem:[%s755 + $0x4c] sm:$0xf]
        %v2575 = vld [vmem:[%s755 + $0x50] sm:$0xf]
        %v2576 = vld [vmem:[%s755 + $0x54] sm:$0xf]
        %v2577 = vld [vmem:[%s755 + $0x58] sm:$0xf]
        %v2578 = vld [vmem:[%s755 + $0x5c] sm:$0xf]
        %v2579 = vld [vmem:[%s755 + $0x60] sm:$0xf]
        %v2580 = vld [vmem:[%s755 + $0x64] sm:$0xf]
        %v2581 = vld [vmem:[%s755 + $0x68] sm:$0xf]
        %v2582 = vld [vmem:[%s755 + $0x6c] sm:$0xf]
        %v2583 = vld [vmem:[%s755 + $0x70] sm:$0xf]
        %v2584 = vld [vmem:[%s755 + $0x74] sm:$0xf]
        %v2585 = vld [vmem:[%s755 + $0x78] sm:$0xf]
        %v2586 = vld [vmem:[%s755 + $0x7c] sm:$0xf]
        %v2587 = vld [vmem:[#allocation13] sm:$0xf]
        %v2588 = vld [vmem:[#allocation13 + $0x4] sm:$0xf]
        %v2589 = vld [vmem:[#allocation13 + $0x8] sm:$0xf]
        %v2590 = vld [vmem:[#allocation13 + $0xc] sm:$0xf]
        %v2591 = vld [vmem:[#allocation13 + $0x10] sm:$0xf]
        %v2592 = vld [vmem:[#allocation13 + $0x14] sm:$0xf]
        %v2593 = vld [vmem:[#allocation13 + $0x18] sm:$0xf]
        %v2594 = vld [vmem:[#allocation13 + $0x1c] sm:$0xf]
        %v2627 = vunpack.c.l.b16 %v2555
        %v2628 = vunpack.c.l.b16 %v2556
        %v2629 = vunpack.c.l.b16 %v2557
        %v2630 = vunpack.c.l.b16 %v2558
        %v2631 = vunpack.c.l.b16 %v2559
        %v2632 = vunpack.c.l.b16 %v2560
        %v2633 = vunpack.c.l.b16 %v2561
        %v2634 = vunpack.c.l.b16 %v2562
        %v2635 = vunpack.c.l.b16 %v2563
        %v2636 = vunpack.c.l.b16 %v2564
        %v2637 = vunpack.c.l.b16 %v2565
        %v2638 = vunpack.c.l.b16 %v2566
        %v2639 = vunpack.c.l.b16 %v2567
        %v2640 = vunpack.c.l.b16 %v2568
        %v2641 = vunpack.c.l.b16 %v2569
        %v2642 = vunpack.c.l.b16 %v2570
        %v2643 = vunpack.c.l.b16 %v2571
        %v2644 = vunpack.c.l.b16 %v2572
        %v2645 = vunpack.c.l.b16 %v2573
        %v2646 = vunpack.c.l.b16 %v2574
        %v2647 = vunpack.c.l.b16 %v2575
        %v2648 = vunpack.c.l.b16 %v2576
        %v2649 = vunpack.c.l.b16 %v2577
        %v2650 = vunpack.c.l.b16 %v2578
        %v2651 = vunpack.c.l.b16 %v2579
        %v2652 = vunpack.c.l.b16 %v2580
        %v2653 = vunpack.c.l.b16 %v2581
        %v2654 = vunpack.c.l.b16 %v2582
        %v2655 = vunpack.c.l.b16 %v2583
        %v2656 = vunpack.c.l.b16 %v2584
        %v2657 = vunpack.c.l.b16 %v2585
        %v2658 = vunpack.c.l.b16 %v2586
        %v2659 = vpack.c.b16 %v2628, %v2627
        %v2660 = vpack.c.b16 %v2630, %v2629
        %v2661 = vpack.c.b16 %v2632, %v2631
        %v2662 = vpack.c.b16 %v2634, %v2633
        %v2663 = vpack.c.b16 %v2636, %v2635
        %v2664 = vpack.c.b16 %v2638, %v2637
        %v2665 = vpack.c.b16 %v2640, %v2639
        %v2666 = vpack.c.b16 %v2642, %v2641
        %v2667 = vpack.c.b16 %v2644, %v2643
        %v2668 = vpack.c.b16 %v2646, %v2645
        %v2669 = vpack.c.b16 %v2648, %v2647
        %v2670 = vpack.c.b16 %v2650, %v2649
        %v2671 = vpack.c.b16 %v2652, %v2651
        %v2672 = vpack.c.b16 %v2654, %v2653
        %v2673 = vpack.c.b16 %v2656, %v2655
        %v2674 = vpack.c.b16 %v2658, %v2657
        %v2683 = vunpack.c.l.b16 %v2587
        %v2684 = vunpack.c.l.b16 %v2588
        %v2685 = vunpack.c.l.b16 %v2589
        %v2686 = vunpack.c.l.b16 %v2590
        %v2687 = vunpack.c.l.b16 %v2591
        %v2688 = vunpack.c.l.b16 %v2592
        %v2689 = vunpack.c.l.b16 %v2593
        %v2690 = vunpack.c.l.b16 %v2594
        %v2691 = vpack.c.b16 %v2684, %v2683
        %v2692 = vpack.c.b16 %v2686, %v2685
        %v2693 = vpack.c.b16 %v2688, %v2687
        %v2694 = vpack.c.b16 %v2690, %v2689
        %v2700 = vsel %vm948, %v2659, 0
        %v2703 = vsel %vm948, %v2660, 0
        %v2706 = vsel %vm948, %v2661, 0
        %v2709 = vsel %vm948, %v2662, 0
        %v2712 = vsel %vm948, %v2663, 0
        %v2715 = vsel %vm948, %v2664, 0
        %v2718 = vsel %vm948, %v2665, 0
        %v2721 = vsel %vm948, %v2666, 0
        %v2724 = vsel %vm948, %v2667, 0
        %v2727 = vsel %vm948, %v2668, 0
        %v2730 = vsel %vm948, %v2669, 0
        %v2733 = vsel %vm948, %v2670, 0
        %v2736 = vsel %vm948, %v2671, 0
        %v2739 = vsel %vm948, %v2672, 0
        %v2742 = vsel %vm948, %v2673, 0
        %v2745 = vsel %vm948, %v2674, 0
        %2747 = vmatprep.subr.bf16.mxu0 0
        %2748 = vmatpush1.bf16.msra.mxu0 %v2691
        %2749 = vmatprep.subr.bf16.mxu0 0
        %2750 = vmatpush1.bf16.msra.mxu0 %v2692
        %2751 = vmatprep.subr.bf16.mxu0 0
        %2752 = vmatpush1.bf16.msra.mxu0 %v2693
        %2753 = vmatprep.subr.bf16.mxu0 0
        %2754 = vmatpush1.bf16.msra.mxu0 %v2694
        %2755 = vmatprep.subr.bf16.mxu0 0
        %2756 = vmatpush1.bf16.msra.mxu0 0
        %2757 = vmatprep.subr.bf16.mxu0 0
        %2758 = vmatpush1.bf16.msra.mxu0 0
        %2759 = vmatprep.subr.bf16.mxu0 0
        %2760 = vmatpush1.bf16.msra.mxu0 0
        %2761 = vmatprep.subr.bf16.mxu0 0
        %2762 = vmatpush1.bf16.msra.mxu0 0
        %2763 = vmatprep.subr.bf16.mxu0 0
        %2764 = vmatpush1.bf16.msra.mxu0 0
        %2765 = vmatprep.subr.bf16.mxu0 0
        %2766 = vmatpush1.bf16.msra.mxu0 0
        %2767 = vmatprep.subr.bf16.mxu0 0
        %2768 = vmatpush1.bf16.msra.mxu0 0
        %2769 = vmatprep.subr.bf16.mxu0 0
        %2770 = vmatpush1.bf16.msra.mxu0 0
        %2771 = vmatprep.subr.bf16.mxu0 0
        %2772 = vmatpush1.bf16.msra.mxu0 0
        %2773 = vmatprep.subr.bf16.mxu0 0
        %2774 = vmatpush1.bf16.msra.mxu0 0
        %2775 = vmatprep.subr.bf16.mxu0 0
        %2776 = vmatpush1.bf16.msra.mxu0 0
        %2777 = vmatprep.subr.bf16.mxu0 0
        %2778 = vmatpush1.bf16.msra.mxu0 0
        %2779 = vmatprep.mubr.bf16.mxu0 0
        %2780 = vmatmul.mubr.bf16.gmra.mrb[0].mxu0 %v2700
        %v2781 = vpop.f32.mrb[0].mxu0
        %v2782 = vadd.f32 0.0, %v2781
        %v2783 = vpop.f32.mrb[0].mxu0
        %v2784 = vpop.f32.mrb[0].mxu0
        %v2785 = vadd.f32 0.0, %v2784
        %v2786 = vpop.f32.mrb[0].mxu0
        %2787 = vmatprep.mubr.bf16.mxu0 0
        %2788 = vmatmul.mubr.bf16.gmra.mrb[0].mxu0 %v2703
        %v2789 = vpop.f32.mrb[0].mxu0
        %v2790 = vadd.f32 0.0, %v2789
        %v2791 = vpop.f32.mrb[0].mxu0
        %v2792 = vpop.f32.mrb[0].mxu0
        %v2793 = vadd.f32 0.0, %v2792
        %v2794 = vpop.f32.mrb[0].mxu0
        %2795 = vmatprep.mubr.bf16.mxu0 0
        %2796 = vmatmul.mubr.bf16.gmra.mrb[0].mxu0 %v2706
        %v2797 = vpop.f32.mrb[0].mxu0
        %v2798 = vadd.f32 0.0, %v2797
        %v2799 = vpop.f32.mrb[0].mxu0
        %v2800 = vpop.f32.mrb[0].mxu0
        %v2801 = vadd.f32 0.0, %v2800
        %v2802 = vpop.f32.mrb[0].mxu0
        %2803 = vmatprep.mubr.bf16.mxu0 0
        %2804 = vmatmul.mubr.bf16.gmra.mrb[0].mxu0 %v2709
        %v2805 = vpop.f32.mrb[0].mxu0
        %v2806 = vadd.f32 0.0, %v2805
        %v2807 = vpop.f32.mrb[0].mxu0
        %v2808 = vpop.f32.mrb[0].mxu0
        %v2809 = vadd.f32 0.0, %v2808
        %v2810 = vpop.f32.mrb[0].mxu0
        %2811 = vmatprep.mubr.bf16.mxu0 0
        %2812 = vmatmul.mubr.bf16.gmra.mrb[0].mxu0 %v2712
        %v2813 = vpop.f32.mrb[0].mxu0
        %v2814 = vadd.f32 0.0, %v2813
        %v2815 = vpop.f32.mrb[0].mxu0
        %v2816 = vpop.f32.mrb[0].mxu0
        %v2817 = vadd.f32 0.0, %v2816
        %v2818 = vpop.f32.mrb[0].mxu0
        %2819 = vmatprep.mubr.bf16.mxu0 0
        %2820 = vmatmul.mubr.bf16.gmra.mrb[0].mxu0 %v2715
        %v2821 = vpop.f32.mrb[0].mxu0
        %v2822 = vadd.f32 0.0, %v2821
        %v2823 = vpop.f32.mrb[0].mxu0
        %v2824 = vpop.f32.mrb[0].mxu0
        %v2825 = vadd.f32 0.0, %v2824
        %v2826 = vpop.f32.mrb[0].mxu0
        %2827 = vmatprep.mubr.bf16.mxu0 0
        %2828 = vmatmul.mubr.bf16.gmra.mrb[0].mxu0 %v2718
        %v2829 = vpop.f32.mrb[0].mxu0
        %v2830 = vadd.f32 0.0, %v2829
        %v2831 = vpop.f32.mrb[0].mxu0
        %v2832 = vpop.f32.mrb[0].mxu0
        %v2833 = vadd.f32 0.0, %v2832
        %v2834 = vpop.f32.mrb[0].mxu0
        %2835 = vmatprep.mubr.bf16.mxu0 0
        %2836 = vmatmul.mubr.bf16.gmra.mrb[0].mxu0 %v2721
        %v2837 = vpop.f32.mrb[0].mxu0
        %v2838 = vadd.f32 0.0, %v2837
        %v2839 = vpop.f32.mrb[0].mxu0
        %v2840 = vpop.f32.mrb[0].mxu0
        %v2841 = vadd.f32 0.0, %v2840
        %v2842 = vpop.f32.mrb[0].mxu0
        %2843 = vmatprep.mubr.bf16.mxu0 0
        %2844 = vmatmul.mubr.bf16.gmra.mrb[0].mxu0 %v2724
        %v2845 = vpop.f32.mrb[0].mxu0
        %v2846 = vadd.f32 0.0, %v2845
        %v2847 = vpop.f32.mrb[0].mxu0
        %v2848 = vpop.f32.mrb[0].mxu0
        %v2849 = vadd.f32 0.0, %v2848
        %v2850 = vpop.f32.mrb[0].mxu0
        %2851 = vmatprep.mubr.bf16.mxu0 0
        %2852 = vmatmul.mubr.bf16.gmra.mrb[0].mxu0 %v2727
        %v2853 = vpop.f32.mrb[0].mxu0
        %v2854 = vadd.f32 0.0, %v2853
        %v2855 = vpop.f32.mrb[0].mxu0
        %v2856 = vpop.f32.mrb[0].mxu0
        %v2857 = vadd.f32 0.0, %v2856
        %v2858 = vpop.f32.mrb[0].mxu0
        %2859 = vmatprep.mubr.bf16.mxu0 0
        %2860 = vmatmul.mubr.bf16.gmra.mrb[0].mxu0 %v2730
        %v2861 = vpop.f32.mrb[0].mxu0
        %v2862 = vadd.f32 0.0, %v2861
        %v2863 = vpop.f32.mrb[0].mxu0
        %v2864 = vpop.f32.mrb[0].mxu0
        %v2865 = vadd.f32 0.0, %v2864
        %v2866 = vpop.f32.mrb[0].mxu0
        %2867 = vmatprep.mubr.bf16.mxu0 0
        %2868 = vmatmul.mubr.bf16.gmra.mrb[0].mxu0 %v2733
        %v2869 = vpop.f32.mrb[0].mxu0
        %v2870 = vadd.f32 0.0, %v2869
        %v2871 = vpop.f32.mrb[0].mxu0
        %v2872 = vpop.f32.mrb[0].mxu0
        %v2873 = vadd.f32 0.0, %v2872
        %v2874 = vpop.f32.mrb[0].mxu0
        %2875 = vmatprep.mubr.bf16.mxu0 0
        %2876 = vmatmul.mubr.bf16.gmra.mrb[0].mxu0 %v2736
        %v2877 = vpop.f32.mrb[0].mxu0
        %v2878 = vadd.f32 0.0, %v2877
        %v2879 = vpop.f32.mrb[0].mxu0
        %v2880 = vpop.f32.mrb[0].mxu0
        %v2881 = vadd.f32 0.0, %v2880
        %v2882 = vpop.f32.mrb[0].mxu0
        %2883 = vmatprep.mubr.bf16.mxu0 0
        %2884 = vmatmul.mubr.bf16.gmra.mrb[0].mxu0 %v2739
        %v2885 = vpop.f32.mrb[0].mxu0
        %v2886 = vadd.f32 0.0, %v2885
        %v2887 = vpop.f32.mrb[0].mxu0
        %v2888 = vpop.f32.mrb[0].mxu0
        %v2889 = vadd.f32 0.0, %v2888
        %v2890 = vpop.f32.mrb[0].mxu0
        %2891 = vmatprep.mubr.bf16.mxu0 0
        %2892 = vmatmul.mubr.bf16.gmra.mrb[0].mxu0 %v2742
        %v2893 = vpop.f32.mrb[0].mxu0
        %v2894 = vadd.f32 0.0, %v2893
        %v2895 = vpop.f32.mrb[0].mxu0
        %v2896 = vpop.f32.mrb[0].mxu0
        %v2897 = vadd.f32 0.0, %v2896
        %v2898 = vpop.f32.mrb[0].mxu0
        %2899 = vmatprep.mubr.bf16.mxu0 0
        %2900 = vmatmul.mubr.bf16.gmra.mrb[0].mxu0 %v2745
        %v2901 = vpop.f32.mrb[0].mxu0
        %v2902 = vadd.f32 0.0, %v2901
        %v2903 = vpop.f32.mrb[0].mxu0
        %v2904 = vpop.f32.mrb[0].mxu0
        %v2905 = vadd.f32 0.0, %v2904
        %v2906 = vpop.f32.mrb[0].mxu0
        %2907 = vdwg.mxu0
        %v2908 = vld [vmem:[#allocation14] sm:$0xf]
        %v2909 = vld [vmem:[#allocation14 + $0x4] sm:$0xf]
        %v2910 = vld [vmem:[#allocation14 + $0x8] sm:$0xf]
        %v2911 = vld [vmem:[#allocation14 + $0xc] sm:$0xf]
        %v2912 = vld [vmem:[#allocation14 + $0x10] sm:$0xf]
        %v2913 = vld [vmem:[#allocation14 + $0x14] sm:$0xf]
        %v2914 = vld [vmem:[#allocation14 + $0x18] sm:$0xf]
        %v2915 = vld [vmem:[#allocation14 + $0x1c] sm:$0xf]
        %v2924 = vunpack.c.l.b16 %v2908
        %v2925 = vunpack.c.l.b16 %v2909
        %v2926 = vunpack.c.l.b16 %v2910
        %v2927 = vunpack.c.l.b16 %v2911
        %v2928 = vunpack.c.l.b16 %v2912
        %v2929 = vunpack.c.l.b16 %v2913
        %v2930 = vunpack.c.l.b16 %v2914
        %v2931 = vunpack.c.l.b16 %v2915
        %v2932 = vpack.c.b16 %v2925, %v2924
        %v2933 = vpack.c.b16 %v2927, %v2926
        %v2934 = vpack.c.b16 %v2929, %v2928
        %v2935 = vpack.c.b16 %v2931, %v2930
        %2940 = vmatprep.subr.bf16.mxu0 0
        %2941 = vmatpush1.bf16.msra.mxu0 %v2932
        %2942 = vmatprep.subr.bf16.mxu0 0
        %2943 = vmatpush1.bf16.msra.mxu0 %v2933
        %2944 = vmatprep.subr.bf16.mxu0 0
        %2945 = vmatpush1.bf16.msra.mxu0 %v2934
        %2946 = vmatprep.subr.bf16.mxu0 0
        %2947 = vmatpush1.bf16.msra.mxu0 %v2935
        %2948 = vmatprep.subr.bf16.mxu0 0
        %2949 = vmatpush1.bf16.msra.mxu0 0
        %2950 = vmatprep.subr.bf16.mxu0 0
        %2951 = vmatpush1.bf16.msra.mxu0 0
        %2952 = vmatprep.subr.bf16.mxu0 0
        %2953 = vmatpush1.bf16.msra.mxu0 0
        %2954 = vmatprep.subr.bf16.mxu0 0
        %2955 = vmatpush1.bf16.msra.mxu0 0
        %2956 = vmatprep.subr.bf16.mxu0 0
        %2957 = vmatpush1.bf16.msra.mxu0 0
        %2958 = vmatprep.subr.bf16.mxu0 0
        %2959 = vmatpush1.bf16.msra.mxu0 0
        %2960 = vmatprep.subr.bf16.mxu0 0
        %2961 = vmatpush1.bf16.msra.mxu0 0
        %2962 = vmatprep.subr.bf16.mxu0 0
        %2963 = vmatpush1.bf16.msra.mxu0 0
        %2964 = vmatprep.subr.bf16.mxu0 0
        %2965 = vmatpush1.bf16.msra.mxu0 0
        %2966 = vmatprep.subr.bf16.mxu0 0
        %2967 = vmatpush1.bf16.msra.mxu0 0
        %2968 = vmatprep.subr.bf16.mxu0 0
        %2969 = vmatpush1.bf16.msra.mxu0 0
        %2970 = vmatprep.subr.bf16.mxu0 0
        %2971 = vmatpush1.bf16.msra.mxu0 0
        %2972 = vmatprep.mubr.bf16.mxu0 0
        %2973 = vmatmul.mubr.bf16.gmra.mrb[0].mxu0 %v2700
        %v2974 = vpop.f32.mrb[0].mxu0
        %v2975 = vadd.f32 0.0, %v2974
        %v2976 = vpop.f32.mrb[0].mxu0
        %v2977 = vpop.f32.mrb[0].mxu0
        %v2978 = vadd.f32 0.0, %v2977
        %v2979 = vpop.f32.mrb[0].mxu0
        %2980 = vmatprep.mubr.bf16.mxu0 0
        %2981 = vmatmul.mubr.bf16.gmra.mrb[0].mxu0 %v2703
        %v2982 = vpop.f32.mrb[0].mxu0
        %v2983 = vadd.f32 0.0, %v2982
        %v2984 = vpop.f32.mrb[0].mxu0
        %v2985 = vpop.f32.mrb[0].mxu0
        %v2986 = vadd.f32 0.0, %v2985
        %v2987 = vpop.f32.mrb[0].mxu0
        %2988 = vmatprep.mubr.bf16.mxu0 0
        %2989 = vmatmul.mubr.bf16.gmra.mrb[0].mxu0 %v2706
        %v2990 = vpop.f32.mrb[0].mxu0
        %v2991 = vadd.f32 0.0, %v2990
        %v2992 = vpop.f32.mrb[0].mxu0
        %v2993 = vpop.f32.mrb[0].mxu0
        %v2994 = vadd.f32 0.0, %v2993
        %v2995 = vpop.f32.mrb[0].mxu0
        %2996 = vmatprep.mubr.bf16.mxu0 0
        %2997 = vmatmul.mubr.bf16.gmra.mrb[0].mxu0 %v2709
        %v2998 = vpop.f32.mrb[0].mxu0
        %v2999 = vadd.f32 0.0, %v2998
        %v3000 = vpop.f32.mrb[0].mxu0
        %v3001 = vpop.f32.mrb[0].mxu0
        %v3002 = vadd.f32 0.0, %v3001
        %v3003 = vpop.f32.mrb[0].mxu0
        %3004 = vmatprep.mubr.bf16.mxu0 0
        %3005 = vmatmul.mubr.bf16.gmra.mrb[0].mxu0 %v2712
        %v3006 = vpop.f32.mrb[0].mxu0
        %v3007 = vadd.f32 0.0, %v3006
        %v3008 = vpop.f32.mrb[0].mxu0
        %v3009 = vpop.f32.mrb[0].mxu0
        %v3010 = vadd.f32 0.0, %v3009
        %v3011 = vpop.f32.mrb[0].mxu0
        %3012 = vmatprep.mubr.bf16.mxu0 0
        %3013 = vmatmul.mubr.bf16.gmra.mrb[0].mxu0 %v2715
        %v3014 = vpop.f32.mrb[0].mxu0
        %v3015 = vadd.f32 0.0, %v3014
        %v3016 = vpop.f32.mrb[0].mxu0
        %v3017 = vpop.f32.mrb[0].mxu0
        %v3018 = vadd.f32 0.0, %v3017
        %v3019 = vpop.f32.mrb[0].mxu0
        %3020 = vmatprep.mubr.bf16.mxu0 0
        %3021 = vmatmul.mubr.bf16.gmra.mrb[0].mxu0 %v2718
        %v3022 = vpop.f32.mrb[0].mxu0
        %v3023 = vadd.f32 0.0, %v3022
        %v3024 = vpop.f32.mrb[0].mxu0
        %v3025 = vpop.f32.mrb[0].mxu0
        %v3026 = vadd.f32 0.0, %v3025
        %v3027 = vpop.f32.mrb[0].mxu0
        %3028 = vmatprep.mubr.bf16.mxu0 0
        %3029 = vmatmul.mubr.bf16.gmra.mrb[0].mxu0 %v2721
        %v3030 = vpop.f32.mrb[0].mxu0
        %v3031 = vadd.f32 0.0, %v3030
        %v3032 = vpop.f32.mrb[0].mxu0
        %v3033 = vpop.f32.mrb[0].mxu0
        %v3034 = vadd.f32 0.0, %v3033
        %v3035 = vpop.f32.mrb[0].mxu0
        %3036 = vmatprep.mubr.bf16.mxu0 0
        %3037 = vmatmul.mubr.bf16.gmra.mrb[0].mxu0 %v2724
        %v3038 = vpop.f32.mrb[0].mxu0
        %v3039 = vadd.f32 0.0, %v3038
        %v3040 = vpop.f32.mrb[0].mxu0
        %v3041 = vpop.f32.mrb[0].mxu0
        %v3042 = vadd.f32 0.0, %v3041
        %v3043 = vpop.f32.mrb[0].mxu0
        %3044 = vmatprep.mubr.bf16.mxu0 0
        %3045 = vmatmul.mubr.bf16.gmra.mrb[0].mxu0 %v2727
        %v3046 = vpop.f32.mrb[0].mxu0
        %v3047 = vadd.f32 0.0, %v3046
        %v3048 = vpop.f32.mrb[0].mxu0
        %v3049 = vpop.f32.mrb[0].mxu0
        %v3050 = vadd.f32 0.0, %v3049
        %v3051 = vpop.f32.mrb[0].mxu0
        %3052 = vmatprep.mubr.bf16.mxu0 0
        %3053 = vmatmul.mubr.bf16.gmra.mrb[0].mxu0 %v2730
        %v3054 = vpop.f32.mrb[0].mxu0
        %v3055 = vadd.f32 0.0, %v3054
        %v3056 = vpop.f32.mrb[0].mxu0
        %v3057 = vpop.f32.mrb[0].mxu0
        %v3058 = vadd.f32 0.0, %v3057
        %v3059 = vpop.f32.mrb[0].mxu0
        %3060 = vmatprep.mubr.bf16.mxu0 0
        %3061 = vmatmul.mubr.bf16.gmra.mrb[0].mxu0 %v2733
        %v3062 = vpop.f32.mrb[0].mxu0
        %v3063 = vadd.f32 0.0, %v3062
        %v3064 = vpop.f32.mrb[0].mxu0
        %v3065 = vpop.f32.mrb[0].mxu0
        %v3066 = vadd.f32 0.0, %v3065
        %v3067 = vpop.f32.mrb[0].mxu0
        %3068 = vmatprep.mubr.bf16.mxu0 0
        %3069 = vmatmul.mubr.bf16.gmra.mrb[0].mxu0 %v2736
        %v3070 = vpop.f32.mrb[0].mxu0
        %v3071 = vadd.f32 0.0, %v3070
        %v3072 = vpop.f32.mrb[0].mxu0
        %v3073 = vpop.f32.mrb[0].mxu0
        %v3074 = vadd.f32 0.0, %v3073
        %v3075 = vpop.f32.mrb[0].mxu0
        %3076 = vmatprep.mubr.bf16.mxu0 0
        %3077 = vmatmul.mubr.bf16.gmra.mrb[0].mxu0 %v2739
        %v3078 = vpop.f32.mrb[0].mxu0
        %v3079 = vadd.f32 0.0, %v3078
        %v3080 = vpop.f32.mrb[0].mxu0
        %v3081 = vpop.f32.mrb[0].mxu0
        %v3082 = vadd.f32 0.0, %v3081
        %v3083 = vpop.f32.mrb[0].mxu0
        %3084 = vmatprep.mubr.bf16.mxu0 0
        %3085 = vmatmul.mubr.bf16.gmra.mrb[0].mxu0 %v2742
        %v3086 = vpop.f32.mrb[0].mxu0
        %v3087 = vadd.f32 0.0, %v3086
        %v3088 = vpop.f32.mrb[0].mxu0
        %v3089 = vpop.f32.mrb[0].mxu0
        %v3090 = vadd.f32 0.0, %v3089
        %v3091 = vpop.f32.mrb[0].mxu0
        %3092 = vmatprep.mubr.bf16.mxu0 0
        %3093 = vmatmul.mubr.bf16.gmra.mrb[0].mxu0 %v2745
        %v3094 = vpop.f32.mrb[0].mxu0
        %v3095 = vadd.f32 0.0, %v3094
        %v3096 = vpop.f32.mrb[0].mxu0
        %v3097 = vpop.f32.mrb[0].mxu0
        %v3098 = vadd.f32 0.0, %v3097
        %v3099 = vpop.f32.mrb[0].mxu0
        %3100 = vdwg.mxu0
        %v3101 = vmul.f32 %v2420, %v2782
        %v3102 = vmul.f32 %v2423, %v2785
        %v3103 = vmul.f32 %v2428, %v2790
        %v3104 = vmul.f32 %v2431, %v2793
        %v3105 = vmul.f32 %v2436, %v2798
        %v3106 = vmul.f32 %v2439, %v2801
        %v3107 = vmul.f32 %v2444, %v2806
        %v3108 = vmul.f32 %v2447, %v2809
        %v3109 = vmul.f32 %v2452, %v2814
        %v3110 = vmul.f32 %v2455, %v2817
        %v3111 = vmul.f32 %v2460, %v2822
        %v3112 = vmul.f32 %v2463, %v2825
        %v3113 = vmul.f32 %v2468, %v2830
        %v3114 = vmul.f32 %v2471, %v2833
        %v3115 = vmul.f32 %v2476, %v2838
        %v3116 = vmul.f32 %v2479, %v2841
        %v3117 = vmul.f32 %v2484, %v2846
        %v3118 = vmul.f32 %v2487, %v2849
        %v3119 = vmul.f32 %v2492, %v2854
        %v3120 = vmul.f32 %v2495, %v2857
        %v3121 = vmul.f32 %v2500, %v2862
        %v3122 = vmul.f32 %v2503, %v2865
        %v3123 = vmul.f32 %v2508, %v2870
        %v3124 = vmul.f32 %v2511, %v2873
        %v3125 = vmul.f32 %v2516, %v2878
        %v3126 = vmul.f32 %v2519, %v2881
        %v3127 = vmul.f32 %v2524, %v2886
        %v3128 = vmul.f32 %v2527, %v2889
        %v3129 = vmul.f32 %v2532, %v2894
        %v3130 = vmul.f32 %v2535, %v2897
        %v3131 = vmul.f32 %v2540, %v2902
        %v3132 = vmul.f32 %v2543, %v2905
        %v3133 = vpack.c.bf16 %v3102, %v3101
        %v3134 = vpack.c.bf16 %v3104, %v3103
        %v3135 = vpack.c.bf16 %v3106, %v3105
        %v3136 = vpack.c.bf16 %v3108, %v3107
        %v3137 = vpack.c.bf16 %v3110, %v3109
        %v3138 = vpack.c.bf16 %v3112, %v3111
        %v3139 = vpack.c.bf16 %v3114, %v3113
        %v3140 = vpack.c.bf16 %v3116, %v3115
        %v3141 = vpack.c.bf16 %v3118, %v3117
        %v3142 = vpack.c.bf16 %v3120, %v3119
        %v3143 = vpack.c.bf16 %v3122, %v3121
        %v3144 = vpack.c.bf16 %v3124, %v3123
        %v3145 = vpack.c.bf16 %v3126, %v3125
        %v3146 = vpack.c.bf16 %v3128, %v3127
        %v3147 = vpack.c.bf16 %v3130, %v3129
        %v3148 = vpack.c.bf16 %v3132, %v3131
        %v3157 = vunpack.c.l.b16 %v2546
        %v3158 = vunpack.c.l.b16 %v2547
        %v3159 = vunpack.c.l.b16 %v2548
        %v3160 = vunpack.c.l.b16 %v2549
        %v3161 = vunpack.c.l.b16 %v2550
        %v3162 = vunpack.c.l.b16 %v2551
        %v3163 = vunpack.c.l.b16 %v2552
        %v3164 = vunpack.c.l.b16 %v2553
        %v3165 = vpack.c.b16 %v3158, %v3157
        %v3166 = vpack.c.b16 %v3160, %v3159
        %v3167 = vpack.c.b16 %v3162, %v3161
        %v3168 = vpack.c.b16 %v3164, %v3163
        %v3174 = vsel %vm948, %v3133, 0
        %v3177 = vsel %vm948, %v3134, 0
        %v3180 = vsel %vm948, %v3135, 0
        %v3183 = vsel %vm948, %v3136, 0
        %v3186 = vsel %vm948, %v3137, 0
        %v3189 = vsel %vm948, %v3138, 0
        %v3192 = vsel %vm948, %v3139, 0
        %v3195 = vsel %vm948, %v3140, 0
        %v3198 = vsel %vm948, %v3141, 0
        %v3201 = vsel %vm948, %v3142, 0
        %v3204 = vsel %vm948, %v3143, 0
        %v3207 = vsel %vm948, %v3144, 0
        %v3210 = vsel %vm948, %v3145, 0
        %v3213 = vsel %vm948, %v3146, 0
        %v3216 = vsel %vm948, %v3147, 0
        %v3219 = vsel %vm948, %v3148, 0
        %3221 = vmatprep.subr.bf16.mxu0 0
        %3222 = vmatpush1.bf16.msra.mxu0 %v3165
        %3223 = vmatprep.subr.bf16.mxu0 0
        %3224 = vmatpush1.bf16.msra.mxu0 %v3166
        %3225 = vmatprep.subr.bf16.mxu0 0
        %3226 = vmatpush1.bf16.msra.mxu0 %v3167
        %3227 = vmatprep.subr.bf16.mxu0 0
        %3228 = vmatpush1.bf16.msra.mxu0 %v3168
        %3229 = vmatprep.subr.bf16.mxu0 0
        %3230 = vmatpush1.bf16.msra.mxu0 0
        %3231 = vmatprep.subr.bf16.mxu0 0
        %3232 = vmatpush1.bf16.msra.mxu0 0
        %3233 = vmatprep.subr.bf16.mxu0 0
        %3234 = vmatpush1.bf16.msra.mxu0 0
        %3235 = vmatprep.subr.bf16.mxu0 0
        %3236 = vmatpush1.bf16.msra.mxu0 0
        %3237 = vmatprep.subr.bf16.mxu0 0
        %3238 = vmatpush1.bf16.msra.mxu0 0
        %3239 = vmatprep.subr.bf16.mxu0 0
        %3240 = vmatpush1.bf16.msra.mxu0 0
        %3241 = vmatprep.subr.bf16.mxu0 0
        %3242 = vmatpush1.bf16.msra.mxu0 0
        %3243 = vmatprep.subr.bf16.mxu0 0
        %3244 = vmatpush1.bf16.msra.mxu0 0
        %3245 = vmatprep.subr.bf16.mxu0 0
        %3246 = vmatpush1.bf16.msra.mxu0 0
        %3247 = vmatprep.subr.bf16.mxu0 0
        %3248 = vmatpush1.bf16.msra.mxu0 0
        %3249 = vmatprep.subr.bf16.mxu0 0
        %3250 = vmatpush1.bf16.msra.mxu0 0
        %3251 = vmatprep.subr.bf16.mxu0 0
        %3252 = vmatpush1.bf16.msra.mxu0 0
        %3253 = vmatprep.mubr.bf16.mxu0 0
        %3254 = vmatmul.mubr.bf16.gmra.mrb[0].mxu0 %v3174
        %v3255 = vpop.f32.mrb[0].mxu0
        %v3256 = vadd.f32 0.0, %v3255
        %v3257 = vpop.f32.mrb[0].mxu0
        %v3258 = vpop.f32.mrb[0].mxu0
        %v3259 = vadd.f32 0.0, %v3258
        %v3260 = vpop.f32.mrb[0].mxu0
        %3261 = vmatprep.mubr.bf16.mxu0 0
        %3262 = vmatmul.mubr.bf16.gmra.mrb[0].mxu0 %v3177
        %v3263 = vpop.f32.mrb[0].mxu0
        %v3264 = vadd.f32 0.0, %v3263
        %v3265 = vpop.f32.mrb[0].mxu0
        %v3266 = vpop.f32.mrb[0].mxu0
        %v3267 = vadd.f32 0.0, %v3266
        %v3268 = vpop.f32.mrb[0].mxu0
        %3269 = vmatprep.mubr.bf16.mxu0 0
        %3270 = vmatmul.mubr.bf16.gmra.mrb[0].mxu0 %v3180
        %v3271 = vpop.f32.mrb[0].mxu0
        %v3272 = vadd.f32 0.0, %v3271
        %v3273 = vpop.f32.mrb[0].mxu0
        %v3274 = vpop.f32.mrb[0].mxu0
        %v3275 = vadd.f32 0.0, %v3274
        %v3276 = vpop.f32.mrb[0].mxu0
        %3277 = vmatprep.mubr.bf16.mxu0 0
        %3278 = vmatmul.mubr.bf16.gmra.mrb[0].mxu0 %v3183
        %v3279 = vpop.f32.mrb[0].mxu0
        %v3280 = vadd.f32 0.0, %v3279
        %v3281 = vpop.f32.mrb[0].mxu0
        %v3282 = vpop.f32.mrb[0].mxu0
        %v3283 = vadd.f32 0.0, %v3282
        %v3284 = vpop.f32.mrb[0].mxu0
        %3285 = vmatprep.mubr.bf16.mxu0 0
        %3286 = vmatmul.mubr.bf16.gmra.mrb[0].mxu0 %v3186
        %v3287 = vpop.f32.mrb[0].mxu0
        %v3288 = vadd.f32 0.0, %v3287
        %v3289 = vpop.f32.mrb[0].mxu0
        %v3290 = vpop.f32.mrb[0].mxu0
        %v3291 = vadd.f32 0.0, %v3290
        %v3292 = vpop.f32.mrb[0].mxu0
        %3293 = vmatprep.mubr.bf16.mxu0 0
        %3294 = vmatmul.mubr.bf16.gmra.mrb[0].mxu0 %v3189
        %v3295 = vpop.f32.mrb[0].mxu0
        %v3296 = vadd.f32 0.0, %v3295
        %v3297 = vpop.f32.mrb[0].mxu0
        %v3298 = vpop.f32.mrb[0].mxu0
        %v3299 = vadd.f32 0.0, %v3298
        %v3300 = vpop.f32.mrb[0].mxu0
        %3301 = vmatprep.mubr.bf16.mxu0 0
        %3302 = vmatmul.mubr.bf16.gmra.mrb[0].mxu0 %v3192
        %v3303 = vpop.f32.mrb[0].mxu0
        %v3304 = vadd.f32 0.0, %v3303
        %v3305 = vpop.f32.mrb[0].mxu0
        %v3306 = vpop.f32.mrb[0].mxu0
        %v3307 = vadd.f32 0.0, %v3306
        %v3308 = vpop.f32.mrb[0].mxu0
        %3309 = vmatprep.mubr.bf16.mxu0 0
        %3310 = vmatmul.mubr.bf16.gmra.mrb[0].mxu0 %v3195
        %v3311 = vpop.f32.mrb[0].mxu0
        %v3312 = vadd.f32 0.0, %v3311
        %v3313 = vpop.f32.mrb[0].mxu0
        %v3314 = vpop.f32.mrb[0].mxu0
        %v3315 = vadd.f32 0.0, %v3314
        %v3316 = vpop.f32.mrb[0].mxu0
        %3317 = vmatprep.mubr.bf16.mxu0 0
        %3318 = vmatmul.mubr.bf16.gmra.mrb[0].mxu0 %v3198
        %v3319 = vpop.f32.mrb[0].mxu0
        %v3320 = vadd.f32 0.0, %v3319
        %v3321 = vpop.f32.mrb[0].mxu0
        %v3322 = vpop.f32.mrb[0].mxu0
        %v3323 = vadd.f32 0.0, %v3322
        %v3324 = vpop.f32.mrb[0].mxu0
        %3325 = vmatprep.mubr.bf16.mxu0 0
        %3326 = vmatmul.mubr.bf16.gmra.mrb[0].mxu0 %v3201
        %v3327 = vpop.f32.mrb[0].mxu0
        %v3328 = vadd.f32 0.0, %v3327
        %v3329 = vpop.f32.mrb[0].mxu0
        %v3330 = vpop.f32.mrb[0].mxu0
        %v3331 = vadd.f32 0.0, %v3330
        %v3332 = vpop.f32.mrb[0].mxu0
        %3333 = vmatprep.mubr.bf16.mxu0 0
        %3334 = vmatmul.mubr.bf16.gmra.mrb[0].mxu0 %v3204
        %v3335 = vpop.f32.mrb[0].mxu0
        %v3336 = vadd.f32 0.0, %v3335
        %v3337 = vpop.f32.mrb[0].mxu0
        %v3338 = vpop.f32.mrb[0].mxu0
        %v3339 = vadd.f32 0.0, %v3338
        %v3340 = vpop.f32.mrb[0].mxu0
        %3341 = vmatprep.mubr.bf16.mxu0 0
        %3342 = vmatmul.mubr.bf16.gmra.mrb[0].mxu0 %v3207
        %v3343 = vpop.f32.mrb[0].mxu0
        %v3344 = vadd.f32 0.0, %v3343
        %v3345 = vpop.f32.mrb[0].mxu0
        %v3346 = vpop.f32.mrb[0].mxu0
        %v3347 = vadd.f32 0.0, %v3346
        %v3348 = vpop.f32.mrb[0].mxu0
        %3349 = vmatprep.mubr.bf16.mxu0 0
        %3350 = vmatmul.mubr.bf16.gmra.mrb[0].mxu0 %v3210
        %v3351 = vpop.f32.mrb[0].mxu0
        %v3352 = vadd.f32 0.0, %v3351
        %v3353 = vpop.f32.mrb[0].mxu0
        %v3354 = vpop.f32.mrb[0].mxu0
        %v3355 = vadd.f32 0.0, %v3354
        %v3356 = vpop.f32.mrb[0].mxu0
        %3357 = vmatprep.mubr.bf16.mxu0 0
        %3358 = vmatmul.mubr.bf16.gmra.mrb[0].mxu0 %v3213
        %v3359 = vpop.f32.mrb[0].mxu0
        %v3360 = vadd.f32 0.0, %v3359
        %v3361 = vpop.f32.mrb[0].mxu0
        %v3362 = vpop.f32.mrb[0].mxu0
        %v3363 = vadd.f32 0.0, %v3362
        %v3364 = vpop.f32.mrb[0].mxu0
        %3365 = vmatprep.mubr.bf16.mxu0 0
        %3366 = vmatmul.mubr.bf16.gmra.mrb[0].mxu0 %v3216
        %v3367 = vpop.f32.mrb[0].mxu0
        %v3368 = vadd.f32 0.0, %v3367
        %v3369 = vpop.f32.mrb[0].mxu0
        %v3370 = vpop.f32.mrb[0].mxu0
        %v3371 = vadd.f32 0.0, %v3370
        %v3372 = vpop.f32.mrb[0].mxu0
        %3373 = vmatprep.mubr.bf16.mxu0 0
        %3374 = vmatmul.mubr.bf16.gmra.mrb[0].mxu0 %v3219
        %v3375 = vpop.f32.mrb[0].mxu0
        %v3376 = vadd.f32 0.0, %v3375
        %v3377 = vpop.f32.mrb[0].mxu0
        %v3378 = vpop.f32.mrb[0].mxu0
        %v3379 = vadd.f32 0.0, %v3378
        %v3380 = vpop.f32.mrb[0].mxu0
        %3381 = vdwg.mxu0
        %v3382 = vmul.f32 %v3256, 0.17677669
        %v3383 = vmul.f32 %v3259, 0.17677669
        %v3384 = vmul.f32 %v3264, 0.17677669
        %v3385 = vmul.f32 %v3267, 0.17677669
        %v3386 = vmul.f32 %v3272, 0.17677669
        %v3387 = vmul.f32 %v3275, 0.17677669
        %v3388 = vmul.f32 %v3280, 0.17677669
        %v3389 = vmul.f32 %v3283, 0.17677669
        %v3390 = vmul.f32 %v3288, 0.17677669
        %v3391 = vmul.f32 %v3291, 0.17677669
        %v3392 = vmul.f32 %v3296, 0.17677669
        %v3393 = vmul.f32 %v3299, 0.17677669
        %v3394 = vmul.f32 %v3304, 0.17677669
        %v3395 = vmul.f32 %v3307, 0.17677669
        %v3396 = vmul.f32 %v3312, 0.17677669
        %v3397 = vmul.f32 %v3315, 0.17677669
        %v3398 = vmul.f32 %v3320, 0.17677669
        %v3399 = vmul.f32 %v3323, 0.17677669
        %v3400 = vmul.f32 %v3328, 0.17677669
        %v3401 = vmul.f32 %v3331, 0.17677669
        %v3402 = vmul.f32 %v3336, 0.17677669
        %v3403 = vmul.f32 %v3339, 0.17677669
        %v3404 = vmul.f32 %v3344, 0.17677669
        %v3405 = vmul.f32 %v3347, 0.17677669
        %v3406 = vmul.f32 %v3352, 0.17677669
        %v3407 = vmul.f32 %v3355, 0.17677669
        %v3408 = vmul.f32 %v3360, 0.17677669
        %v3409 = vmul.f32 %v3363, 0.17677669
        %v3410 = vmul.f32 %v3368, 0.17677669
        %v3411 = vmul.f32 %v3371, 0.17677669
        %v3412 = vmul.f32 %v3376, 0.17677669
        %v3413 = vmul.f32 %v3379, 0.17677669
        %s3414 = scalar_lea.vmem %s755, 128 [#allocation5]
        %v3415 = vld [vmem:[%s3414] sm:$0xf]
        %v3416 = vld [vmem:[%s3414 + $0x4] sm:$0xf]
        %v3417 = vld [vmem:[%s3414 + $0x8] sm:$0xf]
        %v3418 = vld [vmem:[%s3414 + $0xc] sm:$0xf]
        %v3419 = vld [vmem:[%s3414 + $0x10] sm:$0xf]
        %v3420 = vld [vmem:[%s3414 + $0x14] sm:$0xf]
        %v3421 = vld [vmem:[%s3414 + $0x18] sm:$0xf]
        %v3422 = vld [vmem:[%s3414 + $0x1c] sm:$0xf]
        %v3423 = vld [vmem:[%s3414 + $0x20] sm:$0xf]
        %v3424 = vld [vmem:[%s3414 + $0x24] sm:$0xf]
        %v3425 = vld [vmem:[%s3414 + $0x28] sm:$0xf]
        %v3426 = vld [vmem:[%s3414 + $0x2c] sm:$0xf]
        %v3427 = vld [vmem:[%s3414 + $0x30] sm:$0xf]
        %v3428 = vld [vmem:[%s3414 + $0x34] sm:$0xf]
        %v3429 = vld [vmem:[%s3414 + $0x38] sm:$0xf]
        %v3430 = vld [vmem:[%s3414 + $0x3c] sm:$0xf]
        %v3431 = vld [vmem:[%s3414 + $0x40] sm:$0xf]
        %v3432 = vld [vmem:[%s3414 + $0x44] sm:$0xf]
        %v3433 = vld [vmem:[%s3414 + $0x48] sm:$0xf]
        %v3434 = vld [vmem:[%s3414 + $0x4c] sm:$0xf]
        %v3435 = vld [vmem:[%s3414 + $0x50] sm:$0xf]
        %v3436 = vld [vmem:[%s3414 + $0x54] sm:$0xf]
        %v3437 = vld [vmem:[%s3414 + $0x58] sm:$0xf]
        %v3438 = vld [vmem:[%s3414 + $0x5c] sm:$0xf]
        %v3439 = vld [vmem:[%s3414 + $0x60] sm:$0xf]
        %v3440 = vld [vmem:[%s3414 + $0x64] sm:$0xf]
        %v3441 = vld [vmem:[%s3414 + $0x68] sm:$0xf]
        %v3442 = vld [vmem:[%s3414 + $0x6c] sm:$0xf]
        %v3443 = vld [vmem:[%s3414 + $0x70] sm:$0xf]
        %v3444 = vld [vmem:[%s3414 + $0x74] sm:$0xf]
        %v3445 = vld [vmem:[%s3414 + $0x78] sm:$0xf]
        %v3446 = vld [vmem:[%s3414 + $0x7c] sm:$0xf]
        %v3479 = vunpack.c.l.b16 %v3415
        %v3480 = vunpack.c.l.b16 %v3416
        %v3481 = vunpack.c.l.b16 %v3417
        %v3482 = vunpack.c.l.b16 %v3418
        %v3483 = vunpack.c.l.b16 %v3419
        %v3484 = vunpack.c.l.b16 %v3420
        %v3485 = vunpack.c.l.b16 %v3421
        %v3486 = vunpack.c.l.b16 %v3422
        %v3487 = vunpack.c.l.b16 %v3423
        %v3488 = vunpack.c.l.b16 %v3424
        %v3489 = vunpack.c.l.b16 %v3425
        %v3490 = vunpack.c.l.b16 %v3426
        %v3491 = vunpack.c.l.b16 %v3427
        %v3492 = vunpack.c.l.b16 %v3428
        %v3493 = vunpack.c.l.b16 %v3429
        %v3494 = vunpack.c.l.b16 %v3430
        %v3495 = vunpack.c.l.b16 %v3431
        %v3496 = vunpack.c.l.b16 %v3432
        %v3497 = vunpack.c.l.b16 %v3433
        %v3498 = vunpack.c.l.b16 %v3434
        %v3499 = vunpack.c.l.b16 %v3435
        %v3500 = vunpack.c.l.b16 %v3436
        %v3501 = vunpack.c.l.b16 %v3437
        %v3502 = vunpack.c.l.b16 %v3438
        %v3503 = vunpack.c.l.b16 %v3439
        %v3504 = vunpack.c.l.b16 %v3440
        %v3505 = vunpack.c.l.b16 %v3441
        %v3506 = vunpack.c.l.b16 %v3442
        %v3507 = vunpack.c.l.b16 %v3443
        %v3508 = vunpack.c.l.b16 %v3444
        %v3509 = vunpack.c.l.b16 %v3445
        %v3510 = vunpack.c.l.b16 %v3446
        %v3511 = vpack.c.b16 %v3480, %v3479
        %v3512 = vpack.c.b16 %v3482, %v3481
        %v3513 = vpack.c.b16 %v3484, %v3483
        %v3514 = vpack.c.b16 %v3486, %v3485
        %v3515 = vpack.c.b16 %v3488, %v3487
        %v3516 = vpack.c.b16 %v3490, %v3489
        %v3517 = vpack.c.b16 %v3492, %v3491
        %v3518 = vpack.c.b16 %v3494, %v3493
        %v3519 = vpack.c.b16 %v3496, %v3495
        %v3520 = vpack.c.b16 %v3498, %v3497
        %v3521 = vpack.c.b16 %v3500, %v3499
        %v3522 = vpack.c.b16 %v3502, %v3501
        %v3523 = vpack.c.b16 %v3504, %v3503
        %v3524 = vpack.c.b16 %v3506, %v3505
        %v3525 = vpack.c.b16 %v3508, %v3507
        %v3526 = vpack.c.b16 %v3510, %v3509
        %v3528 = vsel %vm948, %v3511, 0
        %v3531 = vsel %vm948, %v3512, 0
        %v3534 = vsel %vm948, %v3513, 0
        %v3537 = vsel %vm948, %v3514, 0
        %v3540 = vsel %vm948, %v3515, 0
        %v3543 = vsel %vm948, %v3516, 0
        %v3546 = vsel %vm948, %v3517, 0
        %v3549 = vsel %vm948, %v3518, 0
        %v3552 = vsel %vm948, %v3519, 0
        %v3555 = vsel %vm948, %v3520, 0
        %v3558 = vsel %vm948, %v3521, 0
        %v3561 = vsel %vm948, %v3522, 0
        %v3564 = vsel %vm948, %v3523, 0
        %v3567 = vsel %vm948, %v3524, 0
        %v3570 = vsel %vm948, %v3525, 0
        %v3573 = vsel %vm948, %v3526, 0
        %3575 = vmatprep.subr.bf16.mxu0 0
        %3576 = vmatpush1.bf16.msra.mxu0 %v2691
        %3577 = vmatprep.subr.bf16.mxu0 0
        %3578 = vmatpush1.bf16.msra.mxu0 %v2692
        %3579 = vmatprep.subr.bf16.mxu0 0
        %3580 = vmatpush1.bf16.msra.mxu0 %v2693
        %3581 = vmatprep.subr.bf16.mxu0 0
        %3582 = vmatpush1.bf16.msra.mxu0 %v2694
        %3583 = vmatprep.subr.bf16.mxu0 0
        %3584 = vmatpush1.bf16.msra.mxu0 0
        %3585 = vmatprep.subr.bf16.mxu0 0
        %3586 = vmatpush1.bf16.msra.mxu0 0
        %3587 = vmatprep.subr.bf16.mxu0 0
        %3588 = vmatpush1.bf16.msra.mxu0 0
        %3589 = vmatprep.subr.bf16.mxu0 0
        %3590 = vmatpush1.bf16.msra.mxu0 0
        %3591 = vmatprep.subr.bf16.mxu0 0
        %3592 = vmatpush1.bf16.msra.mxu0 0
        %3593 = vmatprep.subr.bf16.mxu0 0
        %3594 = vmatpush1.bf16.msra.mxu0 0
        %3595 = vmatprep.subr.bf16.mxu0 0
        %3596 = vmatpush1.bf16.msra.mxu0 0
        %3597 = vmatprep.subr.bf16.mxu0 0
        %3598 = vmatpush1.bf16.msra.mxu0 0
        %3599 = vmatprep.subr.bf16.mxu0 0
        %3600 = vmatpush1.bf16.msra.mxu0 0
        %3601 = vmatprep.subr.bf16.mxu0 0
        %3602 = vmatpush1.bf16.msra.mxu0 0
        %3603 = vmatprep.subr.bf16.mxu0 0
        %3604 = vmatpush1.bf16.msra.mxu0 0
        %3605 = vmatprep.subr.bf16.mxu0 0
        %3606 = vmatpush1.bf16.msra.mxu0 0
        %3607 = vmatprep.mubr.bf16.mxu0 0
        %3608 = vmatmul.mubr.bf16.gmra.mrb[0].mxu0 %v3528
        %v3609 = vpop.f32.mrb[0].mxu0
        %v3610 = vadd.f32 0.0, %v3609
        %v3611 = vpop.f32.mrb[0].mxu0
        %v3612 = vpop.f32.mrb[0].mxu0
        %v3613 = vadd.f32 0.0, %v3612
        %v3614 = vpop.f32.mrb[0].mxu0
        %3615 = vmatprep.mubr.bf16.mxu0 0
        %3616 = vmatmul.mubr.bf16.gmra.mrb[0].mxu0 %v3531
        %v3617 = vpop.f32.mrb[0].mxu0
        %v3618 = vadd.f32 0.0, %v3617
        %v3619 = vpop.f32.mrb[0].mxu0
        %v3620 = vpop.f32.mrb[0].mxu0
        %v3621 = vadd.f32 0.0, %v3620
        %v3622 = vpop.f32.mrb[0].mxu0
        %3623 = vmatprep.mubr.bf16.mxu0 0
        %3624 = vmatmul.mubr.bf16.gmra.mrb[0].mxu0 %v3534
        %v3625 = vpop.f32.mrb[0].mxu0
        %v3626 = vadd.f32 0.0, %v3625
        %v3627 = vpop.f32.mrb[0].mxu0
        %v3628 = vpop.f32.mrb[0].mxu0
        %v3629 = vadd.f32 0.0, %v3628
        %v3630 = vpop.f32.mrb[0].mxu0
        %3631 = vmatprep.mubr.bf16.mxu0 0
        %3632 = vmatmul.mubr.bf16.gmra.mrb[0].mxu0 %v3537
        %v3633 = vpop.f32.mrb[0].mxu0
        %v3634 = vadd.f32 0.0, %v3633
        %v3635 = vpop.f32.mrb[0].mxu0
        %v3636 = vpop.f32.mrb[0].mxu0
        %v3637 = vadd.f32 0.0, %v3636
        %v3638 = vpop.f32.mrb[0].mxu0
        %3639 = vmatprep.mubr.bf16.mxu0 0
        %3640 = vmatmul.mubr.bf16.gmra.mrb[0].mxu0 %v3540
        %v3641 = vpop.f32.mrb[0].mxu0
        %v3642 = vadd.f32 0.0, %v3641
        %v3643 = vpop.f32.mrb[0].mxu0
        %v3644 = vpop.f32.mrb[0].mxu0
        %v3645 = vadd.f32 0.0, %v3644
        %v3646 = vpop.f32.mrb[0].mxu0
        %3647 = vmatprep.mubr.bf16.mxu0 0
        %3648 = vmatmul.mubr.bf16.gmra.mrb[0].mxu0 %v3543
        %v3649 = vpop.f32.mrb[0].mxu0
        %v3650 = vadd.f32 0.0, %v3649
        %v3651 = vpop.f32.mrb[0].mxu0
        %v3652 = vpop.f32.mrb[0].mxu0
        %v3653 = vadd.f32 0.0, %v3652
        %v3654 = vpop.f32.mrb[0].mxu0
        %3655 = vmatprep.mubr.bf16.mxu0 0
        %3656 = vmatmul.mubr.bf16.gmra.mrb[0].mxu0 %v3546
        %v3657 = vpop.f32.mrb[0].mxu0
        %v3658 = vadd.f32 0.0, %v3657
        %v3659 = vpop.f32.mrb[0].mxu0
        %v3660 = vpop.f32.mrb[0].mxu0
        %v3661 = vadd.f32 0.0, %v3660
        %v3662 = vpop.f32.mrb[0].mxu0
        %3663 = vmatprep.mubr.bf16.mxu0 0
        %3664 = vmatmul.mubr.bf16.gmra.mrb[0].mxu0 %v3549
        %v3665 = vpop.f32.mrb[0].mxu0
        %v3666 = vadd.f32 0.0, %v3665
        %v3667 = vpop.f32.mrb[0].mxu0
        %v3668 = vpop.f32.mrb[0].mxu0
        %v3669 = vadd.f32 0.0, %v3668
        %v3670 = vpop.f32.mrb[0].mxu0
        %3671 = vmatprep.mubr.bf16.mxu0 0
        %3672 = vmatmul.mubr.bf16.gmra.mrb[0].mxu0 %v3552
        %v3673 = vpop.f32.mrb[0].mxu0
        %v3674 = vadd.f32 0.0, %v3673
        %v3675 = vpop.f32.mrb[0].mxu0
        %v3676 = vpop.f32.mrb[0].mxu0
        %v3677 = vadd.f32 0.0, %v3676
        %v3678 = vpop.f32.mrb[0].mxu0
        %3679 = vmatprep.mubr.bf16.mxu0 0
        %3680 = vmatmul.mubr.bf16.gmra.mrb[0].mxu0 %v3555
        %v3681 = vpop.f32.mrb[0].mxu0
        %v3682 = vadd.f32 0.0, %v3681
        %v3683 = vpop.f32.mrb[0].mxu0
        %v3684 = vpop.f32.mrb[0].mxu0
        %v3685 = vadd.f32 0.0, %v3684
        %v3686 = vpop.f32.mrb[0].mxu0
        %3687 = vmatprep.mubr.bf16.mxu0 0
        %3688 = vmatmul.mubr.bf16.gmra.mrb[0].mxu0 %v3558
        %v3689 = vpop.f32.mrb[0].mxu0
        %v3690 = vadd.f32 0.0, %v3689
        %v3691 = vpop.f32.mrb[0].mxu0
        %v3692 = vpop.f32.mrb[0].mxu0
        %v3693 = vadd.f32 0.0, %v3692
        %v3694 = vpop.f32.mrb[0].mxu0
        %3695 = vmatprep.mubr.bf16.mxu0 0
        %3696 = vmatmul.mubr.bf16.gmra.mrb[0].mxu0 %v3561
        %v3697 = vpop.f32.mrb[0].mxu0
        %v3698 = vadd.f32 0.0, %v3697
        %v3699 = vpop.f32.mrb[0].mxu0
        %v3700 = vpop.f32.mrb[0].mxu0
        %v3701 = vadd.f32 0.0, %v3700
        %v3702 = vpop.f32.mrb[0].mxu0
        %3703 = vmatprep.mubr.bf16.mxu0 0
        %3704 = vmatmul.mubr.bf16.gmra.mrb[0].mxu0 %v3564
        %v3705 = vpop.f32.mrb[0].mxu0
        %v3706 = vadd.f32 0.0, %v3705
        %v3707 = vpop.f32.mrb[0].mxu0
        %v3708 = vpop.f32.mrb[0].mxu0
        %v3709 = vadd.f32 0.0, %v3708
        %v3710 = vpop.f32.mrb[0].mxu0
        %3711 = vmatprep.mubr.bf16.mxu0 0
        %3712 = vmatmul.mubr.bf16.gmra.mrb[0].mxu0 %v3567
        %v3713 = vpop.f32.mrb[0].mxu0
        %v3714 = vadd.f32 0.0, %v3713
        %v3715 = vpop.f32.mrb[0].mxu0
        %v3716 = vpop.f32.mrb[0].mxu0
        %v3717 = vadd.f32 0.0, %v3716
        %v3718 = vpop.f32.mrb[0].mxu0
        %3719 = vmatprep.mubr.bf16.mxu0 0
        %3720 = vmatmul.mubr.bf16.gmra.mrb[0].mxu0 %v3570
        %v3721 = vpop.f32.mrb[0].mxu0
        %v3722 = vadd.f32 0.0, %v3721
        %v3723 = vpop.f32.mrb[0].mxu0
        %v3724 = vpop.f32.mrb[0].mxu0
        %v3725 = vadd.f32 0.0, %v3724
        %v3726 = vpop.f32.mrb[0].mxu0
        %3727 = vmatprep.mubr.bf16.mxu0 0
        %3728 = vmatmul.mubr.bf16.gmra.mrb[0].mxu0 %v3573
        %v3729 = vpop.f32.mrb[0].mxu0
        %v3730 = vadd.f32 0.0, %v3729
        %v3731 = vpop.f32.mrb[0].mxu0
        %v3732 = vpop.f32.mrb[0].mxu0
        %v3733 = vadd.f32 0.0, %v3732
        %v3734 = vpop.f32.mrb[0].mxu0
        %3735 = vdwg.mxu0
        %3736 = vmatprep.subr.bf16.mxu0 0
        %3737 = vmatpush1.bf16.msra.mxu0 %v2932
        %3738 = vmatprep.subr.bf16.mxu0 0
        %3739 = vmatpush1.bf16.msra.mxu0 %v2933
        %3740 = vmatprep.subr.bf16.mxu0 0
        %3741 = vmatpush1.bf16.msra.mxu0 %v2934
        %3742 = vmatprep.subr.bf16.mxu0 0
        %3743 = vmatpush1.bf16.msra.mxu0 %v2935
        %3744 = vmatprep.subr.bf16.mxu0 0
        %3745 = vmatpush1.bf16.msra.mxu0 0
        %3746 = vmatprep.subr.bf16.mxu0 0
        %3747 = vmatpush1.bf16.msra.mxu0 0
        %3748 = vmatprep.subr.bf16.mxu0 0
        %3749 = vmatpush1.bf16.msra.mxu0 0
        %3750 = vmatprep.subr.bf16.mxu0 0
        %3751 = vmatpush1.bf16.msra.mxu0 0
        %3752 = vmatprep.subr.bf16.mxu0 0
        %3753 = vmatpush1.bf16.msra.mxu0 0
        %3754 = vmatprep.subr.bf16.mxu0 0
        %3755 = vmatpush1.bf16.msra.mxu0 0
        %3756 = vmatprep.subr.bf16.mxu0 0
        %3757 = vmatpush1.bf16.msra.mxu0 0
        %3758 = vmatprep.subr.bf16.mxu0 0
        %3759 = vmatpush1.bf16.msra.mxu0 0
        %3760 = vmatprep.subr.bf16.mxu0 0
        %3761 = vmatpush1.bf16.msra.mxu0 0
        %3762 = vmatprep.subr.bf16.mxu0 0
        %3763 = vmatpush1.bf16.msra.mxu0 0
        %3764 = vmatprep.subr.bf16.mxu0 0
        %3765 = vmatpush1.bf16.msra.mxu0 0
        %3766 = vmatprep.subr.bf16.mxu0 0
        %3767 = vmatpush1.bf16.msra.mxu0 0
        %3768 = vmatprep.mubr.bf16.mxu0 0
        %3769 = vmatmul.mubr.bf16.gmra.mrb[0].mxu0 %v3528
        %v3770 = vpop.f32.mrb[0].mxu0
        %v3771 = vadd.f32 0.0, %v3770
        %v3772 = vpop.f32.mrb[0].mxu0
        %v3773 = vpop.f32.mrb[0].mxu0
        %v3774 = vadd.f32 0.0, %v3773
        %v3775 = vpop.f32.mrb[0].mxu0
        %3776 = vmatprep.mubr.bf16.mxu0 0
        %3777 = vmatmul.mubr.bf16.gmra.mrb[0].mxu0 %v3531
        %v3778 = vpop.f32.mrb[0].mxu0
        %v3779 = vadd.f32 0.0, %v3778
        %v3780 = vpop.f32.mrb[0].mxu0
        %v3781 = vpop.f32.mrb[0].mxu0
        %v3782 = vadd.f32 0.0, %v3781
        %v3783 = vpop.f32.mrb[0].mxu0
        %3784 = vmatprep.mubr.bf16.mxu0 0
        %3785 = vmatmul.mubr.bf16.gmra.mrb[0].mxu0 %v3534
        %v3786 = vpop.f32.mrb[0].mxu0
        %v3787 = vadd.f32 0.0, %v3786
        %v3788 = vpop.f32.mrb[0].mxu0
        %v3789 = vpop.f32.mrb[0].mxu0
        %v3790 = vadd.f32 0.0, %v3789
        %v3791 = vpop.f32.mrb[0].mxu0
        %3792 = vmatprep.mubr.bf16.mxu0 0
        %3793 = vmatmul.mubr.bf16.gmra.mrb[0].mxu0 %v3537
        %v3794 = vpop.f32.mrb[0].mxu0
        %v3795 = vadd.f32 0.0, %v3794
        %v3796 = vpop.f32.mrb[0].mxu0
        %v3797 = vpop.f32.mrb[0].mxu0
        %v3798 = vadd.f32 0.0, %v3797
        %v3799 = vpop.f32.mrb[0].mxu0
        %3800 = vmatprep.mubr.bf16.mxu0 0
        %3801 = vmatmul.mubr.bf16.gmra.mrb[0].mxu0 %v3540
        %v3802 = vpop.f32.mrb[0].mxu0
        %v3803 = vadd.f32 0.0, %v3802
        %v3804 = vpop.f32.mrb[0].mxu0
        %v3805 = vpop.f32.mrb[0].mxu0
        %v3806 = vadd.f32 0.0, %v3805
        %v3807 = vpop.f32.mrb[0].mxu0
        %3808 = vmatprep.mubr.bf16.mxu0 0
        %3809 = vmatmul.mubr.bf16.gmra.mrb[0].mxu0 %v3543
        %v3810 = vpop.f32.mrb[0].mxu0
        %v3811 = vadd.f32 0.0, %v3810
        %v3812 = vpop.f32.mrb[0].mxu0
        %v3813 = vpop.f32.mrb[0].mxu0
        %v3814 = vadd.f32 0.0, %v3813
        %v3815 = vpop.f32.mrb[0].mxu0
        %3816 = vmatprep.mubr.bf16.mxu0 0
        %3817 = vmatmul.mubr.bf16.gmra.mrb[0].mxu0 %v3546
        %v3818 = vpop.f32.mrb[0].mxu0
        %v3819 = vadd.f32 0.0, %v3818
        %v3820 = vpop.f32.mrb[0].mxu0
        %v3821 = vpop.f32.mrb[0].mxu0
        %v3822 = vadd.f32 0.0, %v3821
        %v3823 = vpop.f32.mrb[0].mxu0
        %3824 = vmatprep.mubr.bf16.mxu0 0
        %3825 = vmatmul.mubr.bf16.gmra.mrb[0].mxu0 %v3549
        %v3826 = vpop.f32.mrb[0].mxu0
        %v3827 = vadd.f32 0.0, %v3826
        %v3828 = vpop.f32.mrb[0].mxu0
        %v3829 = vpop.f32.mrb[0].mxu0
        %v3830 = vadd.f32 0.0, %v3829
        %v3831 = vpop.f32.mrb[0].mxu0
        %3832 = vmatprep.mubr.bf16.mxu0 0
        %3833 = vmatmul.mubr.bf16.gmra.mrb[0].mxu0 %v3552
        %v3834 = vpop.f32.mrb[0].mxu0
        %v3835 = vadd.f32 0.0, %v3834
        %v3836 = vpop.f32.mrb[0].mxu0
        %v3837 = vpop.f32.mrb[0].mxu0
        %v3838 = vadd.f32 0.0, %v3837
        %v3839 = vpop.f32.mrb[0].mxu0
        %3840 = vmatprep.mubr.bf16.mxu0 0
        %3841 = vmatmul.mubr.bf16.gmra.mrb[0].mxu0 %v3555
        %v3842 = vpop.f32.mrb[0].mxu0
        %v3843 = vadd.f32 0.0, %v3842
        %v3844 = vpop.f32.mrb[0].mxu0
        %v3845 = vpop.f32.mrb[0].mxu0
        %v3846 = vadd.f32 0.0, %v3845
        %v3847 = vpop.f32.mrb[0].mxu0
        %3848 = vmatprep.mubr.bf16.mxu0 0
        %3849 = vmatmul.mubr.bf16.gmra.mrb[0].mxu0 %v3558
        %v3850 = vpop.f32.mrb[0].mxu0
        %v3851 = vadd.f32 0.0, %v3850
        %v3852 = vpop.f32.mrb[0].mxu0
        %v3853 = vpop.f32.mrb[0].mxu0
        %v3854 = vadd.f32 0.0, %v3853
        %v3855 = vpop.f32.mrb[0].mxu0
        %3856 = vmatprep.mubr.bf16.mxu0 0
        %3857 = vmatmul.mubr.bf16.gmra.mrb[0].mxu0 %v3561
        %v3858 = vpop.f32.mrb[0].mxu0
        %v3859 = vadd.f32 0.0, %v3858
        %v3860 = vpop.f32.mrb[0].mxu0
        %v3861 = vpop.f32.mrb[0].mxu0
        %v3862 = vadd.f32 0.0, %v3861
        %v3863 = vpop.f32.mrb[0].mxu0
        %3864 = vmatprep.mubr.bf16.mxu0 0
        %3865 = vmatmul.mubr.bf16.gmra.mrb[0].mxu0 %v3564
        %v3866 = vpop.f32.mrb[0].mxu0
        %v3867 = vadd.f32 0.0, %v3866
        %v3868 = vpop.f32.mrb[0].mxu0
        %v3869 = vpop.f32.mrb[0].mxu0
        %v3870 = vadd.f32 0.0, %v3869
        %v3871 = vpop.f32.mrb[0].mxu0
        %3872 = vmatprep.mubr.bf16.mxu0 0
        %3873 = vmatmul.mubr.bf16.gmra.mrb[0].mxu0 %v3567
        %v3874 = vpop.f32.mrb[0].mxu0
        %v3875 = vadd.f32 0.0, %v3874
        %v3876 = vpop.f32.mrb[0].mxu0
        %v3877 = vpop.f32.mrb[0].mxu0
        %v3878 = vadd.f32 0.0, %v3877
        %v3879 = vpop.f32.mrb[0].mxu0
        %3880 = vmatprep.mubr.bf16.mxu0 0
        %3881 = vmatmul.mubr.bf16.gmra.mrb[0].mxu0 %v3570
        %v3882 = vpop.f32.mrb[0].mxu0
        %v3883 = vadd.f32 0.0, %v3882
        %v3884 = vpop.f32.mrb[0].mxu0
        %v3885 = vpop.f32.mrb[0].mxu0
        %v3886 = vadd.f32 0.0, %v3885
        %v3887 = vpop.f32.mrb[0].mxu0
        %3888 = vmatprep.mubr.bf16.mxu0 0
        %3889 = vmatmul.mubr.bf16.gmra.mrb[0].mxu0 %v3573
        %v3890 = vpop.f32.mrb[0].mxu0
        %v3891 = vadd.f32 0.0, %v3890
        %v3892 = vpop.f32.mrb[0].mxu0
        %v3893 = vpop.f32.mrb[0].mxu0
        %v3894 = vadd.f32 0.0, %v3893
        %v3895 = vpop.f32.mrb[0].mxu0
        %3896 = vdwg.mxu0
        %v3897 = vmul.f32 %v2420, %v3610
        %v3898 = vmul.f32 %v2423, %v3613
        %v3899 = vmul.f32 %v2428, %v3618
        %v3900 = vmul.f32 %v2431, %v3621
        %v3901 = vmul.f32 %v2436, %v3626
        %v3902 = vmul.f32 %v2439, %v3629
        %v3903 = vmul.f32 %v2444, %v3634
        %v3904 = vmul.f32 %v2447, %v3637
        %v3905 = vmul.f32 %v2452, %v3642
        %v3906 = vmul.f32 %v2455, %v3645
        %v3907 = vmul.f32 %v2460, %v3650
        %v3908 = vmul.f32 %v2463, %v3653
        %v3909 = vmul.f32 %v2468, %v3658
        %v3910 = vmul.f32 %v2471, %v3661
        %v3911 = vmul.f32 %v2476, %v3666
        %v3912 = vmul.f32 %v2479, %v3669
        %v3913 = vmul.f32 %v2484, %v3674
        %v3914 = vmul.f32 %v2487, %v3677
        %v3915 = vmul.f32 %v2492, %v3682
        %v3916 = vmul.f32 %v2495, %v3685
        %v3917 = vmul.f32 %v2500, %v3690
        %v3918 = vmul.f32 %v2503, %v3693
        %v3919 = vmul.f32 %v2508, %v3698
        %v3920 = vmul.f32 %v2511, %v3701
        %v3921 = vmul.f32 %v2516, %v3706
        %v3922 = vmul.f32 %v2519, %v3709
        %v3923 = vmul.f32 %v2524, %v3714
        %v3924 = vmul.f32 %v2527, %v3717
        %v3925 = vmul.f32 %v2532, %v3722
        %v3926 = vmul.f32 %v2535, %v3725
        %v3927 = vmul.f32 %v2540, %v3730
        %v3928 = vmul.f32 %v2543, %v3733
        %v3929 = vpack.c.bf16 %v3898, %v3897
        %v3930 = vpack.c.bf16 %v3900, %v3899
        %v3931 = vpack.c.bf16 %v3902, %v3901
        %v3932 = vpack.c.bf16 %v3904, %v3903
        %v3933 = vpack.c.bf16 %v3906, %v3905
        %v3934 = vpack.c.bf16 %v3908, %v3907
        %v3935 = vpack.c.bf16 %v3910, %v3909
        %v3936 = vpack.c.bf16 %v3912, %v3911
        %v3937 = vpack.c.bf16 %v3914, %v3913
        %v3938 = vpack.c.bf16 %v3916, %v3915
        %v3939 = vpack.c.bf16 %v3918, %v3917
        %v3940 = vpack.c.bf16 %v3920, %v3919
        %v3941 = vpack.c.bf16 %v3922, %v3921
        %v3942 = vpack.c.bf16 %v3924, %v3923
        %v3943 = vpack.c.bf16 %v3926, %v3925
        %v3944 = vpack.c.bf16 %v3928, %v3927
        %v3946 = vsel %vm948, %v3929, 0
        %v3949 = vsel %vm948, %v3930, 0
        %v3952 = vsel %vm948, %v3931, 0
        %v3955 = vsel %vm948, %v3932, 0
        %v3958 = vsel %vm948, %v3933, 0
        %v3961 = vsel %vm948, %v3934, 0
        %v3964 = vsel %vm948, %v3935, 0
        %v3967 = vsel %vm948, %v3936, 0
        %v3970 = vsel %vm948, %v3937, 0
        %v3973 = vsel %vm948, %v3938, 0
        %v3976 = vsel %vm948, %v3939, 0
        %v3979 = vsel %vm948, %v3940, 0
        %v3982 = vsel %vm948, %v3941, 0
        %v3985 = vsel %vm948, %v3942, 0
        %v3988 = vsel %vm948, %v3943, 0
        %v3991 = vsel %vm948, %v3944, 0
        %3993 = vmatprep.subr.bf16.mxu0 0
        %3994 = vmatpush1.bf16.msra.mxu0 %v3165
        %3995 = vmatprep.subr.bf16.mxu0 0
        %3996 = vmatpush1.bf16.msra.mxu0 %v3166
        %3997 = vmatprep.subr.bf16.mxu0 0
        %3998 = vmatpush1.bf16.msra.mxu0 %v3167
        %3999 = vmatprep.subr.bf16.mxu0 0
        %4000 = vmatpush1.bf16.msra.mxu0 %v3168
        %4001 = vmatprep.subr.bf16.mxu0 0
        %4002 = vmatpush1.bf16.msra.mxu0 0
        %4003 = vmatprep.subr.bf16.mxu0 0
        %4004 = vmatpush1.bf16.msra.mxu0 0
        %4005 = vmatprep.subr.bf16.mxu0 0
        %4006 = vmatpush1.bf16.msra.mxu0 0
        %4007 = vmatprep.subr.bf16.mxu0 0
        %4008 = vmatpush1.bf16.msra.mxu0 0
        %4009 = vmatprep.subr.bf16.mxu0 0
        %4010 = vmatpush1.bf16.msra.mxu0 0
        %4011 = vmatprep.subr.bf16.mxu0 0
        %4012 = vmatpush1.bf16.msra.mxu0 0
        %4013 = vmatprep.subr.bf16.mxu0 0
        %4014 = vmatpush1.bf16.msra.mxu0 0
        %4015 = vmatprep.subr.bf16.mxu0 0
        %4016 = vmatpush1.bf16.msra.mxu0 0
        %4017 = vmatprep.subr.bf16.mxu0 0
        %4018 = vmatpush1.bf16.msra.mxu0 0
        %4019 = vmatprep.subr.bf16.mxu0 0
        %4020 = vmatpush1.bf16.msra.mxu0 0
        %4021 = vmatprep.subr.bf16.mxu0 0
        %4022 = vmatpush1.bf16.msra.mxu0 0
        %4023 = vmatprep.subr.bf16.mxu0 0
        %4024 = vmatpush1.bf16.msra.mxu0 0
        %4025 = vmatprep.mubr.bf16.mxu0 0
        %4026 = vmatmul.mubr.bf16.gmra.mrb[0].mxu0 %v3946
        %v4027 = vpop.f32.mrb[0].mxu0
        %v4028 = vadd.f32 0.0, %v4027
        %v4029 = vpop.f32.mrb[0].mxu0
        %v4030 = vpop.f32.mrb[0].mxu0
        %v4031 = vadd.f32 0.0, %v4030
        %v4032 = vpop.f32.mrb[0].mxu0
        %4033 = vmatprep.mubr.bf16.mxu0 0
        %4034 = vmatmul.mubr.bf16.gmra.mrb[0].mxu0 %v3949
        %v4035 = vpop.f32.mrb[0].mxu0
        %v4036 = vadd.f32 0.0, %v4035
        %v4037 = vpop.f32.mrb[0].mxu0
        %v4038 = vpop.f32.mrb[0].mxu0
        %v4039 = vadd.f32 0.0, %v4038
        %v4040 = vpop.f32.mrb[0].mxu0
        %4041 = vmatprep.mubr.bf16.mxu0 0
        %4042 = vmatmul.mubr.bf16.gmra.mrb[0].mxu0 %v3952
        %v4043 = vpop.f32.mrb[0].mxu0
        %v4044 = vadd.f32 0.0, %v4043
        %v4045 = vpop.f32.mrb[0].mxu0
        %v4046 = vpop.f32.mrb[0].mxu0
        %v4047 = vadd.f32 0.0, %v4046
        %v4048 = vpop.f32.mrb[0].mxu0
        %4049 = vmatprep.mubr.bf16.mxu0 0
        %4050 = vmatmul.mubr.bf16.gmra.mrb[0].mxu0 %v3955
        %v4051 = vpop.f32.mrb[0].mxu0
        %v4052 = vadd.f32 0.0, %v4051
        %v4053 = vpop.f32.mrb[0].mxu0
        %v4054 = vpop.f32.mrb[0].mxu0
        %v4055 = vadd.f32 0.0, %v4054
        %v4056 = vpop.f32.mrb[0].mxu0
        %4057 = vmatprep.mubr.bf16.mxu0 0
        %4058 = vmatmul.mubr.bf16.gmra.mrb[0].mxu0 %v3958
        %v4059 = vpop.f32.mrb[0].mxu0
        %v4060 = vadd.f32 0.0, %v4059
        %v4061 = vpop.f32.mrb[0].mxu0
        %v4062 = vpop.f32.mrb[0].mxu0
        %v4063 = vadd.f32 0.0, %v4062
        %v4064 = vpop.f32.mrb[0].mxu0
        %4065 = vmatprep.mubr.bf16.mxu0 0
        %4066 = vmatmul.mubr.bf16.gmra.mrb[0].mxu0 %v3961
        %v4067 = vpop.f32.mrb[0].mxu0
        %v4068 = vadd.f32 0.0, %v4067
        %v4069 = vpop.f32.mrb[0].mxu0
        %v4070 = vpop.f32.mrb[0].mxu0
        %v4071 = vadd.f32 0.0, %v4070
        %v4072 = vpop.f32.mrb[0].mxu0
        %4073 = vmatprep.mubr.bf16.mxu0 0
        %4074 = vmatmul.mubr.bf16.gmra.mrb[0].mxu0 %v3964
        %v4075 = vpop.f32.mrb[0].mxu0
        %v4076 = vadd.f32 0.0, %v4075
        %v4077 = vpop.f32.mrb[0].mxu0
        %v4078 = vpop.f32.mrb[0].mxu0
        %v4079 = vadd.f32 0.0, %v4078
        %v4080 = vpop.f32.mrb[0].mxu0
        %4081 = vmatprep.mubr.bf16.mxu0 0
        %4082 = vmatmul.mubr.bf16.gmra.mrb[0].mxu0 %v3967
        %v4083 = vpop.f32.mrb[0].mxu0
        %v4084 = vadd.f32 0.0, %v4083
        %v4085 = vpop.f32.mrb[0].mxu0
        %v4086 = vpop.f32.mrb[0].mxu0
        %v4087 = vadd.f32 0.0, %v4086
        %v4088 = vpop.f32.mrb[0].mxu0
        %4089 = vmatprep.mubr.bf16.mxu0 0
        %4090 = vmatmul.mubr.bf16.gmra.mrb[0].mxu0 %v3970
        %v4091 = vpop.f32.mrb[0].mxu0
        %v4092 = vadd.f32 0.0, %v4091
        %v4093 = vpop.f32.mrb[0].mxu0
        %v4094 = vpop.f32.mrb[0].mxu0
        %v4095 = vadd.f32 0.0, %v4094
        %v4096 = vpop.f32.mrb[0].mxu0
        %4097 = vmatprep.mubr.bf16.mxu0 0
        %4098 = vmatmul.mubr.bf16.gmra.mrb[0].mxu0 %v3973
        %v4099 = vpop.f32.mrb[0].mxu0
        %v4100 = vadd.f32 0.0, %v4099
        %v4101 = vpop.f32.mrb[0].mxu0
        %v4102 = vpop.f32.mrb[0].mxu0
        %v4103 = vadd.f32 0.0, %v4102
        %v4104 = vpop.f32.mrb[0].mxu0
        %4105 = vmatprep.mubr.bf16.mxu0 0
        %4106 = vmatmul.mubr.bf16.gmra.mrb[0].mxu0 %v3976
        %v4107 = vpop.f32.mrb[0].mxu0
        %v4108 = vadd.f32 0.0, %v4107
        %v4109 = vpop.f32.mrb[0].mxu0
        %v4110 = vpop.f32.mrb[0].mxu0
        %v4111 = vadd.f32 0.0, %v4110
        %v4112 = vpop.f32.mrb[0].mxu0
        %4113 = vmatprep.mubr.bf16.mxu0 0
        %4114 = vmatmul.mubr.bf16.gmra.mrb[0].mxu0 %v3979
        %v4115 = vpop.f32.mrb[0].mxu0
        %v4116 = vadd.f32 0.0, %v4115
        %v4117 = vpop.f32.mrb[0].mxu0
        %v4118 = vpop.f32.mrb[0].mxu0
        %v4119 = vadd.f32 0.0, %v4118
        %v4120 = vpop.f32.mrb[0].mxu0
        %4121 = vmatprep.mubr.bf16.mxu0 0
        %4122 = vmatmul.mubr.bf16.gmra.mrb[0].mxu0 %v3982
        %v4123 = vpop.f32.mrb[0].mxu0
        %v4124 = vadd.f32 0.0, %v4123
        %v4125 = vpop.f32.mrb[0].mxu0
        %v4126 = vpop.f32.mrb[0].mxu0
        %v4127 = vadd.f32 0.0, %v4126
        %v4128 = vpop.f32.mrb[0].mxu0
        %4129 = vmatprep.mubr.bf16.mxu0 0
        %4130 = vmatmul.mubr.bf16.gmra.mrb[0].mxu0 %v3985
        %v4131 = vpop.f32.mrb[0].mxu0
        %v4132 = vadd.f32 0.0, %v4131
        %v4133 = vpop.f32.mrb[0].mxu0
        %v4134 = vpop.f32.mrb[0].mxu0
        %v4135 = vadd.f32 0.0, %v4134
        %v4136 = vpop.f32.mrb[0].mxu0
        %4137 = vmatprep.mubr.bf16.mxu0 0
        %4138 = vmatmul.mubr.bf16.gmra.mrb[0].mxu0 %v3988
        %v4139 = vpop.f32.mrb[0].mxu0
        %v4140 = vadd.f32 0.0, %v4139
        %v4141 = vpop.f32.mrb[0].mxu0
        %v4142 = vpop.f32.mrb[0].mxu0
        %v4143 = vadd.f32 0.0, %v4142
        %v4144 = vpop.f32.mrb[0].mxu0
        %4145 = vmatprep.mubr.bf16.mxu0 0
        %4146 = vmatmul.mubr.bf16.gmra.mrb[0].mxu0 %v3991
        %v4147 = vpop.f32.mrb[0].mxu0
        %v4148 = vadd.f32 0.0, %v4147
        %v4149 = vpop.f32.mrb[0].mxu0
        %v4150 = vpop.f32.mrb[0].mxu0
        %v4151 = vadd.f32 0.0, %v4150
        %v4152 = vpop.f32.mrb[0].mxu0
        %4153 = vdwg.mxu0
        %v4154 = vmul.f32 %v4028, 0.17677669
        %v4155 = vmul.f32 %v4031, 0.17677669
        %v4156 = vmul.f32 %v4036, 0.17677669
        %v4157 = vmul.f32 %v4039, 0.17677669
        %v4158 = vmul.f32 %v4044, 0.17677669
        %v4159 = vmul.f32 %v4047, 0.17677669
        %v4160 = vmul.f32 %v4052, 0.17677669
        %v4161 = vmul.f32 %v4055, 0.17677669
        %v4162 = vmul.f32 %v4060, 0.17677669
        %v4163 = vmul.f32 %v4063, 0.17677669
        %v4164 = vmul.f32 %v4068, 0.17677669
        %v4165 = vmul.f32 %v4071, 0.17677669
        %v4166 = vmul.f32 %v4076, 0.17677669
        %v4167 = vmul.f32 %v4079, 0.17677669
        %v4168 = vmul.f32 %v4084, 0.17677669
        %v4169 = vmul.f32 %v4087, 0.17677669
        %v4170 = vmul.f32 %v4092, 0.17677669
        %v4171 = vmul.f32 %v4095, 0.17677669
        %v4172 = vmul.f32 %v4100, 0.17677669
        %v4173 = vmul.f32 %v4103, 0.17677669
        %v4174 = vmul.f32 %v4108, 0.17677669
        %v4175 = vmul.f32 %v4111, 0.17677669
        %v4176 = vmul.f32 %v4116, 0.17677669
        %v4177 = vmul.f32 %v4119, 0.17677669
        %v4178 = vmul.f32 %v4124, 0.17677669
        %v4179 = vmul.f32 %v4127, 0.17677669
        %v4180 = vmul.f32 %v4132, 0.17677669
        %v4181 = vmul.f32 %v4135, 0.17677669
        %v4182 = vmul.f32 %v4140, 0.17677669
        %v4183 = vmul.f32 %v4143, 0.17677669
        %v4184 = vmul.f32 %v4148, 0.17677669
        %v4185 = vmul.f32 %v4151, 0.17677669
        %v4186 = vsub.f32 %v3382, %v4154
        %v4187 = vsub.f32 %v3383, %v4155
        %v4188 = vsub.f32 %v3384, %v4156
        %v4189 = vsub.f32 %v3385, %v4157
        %v4190 = vsub.f32 %v3386, %v4158
        %v4191 = vsub.f32 %v3387, %v4159
        %v4192 = vsub.f32 %v3388, %v4160
        %v4193 = vsub.f32 %v3389, %v4161
        %v4194 = vsub.f32 %v3390, %v4162
        %v4195 = vsub.f32 %v3391, %v4163
        %v4196 = vsub.f32 %v3392, %v4164
        %v4197 = vsub.f32 %v3393, %v4165
        %v4198 = vsub.f32 %v3394, %v4166
        %v4199 = vsub.f32 %v3395, %v4167
        %v4200 = vsub.f32 %v3396, %v4168
        %v4201 = vsub.f32 %v3397, %v4169
        %v4202 = vsub.f32 %v3398, %v4170
        %v4203 = vsub.f32 %v3399, %v4171
        %v4204 = vsub.f32 %v3400, %v4172
        %v4205 = vsub.f32 %v3401, %v4173
        %v4206 = vsub.f32 %v3402, %v4174
        %v4207 = vsub.f32 %v3403, %v4175
        %v4208 = vsub.f32 %v3404, %v4176
        %v4209 = vsub.f32 %v3405, %v4177
        %v4210 = vsub.f32 %v3406, %v4178
        %v4211 = vsub.f32 %v3407, %v4179
        %v4212 = vsub.f32 %v3408, %v4180
        %v4213 = vsub.f32 %v3409, %v4181
        %v4214 = vsub.f32 %v3410, %v4182
        %v4215 = vsub.f32 %v3411, %v4183
        %v4216 = vsub.f32 %v3412, %v4184
        %v4217 = vsub.f32 %v3413, %v4185
        %v4218 = vxor.u32 %v4186, 2147483648
        %v4219 = vxor.u32 %v4187, 2147483648
        %v4220 = vxor.u32 %v4188, 2147483648
        %v4221 = vxor.u32 %v4189, 2147483648
        %v4222 = vxor.u32 %v4190, 2147483648
        %v4223 = vxor.u32 %v4191, 2147483648
        %v4224 = vxor.u32 %v4192, 2147483648
        %v4225 = vxor.u32 %v4193, 2147483648
        %v4226 = vxor.u32 %v4194, 2147483648
        %v4227 = vxor.u32 %v4195, 2147483648
        %v4228 = vxor.u32 %v4196, 2147483648
        %v4229 = vxor.u32 %v4197, 2147483648
        %v4230 = vxor.u32 %v4198, 2147483648
        %v4231 = vxor.u32 %v4199, 2147483648
        %v4232 = vxor.u32 %v4200, 2147483648
        %v4233 = vxor.u32 %v4201, 2147483648
        %v4234 = vxor.u32 %v4202, 2147483648
        %v4235 = vxor.u32 %v4203, 2147483648
        %v4236 = vxor.u32 %v4204, 2147483648
        %v4237 = vxor.u32 %v4205, 2147483648
        %v4238 = vxor.u32 %v4206, 2147483648
        %v4239 = vxor.u32 %v4207, 2147483648
        %v4240 = vxor.u32 %v4208, 2147483648
        %v4241 = vxor.u32 %v4209, 2147483648
        %v4242 = vxor.u32 %v4210, 2147483648
        %v4243 = vxor.u32 %v4211, 2147483648
        %v4244 = vxor.u32 %v4212, 2147483648
        %v4245 = vxor.u32 %v4213, 2147483648
        %v4246 = vxor.u32 %v4214, 2147483648
        %v4247 = vxor.u32 %v4215, 2147483648
        %v4248 = vxor.u32 %v4216, 2147483648
        %v4249 = vxor.u32 %v4217, 2147483648
        %v4250 = vmul.f32 %v4218, 1.442695
        %v4251 = vpow.pop %v4250
        %v4252 = vmul.f32 %v4219, 1.442695
        %v4253 = vpow.pop %v4252
        %v4254 = vmul.f32 %v4220, 1.442695
        %v4255 = vpow.pop %v4254
        %v4256 = vmul.f32 %v4221, 1.442695
        %v4257 = vpow.pop %v4256
        %v4258 = vmul.f32 %v4222, 1.442695
        %v4259 = vpow.pop %v4258
        %v4260 = vmul.f32 %v4223, 1.442695
        %v4261 = vpow.pop %v4260
        %v4262 = vmul.f32 %v4224, 1.442695
        %v4263 = vpow.pop %v4262
        %v4264 = vmul.f32 %v4225, 1.442695
        %v4265 = vpow.pop %v4264
        %v4266 = vmul.f32 %v4226, 1.442695
        %v4267 = vpow.pop %v4266
        %v4268 = vmul.f32 %v4227, 1.442695
        %v4269 = vpow.pop %v4268
        %v4270 = vmul.f32 %v4228, 1.442695
        %v4271 = vpow.pop %v4270
        %v4272 = vmul.f32 %v4229, 1.442695
        %v4273 = vpow.pop %v4272
        %v4274 = vmul.f32 %v4230, 1.442695
        %v4275 = vpow.pop %v4274
        %v4276 = vmul.f32 %v4231, 1.442695
        %v4277 = vpow.pop %v4276
        %v4278 = vmul.f32 %v4232, 1.442695
        %v4279 = vpow.pop %v4278
        %v4280 = vmul.f32 %v4233, 1.442695
        %v4281 = vpow.pop %v4280
        %v4282 = vmul.f32 %v4234, 1.442695
        %v4283 = vpow.pop %v4282
        %v4284 = vmul.f32 %v4235, 1.442695
        %v4285 = vpow.pop %v4284
        %v4286 = vmul.f32 %v4236, 1.442695
        %v4287 = vpow.pop %v4286
        %v4288 = vmul.f32 %v4237, 1.442695
        %v4289 = vpow.pop %v4288
        %v4290 = vmul.f32 %v4238, 1.442695
        %v4291 = vpow.pop %v4290
        %v4292 = vmul.f32 %v4239, 1.442695
        %v4293 = vpow.pop %v4292
        %v4294 = vmul.f32 %v4240, 1.442695
        %v4295 = vpow.pop %v4294
        %v4296 = vmul.f32 %v4241, 1.442695
        %v4297 = vpow.pop %v4296
        %v4298 = vmul.f32 %v4242, 1.442695
        %v4299 = vpow.pop %v4298
        %v4300 = vmul.f32 %v4243, 1.442695
        %v4301 = vpow.pop %v4300
        %v4302 = vmul.f32 %v4244, 1.442695
        %v4303 = vpow.pop %v4302
        %v4304 = vmul.f32 %v4245, 1.442695
        %v4305 = vpow.pop %v4304
        %v4306 = vmul.f32 %v4246, 1.442695
        %v4307 = vpow.pop %v4306
        %v4308 = vmul.f32 %v4247, 1.442695
        %v4309 = vpow.pop %v4308
        %v4310 = vmul.f32 %v4248, 1.442695
        %v4311 = vpow.pop %v4310
        %v4312 = vmul.f32 %v4249, 1.442695
        %v4313 = vpow.pop %v4312
        %v4314 = vadd.f32 %v4251, 1.0
        %v4315 = vadd.f32 %v4253, 1.0
        %v4316 = vadd.f32 %v4255, 1.0
        %v4317 = vadd.f32 %v4257, 1.0
        %v4318 = vadd.f32 %v4259, 1.0
        %v4319 = vadd.f32 %v4261, 1.0
        %v4320 = vadd.f32 %v4263, 1.0
        %v4321 = vadd.f32 %v4265, 1.0
        %v4322 = vadd.f32 %v4267, 1.0
        %v4323 = vadd.f32 %v4269, 1.0
        %v4324 = vadd.f32 %v4271, 1.0
        %v4325 = vadd.f32 %v4273, 1.0
        %v4326 = vadd.f32 %v4275, 1.0
        %v4327 = vadd.f32 %v4277, 1.0
        %v4328 = vadd.f32 %v4279, 1.0
        %v4329 = vadd.f32 %v4281, 1.0
        %v4330 = vadd.f32 %v4283, 1.0
        %v4331 = vadd.f32 %v4285, 1.0
        %v4332 = vadd.f32 %v4287, 1.0
        %v4333 = vadd.f32 %v4289, 1.0
        %v4334 = vadd.f32 %v4291, 1.0
        %v4335 = vadd.f32 %v4293, 1.0
        %v4336 = vadd.f32 %v4295, 1.0
        %v4337 = vadd.f32 %v4297, 1.0
        %v4338 = vadd.f32 %v4299, 1.0
        %v4339 = vadd.f32 %v4301, 1.0
        %v4340 = vadd.f32 %v4303, 1.0
        %v4341 = vadd.f32 %v4305, 1.0
        %v4342 = vadd.f32 %v4307, 1.0
        %v4343 = vadd.f32 %v4309, 1.0
        %v4344 = vadd.f32 %v4311, 1.0
        %v4345 = vadd.f32 %v4313, 1.0
        %v4346 = vrcp.pop %v4314
        %v4347 = vmul.f32 1.0, %v4346
        %v4348 = vrcp.pop %v4315
        %v4349 = vmul.f32 1.0, %v4348
        %v4350 = vrcp.pop %v4316
        %v4351 = vmul.f32 1.0, %v4350
        %v4352 = vrcp.pop %v4317
        %v4353 = vmul.f32 1.0, %v4352
        %v4354 = vrcp.pop %v4318
        %v4355 = vmul.f32 1.0, %v4354
        %v4356 = vrcp.pop %v4319
        %v4357 = vmul.f32 1.0, %v4356
        %v4358 = vrcp.pop %v4320
        %v4359 = vmul.f32 1.0, %v4358
        %v4360 = vrcp.pop %v4321
        %v4361 = vmul.f32 1.0, %v4360
        %v4362 = vrcp.pop %v4322
        %v4363 = vmul.f32 1.0, %v4362
        %v4364 = vrcp.pop %v4323
        %v4365 = vmul.f32 1.0, %v4364
        %v4366 = vrcp.pop %v4324
        %v4367 = vmul.f32 1.0, %v4366
        %v4368 = vrcp.pop %v4325
        %v4369 = vmul.f32 1.0, %v4368
        %v4370 = vrcp.pop %v4326
        %v4371 = vmul.f32 1.0, %v4370
        %v4372 = vrcp.pop %v4327
        %v4373 = vmul.f32 1.0, %v4372
        %v4374 = vrcp.pop %v4328
        %v4375 = vmul.f32 1.0, %v4374
        %v4376 = vrcp.pop %v4329
        %v4377 = vmul.f32 1.0, %v4376
        %v4378 = vrcp.pop %v4330
        %v4379 = vmul.f32 1.0, %v4378
        %v4380 = vrcp.pop %v4331
        %v4381 = vmul.f32 1.0, %v4380
        %v4382 = vrcp.pop %v4332
        %v4383 = vmul.f32 1.0, %v4382
        %v4384 = vrcp.pop %v4333
        %v4385 = vmul.f32 1.0, %v4384
        %v4386 = vrcp.pop %v4334
        %v4387 = vmul.f32 1.0, %v4386
        %v4388 = vrcp.pop %v4335
        %v4389 = vmul.f32 1.0, %v4388
        %v4390 = vrcp.pop %v4336
        %v4391 = vmul.f32 1.0, %v4390
        %v4392 = vrcp.pop %v4337
        %v4393 = vmul.f32 1.0, %v4392
        %v4394 = vrcp.pop %v4338
        %v4395 = vmul.f32 1.0, %v4394
        %v4396 = vrcp.pop %v4339
        %v4397 = vmul.f32 1.0, %v4396
        %v4398 = vrcp.pop %v4340
        %v4399 = vmul.f32 1.0, %v4398
        %v4400 = vrcp.pop %v4341
        %v4401 = vmul.f32 1.0, %v4400
        %v4402 = vrcp.pop %v4342
        %v4403 = vmul.f32 1.0, %v4402
        %v4404 = vrcp.pop %v4343
        %v4405 = vmul.f32 1.0, %v4404
        %v4406 = vrcp.pop %v4344
        %v4407 = vmul.f32 1.0, %v4406
        %v4408 = vrcp.pop %v4345
        %v4409 = vmul.f32 1.0, %v4408
        %vm4410 = vcmask 15360
        %v4412 = vsel %vm4410, %v4347, 0
        %v4415 = vsel %vm4410, %v4349, 0
        %v4418 = vsel %vm4410, %v4351, 0
        %v4421 = vsel %vm4410, %v4353, 0
        %v4424 = vsel %vm4410, %v4355, 0
        %v4427 = vsel %vm4410, %v4357, 0
        %v4430 = vsel %vm4410, %v4359, 0
        %v4433 = vsel %vm4410, %v4361, 0
        %v4436 = vsel %vm4410, %v4363, 0
        %v4439 = vsel %vm4410, %v4365, 0
        %v4442 = vsel %vm4410, %v4367, 0
        %v4445 = vsel %vm4410, %v4369, 0
        %v4448 = vsel %vm4410, %v4371, 0
        %v4451 = vsel %vm4410, %v4373, 0
        %v4454 = vsel %vm4410, %v4375, 0
        %v4457 = vsel %vm4410, %v4377, 0
        %v4460 = vsel %vm4410, %v4379, 0
        %v4463 = vsel %vm4410, %v4381, 0
        %v4466 = vsel %vm4410, %v4383, 0
        %v4469 = vsel %vm4410, %v4385, 0
        %v4472 = vsel %vm4410, %v4387, 0
        %v4475 = vsel %vm4410, %v4389, 0
        %v4478 = vsel %vm4410, %v4391, 0
        %v4481 = vsel %vm4410, %v4393, 0
        %v4484 = vsel %vm4410, %v4395, 0
        %v4487 = vsel %vm4410, %v4397, 0
        %v4490 = vsel %vm4410, %v4399, 0
        %v4493 = vsel %vm4410, %v4401, 0
        %v4496 = vsel %vm4410, %v4403, 0
        %v4499 = vsel %vm4410, %v4405, 0
        %v4502 = vsel %vm4410, %v4407, 0
        %v4505 = vsel %vm4410, %v4409, 0
        %vm4507 = vcmask 1041408
        %v4509 = vsel %vm4507, %v2554, 0
        %4511 = vmatprep.subr.mxu0 0.0
        %4512 = vmatpush1.msra.mxu0 %v4509
        %4513 = vmatprep.subr.mxu0 0.0
        %4514 = vmatpush1.msra.mxu0 0.0
        %4515 = vmatprep.subr.mxu0 0.0
        %4516 = vmatpush1.msra.mxu0 0.0
        %4517 = vmatprep.subr.mxu0 0.0
        %4518 = vmatpush1.msra.mxu0 0.0
        %4519 = vmatprep.subr.mxu0 0.0
        %4520 = vmatpush1.msra.mxu0 0.0
        %4521 = vmatprep.subr.mxu0 0.0
        %4522 = vmatpush1.msra.mxu0 0.0
        %4523 = vmatprep.subr.mxu0 0.0
        %4524 = vmatpush1.msra.mxu0 0.0
        %4525 = vmatprep.subr.mxu0 0.0
        %4526 = vmatpush1.msra.mxu0 0.0
        %4527 = vmatprep.subr.mxu0 0.0
        %4528 = vmatpush1.msra.mxu0 0.0
        %4529 = vmatprep.subr.mxu0 0.0
        %4530 = vmatpush1.msra.mxu0 0.0
        %4531 = vmatprep.subr.mxu0 0.0
        %4532 = vmatpush1.msra.mxu0 0.0
        %4533 = vmatprep.subr.mxu0 0.0
        %4534 = vmatpush1.msra.mxu0 0.0
        %4535 = vmatprep.subr.mxu0 0.0
        %4536 = vmatpush1.msra.mxu0 0.0
        %4537 = vmatprep.subr.mxu0 0.0
        %4538 = vmatpush1.msra.mxu0 0.0
        %4539 = vmatprep.subr.mxu0 0.0
        %4540 = vmatpush1.msra.mxu0 0.0
        %4541 = vmatprep.subr.mxu0 0.0
        %4542 = vmatpush1.msra.mxu0 0.0
        %4543 = vmatprep.subr.mxu0 0.0
        %4544 = vmatpush1.msra.mxu0 0.0
        %4545 = vmatprep.subr.mxu0 0.0
        %4546 = vmatpush1.msra.mxu0 0.0
        %4547 = vmatprep.subr.mxu0 0.0
        %4548 = vmatpush1.msra.mxu0 0.0
        %4549 = vmatprep.subr.mxu0 0.0
        %4550 = vmatpush1.msra.mxu0 0.0
        %4551 = vmatprep.subr.mxu0 0.0
        %4552 = vmatpush1.msra.mxu0 0.0
        %4553 = vmatprep.subr.mxu0 0.0
        %4554 = vmatpush1.msra.mxu0 0.0
        %4555 = vmatprep.subr.mxu0 0.0
        %4556 = vmatpush1.msra.mxu0 0.0
        %4557 = vmatprep.subr.mxu0 0.0
        %4558 = vmatpush1.msra.mxu0 0.0
        %4559 = vmatprep.subr.mxu0 0.0
        %4560 = vmatpush1.msra.mxu0 0.0
        %4561 = vmatprep.subr.mxu0 0.0
        %4562 = vmatpush1.msra.mxu0 0.0
        %4563 = vmatprep.subr.mxu0 0.0
        %4564 = vmatpush1.msra.mxu0 0.0
        %4565 = vmatprep.subr.mxu0 0.0
        %4566 = vmatpush1.msra.mxu0 0.0
        %4567 = vmatprep.subr.mxu0 0.0
        %4568 = vmatpush1.msra.mxu0 0.0
        %4569 = vmatprep.subr.mxu0 0.0
        %4570 = vmatpush1.msra.mxu0 0.0
        %4571 = vmatprep.subr.mxu0 0.0
        %4572 = vmatpush1.msra.mxu0 0.0
        %4573 = vmatprep.subr.mxu0 0.0
        %4574 = vmatpush1.msra.mxu0 0.0
        %4575 = vmatprep.mubr.f32.mxu0 0.0
        %4576 = vmatmul.mubr.f32.gmra.mrb[0].mxu0 %v4412
        %v4577 = vpop.f32.mrb[0].mxu0
        %v4578 = vadd.f32 0.0, %v4577
        %v4579 = vpop.f32.mrb[0].mxu0
        %4580 = vmatprep.mubr.f32.mxu0 0.0
        %4581 = vmatmul.mubr.f32.gmra.mrb[0].mxu0 %v4415
        %v4582 = vpop.f32.mrb[0].mxu0
        %v4583 = vadd.f32 0.0, %v4582
        %v4584 = vpop.f32.mrb[0].mxu0
        %4585 = vmatprep.mubr.f32.mxu0 0.0
        %4586 = vmatmul.mubr.f32.gmra.mrb[0].mxu0 %v4418
        %v4587 = vpop.f32.mrb[0].mxu0
        %v4588 = vadd.f32 0.0, %v4587
        %v4589 = vpop.f32.mrb[0].mxu0
        %4590 = vmatprep.mubr.f32.mxu0 0.0
        %4591 = vmatmul.mubr.f32.gmra.mrb[0].mxu0 %v4421
        %v4592 = vpop.f32.mrb[0].mxu0
        %v4593 = vadd.f32 0.0, %v4592
        %v4594 = vpop.f32.mrb[0].mxu0
        %4595 = vmatprep.mubr.f32.mxu0 0.0
        %4596 = vmatmul.mubr.f32.gmra.mrb[0].mxu0 %v4424
        %v4597 = vpop.f32.mrb[0].mxu0
        %v4598 = vadd.f32 0.0, %v4597
        %v4599 = vpop.f32.mrb[0].mxu0
        %4600 = vmatprep.mubr.f32.mxu0 0.0
        %4601 = vmatmul.mubr.f32.gmra.mrb[0].mxu0 %v4427
        %v4602 = vpop.f32.mrb[0].mxu0
        %v4603 = vadd.f32 0.0, %v4602
        %v4604 = vpop.f32.mrb[0].mxu0
        %4605 = vmatprep.mubr.f32.mxu0 0.0
        %4606 = vmatmul.mubr.f32.gmra.mrb[0].mxu0 %v4430
        %v4607 = vpop.f32.mrb[0].mxu0
        %v4608 = vadd.f32 0.0, %v4607
        %v4609 = vpop.f32.mrb[0].mxu0
        %4610 = vmatprep.mubr.f32.mxu0 0.0
        %4611 = vmatmul.mubr.f32.gmra.mrb[0].mxu0 %v4433
        %v4612 = vpop.f32.mrb[0].mxu0
        %v4613 = vadd.f32 0.0, %v4612
        %v4614 = vpop.f32.mrb[0].mxu0
        %4615 = vmatprep.mubr.f32.mxu0 0.0
        %4616 = vmatmul.mubr.f32.gmra.mrb[0].mxu0 %v4436
        %v4617 = vpop.f32.mrb[0].mxu0
        %v4618 = vadd.f32 0.0, %v4617
        %v4619 = vpop.f32.mrb[0].mxu0
        %4620 = vmatprep.mubr.f32.mxu0 0.0
        %4621 = vmatmul.mubr.f32.gmra.mrb[0].mxu0 %v4439
        %v4622 = vpop.f32.mrb[0].mxu0
        %v4623 = vadd.f32 0.0, %v4622
        %v4624 = vpop.f32.mrb[0].mxu0
        %4625 = vmatprep.mubr.f32.mxu0 0.0
        %4626 = vmatmul.mubr.f32.gmra.mrb[0].mxu0 %v4442
        %v4627 = vpop.f32.mrb[0].mxu0
        %v4628 = vadd.f32 0.0, %v4627
        %v4629 = vpop.f32.mrb[0].mxu0
        %4630 = vmatprep.mubr.f32.mxu0 0.0
        %4631 = vmatmul.mubr.f32.gmra.mrb[0].mxu0 %v4445
        %v4632 = vpop.f32.mrb[0].mxu0
        %v4633 = vadd.f32 0.0, %v4632
        %v4634 = vpop.f32.mrb[0].mxu0
        %4635 = vmatprep.mubr.f32.mxu0 0.0
        %4636 = vmatmul.mubr.f32.gmra.mrb[0].mxu0 %v4448
        %v4637 = vpop.f32.mrb[0].mxu0
        %v4638 = vadd.f32 0.0, %v4637
        %v4639 = vpop.f32.mrb[0].mxu0
        %4640 = vmatprep.mubr.f32.mxu0 0.0
        %4641 = vmatmul.mubr.f32.gmra.mrb[0].mxu0 %v4451
        %v4642 = vpop.f32.mrb[0].mxu0
        %v4643 = vadd.f32 0.0, %v4642
        %v4644 = vpop.f32.mrb[0].mxu0
        %4645 = vmatprep.mubr.f32.mxu0 0.0
        %4646 = vmatmul.mubr.f32.gmra.mrb[0].mxu0 %v4454
        %v4647 = vpop.f32.mrb[0].mxu0
        %v4648 = vadd.f32 0.0, %v4647
        %v4649 = vpop.f32.mrb[0].mxu0
        %4650 = vmatprep.mubr.f32.mxu0 0.0
        %4651 = vmatmul.mubr.f32.gmra.mrb[0].mxu0 %v4457
        %v4652 = vpop.f32.mrb[0].mxu0
        %v4653 = vadd.f32 0.0, %v4652
        %v4654 = vpop.f32.mrb[0].mxu0
        %4655 = vmatprep.mubr.f32.mxu0 0.0
        %4656 = vmatmul.mubr.f32.gmra.mrb[0].mxu0 %v4460
        %v4657 = vpop.f32.mrb[0].mxu0
        %v4658 = vadd.f32 0.0, %v4657
        %v4659 = vpop.f32.mrb[0].mxu0
        %4660 = vmatprep.mubr.f32.mxu0 0.0
        %4661 = vmatmul.mubr.f32.gmra.mrb[0].mxu0 %v4463
        %v4662 = vpop.f32.mrb[0].mxu0
        %v4663 = vadd.f32 0.0, %v4662
        %v4664 = vpop.f32.mrb[0].mxu0
        %4665 = vmatprep.mubr.f32.mxu0 0.0
        %4666 = vmatmul.mubr.f32.gmra.mrb[0].mxu0 %v4466
        %v4667 = vpop.f32.mrb[0].mxu0
        %v4668 = vadd.f32 0.0, %v4667
        %v4669 = vpop.f32.mrb[0].mxu0
        %4670 = vmatprep.mubr.f32.mxu0 0.0
        %4671 = vmatmul.mubr.f32.gmra.mrb[0].mxu0 %v4469
        %v4672 = vpop.f32.mrb[0].mxu0
        %v4673 = vadd.f32 0.0, %v4672
        %v4674 = vpop.f32.mrb[0].mxu0
        %4675 = vmatprep.mubr.f32.mxu0 0.0
        %4676 = vmatmul.mubr.f32.gmra.mrb[0].mxu0 %v4472
        %v4677 = vpop.f32.mrb[0].mxu0
        %v4678 = vadd.f32 0.0, %v4677
        %v4679 = vpop.f32.mrb[0].mxu0
        %4680 = vmatprep.mubr.f32.mxu0 0.0
        %4681 = vmatmul.mubr.f32.gmra.mrb[0].mxu0 %v4475
        %v4682 = vpop.f32.mrb[0].mxu0
        %v4683 = vadd.f32 0.0, %v4682
        %v4684 = vpop.f32.mrb[0].mxu0
        %4685 = vmatprep.mubr.f32.mxu0 0.0
        %4686 = vmatmul.mubr.f32.gmra.mrb[0].mxu0 %v4478
        %v4687 = vpop.f32.mrb[0].mxu0
        %v4688 = vadd.f32 0.0, %v4687
        %v4689 = vpop.f32.mrb[0].mxu0
        %4690 = vmatprep.mubr.f32.mxu0 0.0
        %4691 = vmatmul.mubr.f32.gmra.mrb[0].mxu0 %v4481
        %v4692 = vpop.f32.mrb[0].mxu0
        %v4693 = vadd.f32 0.0, %v4692
        %v4694 = vpop.f32.mrb[0].mxu0
        %4695 = vmatprep.mubr.f32.mxu0 0.0
        %4696 = vmatmul.mubr.f32.gmra.mrb[0].mxu0 %v4484
        %v4697 = vpop.f32.mrb[0].mxu0
        %v4698 = vadd.f32 0.0, %v4697
        %v4699 = vpop.f32.mrb[0].mxu0
        %4700 = vmatprep.mubr.f32.mxu0 0.0
        %4701 = vmatmul.mubr.f32.gmra.mrb[0].mxu0 %v4487
        %v4702 = vpop.f32.mrb[0].mxu0
        %v4703 = vadd.f32 0.0, %v4702
        %v4704 = vpop.f32.mrb[0].mxu0
        %4705 = vmatprep.mubr.f32.mxu0 0.0
        %4706 = vmatmul.mubr.f32.gmra.mrb[0].mxu0 %v4490
        %v4707 = vpop.f32.mrb[0].mxu0
        %v4708 = vadd.f32 0.0, %v4707
        %v4709 = vpop.f32.mrb[0].mxu0
        %4710 = vmatprep.mubr.f32.mxu0 0.0
        %4711 = vmatmul.mubr.f32.gmra.mrb[0].mxu0 %v4493
        %v4712 = vpop.f32.mrb[0].mxu0
        %v4713 = vadd.f32 0.0, %v4712
        %v4714 = vpop.f32.mrb[0].mxu0
        %4715 = vmatprep.mubr.f32.mxu0 0.0
        %4716 = vmatmul.mubr.f32.gmra.mrb[0].mxu0 %v4496
        %v4717 = vpop.f32.mrb[0].mxu0
        %v4718 = vadd.f32 0.0, %v4717
        %v4719 = vpop.f32.mrb[0].mxu0
        %4720 = vmatprep.mubr.f32.mxu0 0.0
        %4721 = vmatmul.mubr.f32.gmra.mrb[0].mxu0 %v4499
        %v4722 = vpop.f32.mrb[0].mxu0
        %v4723 = vadd.f32 0.0, %v4722
        %v4724 = vpop.f32.mrb[0].mxu0
        %4725 = vmatprep.mubr.f32.mxu0 0.0
        %4726 = vmatmul.mubr.f32.gmra.mrb[0].mxu0 %v4502
        %v4727 = vpop.f32.mrb[0].mxu0
        %v4728 = vadd.f32 0.0, %v4727
        %v4729 = vpop.f32.mrb[0].mxu0
        %4730 = vmatprep.mubr.f32.mxu0 0.0
        %4731 = vmatmul.mubr.f32.gmra.mrb[0].mxu0 %v4505
        %v4732 = vpop.f32.mrb[0].mxu0
        %v4733 = vadd.f32 0.0, %v4732
        %v4734 = vpop.f32.mrb[0].mxu0
        %4735 = vdwg.mxu0
        %v4736 = vmul.f32 %v4578, %v2975
        %v4737 = vmul.f32 %v4583, %v2978
        %v4738 = vmul.f32 %v4588, %v2983
        %v4739 = vmul.f32 %v4593, %v2986
        %v4740 = vmul.f32 %v4598, %v2991
        %v4741 = vmul.f32 %v4603, %v2994
        %v4742 = vmul.f32 %v4608, %v2999
        %v4743 = vmul.f32 %v4613, %v3002
        %v4744 = vmul.f32 %v4618, %v3007
        %v4745 = vmul.f32 %v4623, %v3010
        %v4746 = vmul.f32 %v4628, %v3015
        %v4747 = vmul.f32 %v4633, %v3018
        %v4748 = vmul.f32 %v4638, %v3023
        %v4749 = vmul.f32 %v4643, %v3026
        %v4750 = vmul.f32 %v4648, %v3031
        %v4751 = vmul.f32 %v4653, %v3034
        %v4752 = vmul.f32 %v4658, %v3039
        %v4753 = vmul.f32 %v4663, %v3042
        %v4754 = vmul.f32 %v4668, %v3047
        %v4755 = vmul.f32 %v4673, %v3050
        %v4756 = vmul.f32 %v4678, %v3055
        %v4757 = vmul.f32 %v4683, %v3058
        %v4758 = vmul.f32 %v4688, %v3063
        %v4759 = vmul.f32 %v4693, %v3066
        %v4760 = vmul.f32 %v4698, %v3071
        %v4761 = vmul.f32 %v4703, %v3074
        %v4762 = vmul.f32 %v4708, %v3079
        %v4763 = vmul.f32 %v4713, %v3082
        %v4764 = vmul.f32 %v4718, %v3087
        %v4765 = vmul.f32 %v4723, %v3090
        %v4766 = vmul.f32 %v4728, %v3095
        %v4767 = vmul.f32 %v4733, %v3098
        %v4768 = vsub.f32 1.0, %v4578
        %v4769 = vsub.f32 1.0, %v4583
        %v4770 = vsub.f32 1.0, %v4588
        %v4771 = vsub.f32 1.0, %v4593
        %v4772 = vsub.f32 1.0, %v4598
        %v4773 = vsub.f32 1.0, %v4603
        %v4774 = vsub.f32 1.0, %v4608
        %v4775 = vsub.f32 1.0, %v4613
        %v4776 = vsub.f32 1.0, %v4618
        %v4777 = vsub.f32 1.0, %v4623
        %v4778 = vsub.f32 1.0, %v4628
        %v4779 = vsub.f32 1.0, %v4633
        %v4780 = vsub.f32 1.0, %v4638
        %v4781 = vsub.f32 1.0, %v4643
        %v4782 = vsub.f32 1.0, %v4648
        %v4783 = vsub.f32 1.0, %v4653
        %v4784 = vsub.f32 1.0, %v4658
        %v4785 = vsub.f32 1.0, %v4663
        %v4786 = vsub.f32 1.0, %v4668
        %v4787 = vsub.f32 1.0, %v4673
        %v4788 = vsub.f32 1.0, %v4678
        %v4789 = vsub.f32 1.0, %v4683
        %v4790 = vsub.f32 1.0, %v4688
        %v4791 = vsub.f32 1.0, %v4693
        %v4792 = vsub.f32 1.0, %v4698
        %v4793 = vsub.f32 1.0, %v4703
        %v4794 = vsub.f32 1.0, %v4708
        %v4795 = vsub.f32 1.0, %v4713
        %v4796 = vsub.f32 1.0, %v4718
        %v4797 = vsub.f32 1.0, %v4723
        %v4798 = vsub.f32 1.0, %v4728
        %v4799 = vsub.f32 1.0, %v4733
        %v4800 = vmul.f32 %v4768, %v3771
        %v4801 = vmul.f32 %v4769, %v3774
        %v4802 = vmul.f32 %v4770, %v3779
        %v4803 = vmul.f32 %v4771, %v3782
        %v4804 = vmul.f32 %v4772, %v3787
        %v4805 = vmul.f32 %v4773, %v3790
        %v4806 = vmul.f32 %v4774, %v3795
        %v4807 = vmul.f32 %v4775, %v3798
        %v4808 = vmul.f32 %v4776, %v3803
        %v4809 = vmul.f32 %v4777, %v3806
        %v4810 = vmul.f32 %v4778, %v3811
        %v4811 = vmul.f32 %v4779, %v3814
        %v4812 = vmul.f32 %v4780, %v3819
        %v4813 = vmul.f32 %v4781, %v3822
        %v4814 = vmul.f32 %v4782, %v3827
        %v4815 = vmul.f32 %v4783, %v3830
        %v4816 = vmul.f32 %v4784, %v3835
        %v4817 = vmul.f32 %v4785, %v3838
        %v4818 = vmul.f32 %v4786, %v3843
        %v4819 = vmul.f32 %v4787, %v3846
        %v4820 = vmul.f32 %v4788, %v3851
        %v4821 = vmul.f32 %v4789, %v3854
        %v4822 = vmul.f32 %v4790, %v3859
        %v4823 = vmul.f32 %v4791, %v3862
        %v4824 = vmul.f32 %v4792, %v3867
        %v4825 = vmul.f32 %v4793, %v3870
        %v4826 = vmul.f32 %v4794, %v3875
        %v4827 = vmul.f32 %v4795, %v3878
        %v4828 = vmul.f32 %v4796, %v3883
        %v4829 = vmul.f32 %v4797, %v3886
        %v4830 = vmul.f32 %v4798, %v3891
        %v4831 = vmul.f32 %v4799, %v3894
        %v4832 = vadd.f32 %v4736, %v4800
        %v4833 = vadd.f32 %v4737, %v4801
        %v4834 = vadd.f32 %v4738, %v4802
        %v4835 = vadd.f32 %v4739, %v4803
        %v4836 = vadd.f32 %v4740, %v4804
        %v4837 = vadd.f32 %v4741, %v4805
        %v4838 = vadd.f32 %v4742, %v4806
        %v4839 = vadd.f32 %v4743, %v4807
        %v4840 = vadd.f32 %v4744, %v4808
        %v4841 = vadd.f32 %v4745, %v4809
        %v4842 = vadd.f32 %v4746, %v4810
        %v4843 = vadd.f32 %v4747, %v4811
        %v4844 = vadd.f32 %v4748, %v4812
        %v4845 = vadd.f32 %v4749, %v4813
        %v4846 = vadd.f32 %v4750, %v4814
        %v4847 = vadd.f32 %v4751, %v4815
        %v4848 = vadd.f32 %v4752, %v4816
        %v4849 = vadd.f32 %v4753, %v4817
        %v4850 = vadd.f32 %v4754, %v4818
        %v4851 = vadd.f32 %v4755, %v4819
        %v4852 = vadd.f32 %v4756, %v4820
        %v4853 = vadd.f32 %v4757, %v4821
        %v4854 = vadd.f32 %v4758, %v4822
        %v4855 = vadd.f32 %v4759, %v4823
        %v4856 = vadd.f32 %v4760, %v4824
        %v4857 = vadd.f32 %v4761, %v4825
        %v4858 = vadd.f32 %v4762, %v4826
        %v4859 = vadd.f32 %v4763, %v4827
        %v4860 = vadd.f32 %v4764, %v4828
        %v4861 = vadd.f32 %v4765, %v4829
        %v4862 = vadd.f32 %v4766, %v4830
        %v4863 = vadd.f32 %v4767, %v4831
        %v4864 = vpack.c.bf16 %v4833, %v4832
        %v4865 = vpack.c.bf16 %v4835, %v4834
        %v4866 = vpack.c.bf16 %v4837, %v4836
        %v4867 = vpack.c.bf16 %v4839, %v4838
        %v4868 = vpack.c.bf16 %v4841, %v4840
        %v4869 = vpack.c.bf16 %v4843, %v4842
        %v4870 = vpack.c.bf16 %v4845, %v4844
        %v4871 = vpack.c.bf16 %v4847, %v4846
        %v4872 = vpack.c.bf16 %v4849, %v4848
        %v4873 = vpack.c.bf16 %v4851, %v4850
        %v4874 = vpack.c.bf16 %v4853, %v4852
        %v4875 = vpack.c.bf16 %v4855, %v4854
        %v4876 = vpack.c.bf16 %v4857, %v4856
        %v4877 = vpack.c.bf16 %v4859, %v4858
        %v4878 = vpack.c.bf16 %v4861, %v4860
        %v4879 = vpack.c.bf16 %v4863, %v4862
        %v4880 = vld [vmem:[#allocation16] sm:$0xf]
        %v4881 = vld [vmem:[#allocation16 + $0x4] sm:$0xf]
        %v4882 = vld [vmem:[#allocation16 + $0x8] sm:$0xf]
        %v4883 = vld [vmem:[#allocation16 + $0xc] sm:$0xf]
        %v4884 = vld [vmem:[#allocation16 + $0x10] sm:$0xf]
        %v4885 = vld [vmem:[#allocation16 + $0x14] sm:$0xf]
        %v4886 = vld [vmem:[#allocation16 + $0x18] sm:$0xf]
        %v4887 = vld [vmem:[#allocation16 + $0x1c] sm:$0xf]
        %v4896 = vunpack.c.l.b16 %v4880
        %v4897 = vunpack.c.l.b16 %v4881
        %v4898 = vunpack.c.l.b16 %v4882
        %v4899 = vunpack.c.l.b16 %v4883
        %v4900 = vunpack.c.l.b16 %v4884
        %v4901 = vunpack.c.l.b16 %v4885
        %v4902 = vunpack.c.l.b16 %v4886
        %v4903 = vunpack.c.l.b16 %v4887
        %v4904 = vpack.c.b16 %v4897, %v4896
        %v4905 = vpack.c.b16 %v4899, %v4898
        %v4906 = vpack.c.b16 %v4901, %v4900
        %v4907 = vpack.c.b16 %v4903, %v4902
        %v4913 = vsel %vm948, %v4864, 0
        %v4916 = vsel %vm948, %v4865, 0
        %v4919 = vsel %vm948, %v4866, 0
        %v4922 = vsel %vm948, %v4867, 0
        %v4925 = vsel %vm948, %v4868, 0
        %v4928 = vsel %vm948, %v4869, 0
        %v4931 = vsel %vm948, %v4870, 0
        %v4934 = vsel %vm948, %v4871, 0
        %v4937 = vsel %vm948, %v4872, 0
        %v4940 = vsel %vm948, %v4873, 0
        %v4943 = vsel %vm948, %v4874, 0
        %v4946 = vsel %vm948, %v4875, 0
        %v4949 = vsel %vm948, %v4876, 0
        %v4952 = vsel %vm948, %v4877, 0
        %v4955 = vsel %vm948, %v4878, 0
        %v4958 = vsel %vm948, %v4879, 0
        %4960 = vmatprep.subr.bf16.mxu0 0
        %4961 = vmatpush1.bf16.msra.mxu0 %v4904
        %4962 = vmatprep.subr.bf16.mxu0 0
        %4963 = vmatpush1.bf16.msra.mxu0 %v4905
        %4964 = vmatprep.subr.bf16.mxu0 0
        %4965 = vmatpush1.bf16.msra.mxu0 %v4906
        %4966 = vmatprep.subr.bf16.mxu0 0
        %4967 = vmatpush1.bf16.msra.mxu0 %v4907
        %4968 = vmatprep.subr.bf16.mxu0 0
        %4969 = vmatpush1.bf16.msra.mxu0 0
        %4970 = vmatprep.subr.bf16.mxu0 0
        %4971 = vmatpush1.bf16.msra.mxu0 0
        %4972 = vmatprep.subr.bf16.mxu0 0
        %4973 = vmatpush1.bf16.msra.mxu0 0
        %4974 = vmatprep.subr.bf16.mxu0 0
        %4975 = vmatpush1.bf16.msra.mxu0 0
        %4976 = vmatprep.subr.bf16.mxu0 0
        %4977 = vmatpush1.bf16.msra.mxu0 0
        %4978 = vmatprep.subr.bf16.mxu0 0
        %4979 = vmatpush1.bf16.msra.mxu0 0
        %4980 = vmatprep.subr.bf16.mxu0 0
        %4981 = vmatpush1.bf16.msra.mxu0 0
        %4982 = vmatprep.subr.bf16.mxu0 0
        %4983 = vmatpush1.bf16.msra.mxu0 0
        %4984 = vmatprep.subr.bf16.mxu0 0
        %4985 = vmatpush1.bf16.msra.mxu0 0
        %4986 = vmatprep.subr.bf16.mxu0 0
        %4987 = vmatpush1.bf16.msra.mxu0 0
        %4988 = vmatprep.subr.bf16.mxu0 0
        %4989 = vmatpush1.bf16.msra.mxu0 0
        %4990 = vmatprep.subr.bf16.mxu0 0
        %4991 = vmatpush1.bf16.msra.mxu0 0
        %4992 = vmatprep.mubr.bf16.mxu0 0
        %4993 = vmatmul.mubr.bf16.gmra.mrb[0].mxu0 %v4913
        %v4994 = vpop.f32.mrb[0].mxu0
        %v4995 = vadd.f32 0.0, %v4994
        %v4996 = vpop.f32.mrb[0].mxu0
        %v4997 = vpop.f32.mrb[0].mxu0
        %v4998 = vadd.f32 0.0, %v4997
        %v4999 = vpop.f32.mrb[0].mxu0
        %5000 = vmatprep.mubr.bf16.mxu0 0
        %5001 = vmatmul.mubr.bf16.gmra.mrb[0].mxu0 %v4916
        %v5002 = vpop.f32.mrb[0].mxu0
        %v5003 = vadd.f32 0.0, %v5002
        %v5004 = vpop.f32.mrb[0].mxu0
        %v5005 = vpop.f32.mrb[0].mxu0
        %v5006 = vadd.f32 0.0, %v5005
        %v5007 = vpop.f32.mrb[0].mxu0
        %5008 = vmatprep.mubr.bf16.mxu0 0
        %5009 = vmatmul.mubr.bf16.gmra.mrb[0].mxu0 %v4919
        %v5010 = vpop.f32.mrb[0].mxu0
        %v5011 = vadd.f32 0.0, %v5010
        %v5012 = vpop.f32.mrb[0].mxu0
        %v5013 = vpop.f32.mrb[0].mxu0
        %v5014 = vadd.f32 0.0, %v5013
        %v5015 = vpop.f32.mrb[0].mxu0
        %5016 = vmatprep.mubr.bf16.mxu0 0
        %5017 = vmatmul.mubr.bf16.gmra.mrb[0].mxu0 %v4922
        %v5018 = vpop.f32.mrb[0].mxu0
        %v5019 = vadd.f32 0.0, %v5018
        %v5020 = vpop.f32.mrb[0].mxu0
        %v5021 = vpop.f32.mrb[0].mxu0
        %v5022 = vadd.f32 0.0, %v5021
        %v5023 = vpop.f32.mrb[0].mxu0
        %5024 = vmatprep.mubr.bf16.mxu0 0
        %5025 = vmatmul.mubr.bf16.gmra.mrb[0].mxu0 %v4925
        %v5026 = vpop.f32.mrb[0].mxu0
        %v5027 = vadd.f32 0.0, %v5026
        %v5028 = vpop.f32.mrb[0].mxu0
        %v5029 = vpop.f32.mrb[0].mxu0
        %v5030 = vadd.f32 0.0, %v5029
        %v5031 = vpop.f32.mrb[0].mxu0
        %5032 = vmatprep.mubr.bf16.mxu0 0
        %5033 = vmatmul.mubr.bf16.gmra.mrb[0].mxu0 %v4928
        %v5034 = vpop.f32.mrb[0].mxu0
        %v5035 = vadd.f32 0.0, %v5034
        %v5036 = vpop.f32.mrb[0].mxu0
        %v5037 = vpop.f32.mrb[0].mxu0
        %v5038 = vadd.f32 0.0, %v5037
        %v5039 = vpop.f32.mrb[0].mxu0
        %5040 = vmatprep.mubr.bf16.mxu0 0
        %5041 = vmatmul.mubr.bf16.gmra.mrb[0].mxu0 %v4931
        %v5042 = vpop.f32.mrb[0].mxu0
        %v5043 = vadd.f32 0.0, %v5042
        %v5044 = vpop.f32.mrb[0].mxu0
        %v5045 = vpop.f32.mrb[0].mxu0
        %v5046 = vadd.f32 0.0, %v5045
        %v5047 = vpop.f32.mrb[0].mxu0
        %5048 = vmatprep.mubr.bf16.mxu0 0
        %5049 = vmatmul.mubr.bf16.gmra.mrb[0].mxu0 %v4934
        %v5050 = vpop.f32.mrb[0].mxu0
        %v5051 = vadd.f32 0.0, %v5050
        %v5052 = vpop.f32.mrb[0].mxu0
        %v5053 = vpop.f32.mrb[0].mxu0
        %v5054 = vadd.f32 0.0, %v5053
        %v5055 = vpop.f32.mrb[0].mxu0
        %5056 = vmatprep.mubr.bf16.mxu0 0
        %5057 = vmatmul.mubr.bf16.gmra.mrb[0].mxu0 %v4937
        %v5058 = vpop.f32.mrb[0].mxu0
        %v5059 = vadd.f32 0.0, %v5058
        %v5060 = vpop.f32.mrb[0].mxu0
        %v5061 = vpop.f32.mrb[0].mxu0
        %v5062 = vadd.f32 0.0, %v5061
        %v5063 = vpop.f32.mrb[0].mxu0
        %5064 = vmatprep.mubr.bf16.mxu0 0
        %5065 = vmatmul.mubr.bf16.gmra.mrb[0].mxu0 %v4940
        %v5066 = vpop.f32.mrb[0].mxu0
        %v5067 = vadd.f32 0.0, %v5066
        %v5068 = vpop.f32.mrb[0].mxu0
        %v5069 = vpop.f32.mrb[0].mxu0
        %v5070 = vadd.f32 0.0, %v5069
        %v5071 = vpop.f32.mrb[0].mxu0
        %5072 = vmatprep.mubr.bf16.mxu0 0
        %5073 = vmatmul.mubr.bf16.gmra.mrb[0].mxu0 %v4943
        %v5074 = vpop.f32.mrb[0].mxu0
        %v5075 = vadd.f32 0.0, %v5074
        %v5076 = vpop.f32.mrb[0].mxu0
        %v5077 = vpop.f32.mrb[0].mxu0
        %v5078 = vadd.f32 0.0, %v5077
        %v5079 = vpop.f32.mrb[0].mxu0
        %5080 = vmatprep.mubr.bf16.mxu0 0
        %5081 = vmatmul.mubr.bf16.gmra.mrb[0].mxu0 %v4946
        %v5082 = vpop.f32.mrb[0].mxu0
        %v5083 = vadd.f32 0.0, %v5082
        %v5084 = vpop.f32.mrb[0].mxu0
        %v5085 = vpop.f32.mrb[0].mxu0
        %v5086 = vadd.f32 0.0, %v5085
        %v5087 = vpop.f32.mrb[0].mxu0
        %5088 = vmatprep.mubr.bf16.mxu0 0
        %5089 = vmatmul.mubr.bf16.gmra.mrb[0].mxu0 %v4949
        %v5090 = vpop.f32.mrb[0].mxu0
        %v5091 = vadd.f32 0.0, %v5090
        %v5092 = vpop.f32.mrb[0].mxu0
        %v5093 = vpop.f32.mrb[0].mxu0
        %v5094 = vadd.f32 0.0, %v5093
        %v5095 = vpop.f32.mrb[0].mxu0
        %5096 = vmatprep.mubr.bf16.mxu0 0
        %5097 = vmatmul.mubr.bf16.gmra.mrb[0].mxu0 %v4952
        %v5098 = vpop.f32.mrb[0].mxu0
        %v5099 = vadd.f32 0.0, %v5098
        %v5100 = vpop.f32.mrb[0].mxu0
        %v5101 = vpop.f32.mrb[0].mxu0
        %v5102 = vadd.f32 0.0, %v5101
        %v5103 = vpop.f32.mrb[0].mxu0
        %5104 = vmatprep.mubr.bf16.mxu0 0
        %5105 = vmatmul.mubr.bf16.gmra.mrb[0].mxu0 %v4955
        %v5106 = vpop.f32.mrb[0].mxu0
        %v5107 = vadd.f32 0.0, %v5106
        %v5108 = vpop.f32.mrb[0].mxu0
        %v5109 = vpop.f32.mrb[0].mxu0
        %v5110 = vadd.f32 0.0, %v5109
        %v5111 = vpop.f32.mrb[0].mxu0
        %5112 = vmatprep.mubr.bf16.mxu0 0
        %5113 = vmatmul.mubr.bf16.gmra.mrb[0].mxu0 %v4958
        %v5114 = vpop.f32.mrb[0].mxu0
        %v5115 = vadd.f32 0.0, %v5114
        %v5116 = vpop.f32.mrb[0].mxu0
        %v5117 = vpop.f32.mrb[0].mxu0
        %v5118 = vadd.f32 0.0, %v5117
        %v5119 = vpop.f32.mrb[0].mxu0
        %5120 = vdwg.mxu0
        %v5121 = vadd.f32 %v1731, %v4995
        %v5122 = vadd.f32 %v1732, %v4998
        %v5123 = vadd.f32 %v1733, %v5003
        %v5124 = vadd.f32 %v1734, %v5006
        %v5125 = vadd.f32 %v1735, %v5011
        %v5126 = vadd.f32 %v1736, %v5014
        %v5127 = vadd.f32 %v1737, %v5019
        %v5128 = vadd.f32 %v1738, %v5022
        %v5129 = vadd.f32 %v1739, %v5027
        %v5130 = vadd.f32 %v1740, %v5030
        %v5131 = vadd.f32 %v1741, %v5035
        %v5132 = vadd.f32 %v1742, %v5038
        %v5133 = vadd.f32 %v1743, %v5043
        %v5134 = vadd.f32 %v1744, %v5046
        %v5135 = vadd.f32 %v1745, %v5051
        %v5136 = vadd.f32 %v1746, %v5054
        %v5137 = vadd.f32 %v1747, %v5059
        %v5138 = vadd.f32 %v1748, %v5062
        %v5139 = vadd.f32 %v1749, %v5067
        %v5140 = vadd.f32 %v1750, %v5070
        %v5141 = vadd.f32 %v1751, %v5075
        %v5142 = vadd.f32 %v1752, %v5078
        %v5143 = vadd.f32 %v1753, %v5083
        %v5144 = vadd.f32 %v1754, %v5086
        %v5145 = vadd.f32 %v1755, %v5091
        %v5146 = vadd.f32 %v1756, %v5094
        %v5147 = vadd.f32 %v1757, %v5099
        %v5148 = vadd.f32 %v1758, %v5102
        %v5149 = vadd.f32 %v1759, %v5107
        %v5150 = vadd.f32 %v1760, %v5110
        %v5151 = vadd.f32 %v1761, %v5115
        %v5152 = vadd.f32 %v1762, %v5118
        %v5153 = vlaneseq
        %v5154 = vshrl.u32 %v5153, 7
        %v5155 = vsub.s32 1, %v5154
        %v5156 = vrot.slane %v947, %v5155
        %v5157 = vadd.f32 %v5121, %v5156
        %v5158 = vadd.f32 %v5122, %v5156
        %v5159 = vadd.f32 %v5123, %v5156
        %v5160 = vadd.f32 %v5124, %v5156
        %v5161 = vadd.f32 %v5125, %v5156
        %v5162 = vadd.f32 %v5126, %v5156
        %v5163 = vadd.f32 %v5127, %v5156
        %v5164 = vadd.f32 %v5128, %v5156
        %v5165 = vadd.f32 %v5129, %v5156
        %v5166 = vadd.f32 %v5130, %v5156
        %v5167 = vadd.f32 %v5131, %v5156
        %v5168 = vadd.f32 %v5132, %v5156
        %v5169 = vadd.f32 %v5133, %v5156
        %v5170 = vadd.f32 %v5134, %v5156
        %v5171 = vadd.f32 %v5135, %v5156
        %v5172 = vadd.f32 %v5136, %v5156
        %v5173 = vadd.f32 %v5137, %v5156
        %v5174 = vadd.f32 %v5138, %v5156
        %v5175 = vadd.f32 %v5139, %v5156
        %v5176 = vadd.f32 %v5140, %v5156
        %v5177 = vadd.f32 %v5141, %v5156
        %v5178 = vadd.f32 %v5142, %v5156
        %v5179 = vadd.f32 %v5143, %v5156
        %v5180 = vadd.f32 %v5144, %v5156
        %v5181 = vadd.f32 %v5145, %v5156
        %v5182 = vadd.f32 %v5146, %v5156
        %v5183 = vadd.f32 %v5147, %v5156
        %v5184 = vadd.f32 %v5148, %v5156
        %v5185 = vadd.f32 %v5149, %v5156
        %v5186 = vadd.f32 %v5150, %v5156
        %v5187 = vadd.f32 %v5151, %v5156
        %v5188 = vadd.f32 %v5152, %v5156
        %v5189 = vsel %vm948, %v5157, 0.0
        %5190 = vadd.xlane.f32.xlu0 %v5189
        %v5191 = vpop.xlane.xlu0 %5190
        %v5192 = vsel %vm948, %v5158, 0.0
        %5193 = vadd.xlane.f32.xlu0 %v5192
        %v5194 = vpop.xlane.xlu0 %5193
        %v5195 = vsel %vm948, %v5159, 0.0
        %5196 = vadd.xlane.f32.xlu0 %v5195
        %v5197 = vpop.xlane.xlu0 %5196
        %v5198 = vsel %vm948, %v5160, 0.0
        %5199 = vadd.xlane.f32.xlu0 %v5198
        %v5200 = vpop.xlane.xlu0 %5199
        %v5201 = vsel %vm948, %v5161, 0.0
        %5202 = vadd.xlane.f32.xlu0 %v5201
        %v5203 = vpop.xlane.xlu0 %5202
        %v5204 = vsel %vm948, %v5162, 0.0
        %5205 = vadd.xlane.f32.xlu0 %v5204
        %v5206 = vpop.xlane.xlu0 %5205
        %v5207 = vsel %vm948, %v5163, 0.0
        %5208 = vadd.xlane.f32.xlu0 %v5207
        %v5209 = vpop.xlane.xlu0 %5208
        %v5210 = vsel %vm948, %v5164, 0.0
        %5211 = vadd.xlane.f32.xlu0 %v5210
        %v5212 = vpop.xlane.xlu0 %5211
        %v5213 = vsel %vm948, %v5165, 0.0
        %5214 = vadd.xlane.f32.xlu0 %v5213
        %v5215 = vpop.xlane.xlu0 %5214
        %v5216 = vsel %vm948, %v5166, 0.0
        %5217 = vadd.xlane.f32.xlu0 %v5216
        %v5218 = vpop.xlane.xlu0 %5217
        %v5219 = vsel %vm948, %v5167, 0.0
        %5220 = vadd.xlane.f32.xlu0 %v5219
        %v5221 = vpop.xlane.xlu0 %5220
        %v5222 = vsel %vm948, %v5168, 0.0
        %5223 = vadd.xlane.f32.xlu0 %v5222
        %v5224 = vpop.xlane.xlu0 %5223
        %v5225 = vsel %vm948, %v5169, 0.0
        %5226 = vadd.xlane.f32.xlu0 %v5225
        %v5227 = vpop.xlane.xlu0 %5226
        %v5228 = vsel %vm948, %v5170, 0.0
        %5229 = vadd.xlane.f32.xlu0 %v5228
        %v5230 = vpop.xlane.xlu0 %5229
        %v5231 = vsel %vm948, %v5171, 0.0
        %5232 = vadd.xlane.f32.xlu0 %v5231
        %v5233 = vpop.xlane.xlu0 %5232
        %v5234 = vsel %vm948, %v5172, 0.0
        %5235 = vadd.xlane.f32.xlu0 %v5234
        %v5236 = vpop.xlane.xlu0 %5235
        %v5237 = vsel %vm948, %v5173, 0.0
        %5238 = vadd.xlane.f32.xlu0 %v5237
        %v5239 = vpop.xlane.xlu0 %5238
        %v5240 = vsel %vm948, %v5174, 0.0
        %5241 = vadd.xlane.f32.xlu0 %v5240
        %v5242 = vpop.xlane.xlu0 %5241
        %v5243 = vsel %vm948, %v5175, 0.0
        %5244 = vadd.xlane.f32.xlu0 %v5243
        %v5245 = vpop.xlane.xlu0 %5244
        %v5246 = vsel %vm948, %v5176, 0.0
        %5247 = vadd.xlane.f32.xlu0 %v5246
        %v5248 = vpop.xlane.xlu0 %5247
        %v5249 = vsel %vm948, %v5177, 0.0
        %5250 = vadd.xlane.f32.xlu0 %v5249
        %v5251 = vpop.xlane.xlu0 %5250
        %v5252 = vsel %vm948, %v5178, 0.0
        %5253 = vadd.xlane.f32.xlu0 %v5252
        %v5254 = vpop.xlane.xlu0 %5253
        %v5255 = vsel %vm948, %v5179, 0.0
        %5256 = vadd.xlane.f32.xlu0 %v5255
        %v5257 = vpop.xlane.xlu0 %5256
        %v5258 = vsel %vm948, %v5180, 0.0
        %5259 = vadd.xlane.f32.xlu0 %v5258
        %v5260 = vpop.xlane.xlu0 %5259
        %v5261 = vsel %vm948, %v5181, 0.0
        %5262 = vadd.xlane.f32.xlu0 %v5261
        %v5263 = vpop.xlane.xlu0 %5262
        %v5264 = vsel %vm948, %v5182, 0.0
        %5265 = vadd.xlane.f32.xlu0 %v5264
        %v5266 = vpop.xlane.xlu0 %5265
        %v5267 = vsel %vm948, %v5183, 0.0
        %5268 = vadd.xlane.f32.xlu0 %v5267
        %v5269 = vpop.xlane.xlu0 %5268
        %v5270 = vsel %vm948, %v5184, 0.0
        %5271 = vadd.xlane.f32.xlu0 %v5270
        %v5272 = vpop.xlane.xlu0 %5271
        %v5273 = vsel %vm948, %v5185, 0.0
        %5274 = vadd.xlane.f32.xlu0 %v5273
        %v5275 = vpop.xlane.xlu0 %5274
        %v5276 = vsel %vm948, %v5186, 0.0
        %5277 = vadd.xlane.f32.xlu0 %v5276
        %v5278 = vpop.xlane.xlu0 %5277
        %v5279 = vsel %vm948, %v5187, 0.0
        %5280 = vadd.xlane.f32.xlu0 %v5279
        %v5281 = vpop.xlane.xlu0 %5280
        %v5282 = vsel %vm948, %v5188, 0.0
        %5283 = vadd.xlane.f32.xlu0 %v5282
        %v5284 = vpop.xlane.xlu0 %5283
        %v5285 = vmul.f32 %v5191, %v1045
        %v5286 = vmul.f32 %v5194, %v1045
        %v5287 = vmul.f32 %v5197, %v1045
        %v5288 = vmul.f32 %v5200, %v1045
        %v5289 = vmul.f32 %v5203, %v1045
        %v5290 = vmul.f32 %v5206, %v1045
        %v5291 = vmul.f32 %v5209, %v1045
        %v5292 = vmul.f32 %v5212, %v1045
        %v5293 = vmul.f32 %v5215, %v1045
        %v5294 = vmul.f32 %v5218, %v1045
        %v5295 = vmul.f32 %v5221, %v1045
        %v5296 = vmul.f32 %v5224, %v1045
        %v5297 = vmul.f32 %v5227, %v1045
        %v5298 = vmul.f32 %v5230, %v1045
        %v5299 = vmul.f32 %v5233, %v1045
        %v5300 = vmul.f32 %v5236, %v1045
        %v5301 = vmul.f32 %v5239, %v1045
        %v5302 = vmul.f32 %v5242, %v1045
        %v5303 = vmul.f32 %v5245, %v1045
        %v5304 = vmul.f32 %v5248, %v1045
        %v5305 = vmul.f32 %v5251, %v1045
        %v5306 = vmul.f32 %v5254, %v1045
        %v5307 = vmul.f32 %v5257, %v1045
        %v5308 = vmul.f32 %v5260, %v1045
        %v5309 = vmul.f32 %v5263, %v1045
        %v5310 = vmul.f32 %v5266, %v1045
        %v5311 = vmul.f32 %v5269, %v1045
        %v5312 = vmul.f32 %v5272, %v1045
        %v5313 = vmul.f32 %v5275, %v1045
        %v5314 = vmul.f32 %v5278, %v1045
        %v5315 = vmul.f32 %v5281, %v1045
        %v5316 = vmul.f32 %v5284, %v1045
        %v5317 = vsub.f32 %v5157, %v5285
        %v5318 = vsub.f32 %v5158, %v5286
        %v5319 = vsub.f32 %v5159, %v5287
        %v5320 = vsub.f32 %v5160, %v5288
        %v5321 = vsub.f32 %v5161, %v5289
        %v5322 = vsub.f32 %v5162, %v5290
        %v5323 = vsub.f32 %v5163, %v5291
        %v5324 = vsub.f32 %v5164, %v5292
        %v5325 = vsub.f32 %v5165, %v5293
        %v5326 = vsub.f32 %v5166, %v5294
        %v5327 = vsub.f32 %v5167, %v5295
        %v5328 = vsub.f32 %v5168, %v5296
        %v5329 = vsub.f32 %v5169, %v5297
        %v5330 = vsub.f32 %v5170, %v5298
        %v5331 = vsub.f32 %v5171, %v5299
        %v5332 = vsub.f32 %v5172, %v5300
        %v5333 = vsub.f32 %v5173, %v5301
        %v5334 = vsub.f32 %v5174, %v5302
        %v5335 = vsub.f32 %v5175, %v5303
        %v5336 = vsub.f32 %v5176, %v5304
        %v5337 = vsub.f32 %v5177, %v5305
        %v5338 = vsub.f32 %v5178, %v5306
        %v5339 = vsub.f32 %v5179, %v5307
        %v5340 = vsub.f32 %v5180, %v5308
        %v5341 = vsub.f32 %v5181, %v5309
        %v5342 = vsub.f32 %v5182, %v5310
        %v5343 = vsub.f32 %v5183, %v5311
        %v5344 = vsub.f32 %v5184, %v5312
        %v5345 = vsub.f32 %v5185, %v5313
        %v5346 = vsub.f32 %v5186, %v5314
        %v5347 = vsub.f32 %v5187, %v5315
        %v5348 = vsub.f32 %v5188, %v5316
        %v5349 = vmul.f32 %v5317, %v5317
        %v5350 = vmul.f32 %v5318, %v5318
        %v5351 = vmul.f32 %v5319, %v5319
        %v5352 = vmul.f32 %v5320, %v5320
        %v5353 = vmul.f32 %v5321, %v5321
        %v5354 = vmul.f32 %v5322, %v5322
        %v5355 = vmul.f32 %v5323, %v5323
        %v5356 = vmul.f32 %v5324, %v5324
        %v5357 = vmul.f32 %v5325, %v5325
        %v5358 = vmul.f32 %v5326, %v5326
        %v5359 = vmul.f32 %v5327, %v5327
        %v5360 = vmul.f32 %v5328, %v5328
        %v5361 = vmul.f32 %v5329, %v5329
        %v5362 = vmul.f32 %v5330, %v5330
        %v5363 = vmul.f32 %v5331, %v5331
        %v5364 = vmul.f32 %v5332, %v5332
        %v5365 = vmul.f32 %v5333, %v5333
        %v5366 = vmul.f32 %v5334, %v5334
        %v5367 = vmul.f32 %v5335, %v5335
        %v5368 = vmul.f32 %v5336, %v5336
        %v5369 = vmul.f32 %v5337, %v5337
        %v5370 = vmul.f32 %v5338, %v5338
        %v5371 = vmul.f32 %v5339, %v5339
        %v5372 = vmul.f32 %v5340, %v5340
        %v5373 = vmul.f32 %v5341, %v5341
        %v5374 = vmul.f32 %v5342, %v5342
        %v5375 = vmul.f32 %v5343, %v5343
        %v5376 = vmul.f32 %v5344, %v5344
        %v5377 = vmul.f32 %v5345, %v5345
        %v5378 = vmul.f32 %v5346, %v5346
        %v5379 = vmul.f32 %v5347, %v5347
        %v5380 = vmul.f32 %v5348, %v5348
        %v5381 = vsel %vm948, %v5349, 0.0
        %5382 = vadd.xlane.f32.xlu0 %v5381
        %v5383 = vpop.xlane.xlu0 %5382
        %v5384 = vsel %vm948, %v5350, 0.0
        %5385 = vadd.xlane.f32.xlu0 %v5384
        %v5386 = vpop.xlane.xlu0 %5385
        %v5387 = vsel %vm948, %v5351, 0.0
        %5388 = vadd.xlane.f32.xlu0 %v5387
        %v5389 = vpop.xlane.xlu0 %5388
        %v5390 = vsel %vm948, %v5352, 0.0
        %5391 = vadd.xlane.f32.xlu0 %v5390
        %v5392 = vpop.xlane.xlu0 %5391
        %v5393 = vsel %vm948, %v5353, 0.0
        %5394 = vadd.xlane.f32.xlu0 %v5393
        %v5395 = vpop.xlane.xlu0 %5394
        %v5396 = vsel %vm948, %v5354, 0.0
        %5397 = vadd.xlane.f32.xlu0 %v5396
        %v5398 = vpop.xlane.xlu0 %5397
        %v5399 = vsel %vm948, %v5355, 0.0
        %5400 = vadd.xlane.f32.xlu0 %v5399
        %v5401 = vpop.xlane.xlu0 %5400
        %v5402 = vsel %vm948, %v5356, 0.0
        %5403 = vadd.xlane.f32.xlu0 %v5402
        %v5404 = vpop.xlane.xlu0 %5403
        %v5405 = vsel %vm948, %v5357, 0.0
        %5406 = vadd.xlane.f32.xlu0 %v5405
        %v5407 = vpop.xlane.xlu0 %5406
        %v5408 = vsel %vm948, %v5358, 0.0
        %5409 = vadd.xlane.f32.xlu0 %v5408
        %v5410 = vpop.xlane.xlu0 %5409
        %v5411 = vsel %vm948, %v5359, 0.0
        %5412 = vadd.xlane.f32.xlu0 %v5411
        %v5413 = vpop.xlane.xlu0 %5412
        %v5414 = vsel %vm948, %v5360, 0.0
        %5415 = vadd.xlane.f32.xlu0 %v5414
        %v5416 = vpop.xlane.xlu0 %5415
        %v5417 = vsel %vm948, %v5361, 0.0
        %5418 = vadd.xlane.f32.xlu0 %v5417
        %v5419 = vpop.xlane.xlu0 %5418
        %v5420 = vsel %vm948, %v5362, 0.0
        %5421 = vadd.xlane.f32.xlu0 %v5420
        %v5422 = vpop.xlane.xlu0 %5421
        %v5423 = vsel %vm948, %v5363, 0.0
        %5424 = vadd.xlane.f32.xlu0 %v5423
        %v5425 = vpop.xlane.xlu0 %5424
        %v5426 = vsel %vm948, %v5364, 0.0
        %5427 = vadd.xlane.f32.xlu0 %v5426
        %v5428 = vpop.xlane.xlu0 %5427
        %v5429 = vsel %vm948, %v5365, 0.0
        %5430 = vadd.xlane.f32.xlu0 %v5429
        %v5431 = vpop.xlane.xlu0 %5430
        %v5432 = vsel %vm948, %v5366, 0.0
        %5433 = vadd.xlane.f32.xlu0 %v5432
        %v5434 = vpop.xlane.xlu0 %5433
        %v5435 = vsel %vm948, %v5367, 0.0
        %5436 = vadd.xlane.f32.xlu0 %v5435
        %v5437 = vpop.xlane.xlu0 %5436
        %v5438 = vsel %vm948, %v5368, 0.0
        %5439 = vadd.xlane.f32.xlu0 %v5438
        %v5440 = vpop.xlane.xlu0 %5439
        %v5441 = vsel %vm948, %v5369, 0.0
        %5442 = vadd.xlane.f32.xlu0 %v5441
        %v5443 = vpop.xlane.xlu0 %5442
        %v5444 = vsel %vm948, %v5370, 0.0
        %5445 = vadd.xlane.f32.xlu0 %v5444
        %v5446 = vpop.xlane.xlu0 %5445
        %v5447 = vsel %vm948, %v5371, 0.0
        %5448 = vadd.xlane.f32.xlu0 %v5447
        %v5449 = vpop.xlane.xlu0 %5448
        %v5450 = vsel %vm948, %v5372, 0.0
        %5451 = vadd.xlane.f32.xlu0 %v5450
        %v5452 = vpop.xlane.xlu0 %5451
        %v5453 = vsel %vm948, %v5373, 0.0
        %5454 = vadd.xlane.f32.xlu0 %v5453
        %v5455 = vpop.xlane.xlu0 %5454
        %v5456 = vsel %vm948, %v5374, 0.0
        %5457 = vadd.xlane.f32.xlu0 %v5456
        %v5458 = vpop.xlane.xlu0 %5457
        %v5459 = vsel %vm948, %v5375, 0.0
        %5460 = vadd.xlane.f32.xlu0 %v5459
        %v5461 = vpop.xlane.xlu0 %5460
        %v5462 = vsel %vm948, %v5376, 0.0
        %5463 = vadd.xlane.f32.xlu0 %v5462
        %v5464 = vpop.xlane.xlu0 %5463
        %v5465 = vsel %vm948, %v5377, 0.0
        %5466 = vadd.xlane.f32.xlu0 %v5465
        %v5467 = vpop.xlane.xlu0 %5466
        %v5468 = vsel %vm948, %v5378, 0.0
        %5469 = vadd.xlane.f32.xlu0 %v5468
        %v5470 = vpop.xlane.xlu0 %5469
        %v5471 = vsel %vm948, %v5379, 0.0
        %5472 = vadd.xlane.f32.xlu0 %v5471
        %v5473 = vpop.xlane.xlu0 %5472
        %v5474 = vsel %vm948, %v5380, 0.0
        %5475 = vadd.xlane.f32.xlu0 %v5474
        %v5476 = vpop.xlane.xlu0 %5475
        %v5477 = vmul.f32 %v5383, %v1045
        %v5478 = vmul.f32 %v5386, %v1045
        %v5479 = vmul.f32 %v5389, %v1045
        %v5480 = vmul.f32 %v5392, %v1045
        %v5481 = vmul.f32 %v5395, %v1045
        %v5482 = vmul.f32 %v5398, %v1045
        %v5483 = vmul.f32 %v5401, %v1045
        %v5484 = vmul.f32 %v5404, %v1045
        %v5485 = vmul.f32 %v5407, %v1045
        %v5486 = vmul.f32 %v5410, %v1045
        %v5487 = vmul.f32 %v5413, %v1045
        %v5488 = vmul.f32 %v5416, %v1045
        %v5489 = vmul.f32 %v5419, %v1045
        %v5490 = vmul.f32 %v5422, %v1045
        %v5491 = vmul.f32 %v5425, %v1045
        %v5492 = vmul.f32 %v5428, %v1045
        %v5493 = vmul.f32 %v5431, %v1045
        %v5494 = vmul.f32 %v5434, %v1045
        %v5495 = vmul.f32 %v5437, %v1045
        %v5496 = vmul.f32 %v5440, %v1045
        %v5497 = vmul.f32 %v5443, %v1045
        %v5498 = vmul.f32 %v5446, %v1045
        %v5499 = vmul.f32 %v5449, %v1045
        %v5500 = vmul.f32 %v5452, %v1045
        %v5501 = vmul.f32 %v5455, %v1045
        %v5502 = vmul.f32 %v5458, %v1045
        %v5503 = vmul.f32 %v5461, %v1045
        %v5504 = vmul.f32 %v5464, %v1045
        %v5505 = vmul.f32 %v5467, %v1045
        %v5506 = vmul.f32 %v5470, %v1045
        %v5507 = vmul.f32 %v5473, %v1045
        %v5508 = vmul.f32 %v5476, %v1045
        %v5509 = vadd.f32 %v5477, 1e-05
        %v5510 = vadd.f32 %v5478, 1e-05
        %v5511 = vadd.f32 %v5479, 1e-05
        %v5512 = vadd.f32 %v5480, 1e-05
        %v5513 = vadd.f32 %v5481, 1e-05
        %v5514 = vadd.f32 %v5482, 1e-05
        %v5515 = vadd.f32 %v5483, 1e-05
        %v5516 = vadd.f32 %v5484, 1e-05
        %v5517 = vadd.f32 %v5485, 1e-05
        %v5518 = vadd.f32 %v5486, 1e-05
        %v5519 = vadd.f32 %v5487, 1e-05
        %v5520 = vadd.f32 %v5488, 1e-05
        %v5521 = vadd.f32 %v5489, 1e-05
        %v5522 = vadd.f32 %v5490, 1e-05
        %v5523 = vadd.f32 %v5491, 1e-05
        %v5524 = vadd.f32 %v5492, 1e-05
        %v5525 = vadd.f32 %v5493, 1e-05
        %v5526 = vadd.f32 %v5494, 1e-05
        %v5527 = vadd.f32 %v5495, 1e-05
        %v5528 = vadd.f32 %v5496, 1e-05
        %v5529 = vadd.f32 %v5497, 1e-05
        %v5530 = vadd.f32 %v5498, 1e-05
        %v5531 = vadd.f32 %v5499, 1e-05
        %v5532 = vadd.f32 %v5500, 1e-05
        %v5533 = vadd.f32 %v5501, 1e-05
        %v5534 = vadd.f32 %v5502, 1e-05
        %v5535 = vadd.f32 %v5503, 1e-05
        %v5536 = vadd.f32 %v5504, 1e-05
        %v5537 = vadd.f32 %v5505, 1e-05
        %v5538 = vadd.f32 %v5506, 1e-05
        %v5539 = vadd.f32 %v5507, 1e-05
        %v5540 = vadd.f32 %v5508, 1e-05
        %v5541 = vrsqrt.pop %v5509
        %v5542 = vrsqrt.pop %v5510
        %v5543 = vrsqrt.pop %v5511
        %v5544 = vrsqrt.pop %v5512
        %v5545 = vrsqrt.pop %v5513
        %v5546 = vrsqrt.pop %v5514
        %v5547 = vrsqrt.pop %v5515
        %v5548 = vrsqrt.pop %v5516
        %v5549 = vrsqrt.pop %v5517
        %v5550 = vrsqrt.pop %v5518
        %v5551 = vrsqrt.pop %v5519
        %v5552 = vrsqrt.pop %v5520
        %v5553 = vrsqrt.pop %v5521
        %v5554 = vrsqrt.pop %v5522
        %v5555 = vrsqrt.pop %v5523
        %v5556 = vrsqrt.pop %v5524
        %v5557 = vrsqrt.pop %v5525
        %v5558 = vrsqrt.pop %v5526
        %v5559 = vrsqrt.pop %v5527
        %v5560 = vrsqrt.pop %v5528
        %v5561 = vrsqrt.pop %v5529
        %v5562 = vrsqrt.pop %v5530
        %v5563 = vrsqrt.pop %v5531
        %v5564 = vrsqrt.pop %v5532
        %v5565 = vrsqrt.pop %v5533
        %v5566 = vrsqrt.pop %v5534
        %v5567 = vrsqrt.pop %v5535
        %v5568 = vrsqrt.pop %v5536
        %v5569 = vrsqrt.pop %v5537
        %v5570 = vrsqrt.pop %v5538
        %v5571 = vrsqrt.pop %v5539
        %v5572 = vrsqrt.pop %v5540
        %v5573 = vmul.f32 %v5317, %v5541
        %v5574 = vmul.f32 %v5318, %v5542
        %v5575 = vmul.f32 %v5319, %v5543
        %v5576 = vmul.f32 %v5320, %v5544
        %v5577 = vmul.f32 %v5321, %v5545
        %v5578 = vmul.f32 %v5322, %v5546
        %v5579 = vmul.f32 %v5323, %v5547
        %v5580 = vmul.f32 %v5324, %v5548
        %v5581 = vmul.f32 %v5325, %v5549
        %v5582 = vmul.f32 %v5326, %v5550
        %v5583 = vmul.f32 %v5327, %v5551
        %v5584 = vmul.f32 %v5328, %v5552
        %v5585 = vmul.f32 %v5329, %v5553
        %v5586 = vmul.f32 %v5330, %v5554
        %v5587 = vmul.f32 %v5331, %v5555
        %v5588 = vmul.f32 %v5332, %v5556
        %v5589 = vmul.f32 %v5333, %v5557
        %v5590 = vmul.f32 %v5334, %v5558
        %v5591 = vmul.f32 %v5335, %v5559
        %v5592 = vmul.f32 %v5336, %v5560
        %v5593 = vmul.f32 %v5337, %v5561
        %v5594 = vmul.f32 %v5338, %v5562
        %v5595 = vmul.f32 %v5339, %v5563
        %v5596 = vmul.f32 %v5340, %v5564
        %v5597 = vmul.f32 %v5341, %v5565
        %v5598 = vmul.f32 %v5342, %v5566
        %v5599 = vmul.f32 %v5343, %v5567
        %v5600 = vmul.f32 %v5344, %v5568
        %v5601 = vmul.f32 %v5345, %v5569
        %v5602 = vmul.f32 %v5346, %v5570
        %v5603 = vmul.f32 %v5347, %v5571
        %v5604 = vmul.f32 %v5348, %v5572
        %v5605 = vlaneseq
        %v5606 = vshrl.u32 %v5605, 7
        %v5607 = vsub.s32 4, %v5606
        %v5608 = vrot.slane %v945, %v5607
        %v5609 = vmul.f32 %v5573, %v5608
        %v5610 = vmul.f32 %v5574, %v5608
        %v5611 = vmul.f32 %v5575, %v5608
        %v5612 = vmul.f32 %v5576, %v5608
        %v5613 = vmul.f32 %v5577, %v5608
        %v5614 = vmul.f32 %v5578, %v5608
        %v5615 = vmul.f32 %v5579, %v5608
        %v5616 = vmul.f32 %v5580, %v5608
        %v5617 = vmul.f32 %v5581, %v5608
        %v5618 = vmul.f32 %v5582, %v5608
        %v5619 = vmul.f32 %v5583, %v5608
        %v5620 = vmul.f32 %v5584, %v5608
        %v5621 = vmul.f32 %v5585, %v5608
        %v5622 = vmul.f32 %v5586, %v5608
        %v5623 = vmul.f32 %v5587, %v5608
        %v5624 = vmul.f32 %v5588, %v5608
        %v5625 = vmul.f32 %v5589, %v5608
        %v5626 = vmul.f32 %v5590, %v5608
        %v5627 = vmul.f32 %v5591, %v5608
        %v5628 = vmul.f32 %v5592, %v5608
        %v5629 = vmul.f32 %v5593, %v5608
        %v5630 = vmul.f32 %v5594, %v5608
        %v5631 = vmul.f32 %v5595, %v5608
        %v5632 = vmul.f32 %v5596, %v5608
        %v5633 = vmul.f32 %v5597, %v5608
        %v5634 = vmul.f32 %v5598, %v5608
        %v5635 = vmul.f32 %v5599, %v5608
        %v5636 = vmul.f32 %v5600, %v5608
        %v5637 = vmul.f32 %v5601, %v5608
        %v5638 = vmul.f32 %v5602, %v5608
        %v5639 = vmul.f32 %v5603, %v5608
        %v5640 = vmul.f32 %v5604, %v5608
        %v5641 = vlaneseq
        %v5642 = vshrl.u32 %v5641, 7
        %v5643 = vsub.s32 5, %v5642
        %v5644 = vrot.slane %v945, %v5643
        %v5645 = vadd.f32 %v5609, %v5644
        %v5646 = vadd.f32 %v5610, %v5644
        %v5647 = vadd.f32 %v5611, %v5644
        %v5648 = vadd.f32 %v5612, %v5644
        %v5649 = vadd.f32 %v5613, %v5644
        %v5650 = vadd.f32 %v5614, %v5644
        %v5651 = vadd.f32 %v5615, %v5644
        %v5652 = vadd.f32 %v5616, %v5644
        %v5653 = vadd.f32 %v5617, %v5644
        %v5654 = vadd.f32 %v5618, %v5644
        %v5655 = vadd.f32 %v5619, %v5644
        %v5656 = vadd.f32 %v5620, %v5644
        %v5657 = vadd.f32 %v5621, %v5644
        %v5658 = vadd.f32 %v5622, %v5644
        %v5659 = vadd.f32 %v5623, %v5644
        %v5660 = vadd.f32 %v5624, %v5644
        %v5661 = vadd.f32 %v5625, %v5644
        %v5662 = vadd.f32 %v5626, %v5644
        %v5663 = vadd.f32 %v5627, %v5644
        %v5664 = vadd.f32 %v5628, %v5644
        %v5665 = vadd.f32 %v5629, %v5644
        %v5666 = vadd.f32 %v5630, %v5644
        %v5667 = vadd.f32 %v5631, %v5644
        %v5668 = vadd.f32 %v5632, %v5644
        %v5669 = vadd.f32 %v5633, %v5644
        %v5670 = vadd.f32 %v5634, %v5644
        %v5671 = vadd.f32 %v5635, %v5644
        %v5672 = vadd.f32 %v5636, %v5644
        %v5673 = vadd.f32 %v5637, %v5644
        %v5674 = vadd.f32 %v5638, %v5644
        %v5675 = vadd.f32 %v5639, %v5644
        %v5676 = vadd.f32 %v5640, %v5644
        %v5677 = vpack.c.bf16 %v5646, %v5645
        %v5678 = vpack.c.bf16 %v5648, %v5647
        %v5679 = vpack.c.bf16 %v5650, %v5649
        %v5680 = vpack.c.bf16 %v5652, %v5651
        %v5681 = vpack.c.bf16 %v5654, %v5653
        %v5682 = vpack.c.bf16 %v5656, %v5655
        %v5683 = vpack.c.bf16 %v5658, %v5657
        %v5684 = vpack.c.bf16 %v5660, %v5659
        %v5685 = vpack.c.bf16 %v5662, %v5661
        %v5686 = vpack.c.bf16 %v5664, %v5663
        %v5687 = vpack.c.bf16 %v5666, %v5665
        %v5688 = vpack.c.bf16 %v5668, %v5667
        %v5689 = vpack.c.bf16 %v5670, %v5669
        %v5690 = vpack.c.bf16 %v5672, %v5671
        %v5691 = vpack.c.bf16 %v5674, %v5673
        %v5692 = vpack.c.bf16 %v5676, %v5675
        %v5693 = vld [vmem:[#allocation25] sm:$0xff]
        %v5694 = vld [vmem:[#allocation25 + $0x8] sm:$0xff]
        %v5695 = vld [vmem:[#allocation25 + $0x10] sm:$0xff]
        %v5696 = vld [vmem:[#allocation25 + $0x18] sm:$0xff]
        %v5697 = vld [vmem:[#allocation25 + $0x20] sm:$0xff]
        %v5698 = vld [vmem:[#allocation25 + $0x28] sm:$0xff]
        %v5699 = vld [vmem:[#allocation25 + $0x30] sm:$0xff]
        %v5700 = vld [vmem:[#allocation25 + $0x38] sm:$0xff]
        %v5701 = vld [vmem:[#allocation26] sm:$0x3]
        %v5703 = vlaneseq
        %v5704 = vshrl.u32 %v5703, 7
        %v5705 = vsub.s32 0, %v5704
        %v5706 = vrot.slane %v5701, %v5705
        %v5707 = vlaneseq
        %v5708 = vshrl.u32 %v5707, 7
        %v5709 = vsub.s32 1, %v5708
        %v5710 = vrot.slane %v5701, %v5709
        %v5721 = vunpack.c.l.b16 %v5693
        %v5722 = vunpack.c.h.b16 %v5693
        %v5723 = vunpack.c.l.b16 %v5694
        %v5724 = vunpack.c.h.b16 %v5694
        %v5725 = vunpack.c.l.b16 %v5695
        %v5726 = vunpack.c.h.b16 %v5695
        %v5727 = vunpack.c.l.b16 %v5696
        %v5728 = vunpack.c.h.b16 %v5696
        %v5729 = vunpack.c.l.b16 %v5697
        %v5730 = vunpack.c.h.b16 %v5697
        %v5731 = vunpack.c.l.b16 %v5698
        %v5732 = vunpack.c.h.b16 %v5698
        %v5733 = vunpack.c.l.b16 %v5699
        %v5734 = vunpack.c.h.b16 %v5699
        %v5735 = vunpack.c.l.b16 %v5700
        %v5736 = vunpack.c.h.b16 %v5700
        %v5737 = vpack.c.b16 %v5723, %v5721
        %v5738 = vpack.c.b16 %v5724, %v5722
        %v5739 = vpack.c.b16 %v5727, %v5725
        %v5740 = vpack.c.b16 %v5728, %v5726
        %v5741 = vpack.c.b16 %v5731, %v5729
        %v5742 = vpack.c.b16 %v5732, %v5730
        %v5743 = vpack.c.b16 %v5735, %v5733
        %v5744 = vpack.c.b16 %v5736, %v5734
        %v5754 = vsel %vm948, %v5677, 0
        %v5757 = vsel %vm948, %v5678, 0
        %v5760 = vsel %vm948, %v5679, 0
        %v5763 = vsel %vm948, %v5680, 0
        %v5766 = vsel %vm948, %v5681, 0
        %v5769 = vsel %vm948, %v5682, 0
        %v5772 = vsel %vm948, %v5683, 0
        %v5775 = vsel %vm948, %v5684, 0
        %v5778 = vsel %vm948, %v5685, 0
        %v5781 = vsel %vm948, %v5686, 0
        %v5784 = vsel %vm948, %v5687, 0
        %v5787 = vsel %vm948, %v5688, 0
        %v5790 = vsel %vm948, %v5689, 0
        %v5793 = vsel %vm948, %v5690, 0
        %v5796 = vsel %vm948, %v5691, 0
        %v5799 = vsel %vm948, %v5692, 0
        %5801 = vmatprep.subr.bf16.mxu0 %v5738
        %5802 = vmatpush1.bf16.msra.mxu0 %v5737
        %5803 = vmatprep.subr.bf16.mxu0 %v5740
        %5804 = vmatpush1.bf16.msra.mxu0 %v5739
        %5805 = vmatprep.subr.bf16.mxu0 %v5742
        %5806 = vmatpush1.bf16.msra.mxu0 %v5741
        %5807 = vmatprep.subr.bf16.mxu0 %v5744
        %5808 = vmatpush1.bf16.msra.mxu0 %v5743
        %5809 = vmatprep.subr.bf16.mxu0 0
        %5810 = vmatpush1.bf16.msra.mxu0 0
        %5811 = vmatprep.subr.bf16.mxu0 0
        %5812 = vmatpush1.bf16.msra.mxu0 0
        %5813 = vmatprep.subr.bf16.mxu0 0
        %5814 = vmatpush1.bf16.msra.mxu0 0
        %5815 = vmatprep.subr.bf16.mxu0 0
        %5816 = vmatpush1.bf16.msra.mxu0 0
        %5817 = vmatprep.subr.bf16.mxu0 0
        %5818 = vmatpush1.bf16.msra.mxu0 0
        %5819 = vmatprep.subr.bf16.mxu0 0
        %5820 = vmatpush1.bf16.msra.mxu0 0
        %5821 = vmatprep.subr.bf16.mxu0 0
        %5822 = vmatpush1.bf16.msra.mxu0 0
        %5823 = vmatprep.subr.bf16.mxu0 0
        %5824 = vmatpush1.bf16.msra.mxu0 0
        %5825 = vmatprep.subr.bf16.mxu0 0
        %5826 = vmatpush1.bf16.msra.mxu0 0
        %5827 = vmatprep.subr.bf16.mxu0 0
        %5828 = vmatpush1.bf16.msra.mxu0 0
        %5829 = vmatprep.subr.bf16.mxu0 0
        %5830 = vmatpush1.bf16.msra.mxu0 0
        %5831 = vmatprep.subr.bf16.mxu0 0
        %5832 = vmatpush1.bf16.msra.mxu0 0
        %5833 = vmatprep.mubr.bf16.mxu0 0
        %5834 = vmatmul.mubr.bf16.gmra.mrb[0].mxu0 %v5754
        %v5835 = vpop.f32.mrb[0].mxu0
        %v5836 = vadd.f32 %v5706, %v5835
        %v5837 = vpop.f32.mrb[0].mxu0
        %v5838 = vadd.f32 %v5710, %v5837
        %v5839 = vpop.f32.mrb[0].mxu0
        %v5840 = vadd.f32 %v5706, %v5839
        %v5841 = vpop.f32.mrb[0].mxu0
        %v5842 = vadd.f32 %v5710, %v5841
        %5843 = vmatprep.mubr.bf16.mxu0 0
        %5844 = vmatmul.mubr.bf16.gmra.mrb[0].mxu0 %v5757
        %v5845 = vpop.f32.mrb[0].mxu0
        %v5846 = vadd.f32 %v5706, %v5845
        %v5847 = vpop.f32.mrb[0].mxu0
        %v5848 = vadd.f32 %v5710, %v5847
        %v5849 = vpop.f32.mrb[0].mxu0
        %v5850 = vadd.f32 %v5706, %v5849
        %v5851 = vpop.f32.mrb[0].mxu0
        %v5852 = vadd.f32 %v5710, %v5851
        %5853 = vmatprep.mubr.bf16.mxu0 0
        %5854 = vmatmul.mubr.bf16.gmra.mrb[0].mxu0 %v5760
        %v5855 = vpop.f32.mrb[0].mxu0
        %v5856 = vadd.f32 %v5706, %v5855
        %v5857 = vpop.f32.mrb[0].mxu0
        %v5858 = vadd.f32 %v5710, %v5857
        %v5859 = vpop.f32.mrb[0].mxu0
        %v5860 = vadd.f32 %v5706, %v5859
        %v5861 = vpop.f32.mrb[0].mxu0
        %v5862 = vadd.f32 %v5710, %v5861
        %5863 = vmatprep.mubr.bf16.mxu0 0
        %5864 = vmatmul.mubr.bf16.gmra.mrb[0].mxu0 %v5763
        %v5865 = vpop.f32.mrb[0].mxu0
        %v5866 = vadd.f32 %v5706, %v5865
        %v5867 = vpop.f32.mrb[0].mxu0
        %v5868 = vadd.f32 %v5710, %v5867
        %v5869 = vpop.f32.mrb[0].mxu0
        %v5870 = vadd.f32 %v5706, %v5869
        %v5871 = vpop.f32.mrb[0].mxu0
        %v5872 = vadd.f32 %v5710, %v5871
        %5873 = vmatprep.mubr.bf16.mxu0 0
        %5874 = vmatmul.mubr.bf16.gmra.mrb[0].mxu0 %v5766
        %v5875 = vpop.f32.mrb[0].mxu0
        %v5876 = vadd.f32 %v5706, %v5875
        %v5877 = vpop.f32.mrb[0].mxu0
        %v5878 = vadd.f32 %v5710, %v5877
        %v5879 = vpop.f32.mrb[0].mxu0
        %v5880 = vadd.f32 %v5706, %v5879
        %v5881 = vpop.f32.mrb[0].mxu0
        %v5882 = vadd.f32 %v5710, %v5881
        %5883 = vmatprep.mubr.bf16.mxu0 0
        %5884 = vmatmul.mubr.bf16.gmra.mrb[0].mxu0 %v5769
        %v5885 = vpop.f32.mrb[0].mxu0
        %v5886 = vadd.f32 %v5706, %v5885
        %v5887 = vpop.f32.mrb[0].mxu0
        %v5888 = vadd.f32 %v5710, %v5887
        %v5889 = vpop.f32.mrb[0].mxu0
        %v5890 = vadd.f32 %v5706, %v5889
        %v5891 = vpop.f32.mrb[0].mxu0
        %v5892 = vadd.f32 %v5710, %v5891
        %5893 = vmatprep.mubr.bf16.mxu0 0
        %5894 = vmatmul.mubr.bf16.gmra.mrb[0].mxu0 %v5772
        %v5895 = vpop.f32.mrb[0].mxu0
        %v5896 = vadd.f32 %v5706, %v5895
        %v5897 = vpop.f32.mrb[0].mxu0
        %v5898 = vadd.f32 %v5710, %v5897
        %v5899 = vpop.f32.mrb[0].mxu0
        %v5900 = vadd.f32 %v5706, %v5899
        %v5901 = vpop.f32.mrb[0].mxu0
        %v5902 = vadd.f32 %v5710, %v5901
        %5903 = vmatprep.mubr.bf16.mxu0 0
        %5904 = vmatmul.mubr.bf16.gmra.mrb[0].mxu0 %v5775
        %v5905 = vpop.f32.mrb[0].mxu0
        %v5906 = vadd.f32 %v5706, %v5905
        %v5907 = vpop.f32.mrb[0].mxu0
        %v5908 = vadd.f32 %v5710, %v5907
        %v5909 = vpop.f32.mrb[0].mxu0
        %v5910 = vadd.f32 %v5706, %v5909
        %v5911 = vpop.f32.mrb[0].mxu0
        %v5912 = vadd.f32 %v5710, %v5911
        %5913 = vmatprep.mubr.bf16.mxu0 0
        %5914 = vmatmul.mubr.bf16.gmra.mrb[0].mxu0 %v5778
        %v5915 = vpop.f32.mrb[0].mxu0
        %v5916 = vadd.f32 %v5706, %v5915
        %v5917 = vpop.f32.mrb[0].mxu0
        %v5918 = vadd.f32 %v5710, %v5917
        %v5919 = vpop.f32.mrb[0].mxu0
        %v5920 = vadd.f32 %v5706, %v5919
        %v5921 = vpop.f32.mrb[0].mxu0
        %v5922 = vadd.f32 %v5710, %v5921
        %5923 = vmatprep.mubr.bf16.mxu0 0
        %5924 = vmatmul.mubr.bf16.gmra.mrb[0].mxu0 %v5781
        %v5925 = vpop.f32.mrb[0].mxu0
        %v5926 = vadd.f32 %v5706, %v5925
        %v5927 = vpop.f32.mrb[0].mxu0
        %v5928 = vadd.f32 %v5710, %v5927
        %v5929 = vpop.f32.mrb[0].mxu0
        %v5930 = vadd.f32 %v5706, %v5929
        %v5931 = vpop.f32.mrb[0].mxu0
        %v5932 = vadd.f32 %v5710, %v5931
        %5933 = vmatprep.mubr.bf16.mxu0 0
        %5934 = vmatmul.mubr.bf16.gmra.mrb[0].mxu0 %v5784
        %v5935 = vpop.f32.mrb[0].mxu0
        %v5936 = vadd.f32 %v5706, %v5935
        %v5937 = vpop.f32.mrb[0].mxu0
        %v5938 = vadd.f32 %v5710, %v5937
        %v5939 = vpop.f32.mrb[0].mxu0
        %v5940 = vadd.f32 %v5706, %v5939
        %v5941 = vpop.f32.mrb[0].mxu0
        %v5942 = vadd.f32 %v5710, %v5941
        %5943 = vmatprep.mubr.bf16.mxu0 0
        %5944 = vmatmul.mubr.bf16.gmra.mrb[0].mxu0 %v5787
        %v5945 = vpop.f32.mrb[0].mxu0
        %v5946 = vadd.f32 %v5706, %v5945
        %v5947 = vpop.f32.mrb[0].mxu0
        %v5948 = vadd.f32 %v5710, %v5947
        %v5949 = vpop.f32.mrb[0].mxu0
        %v5950 = vadd.f32 %v5706, %v5949
        %v5951 = vpop.f32.mrb[0].mxu0
        %v5952 = vadd.f32 %v5710, %v5951
        %5953 = vmatprep.mubr.bf16.mxu0 0
        %5954 = vmatmul.mubr.bf16.gmra.mrb[0].mxu0 %v5790
        %v5955 = vpop.f32.mrb[0].mxu0
        %v5956 = vadd.f32 %v5706, %v5955
        %v5957 = vpop.f32.mrb[0].mxu0
        %v5958 = vadd.f32 %v5710, %v5957
        %v5959 = vpop.f32.mrb[0].mxu0
        %v5960 = vadd.f32 %v5706, %v5959
        %v5961 = vpop.f32.mrb[0].mxu0
        %v5962 = vadd.f32 %v5710, %v5961
        %5963 = vmatprep.mubr.bf16.mxu0 0
        %5964 = vmatmul.mubr.bf16.gmra.mrb[0].mxu0 %v5793
        %v5965 = vpop.f32.mrb[0].mxu0
        %v5966 = vadd.f32 %v5706, %v5965
        %v5967 = vpop.f32.mrb[0].mxu0
        %v5968 = vadd.f32 %v5710, %v5967
        %v5969 = vpop.f32.mrb[0].mxu0
        %v5970 = vadd.f32 %v5706, %v5969
        %v5971 = vpop.f32.mrb[0].mxu0
        %v5972 = vadd.f32 %v5710, %v5971
        %5973 = vmatprep.mubr.bf16.mxu0 0
        %5974 = vmatmul.mubr.bf16.gmra.mrb[0].mxu0 %v5796
        %v5975 = vpop.f32.mrb[0].mxu0
        %v5976 = vadd.f32 %v5706, %v5975
        %v5977 = vpop.f32.mrb[0].mxu0
        %v5978 = vadd.f32 %v5710, %v5977
        %v5979 = vpop.f32.mrb[0].mxu0
        %v5980 = vadd.f32 %v5706, %v5979
        %v5981 = vpop.f32.mrb[0].mxu0
        %v5982 = vadd.f32 %v5710, %v5981
        %5983 = vmatprep.mubr.bf16.mxu0 0
        %5984 = vmatmul.mubr.bf16.gmra.mrb[0].mxu0 %v5799
        %v5985 = vpop.f32.mrb[0].mxu0
        %v5986 = vadd.f32 %v5706, %v5985
        %v5987 = vpop.f32.mrb[0].mxu0
        %v5988 = vadd.f32 %v5710, %v5987
        %v5989 = vpop.f32.mrb[0].mxu0
        %v5990 = vadd.f32 %v5706, %v5989
        %v5991 = vpop.f32.mrb[0].mxu0
        %v5992 = vadd.f32 %v5710, %v5991
        %5993 = vdwg.mxu0
        %v5994 = vmul.f32 %v5836, %v5836
        %v5995 = vmul.f32 %v5838, %v5838
        %v5996 = vmul.f32 %v5840, %v5840
        %v5997 = vmul.f32 %v5842, %v5842
        %v5998 = vmul.f32 %v5846, %v5846
        %v5999 = vmul.f32 %v5848, %v5848
        %v6000 = vmul.f32 %v5850, %v5850
        %v6001 = vmul.f32 %v5852, %v5852
        %v6002 = vmul.f32 %v5856, %v5856
        %v6003 = vmul.f32 %v5858, %v5858
        %v6004 = vmul.f32 %v5860, %v5860
        %v6005 = vmul.f32 %v5862, %v5862
        %v6006 = vmul.f32 %v5866, %v5866
        %v6007 = vmul.f32 %v5868, %v5868
        %v6008 = vmul.f32 %v5870, %v5870
        %v6009 = vmul.f32 %v5872, %v5872
        %v6010 = vmul.f32 %v5876, %v5876
        %v6011 = vmul.f32 %v5878, %v5878
        %v6012 = vmul.f32 %v5880, %v5880
        %v6013 = vmul.f32 %v5882, %v5882
        %v6014 = vmul.f32 %v5886, %v5886
        %v6015 = vmul.f32 %v5888, %v5888
        %v6016 = vmul.f32 %v5890, %v5890
        %v6017 = vmul.f32 %v5892, %v5892
        %v6018 = vmul.f32 %v5896, %v5896
        %v6019 = vmul.f32 %v5898, %v5898
        %v6020 = vmul.f32 %v5900, %v5900
        %v6021 = vmul.f32 %v5902, %v5902
        %v6022 = vmul.f32 %v5906, %v5906
        %v6023 = vmul.f32 %v5908, %v5908
        %v6024 = vmul.f32 %v5910, %v5910
        %v6025 = vmul.f32 %v5912, %v5912
        %v6026 = vmul.f32 %v5916, %v5916
        %v6027 = vmul.f32 %v5918, %v5918
        %v6028 = vmul.f32 %v5920, %v5920
        %v6029 = vmul.f32 %v5922, %v5922
        %v6030 = vmul.f32 %v5926, %v5926
        %v6031 = vmul.f32 %v5928, %v5928
        %v6032 = vmul.f32 %v5930, %v5930
        %v6033 = vmul.f32 %v5932, %v5932
        %v6034 = vmul.f32 %v5936, %v5936
        %v6035 = vmul.f32 %v5938, %v5938
        %v6036 = vmul.f32 %v5940, %v5940
        %v6037 = vmul.f32 %v5942, %v5942
        %v6038 = vmul.f32 %v5946, %v5946
        %v6039 = vmul.f32 %v5948, %v5948
        %v6040 = vmul.f32 %v5950, %v5950
        %v6041 = vmul.f32 %v5952, %v5952
        %v6042 = vmul.f32 %v5956, %v5956
        %v6043 = vmul.f32 %v5958, %v5958
        %v6044 = vmul.f32 %v5960, %v5960
        %v6045 = vmul.f32 %v5962, %v5962
        %v6046 = vmul.f32 %v5966, %v5966
        %v6047 = vmul.f32 %v5968, %v5968
        %v6048 = vmul.f32 %v5970, %v5970
        %v6049 = vmul.f32 %v5972, %v5972
        %v6050 = vmul.f32 %v5976, %v5976
        %v6051 = vmul.f32 %v5978, %v5978
        %v6052 = vmul.f32 %v5980, %v5980
        %v6053 = vmul.f32 %v5982, %v5982
        %v6054 = vmul.f32 %v5986, %v5986
        %v6055 = vmul.f32 %v5988, %v5988
        %v6056 = vmul.f32 %v5990, %v5990
        %v6057 = vmul.f32 %v5992, %v5992
        %v6058 = vmul.f32 %v5836, %v5994
        %v6059 = vmul.f32 %v5838, %v5995
        %v6060 = vmul.f32 %v5840, %v5996
        %v6061 = vmul.f32 %v5842, %v5997
        %v6062 = vmul.f32 %v5846, %v5998
        %v6063 = vmul.f32 %v5848, %v5999
        %v6064 = vmul.f32 %v5850, %v6000
        %v6065 = vmul.f32 %v5852, %v6001
        %v6066 = vmul.f32 %v5856, %v6002
        %v6067 = vmul.f32 %v5858, %v6003
        %v6068 = vmul.f32 %v5860, %v6004
        %v6069 = vmul.f32 %v5862, %v6005
        %v6070 = vmul.f32 %v5866, %v6006
        %v6071 = vmul.f32 %v5868, %v6007
        %v6072 = vmul.f32 %v5870, %v6008
        %v6073 = vmul.f32 %v5872, %v6009
        %v6074 = vmul.f32 %v5876, %v6010
        %v6075 = vmul.f32 %v5878, %v6011
        %v6076 = vmul.f32 %v5880, %v6012
        %v6077 = vmul.f32 %v5882, %v6013
        %v6078 = vmul.f32 %v5886, %v6014
        %v6079 = vmul.f32 %v5888, %v6015
        %v6080 = vmul.f32 %v5890, %v6016
        %v6081 = vmul.f32 %v5892, %v6017
        %v6082 = vmul.f32 %v5896, %v6018
        %v6083 = vmul.f32 %v5898, %v6019
        %v6084 = vmul.f32 %v5900, %v6020
        %v6085 = vmul.f32 %v5902, %v6021
        %v6086 = vmul.f32 %v5906, %v6022
        %v6087 = vmul.f32 %v5908, %v6023
        %v6088 = vmul.f32 %v5910, %v6024
        %v6089 = vmul.f32 %v5912, %v6025
        %v6090 = vmul.f32 %v5916, %v6026
        %v6091 = vmul.f32 %v5918, %v6027
        %v6092 = vmul.f32 %v5920, %v6028
        %v6093 = vmul.f32 %v5922, %v6029
        %v6094 = vmul.f32 %v5926, %v6030
        %v6095 = vmul.f32 %v5928, %v6031
        %v6096 = vmul.f32 %v5930, %v6032
        %v6097 = vmul.f32 %v5932, %v6033
        %v6098 = vmul.f32 %v5936, %v6034
        %v6099 = vmul.f32 %v5938, %v6035
        %v6100 = vmul.f32 %v5940, %v6036
        %v6101 = vmul.f32 %v5942, %v6037
        %v6102 = vmul.f32 %v5946, %v6038
        %v6103 = vmul.f32 %v5948, %v6039
        %v6104 = vmul.f32 %v5950, %v6040
        %v6105 = vmul.f32 %v5952, %v6041
        %v6106 = vmul.f32 %v5956, %v6042
        %v6107 = vmul.f32 %v5958, %v6043
        %v6108 = vmul.f32 %v5960, %v6044
        %v6109 = vmul.f32 %v5962, %v6045
        %v6110 = vmul.f32 %v5966, %v6046
        %v6111 = vmul.f32 %v5968, %v6047
        %v6112 = vmul.f32 %v5970, %v6048
        %v6113 = vmul.f32 %v5972, %v6049
        %v6114 = vmul.f32 %v5976, %v6050
        %v6115 = vmul.f32 %v5978, %v6051
        %v6116 = vmul.f32 %v5980, %v6052
        %v6117 = vmul.f32 %v5982, %v6053
        %v6118 = vmul.f32 %v5986, %v6054
        %v6119 = vmul.f32 %v5988, %v6055
        %v6120 = vmul.f32 %v5990, %v6056
        %v6121 = vmul.f32 %v5992, %v6057
        %v6122 = vmul.f32 %v6058, 0.044715
        %v6123 = vmul.f32 %v6059, 0.044715
        %v6124 = vmul.f32 %v6060, 0.044715
        %v6125 = vmul.f32 %v6061, 0.044715
        %v6126 = vmul.f32 %v6062, 0.044715
        %v6127 = vmul.f32 %v6063, 0.044715
        %v6128 = vmul.f32 %v6064, 0.044715
        %v6129 = vmul.f32 %v6065, 0.044715
        %v6130 = vmul.f32 %v6066, 0.044715
        %v6131 = vmul.f32 %v6067, 0.044715
        %v6132 = vmul.f32 %v6068, 0.044715
        %v6133 = vmul.f32 %v6069, 0.044715
        %v6134 = vmul.f32 %v6070, 0.044715
        %v6135 = vmul.f32 %v6071, 0.044715
        %v6136 = vmul.f32 %v6072, 0.044715
        %v6137 = vmul.f32 %v6073, 0.044715
        %v6138 = vmul.f32 %v6074, 0.044715
        %v6139 = vmul.f32 %v6075, 0.044715
        %v6140 = vmul.f32 %v6076, 0.044715
        %v6141 = vmul.f32 %v6077, 0.044715
        %v6142 = vmul.f32 %v6078, 0.044715
        %v6143 = vmul.f32 %v6079, 0.044715
        %v6144 = vmul.f32 %v6080, 0.044715
        %v6145 = vmul.f32 %v6081, 0.044715
        %v6146 = vmul.f32 %v6082, 0.044715
        %v6147 = vmul.f32 %v6083, 0.044715
        %v6148 = vmul.f32 %v6084, 0.044715
        %v6149 = vmul.f32 %v6085, 0.044715
        %v6150 = vmul.f32 %v6086, 0.044715
        %v6151 = vmul.f32 %v6087, 0.044715
        %v6152 = vmul.f32 %v6088, 0.044715
        %v6153 = vmul.f32 %v6089, 0.044715
        %v6154 = vmul.f32 %v6090, 0.044715
        %v6155 = vmul.f32 %v6091, 0.044715
        %v6156 = vmul.f32 %v6092, 0.044715
        %v6157 = vmul.f32 %v6093, 0.044715
        %v6158 = vmul.f32 %v6094, 0.044715
        %v6159 = vmul.f32 %v6095, 0.044715
        %v6160 = vmul.f32 %v6096, 0.044715
        %v6161 = vmul.f32 %v6097, 0.044715
        %v6162 = vmul.f32 %v6098, 0.044715
        %v6163 = vmul.f32 %v6099, 0.044715
        %v6164 = vmul.f32 %v6100, 0.044715
        %v6165 = vmul.f32 %v6101, 0.044715
        %v6166 = vmul.f32 %v6102, 0.044715
        %v6167 = vmul.f32 %v6103, 0.044715
        %v6168 = vmul.f32 %v6104, 0.044715
        %v6169 = vmul.f32 %v6105, 0.044715
        %v6170 = vmul.f32 %v6106, 0.044715
        %v6171 = vmul.f32 %v6107, 0.044715
        %v6172 = vmul.f32 %v6108, 0.044715
        %v6173 = vmul.f32 %v6109, 0.044715
        %v6174 = vmul.f32 %v6110, 0.044715
        %v6175 = vmul.f32 %v6111, 0.044715
        %v6176 = vmul.f32 %v6112, 0.044715
        %v6177 = vmul.f32 %v6113, 0.044715
        %v6178 = vmul.f32 %v6114, 0.044715
        %v6179 = vmul.f32 %v6115, 0.044715
        %v6180 = vmul.f32 %v6116, 0.044715
        %v6181 = vmul.f32 %v6117, 0.044715
        %v6182 = vmul.f32 %v6118, 0.044715
        %v6183 = vmul.f32 %v6119, 0.044715
        %v6184 = vmul.f32 %v6120, 0.044715
        %v6185 = vmul.f32 %v6121, 0.044715
        %v6186 = vadd.f32 %v5836, %v6122
        %v6187 = vadd.f32 %v5838, %v6123
        %v6188 = vadd.f32 %v5840, %v6124
        %v6189 = vadd.f32 %v5842, %v6125
        %v6190 = vadd.f32 %v5846, %v6126
        %v6191 = vadd.f32 %v5848, %v6127
        %v6192 = vadd.f32 %v5850, %v6128
        %v6193 = vadd.f32 %v5852, %v6129
        %v6194 = vadd.f32 %v5856, %v6130
        %v6195 = vadd.f32 %v5858, %v6131
        %v6196 = vadd.f32 %v5860, %v6132
        %v6197 = vadd.f32 %v5862, %v6133
        %v6198 = vadd.f32 %v5866, %v6134
        %v6199 = vadd.f32 %v5868, %v6135
        %v6200 = vadd.f32 %v5870, %v6136
        %v6201 = vadd.f32 %v5872, %v6137
        %v6202 = vadd.f32 %v5876, %v6138
        %v6203 = vadd.f32 %v5878, %v6139
        %v6204 = vadd.f32 %v5880, %v6140
        %v6205 = vadd.f32 %v5882, %v6141
        %v6206 = vadd.f32 %v5886, %v6142
        %v6207 = vadd.f32 %v5888, %v6143
        %v6208 = vadd.f32 %v5890, %v6144
        %v6209 = vadd.f32 %v5892, %v6145
        %v6210 = vadd.f32 %v5896, %v6146
        %v6211 = vadd.f32 %v5898, %v6147
        %v6212 = vadd.f32 %v5900, %v6148
        %v6213 = vadd.f32 %v5902, %v6149
        %v6214 = vadd.f32 %v5906, %v6150
        %v6215 = vadd.f32 %v5908, %v6151
        %v6216 = vadd.f32 %v5910, %v6152
        %v6217 = vadd.f32 %v5912, %v6153
        %v6218 = vadd.f32 %v5916, %v6154
        %v6219 = vadd.f32 %v5918, %v6155
        %v6220 = vadd.f32 %v5920, %v6156
        %v6221 = vadd.f32 %v5922, %v6157
        %v6222 = vadd.f32 %v5926, %v6158
        %v6223 = vadd.f32 %v5928, %v6159
        %v6224 = vadd.f32 %v5930, %v6160
        %v6225 = vadd.f32 %v5932, %v6161
        %v6226 = vadd.f32 %v5936, %v6162
        %v6227 = vadd.f32 %v5938, %v6163
        %v6228 = vadd.f32 %v5940, %v6164
        %v6229 = vadd.f32 %v5942, %v6165
        %v6230 = vadd.f32 %v5946, %v6166
        %v6231 = vadd.f32 %v5948, %v6167
        %v6232 = vadd.f32 %v5950, %v6168
        %v6233 = vadd.f32 %v5952, %v6169
        %v6234 = vadd.f32 %v5956, %v6170
        %v6235 = vadd.f32 %v5958, %v6171
        %v6236 = vadd.f32 %v5960, %v6172
        %v6237 = vadd.f32 %v5962, %v6173
        %v6238 = vadd.f32 %v5966, %v6174
        %v6239 = vadd.f32 %v5968, %v6175
        %v6240 = vadd.f32 %v5970, %v6176
        %v6241 = vadd.f32 %v5972, %v6177
        %v6242 = vadd.f32 %v5976, %v6178
        %v6243 = vadd.f32 %v5978, %v6179
        %v6244 = vadd.f32 %v5980, %v6180
        %v6245 = vadd.f32 %v5982, %v6181
        %v6246 = vadd.f32 %v5986, %v6182
        %v6247 = vadd.f32 %v5988, %v6183
        %v6248 = vadd.f32 %v5990, %v6184
        %v6249 = vadd.f32 %v5992, %v6185
        %v6250 = vmul.f32 %v6186, 0.7978846
        %v6251 = vmul.f32 %v6187, 0.7978846
        %v6252 = vmul.f32 %v6188, 0.7978846
        %v6253 = vmul.f32 %v6189, 0.7978846
        %v6254 = vmul.f32 %v6190, 0.7978846
        %v6255 = vmul.f32 %v6191, 0.7978846
        %v6256 = vmul.f32 %v6192, 0.7978846
        %v6257 = vmul.f32 %v6193, 0.7978846
        %v6258 = vmul.f32 %v6194, 0.7978846
        %v6259 = vmul.f32 %v6195, 0.7978846
        %v6260 = vmul.f32 %v6196, 0.7978846
        %v6261 = vmul.f32 %v6197, 0.7978846
        %v6262 = vmul.f32 %v6198, 0.7978846
        %v6263 = vmul.f32 %v6199, 0.7978846
        %v6264 = vmul.f32 %v6200, 0.7978846
        %v6265 = vmul.f32 %v6201, 0.7978846
        %v6266 = vmul.f32 %v6202, 0.7978846
        %v6267 = vmul.f32 %v6203, 0.7978846
        %v6268 = vmul.f32 %v6204, 0.7978846
        %v6269 = vmul.f32 %v6205, 0.7978846
        %v6270 = vmul.f32 %v6206, 0.7978846
        %v6271 = vmul.f32 %v6207, 0.7978846
        %v6272 = vmul.f32 %v6208, 0.7978846
        %v6273 = vmul.f32 %v6209, 0.7978846
        %v6274 = vmul.f32 %v6210, 0.7978846
        %v6275 = vmul.f32 %v6211, 0.7978846
        %v6276 = vmul.f32 %v6212, 0.7978846
        %v6277 = vmul.f32 %v6213, 0.7978846
        %v6278 = vmul.f32 %v6214, 0.7978846
        %v6279 = vmul.f32 %v6215, 0.7978846
        %v6280 = vmul.f32 %v6216, 0.7978846
        %v6281 = vmul.f32 %v6217, 0.7978846
        %v6282 = vmul.f32 %v6218, 0.7978846
        %v6283 = vmul.f32 %v6219, 0.7978846
        %v6284 = vmul.f32 %v6220, 0.7978846
        %v6285 = vmul.f32 %v6221, 0.7978846
        %v6286 = vmul.f32 %v6222, 0.7978846
        %v6287 = vmul.f32 %v6223, 0.7978846
        %v6288 = vmul.f32 %v6224, 0.7978846
        %v6289 = vmul.f32 %v6225, 0.7978846
        %v6290 = vmul.f32 %v6226, 0.7978846
        %v6291 = vmul.f32 %v6227, 0.7978846
        %v6292 = vmul.f32 %v6228, 0.7978846
        %v6293 = vmul.f32 %v6229, 0.7978846
        %v6294 = vmul.f32 %v6230, 0.7978846
        %v6295 = vmul.f32 %v6231, 0.7978846
        %v6296 = vmul.f32 %v6232, 0.7978846
        %v6297 = vmul.f32 %v6233, 0.7978846
        %v6298 = vmul.f32 %v6234, 0.7978846
        %v6299 = vmul.f32 %v6235, 0.7978846
        %v6300 = vmul.f32 %v6236, 0.7978846
        %v6301 = vmul.f32 %v6237, 0.7978846
        %v6302 = vmul.f32 %v6238, 0.7978846
        %v6303 = vmul.f32 %v6239, 0.7978846
        %v6304 = vmul.f32 %v6240, 0.7978846
        %v6305 = vmul.f32 %v6241, 0.7978846
        %v6306 = vmul.f32 %v6242, 0.7978846
        %v6307 = vmul.f32 %v6243, 0.7978846
        %v6308 = vmul.f32 %v6244, 0.7978846
        %v6309 = vmul.f32 %v6245, 0.7978846
        %v6310 = vmul.f32 %v6246, 0.7978846
        %v6311 = vmul.f32 %v6247, 0.7978846
        %v6312 = vmul.f32 %v6248, 0.7978846
        %v6313 = vmul.f32 %v6249, 0.7978846
        %v6314 = vtanh.pop %v6250
        %v6315 = vtanh.pop %v6251
        %v6316 = vtanh.pop %v6252
        %v6317 = vtanh.pop %v6253
        %v6318 = vtanh.pop %v6254
        %v6319 = vtanh.pop %v6255
        %v6320 = vtanh.pop %v6256
        %v6321 = vtanh.pop %v6257
        %v6322 = vtanh.pop %v6258
        %v6323 = vtanh.pop %v6259
        %v6324 = vtanh.pop %v6260
        %v6325 = vtanh.pop %v6261
        %v6326 = vtanh.pop %v6262
        %v6327 = vtanh.pop %v6263
        %v6328 = vtanh.pop %v6264
        %v6329 = vtanh.pop %v6265
        %v6330 = vtanh.pop %v6266
        %v6331 = vtanh.pop %v6267
        %v6332 = vtanh.pop %v6268
        %v6333 = vtanh.pop %v6269
        %v6334 = vtanh.pop %v6270
        %v6335 = vtanh.pop %v6271
        %v6336 = vtanh.pop %v6272
        %v6337 = vtanh.pop %v6273
        %v6338 = vtanh.pop %v6274
        %v6339 = vtanh.pop %v6275
        %v6340 = vtanh.pop %v6276
        %v6341 = vtanh.pop %v6277
        %v6342 = vtanh.pop %v6278
        %v6343 = vtanh.pop %v6279
        %v6344 = vtanh.pop %v6280
        %v6345 = vtanh.pop %v6281
        %v6346 = vtanh.pop %v6282
        %v6347 = vtanh.pop %v6283
        %v6348 = vtanh.pop %v6284
        %v6349 = vtanh.pop %v6285
        %v6350 = vtanh.pop %v6286
        %v6351 = vtanh.pop %v6287
        %v6352 = vtanh.pop %v6288
        %v6353 = vtanh.pop %v6289
        %v6354 = vtanh.pop %v6290
        %v6355 = vtanh.pop %v6291
        %v6356 = vtanh.pop %v6292
        %v6357 = vtanh.pop %v6293
        %v6358 = vtanh.pop %v6294
        %v6359 = vtanh.pop %v6295
        %v6360 = vtanh.pop %v6296
        %v6361 = vtanh.pop %v6297
        %v6362 = vtanh.pop %v6298
        %v6363 = vtanh.pop %v6299
        %v6364 = vtanh.pop %v6300
        %v6365 = vtanh.pop %v6301
        %v6366 = vtanh.pop %v6302
        %v6367 = vtanh.pop %v6303
        %v6368 = vtanh.pop %v6304
        %v6369 = vtanh.pop %v6305
        %v6370 = vtanh.pop %v6306
        %v6371 = vtanh.pop %v6307
        %v6372 = vtanh.pop %v6308
        %v6373 = vtanh.pop %v6309
        %v6374 = vtanh.pop %v6310
        %v6375 = vtanh.pop %v6311
        %v6376 = vtanh.pop %v6312
        %v6377 = vtanh.pop %v6313
        %v6378 = vadd.f32 %v6314, 1.0
        %v6379 = vadd.f32 %v6315, 1.0
        %v6380 = vadd.f32 %v6316, 1.0
        %v6381 = vadd.f32 %v6317, 1.0
        %v6382 = vadd.f32 %v6318, 1.0
        %v6383 = vadd.f32 %v6319, 1.0
        %v6384 = vadd.f32 %v6320, 1.0
        %v6385 = vadd.f32 %v6321, 1.0
        %v6386 = vadd.f32 %v6322, 1.0
        %v6387 = vadd.f32 %v6323, 1.0
        %v6388 = vadd.f32 %v6324, 1.0
        %v6389 = vadd.f32 %v6325, 1.0
        %v6390 = vadd.f32 %v6326, 1.0
        %v6391 = vadd.f32 %v6327, 1.0
        %v6392 = vadd.f32 %v6328, 1.0
        %v6393 = vadd.f32 %v6329, 1.0
        %v6394 = vadd.f32 %v6330, 1.0
        %v6395 = vadd.f32 %v6331, 1.0
        %v6396 = vadd.f32 %v6332, 1.0
        %v6397 = vadd.f32 %v6333, 1.0
        %v6398 = vadd.f32 %v6334, 1.0
        %v6399 = vadd.f32 %v6335, 1.0
        %v6400 = vadd.f32 %v6336, 1.0
        %v6401 = vadd.f32 %v6337, 1.0
        %v6402 = vadd.f32 %v6338, 1.0
        %v6403 = vadd.f32 %v6339, 1.0
        %v6404 = vadd.f32 %v6340, 1.0
        %v6405 = vadd.f32 %v6341, 1.0
        %v6406 = vadd.f32 %v6342, 1.0
        %v6407 = vadd.f32 %v6343, 1.0
        %v6408 = vadd.f32 %v6344, 1.0
        %v6409 = vadd.f32 %v6345, 1.0
        %v6410 = vadd.f32 %v6346, 1.0
        %v6411 = vadd.f32 %v6347, 1.0
        %v6412 = vadd.f32 %v6348, 1.0
        %v6413 = vadd.f32 %v6349, 1.0
        %v6414 = vadd.f32 %v6350, 1.0
        %v6415 = vadd.f32 %v6351, 1.0
        %v6416 = vadd.f32 %v6352, 1.0
        %v6417 = vadd.f32 %v6353, 1.0
        %v6418 = vadd.f32 %v6354, 1.0
        %v6419 = vadd.f32 %v6355, 1.0
        %v6420 = vadd.f32 %v6356, 1.0
        %v6421 = vadd.f32 %v6357, 1.0
        %v6422 = vadd.f32 %v6358, 1.0
        %v6423 = vadd.f32 %v6359, 1.0
        %v6424 = vadd.f32 %v6360, 1.0
        %v6425 = vadd.f32 %v6361, 1.0
        %v6426 = vadd.f32 %v6362, 1.0
        %v6427 = vadd.f32 %v6363, 1.0
        %v6428 = vadd.f32 %v6364, 1.0
        %v6429 = vadd.f32 %v6365, 1.0
        %v6430 = vadd.f32 %v6366, 1.0
        %v6431 = vadd.f32 %v6367, 1.0
        %v6432 = vadd.f32 %v6368, 1.0
        %v6433 = vadd.f32 %v6369, 1.0
        %v6434 = vadd.f32 %v6370, 1.0
        %v6435 = vadd.f32 %v6371, 1.0
        %v6436 = vadd.f32 %v6372, 1.0
        %v6437 = vadd.f32 %v6373, 1.0
        %v6438 = vadd.f32 %v6374, 1.0
        %v6439 = vadd.f32 %v6375, 1.0
        %v6440 = vadd.f32 %v6376, 1.0
        %v6441 = vadd.f32 %v6377, 1.0
        %v6442 = vmul.f32 %v6378, 0.5
        %v6443 = vmul.f32 %v6379, 0.5
        %v6444 = vmul.f32 %v6380, 0.5
        %v6445 = vmul.f32 %v6381, 0.5
        %v6446 = vmul.f32 %v6382, 0.5
        %v6447 = vmul.f32 %v6383, 0.5
        %v6448 = vmul.f32 %v6384, 0.5
        %v6449 = vmul.f32 %v6385, 0.5
        %v6450 = vmul.f32 %v6386, 0.5
        %v6451 = vmul.f32 %v6387, 0.5
        %v6452 = vmul.f32 %v6388, 0.5
        %v6453 = vmul.f32 %v6389, 0.5
        %v6454 = vmul.f32 %v6390, 0.5
        %v6455 = vmul.f32 %v6391, 0.5
        %v6456 = vmul.f32 %v6392, 0.5
        %v6457 = vmul.f32 %v6393, 0.5
        %v6458 = vmul.f32 %v6394, 0.5
        %v6459 = vmul.f32 %v6395, 0.5
        %v6460 = vmul.f32 %v6396, 0.5
        %v6461 = vmul.f32 %v6397, 0.5
        %v6462 = vmul.f32 %v6398, 0.5
        %v6463 = vmul.f32 %v6399, 0.5
        %v6464 = vmul.f32 %v6400, 0.5
        %v6465 = vmul.f32 %v6401, 0.5
        %v6466 = vmul.f32 %v6402, 0.5
        %v6467 = vmul.f32 %v6403, 0.5
        %v6468 = vmul.f32 %v6404, 0.5
        %v6469 = vmul.f32 %v6405, 0.5
        %v6470 = vmul.f32 %v6406, 0.5
        %v6471 = vmul.f32 %v6407, 0.5
        %v6472 = vmul.f32 %v6408, 0.5
        %v6473 = vmul.f32 %v6409, 0.5
        %v6474 = vmul.f32 %v6410, 0.5
        %v6475 = vmul.f32 %v6411, 0.5
        %v6476 = vmul.f32 %v6412, 0.5
        %v6477 = vmul.f32 %v6413, 0.5
        %v6478 = vmul.f32 %v6414, 0.5
        %v6479 = vmul.f32 %v6415, 0.5
        %v6480 = vmul.f32 %v6416, 0.5
        %v6481 = vmul.f32 %v6417, 0.5
        %v6482 = vmul.f32 %v6418, 0.5
        %v6483 = vmul.f32 %v6419, 0.5
        %v6484 = vmul.f32 %v6420, 0.5
        %v6485 = vmul.f32 %v6421, 0.5
        %v6486 = vmul.f32 %v6422, 0.5
        %v6487 = vmul.f32 %v6423, 0.5
        %v6488 = vmul.f32 %v6424, 0.5
        %v6489 = vmul.f32 %v6425, 0.5
        %v6490 = vmul.f32 %v6426, 0.5
        %v6491 = vmul.f32 %v6427, 0.5
        %v6492 = vmul.f32 %v6428, 0.5
        %v6493 = vmul.f32 %v6429, 0.5
        %v6494 = vmul.f32 %v6430, 0.5
        %v6495 = vmul.f32 %v6431, 0.5
        %v6496 = vmul.f32 %v6432, 0.5
        %v6497 = vmul.f32 %v6433, 0.5
        %v6498 = vmul.f32 %v6434, 0.5
        %v6499 = vmul.f32 %v6435, 0.5
        %v6500 = vmul.f32 %v6436, 0.5
        %v6501 = vmul.f32 %v6437, 0.5
        %v6502 = vmul.f32 %v6438, 0.5
        %v6503 = vmul.f32 %v6439, 0.5
        %v6504 = vmul.f32 %v6440, 0.5
        %v6505 = vmul.f32 %v6441, 0.5
        %v6506 = vmul.f32 %v5836, %v6442
        %v6507 = vmul.f32 %v5838, %v6443
        %v6508 = vmul.f32 %v5840, %v6444
        %v6509 = vmul.f32 %v5842, %v6445
        %v6510 = vmul.f32 %v5846, %v6446
        %v6511 = vmul.f32 %v5848, %v6447
        %v6512 = vmul.f32 %v5850, %v6448
        %v6513 = vmul.f32 %v5852, %v6449
        %v6514 = vmul.f32 %v5856, %v6450
        %v6515 = vmul.f32 %v5858, %v6451
        %v6516 = vmul.f32 %v5860, %v6452
        %v6517 = vmul.f32 %v5862, %v6453
        %v6518 = vmul.f32 %v5866, %v6454
        %v6519 = vmul.f32 %v5868, %v6455
        %v6520 = vmul.f32 %v5870, %v6456
        %v6521 = vmul.f32 %v5872, %v6457
        %v6522 = vmul.f32 %v5876, %v6458
        %v6523 = vmul.f32 %v5878, %v6459
        %v6524 = vmul.f32 %v5880, %v6460
        %v6525 = vmul.f32 %v5882, %v6461
        %v6526 = vmul.f32 %v5886, %v6462
        %v6527 = vmul.f32 %v5888, %v6463
        %v6528 = vmul.f32 %v5890, %v6464
        %v6529 = vmul.f32 %v5892, %v6465
        %v6530 = vmul.f32 %v5896, %v6466
        %v6531 = vmul.f32 %v5898, %v6467
        %v6532 = vmul.f32 %v5900, %v6468
        %v6533 = vmul.f32 %v5902, %v6469
        %v6534 = vmul.f32 %v5906, %v6470
        %v6535 = vmul.f32 %v5908, %v6471
        %v6536 = vmul.f32 %v5910, %v6472
        %v6537 = vmul.f32 %v5912, %v6473
        %v6538 = vmul.f32 %v5916, %v6474
        %v6539 = vmul.f32 %v5918, %v6475
        %v6540 = vmul.f32 %v5920, %v6476
        %v6541 = vmul.f32 %v5922, %v6477
        %v6542 = vmul.f32 %v5926, %v6478
        %v6543 = vmul.f32 %v5928, %v6479
        %v6544 = vmul.f32 %v5930, %v6480
        %v6545 = vmul.f32 %v5932, %v6481
        %v6546 = vmul.f32 %v5936, %v6482
        %v6547 = vmul.f32 %v5938, %v6483
        %v6548 = vmul.f32 %v5940, %v6484
        %v6549 = vmul.f32 %v5942, %v6485
        %v6550 = vmul.f32 %v5946, %v6486
        %v6551 = vmul.f32 %v5948, %v6487
        %v6552 = vmul.f32 %v5950, %v6488
        %v6553 = vmul.f32 %v5952, %v6489
        %v6554 = vmul.f32 %v5956, %v6490
        %v6555 = vmul.f32 %v5958, %v6491
        %v6556 = vmul.f32 %v5960, %v6492
        %v6557 = vmul.f32 %v5962, %v6493
        %v6558 = vmul.f32 %v5966, %v6494
        %v6559 = vmul.f32 %v5968, %v6495
        %v6560 = vmul.f32 %v5970, %v6496
        %v6561 = vmul.f32 %v5972, %v6497
        %v6562 = vmul.f32 %v5976, %v6498
        %v6563 = vmul.f32 %v5978, %v6499
        %v6564 = vmul.f32 %v5980, %v6500
        %v6565 = vmul.f32 %v5982, %v6501
        %v6566 = vmul.f32 %v5986, %v6502
        %v6567 = vmul.f32 %v5988, %v6503
        %v6568 = vmul.f32 %v5990, %v6504
        %v6569 = vmul.f32 %v5992, %v6505
        %v6570 = vld [vmem:[#allocation22] sm:$0xff]
        %v6571 = vld [vmem:[#allocation22 + $0x8] sm:$0xff]
        %v6572 = vld [vmem:[#allocation22 + $0x10] sm:$0xff]
        %v6573 = vld [vmem:[#allocation22 + $0x18] sm:$0xff]
        %v6574 = vld [vmem:[#allocation22 + $0x20] sm:$0xff]
        %v6575 = vld [vmem:[#allocation22 + $0x28] sm:$0xff]
        %v6576 = vld [vmem:[#allocation22 + $0x30] sm:$0xff]
        %v6577 = vld [vmem:[#allocation22 + $0x38] sm:$0xff]
        %v6578 = vld [vmem:[#allocation23] sm:$0x3]
        %v6580 = vlaneseq
        %v6581 = vshrl.u32 %v6580, 7
        %v6582 = vsub.s32 0, %v6581
        %v6583 = vrot.slane %v6578, %v6582
        %v6584 = vlaneseq
        %v6585 = vshrl.u32 %v6584, 7
        %v6586 = vsub.s32 1, %v6585
        %v6587 = vrot.slane %v6578, %v6586
        %v6598 = vunpack.c.l.b16 %v6570
        %v6599 = vunpack.c.h.b16 %v6570
        %v6600 = vunpack.c.l.b16 %v6571
        %v6601 = vunpack.c.h.b16 %v6571
        %v6602 = vunpack.c.l.b16 %v6572
        %v6603 = vunpack.c.h.b16 %v6572
        %v6604 = vunpack.c.l.b16 %v6573
        %v6605 = vunpack.c.h.b16 %v6573
        %v6606 = vunpack.c.l.b16 %v6574
        %v6607 = vunpack.c.h.b16 %v6574
        %v6608 = vunpack.c.l.b16 %v6575
        %v6609 = vunpack.c.h.b16 %v6575
        %v6610 = vunpack.c.l.b16 %v6576
        %v6611 = vunpack.c.h.b16 %v6576
        %v6612 = vunpack.c.l.b16 %v6577
        %v6613 = vunpack.c.h.b16 %v6577
        %v6614 = vpack.c.b16 %v6600, %v6598
        %v6615 = vpack.c.b16 %v6601, %v6599
        %v6616 = vpack.c.b16 %v6604, %v6602
        %v6617 = vpack.c.b16 %v6605, %v6603
        %v6618 = vpack.c.b16 %v6608, %v6606
        %v6619 = vpack.c.b16 %v6609, %v6607
        %v6620 = vpack.c.b16 %v6612, %v6610
        %v6621 = vpack.c.b16 %v6613, %v6611
        %6630 = vmatprep.subr.bf16.mxu0 %v6615
        %6631 = vmatpush1.bf16.msra.mxu0 %v6614
        %6632 = vmatprep.subr.bf16.mxu0 %v6617
        %6633 = vmatpush1.bf16.msra.mxu0 %v6616
        %6634 = vmatprep.subr.bf16.mxu0 %v6619
        %6635 = vmatpush1.bf16.msra.mxu0 %v6618
        %6636 = vmatprep.subr.bf16.mxu0 %v6621
        %6637 = vmatpush1.bf16.msra.mxu0 %v6620
        %6638 = vmatprep.subr.bf16.mxu0 0
        %6639 = vmatpush1.bf16.msra.mxu0 0
        %6640 = vmatprep.subr.bf16.mxu0 0
        %6641 = vmatpush1.bf16.msra.mxu0 0
        %6642 = vmatprep.subr.bf16.mxu0 0
        %6643 = vmatpush1.bf16.msra.mxu0 0
        %6644 = vmatprep.subr.bf16.mxu0 0
        %6645 = vmatpush1.bf16.msra.mxu0 0
        %6646 = vmatprep.subr.bf16.mxu0 0
        %6647 = vmatpush1.bf16.msra.mxu0 0
        %6648 = vmatprep.subr.bf16.mxu0 0
        %6649 = vmatpush1.bf16.msra.mxu0 0
        %6650 = vmatprep.subr.bf16.mxu0 0
        %6651 = vmatpush1.bf16.msra.mxu0 0
        %6652 = vmatprep.subr.bf16.mxu0 0
        %6653 = vmatpush1.bf16.msra.mxu0 0
        %6654 = vmatprep.subr.bf16.mxu0 0
        %6655 = vmatpush1.bf16.msra.mxu0 0
        %6656 = vmatprep.subr.bf16.mxu0 0
        %6657 = vmatpush1.bf16.msra.mxu0 0
        %6658 = vmatprep.subr.bf16.mxu0 0
        %6659 = vmatpush1.bf16.msra.mxu0 0
        %6660 = vmatprep.subr.bf16.mxu0 0
        %6661 = vmatpush1.bf16.msra.mxu0 0
        %6662 = vmatprep.mubr.bf16.mxu0 0
        %6663 = vmatmul.mubr.bf16.gmra.mrb[0].mxu0 %v5754
        %v6664 = vpop.f32.mrb[0].mxu0
        %v6665 = vadd.f32 %v6583, %v6664
        %v6666 = vpop.f32.mrb[0].mxu0
        %v6667 = vadd.f32 %v6587, %v6666
        %v6668 = vpop.f32.mrb[0].mxu0
        %v6669 = vadd.f32 %v6583, %v6668
        %v6670 = vpop.f32.mrb[0].mxu0
        %v6671 = vadd.f32 %v6587, %v6670
        %6672 = vmatprep.mubr.bf16.mxu0 0
        %6673 = vmatmul.mubr.bf16.gmra.mrb[0].mxu0 %v5757
        %v6674 = vpop.f32.mrb[0].mxu0
        %v6675 = vadd.f32 %v6583, %v6674
        %v6676 = vpop.f32.mrb[0].mxu0
        %v6677 = vadd.f32 %v6587, %v6676
        %v6678 = vpop.f32.mrb[0].mxu0
        %v6679 = vadd.f32 %v6583, %v6678
        %v6680 = vpop.f32.mrb[0].mxu0
        %v6681 = vadd.f32 %v6587, %v6680
        %6682 = vmatprep.mubr.bf16.mxu0 0
        %6683 = vmatmul.mubr.bf16.gmra.mrb[0].mxu0 %v5760
        %v6684 = vpop.f32.mrb[0].mxu0
        %v6685 = vadd.f32 %v6583, %v6684
        %v6686 = vpop.f32.mrb[0].mxu0
        %v6687 = vadd.f32 %v6587, %v6686
        %v6688 = vpop.f32.mrb[0].mxu0
        %v6689 = vadd.f32 %v6583, %v6688
        %v6690 = vpop.f32.mrb[0].mxu0
        %v6691 = vadd.f32 %v6587, %v6690
        %6692 = vmatprep.mubr.bf16.mxu0 0
        %6693 = vmatmul.mubr.bf16.gmra.mrb[0].mxu0 %v5763
        %v6694 = vpop.f32.mrb[0].mxu0
        %v6695 = vadd.f32 %v6583, %v6694
        %v6696 = vpop.f32.mrb[0].mxu0
        %v6697 = vadd.f32 %v6587, %v6696
        %v6698 = vpop.f32.mrb[0].mxu0
        %v6699 = vadd.f32 %v6583, %v6698
        %v6700 = vpop.f32.mrb[0].mxu0
        %v6701 = vadd.f32 %v6587, %v6700
        %6702 = vmatprep.mubr.bf16.mxu0 0
        %6703 = vmatmul.mubr.bf16.gmra.mrb[0].mxu0 %v5766
        %v6704 = vpop.f32.mrb[0].mxu0
        %v6705 = vadd.f32 %v6583, %v6704
        %v6706 = vpop.f32.mrb[0].mxu0
        %v6707 = vadd.f32 %v6587, %v6706
        %v6708 = vpop.f32.mrb[0].mxu0
        %v6709 = vadd.f32 %v6583, %v6708
        %v6710 = vpop.f32.mrb[0].mxu0
        %v6711 = vadd.f32 %v6587, %v6710
        %6712 = vmatprep.mubr.bf16.mxu0 0
        %6713 = vmatmul.mubr.bf16.gmra.mrb[0].mxu0 %v5769
        %v6714 = vpop.f32.mrb[0].mxu0
        %v6715 = vadd.f32 %v6583, %v6714
        %v6716 = vpop.f32.mrb[0].mxu0
        %v6717 = vadd.f32 %v6587, %v6716
        %v6718 = vpop.f32.mrb[0].mxu0
        %v6719 = vadd.f32 %v6583, %v6718
        %v6720 = vpop.f32.mrb[0].mxu0
        %v6721 = vadd.f32 %v6587, %v6720
        %6722 = vmatprep.mubr.bf16.mxu0 0
        %6723 = vmatmul.mubr.bf16.gmra.mrb[0].mxu0 %v5772
        %v6724 = vpop.f32.mrb[0].mxu0
        %v6725 = vadd.f32 %v6583, %v6724
        %v6726 = vpop.f32.mrb[0].mxu0
        %v6727 = vadd.f32 %v6587, %v6726
        %v6728 = vpop.f32.mrb[0].mxu0
        %v6729 = vadd.f32 %v6583, %v6728
        %v6730 = vpop.f32.mrb[0].mxu0
        %v6731 = vadd.f32 %v6587, %v6730
        %6732 = vmatprep.mubr.bf16.mxu0 0
        %6733 = vmatmul.mubr.bf16.gmra.mrb[0].mxu0 %v5775
        %v6734 = vpop.f32.mrb[0].mxu0
        %v6735 = vadd.f32 %v6583, %v6734
        %v6736 = vpop.f32.mrb[0].mxu0
        %v6737 = vadd.f32 %v6587, %v6736
        %v6738 = vpop.f32.mrb[0].mxu0
        %v6739 = vadd.f32 %v6583, %v6738
        %v6740 = vpop.f32.mrb[0].mxu0
        %v6741 = vadd.f32 %v6587, %v6740
        %6742 = vmatprep.mubr.bf16.mxu0 0
        %6743 = vmatmul.mubr.bf16.gmra.mrb[0].mxu0 %v5778
        %v6744 = vpop.f32.mrb[0].mxu0
        %v6745 = vadd.f32 %v6583, %v6744
        %v6746 = vpop.f32.mrb[0].mxu0
        %v6747 = vadd.f32 %v6587, %v6746
        %v6748 = vpop.f32.mrb[0].mxu0
        %v6749 = vadd.f32 %v6583, %v6748
        %v6750 = vpop.f32.mrb[0].mxu0
        %v6751 = vadd.f32 %v6587, %v6750
        %6752 = vmatprep.mubr.bf16.mxu0 0
        %6753 = vmatmul.mubr.bf16.gmra.mrb[0].mxu0 %v5781
        %v6754 = vpop.f32.mrb[0].mxu0
        %v6755 = vadd.f32 %v6583, %v6754
        %v6756 = vpop.f32.mrb[0].mxu0
        %v6757 = vadd.f32 %v6587, %v6756
        %v6758 = vpop.f32.mrb[0].mxu0
        %v6759 = vadd.f32 %v6583, %v6758
        %v6760 = vpop.f32.mrb[0].mxu0
        %v6761 = vadd.f32 %v6587, %v6760
        %6762 = vmatprep.mubr.bf16.mxu0 0
        %6763 = vmatmul.mubr.bf16.gmra.mrb[0].mxu0 %v5784
        %v6764 = vpop.f32.mrb[0].mxu0
        %v6765 = vadd.f32 %v6583, %v6764
        %v6766 = vpop.f32.mrb[0].mxu0
        %v6767 = vadd.f32 %v6587, %v6766
        %v6768 = vpop.f32.mrb[0].mxu0
        %v6769 = vadd.f32 %v6583, %v6768
        %v6770 = vpop.f32.mrb[0].mxu0
        %v6771 = vadd.f32 %v6587, %v6770
        %6772 = vmatprep.mubr.bf16.mxu0 0
        %6773 = vmatmul.mubr.bf16.gmra.mrb[0].mxu0 %v5787
        %v6774 = vpop.f32.mrb[0].mxu0
        %v6775 = vadd.f32 %v6583, %v6774
        %v6776 = vpop.f32.mrb[0].mxu0
        %v6777 = vadd.f32 %v6587, %v6776
        %v6778 = vpop.f32.mrb[0].mxu0
        %v6779 = vadd.f32 %v6583, %v6778
        %v6780 = vpop.f32.mrb[0].mxu0
        %v6781 = vadd.f32 %v6587, %v6780
        %6782 = vmatprep.mubr.bf16.mxu0 0
        %6783 = vmatmul.mubr.bf16.gmra.mrb[0].mxu0 %v5790
        %v6784 = vpop.f32.mrb[0].mxu0
        %v6785 = vadd.f32 %v6583, %v6784
        %v6786 = vpop.f32.mrb[0].mxu0
        %v6787 = vadd.f32 %v6587, %v6786
        %v6788 = vpop.f32.mrb[0].mxu0
        %v6789 = vadd.f32 %v6583, %v6788
        %v6790 = vpop.f32.mrb[0].mxu0
        %v6791 = vadd.f32 %v6587, %v6790
        %6792 = vmatprep.mubr.bf16.mxu0 0
        %6793 = vmatmul.mubr.bf16.gmra.mrb[0].mxu0 %v5793
        %v6794 = vpop.f32.mrb[0].mxu0
        %v6795 = vadd.f32 %v6583, %v6794
        %v6796 = vpop.f32.mrb[0].mxu0
        %v6797 = vadd.f32 %v6587, %v6796
        %v6798 = vpop.f32.mrb[0].mxu0
        %v6799 = vadd.f32 %v6583, %v6798
        %v6800 = vpop.f32.mrb[0].mxu0
        %v6801 = vadd.f32 %v6587, %v6800
        %6802 = vmatprep.mubr.bf16.mxu0 0
        %6803 = vmatmul.mubr.bf16.gmra.mrb[0].mxu0 %v5796
        %v6804 = vpop.f32.mrb[0].mxu0
        %v6805 = vadd.f32 %v6583, %v6804
        %v6806 = vpop.f32.mrb[0].mxu0
        %v6807 = vadd.f32 %v6587, %v6806
        %v6808 = vpop.f32.mrb[0].mxu0
        %v6809 = vadd.f32 %v6583, %v6808
        %v6810 = vpop.f32.mrb[0].mxu0
        %v6811 = vadd.f32 %v6587, %v6810
        %6812 = vmatprep.mubr.bf16.mxu0 0
        %6813 = vmatmul.mubr.bf16.gmra.mrb[0].mxu0 %v5799
        %v6814 = vpop.f32.mrb[0].mxu0
        %v6815 = vadd.f32 %v6583, %v6814
        %v6816 = vpop.f32.mrb[0].mxu0
        %v6817 = vadd.f32 %v6587, %v6816
        %v6818 = vpop.f32.mrb[0].mxu0
        %v6819 = vadd.f32 %v6583, %v6818
        %v6820 = vpop.f32.mrb[0].mxu0
        %v6821 = vadd.f32 %v6587, %v6820
        %6822 = vdwg.mxu0
        %v6823 = vmul.f32 %v6665, %v6506
        %v6824 = vmul.f32 %v6667, %v6507
        %v6825 = vmul.f32 %v6669, %v6508
        %v6826 = vmul.f32 %v6671, %v6509
        %v6827 = vmul.f32 %v6675, %v6510
        %v6828 = vmul.f32 %v6677, %v6511
        %v6829 = vmul.f32 %v6679, %v6512
        %v6830 = vmul.f32 %v6681, %v6513
        %v6831 = vmul.f32 %v6685, %v6514
        %v6832 = vmul.f32 %v6687, %v6515
        %v6833 = vmul.f32 %v6689, %v6516
        %v6834 = vmul.f32 %v6691, %v6517
        %v6835 = vmul.f32 %v6695, %v6518
        %v6836 = vmul.f32 %v6697, %v6519
        %v6837 = vmul.f32 %v6699, %v6520
        %v6838 = vmul.f32 %v6701, %v6521
        %v6839 = vmul.f32 %v6705, %v6522
        %v6840 = vmul.f32 %v6707, %v6523
        %v6841 = vmul.f32 %v6709, %v6524
        %v6842 = vmul.f32 %v6711, %v6525
        %v6843 = vmul.f32 %v6715, %v6526
        %v6844 = vmul.f32 %v6717, %v6527
        %v6845 = vmul.f32 %v6719, %v6528
        %v6846 = vmul.f32 %v6721, %v6529
        %v6847 = vmul.f32 %v6725, %v6530
        %v6848 = vmul.f32 %v6727, %v6531
        %v6849 = vmul.f32 %v6729, %v6532
        %v6850 = vmul.f32 %v6731, %v6533
        %v6851 = vmul.f32 %v6735, %v6534
        %v6852 = vmul.f32 %v6737, %v6535
        %v6853 = vmul.f32 %v6739, %v6536
        %v6854 = vmul.f32 %v6741, %v6537
        %v6855 = vmul.f32 %v6745, %v6538
        %v6856 = vmul.f32 %v6747, %v6539
        %v6857 = vmul.f32 %v6749, %v6540
        %v6858 = vmul.f32 %v6751, %v6541
        %v6859 = vmul.f32 %v6755, %v6542
        %v6860 = vmul.f32 %v6757, %v6543
        %v6861 = vmul.f32 %v6759, %v6544
        %v6862 = vmul.f32 %v6761, %v6545
        %v6863 = vmul.f32 %v6765, %v6546
        %v6864 = vmul.f32 %v6767, %v6547
        %v6865 = vmul.f32 %v6769, %v6548
        %v6866 = vmul.f32 %v6771, %v6549
        %v6867 = vmul.f32 %v6775, %v6550
        %v6868 = vmul.f32 %v6777, %v6551
        %v6869 = vmul.f32 %v6779, %v6552
        %v6870 = vmul.f32 %v6781, %v6553
        %v6871 = vmul.f32 %v6785, %v6554
        %v6872 = vmul.f32 %v6787, %v6555
        %v6873 = vmul.f32 %v6789, %v6556
        %v6874 = vmul.f32 %v6791, %v6557
        %v6875 = vmul.f32 %v6795, %v6558
        %v6876 = vmul.f32 %v6797, %v6559
        %v6877 = vmul.f32 %v6799, %v6560
        %v6878 = vmul.f32 %v6801, %v6561
        %v6879 = vmul.f32 %v6805, %v6562
        %v6880 = vmul.f32 %v6807, %v6563
        %v6881 = vmul.f32 %v6809, %v6564
        %v6882 = vmul.f32 %v6811, %v6565
        %v6883 = vmul.f32 %v6815, %v6566
        %v6884 = vmul.f32 %v6817, %v6567
        %v6885 = vmul.f32 %v6819, %v6568
        %v6886 = vmul.f32 %v6821, %v6569
        %v6887 = vpack.c.bf16 %v6825, %v6823
        %v6888 = vpack.c.bf16 %v6826, %v6824
        %v6889 = vpack.c.bf16 %v6829, %v6827
        %v6890 = vpack.c.bf16 %v6830, %v6828
        %v6891 = vpack.c.bf16 %v6833, %v6831
        %v6892 = vpack.c.bf16 %v6834, %v6832
        %v6893 = vpack.c.bf16 %v6837, %v6835
        %v6894 = vpack.c.bf16 %v6838, %v6836
        %v6895 = vpack.c.bf16 %v6841, %v6839
        %v6896 = vpack.c.bf16 %v6842, %v6840
        %v6897 = vpack.c.bf16 %v6845, %v6843
        %v6898 = vpack.c.bf16 %v6846, %v6844
        %v6899 = vpack.c.bf16 %v6849, %v6847
        %v6900 = vpack.c.bf16 %v6850, %v6848
        %v6901 = vpack.c.bf16 %v6853, %v6851
        %v6902 = vpack.c.bf16 %v6854, %v6852
        %v6903 = vpack.c.bf16 %v6857, %v6855
        %v6904 = vpack.c.bf16 %v6858, %v6856
        %v6905 = vpack.c.bf16 %v6861, %v6859
        %v6906 = vpack.c.bf16 %v6862, %v6860
        %v6907 = vpack.c.bf16 %v6865, %v6863
        %v6908 = vpack.c.bf16 %v6866, %v6864
        %v6909 = vpack.c.bf16 %v6869, %v6867
        %v6910 = vpack.c.bf16 %v6870, %v6868
        %v6911 = vpack.c.bf16 %v6873, %v6871
        %v6912 = vpack.c.bf16 %v6874, %v6872
        %v6913 = vpack.c.bf16 %v6877, %v6875
        %v6914 = vpack.c.bf16 %v6878, %v6876
        %v6915 = vpack.c.bf16 %v6881, %v6879
        %v6916 = vpack.c.bf16 %v6882, %v6880
        %v6917 = vpack.c.bf16 %v6885, %v6883
        %v6918 = vpack.c.bf16 %v6886, %v6884
        %v6919 = vld [vmem:[#allocation28] sm:$0xf]
        %v6920 = vld [vmem:[#allocation28 + $0x4] sm:$0xf]
        %v6921 = vld [vmem:[#allocation28 + $0x8] sm:$0xf]
        %v6922 = vld [vmem:[#allocation28 + $0xc] sm:$0xf]
        %v6923 = vld [vmem:[#allocation28 + $0x10] sm:$0xf]
        %v6924 = vld [vmem:[#allocation28 + $0x14] sm:$0xf]
        %v6925 = vld [vmem:[#allocation28 + $0x18] sm:$0xf]
        %v6926 = vld [vmem:[#allocation28 + $0x1c] sm:$0xf]
        %v6927 = vld [vmem:[#allocation28 + $0x20] sm:$0xf]
        %v6928 = vld [vmem:[#allocation28 + $0x24] sm:$0xf]
        %v6929 = vld [vmem:[#allocation28 + $0x28] sm:$0xf]
        %v6930 = vld [vmem:[#allocation28 + $0x2c] sm:$0xf]
        %v6931 = vld [vmem:[#allocation28 + $0x30] sm:$0xf]
        %v6932 = vld [vmem:[#allocation28 + $0x34] sm:$0xf]
        %v6933 = vld [vmem:[#allocation28 + $0x38] sm:$0xf]
        %v6934 = vld [vmem:[#allocation28 + $0x3c] sm:$0xf]
        %v6935 = vld [vmem:[#allocation28 + $0x40] sm:$0xf]
        %v6936 = vld [vmem:[#allocation28 + $0x44] sm:$0xf]
        %v6937 = vld [vmem:[#allocation28 + $0x48] sm:$0xf]
        %v6938 = vld [vmem:[#allocation28 + $0x4c] sm:$0xf]
        %v6939 = vld [vmem:[#allocation28 + $0x50] sm:$0xf]
        %v6940 = vld [vmem:[#allocation28 + $0x54] sm:$0xf]
        %v6941 = vld [vmem:[#allocation28 + $0x58] sm:$0xf]
        %v6942 = vld [vmem:[#allocation28 + $0x5c] sm:$0xf]
        %v6943 = vld [vmem:[#allocation28 + $0x60] sm:$0xf]
        %v6944 = vld [vmem:[#allocation28 + $0x64] sm:$0xf]
        %v6945 = vld [vmem:[#allocation28 + $0x68] sm:$0xf]
        %v6946 = vld [vmem:[#allocation28 + $0x6c] sm:$0xf]
        %v6947 = vld [vmem:[#allocation28 + $0x70] sm:$0xf]
        %v6948 = vld [vmem:[#allocation28 + $0x74] sm:$0xf]
        %v6949 = vld [vmem:[#allocation28 + $0x78] sm:$0xf]
        %v6950 = vld [vmem:[#allocation28 + $0x7c] sm:$0xf]
        %v6983 = vunpack.c.l.b16 %v6919
        %v6984 = vunpack.c.l.b16 %v6920
        %v6985 = vunpack.c.l.b16 %v6921
        %v6986 = vunpack.c.l.b16 %v6922
        %v6987 = vunpack.c.l.b16 %v6923
        %v6988 = vunpack.c.l.b16 %v6924
        %v6989 = vunpack.c.l.b16 %v6925
        %v6990 = vunpack.c.l.b16 %v6926
        %v6991 = vunpack.c.l.b16 %v6927
        %v6992 = vunpack.c.l.b16 %v6928
        %v6993 = vunpack.c.l.b16 %v6929
        %v6994 = vunpack.c.l.b16 %v6930
        %v6995 = vunpack.c.l.b16 %v6931
        %v6996 = vunpack.c.l.b16 %v6932
        %v6997 = vunpack.c.l.b16 %v6933
        %v6998 = vunpack.c.l.b16 %v6934
        %v6999 = vunpack.c.l.b16 %v6935
        %v7000 = vunpack.c.l.b16 %v6936
        %v7001 = vunpack.c.l.b16 %v6937
        %v7002 = vunpack.c.l.b16 %v6938
        %v7003 = vunpack.c.l.b16 %v6939
        %v7004 = vunpack.c.l.b16 %v6940
        %v7005 = vunpack.c.l.b16 %v6941
        %v7006 = vunpack.c.l.b16 %v6942
        %v7007 = vunpack.c.l.b16 %v6943
        %v7008 = vunpack.c.l.b16 %v6944
        %v7009 = vunpack.c.l.b16 %v6945
        %v7010 = vunpack.c.l.b16 %v6946
        %v7011 = vunpack.c.l.b16 %v6947
        %v7012 = vunpack.c.l.b16 %v6948
        %v7013 = vunpack.c.l.b16 %v6949
        %v7014 = vunpack.c.l.b16 %v6950
        %v7015 = vpack.c.b16 %v6984, %v6983
        %v7016 = vpack.c.b16 %v6986, %v6985
        %v7017 = vpack.c.b16 %v6988, %v6987
        %v7018 = vpack.c.b16 %v6990, %v6989
        %v7019 = vpack.c.b16 %v6992, %v6991
        %v7020 = vpack.c.b16 %v6994, %v6993
        %v7021 = vpack.c.b16 %v6996, %v6995
        %v7022 = vpack.c.b16 %v6998, %v6997
        %v7023 = vpack.c.b16 %v7000, %v6999
        %v7024 = vpack.c.b16 %v7002, %v7001
        %v7025 = vpack.c.b16 %v7004, %v7003
        %v7026 = vpack.c.b16 %v7006, %v7005
        %v7027 = vpack.c.b16 %v7008, %v7007
        %v7028 = vpack.c.b16 %v7010, %v7009
        %v7029 = vpack.c.b16 %v7012, %v7011
        %v7030 = vpack.c.b16 %v7014, %v7013
        %7047 = vmatprep.subr.bf16.mxu0 0
        %7048 = vmatpush1.bf16.msra.mxu0 %v7015
        %7049 = vmatprep.subr.bf16.mxu0 0
        %7050 = vmatpush1.bf16.msra.mxu0 %v7016
        %7051 = vmatprep.subr.bf16.mxu0 0
        %7052 = vmatpush1.bf16.msra.mxu0 %v7017
        %7053 = vmatprep.subr.bf16.mxu0 0
        %7054 = vmatpush1.bf16.msra.mxu0 %v7018
        %7055 = vmatprep.subr.bf16.mxu0 0
        %7056 = vmatpush1.bf16.msra.mxu0 %v7019
        %7057 = vmatprep.subr.bf16.mxu0 0
        %7058 = vmatpush1.bf16.msra.mxu0 %v7020
        %7059 = vmatprep.subr.bf16.mxu0 0
        %7060 = vmatpush1.bf16.msra.mxu0 %v7021
        %7061 = vmatprep.subr.bf16.mxu0 0
        %7062 = vmatpush1.bf16.msra.mxu0 %v7022
        %7063 = vmatprep.subr.bf16.mxu0 0
        %7064 = vmatpush1.bf16.msra.mxu0 %v7023
        %7065 = vmatprep.subr.bf16.mxu0 0
        %7066 = vmatpush1.bf16.msra.mxu0 %v7024
        %7067 = vmatprep.subr.bf16.mxu0 0
        %7068 = vmatpush1.bf16.msra.mxu0 %v7025
        %7069 = vmatprep.subr.bf16.mxu0 0
        %7070 = vmatpush1.bf16.msra.mxu0 %v7026
        %7071 = vmatprep.subr.bf16.mxu0 0
        %7072 = vmatpush1.bf16.msra.mxu0 %v7027
        %7073 = vmatprep.subr.bf16.mxu0 0
        %7074 = vmatpush1.bf16.msra.mxu0 %v7028
        %7075 = vmatprep.subr.bf16.mxu0 0
        %7076 = vmatpush1.bf16.msra.mxu0 %v7029
        %7077 = vmatprep.subr.bf16.mxu0 0
        %7078 = vmatpush1.bf16.msra.mxu0 %v7030
        %7079 = vmatprep.mubr.bf16.mxu0 %v6888
        %7080 = vmatmul.mubr.bf16.gmra.mrb[0].mxu0 %v6887
        %v7081 = vpop.f32.mrb[0].mxu0
        %v7082 = vadd.f32 0.0, %v7081
        %v7083 = vpop.f32.mrb[0].mxu0
        %v7084 = vpop.f32.mrb[0].mxu0
        %v7085 = vadd.f32 0.0, %v7084
        %v7086 = vpop.f32.mrb[0].mxu0
        %7087 = vmatprep.mubr.bf16.mxu0 %v6890
        %7088 = vmatmul.mubr.bf16.gmra.mrb[0].mxu0 %v6889
        %v7089 = vpop.f32.mrb[0].mxu0
        %v7090 = vadd.f32 0.0, %v7089
        %v7091 = vpop.f32.mrb[0].mxu0
        %v7092 = vpop.f32.mrb[0].mxu0
        %v7093 = vadd.f32 0.0, %v7092
        %v7094 = vpop.f32.mrb[0].mxu0
        %7095 = vmatprep.mubr.bf16.mxu0 %v6892
        %7096 = vmatmul.mubr.bf16.gmra.mrb[0].mxu0 %v6891
        %v7097 = vpop.f32.mrb[0].mxu0
        %v7098 = vadd.f32 0.0, %v7097
        %v7099 = vpop.f32.mrb[0].mxu0
        %v7100 = vpop.f32.mrb[0].mxu0
        %v7101 = vadd.f32 0.0, %v7100
        %v7102 = vpop.f32.mrb[0].mxu0
        %7103 = vmatprep.mubr.bf16.mxu0 %v6894
        %7104 = vmatmul.mubr.bf16.gmra.mrb[0].mxu0 %v6893
        %v7105 = vpop.f32.mrb[0].mxu0
        %v7106 = vadd.f32 0.0, %v7105
        %v7107 = vpop.f32.mrb[0].mxu0
        %v7108 = vpop.f32.mrb[0].mxu0
        %v7109 = vadd.f32 0.0, %v7108
        %v7110 = vpop.f32.mrb[0].mxu0
        %7111 = vmatprep.mubr.bf16.mxu0 %v6896
        %7112 = vmatmul.mubr.bf16.gmra.mrb[0].mxu0 %v6895
        %v7113 = vpop.f32.mrb[0].mxu0
        %v7114 = vadd.f32 0.0, %v7113
        %v7115 = vpop.f32.mrb[0].mxu0
        %v7116 = vpop.f32.mrb[0].mxu0
        %v7117 = vadd.f32 0.0, %v7116
        %v7118 = vpop.f32.mrb[0].mxu0
        %7119 = vmatprep.mubr.bf16.mxu0 %v6898
        %7120 = vmatmul.mubr.bf16.gmra.mrb[0].mxu0 %v6897
        %v7121 = vpop.f32.mrb[0].mxu0
        %v7122 = vadd.f32 0.0, %v7121
        %v7123 = vpop.f32.mrb[0].mxu0
        %v7124 = vpop.f32.mrb[0].mxu0
        %v7125 = vadd.f32 0.0, %v7124
        %v7126 = vpop.f32.mrb[0].mxu0
        %7127 = vmatprep.mubr.bf16.mxu0 %v6900
        %7128 = vmatmul.mubr.bf16.gmra.mrb[0].mxu0 %v6899
        %v7129 = vpop.f32.mrb[0].mxu0
        %v7130 = vadd.f32 0.0, %v7129
        %v7131 = vpop.f32.mrb[0].mxu0
        %v7132 = vpop.f32.mrb[0].mxu0
        %v7133 = vadd.f32 0.0, %v7132
        %v7134 = vpop.f32.mrb[0].mxu0
        %7135 = vmatprep.mubr.bf16.mxu0 %v6902
        %7136 = vmatmul.mubr.bf16.gmra.mrb[0].mxu0 %v6901
        %v7137 = vpop.f32.mrb[0].mxu0
        %v7138 = vadd.f32 0.0, %v7137
        %v7139 = vpop.f32.mrb[0].mxu0
        %v7140 = vpop.f32.mrb[0].mxu0
        %v7141 = vadd.f32 0.0, %v7140
        %v7142 = vpop.f32.mrb[0].mxu0
        %7143 = vmatprep.mubr.bf16.mxu0 %v6904
        %7144 = vmatmul.mubr.bf16.gmra.mrb[0].mxu0 %v6903
        %v7145 = vpop.f32.mrb[0].mxu0
        %v7146 = vadd.f32 0.0, %v7145
        %v7147 = vpop.f32.mrb[0].mxu0
        %v7148 = vpop.f32.mrb[0].mxu0
        %v7149 = vadd.f32 0.0, %v7148
        %v7150 = vpop.f32.mrb[0].mxu0
        %7151 = vmatprep.mubr.bf16.mxu0 %v6906
        %7152 = vmatmul.mubr.bf16.gmra.mrb[0].mxu0 %v6905
        %v7153 = vpop.f32.mrb[0].mxu0
        %v7154 = vadd.f32 0.0, %v7153
        %v7155 = vpop.f32.mrb[0].mxu0
        %v7156 = vpop.f32.mrb[0].mxu0
        %v7157 = vadd.f32 0.0, %v7156
        %v7158 = vpop.f32.mrb[0].mxu0
        %7159 = vmatprep.mubr.bf16.mxu0 %v6908
        %7160 = vmatmul.mubr.bf16.gmra.mrb[0].mxu0 %v6907
        %v7161 = vpop.f32.mrb[0].mxu0
        %v7162 = vadd.f32 0.0, %v7161
        %v7163 = vpop.f32.mrb[0].mxu0
        %v7164 = vpop.f32.mrb[0].mxu0
        %v7165 = vadd.f32 0.0, %v7164
        %v7166 = vpop.f32.mrb[0].mxu0
        %7167 = vmatprep.mubr.bf16.mxu0 %v6910
        %7168 = vmatmul.mubr.bf16.gmra.mrb[0].mxu0 %v6909
        %v7169 = vpop.f32.mrb[0].mxu0
        %v7170 = vadd.f32 0.0, %v7169
        %v7171 = vpop.f32.mrb[0].mxu0
        %v7172 = vpop.f32.mrb[0].mxu0
        %v7173 = vadd.f32 0.0, %v7172
        %v7174 = vpop.f32.mrb[0].mxu0
        %7175 = vmatprep.mubr.bf16.mxu0 %v6912
        %7176 = vmatmul.mubr.bf16.gmra.mrb[0].mxu0 %v6911
        %v7177 = vpop.f32.mrb[0].mxu0
        %v7178 = vadd.f32 0.0, %v7177
        %v7179 = vpop.f32.mrb[0].mxu0
        %v7180 = vpop.f32.mrb[0].mxu0
        %v7181 = vadd.f32 0.0, %v7180
        %v7182 = vpop.f32.mrb[0].mxu0
        %7183 = vmatprep.mubr.bf16.mxu0 %v6914
        %7184 = vmatmul.mubr.bf16.gmra.mrb[0].mxu0 %v6913
        %v7185 = vpop.f32.mrb[0].mxu0
        %v7186 = vadd.f32 0.0, %v7185
        %v7187 = vpop.f32.mrb[0].mxu0
        %v7188 = vpop.f32.mrb[0].mxu0
        %v7189 = vadd.f32 0.0, %v7188
        %v7190 = vpop.f32.mrb[0].mxu0
        %7191 = vmatprep.mubr.bf16.mxu0 %v6916
        %7192 = vmatmul.mubr.bf16.gmra.mrb[0].mxu0 %v6915
        %v7193 = vpop.f32.mrb[0].mxu0
        %v7194 = vadd.f32 0.0, %v7193
        %v7195 = vpop.f32.mrb[0].mxu0
        %v7196 = vpop.f32.mrb[0].mxu0
        %v7197 = vadd.f32 0.0, %v7196
        %v7198 = vpop.f32.mrb[0].mxu0
        %7199 = vmatprep.mubr.bf16.mxu0 %v6918
        %7200 = vmatmul.mubr.bf16.gmra.mrb[0].mxu0 %v6917
        %v7201 = vpop.f32.mrb[0].mxu0
        %v7202 = vadd.f32 0.0, %v7201
        %v7203 = vpop.f32.mrb[0].mxu0
        %v7204 = vpop.f32.mrb[0].mxu0
        %v7205 = vadd.f32 0.0, %v7204
        %v7206 = vpop.f32.mrb[0].mxu0
        %7207 = vdwg.mxu0
        %v7208 = vadd.f32 %v5157, %v7082
        %v7209 = vadd.f32 %v5158, %v7085
        %v7210 = vadd.f32 %v5159, %v7090
        %v7211 = vadd.f32 %v5160, %v7093
        %v7212 = vadd.f32 %v5161, %v7098
        %v7213 = vadd.f32 %v5162, %v7101
        %v7214 = vadd.f32 %v5163, %v7106
        %v7215 = vadd.f32 %v5164, %v7109
        %v7216 = vadd.f32 %v5165, %v7114
        %v7217 = vadd.f32 %v5166, %v7117
        %v7218 = vadd.f32 %v5167, %v7122
        %v7219 = vadd.f32 %v5168, %v7125
        %v7220 = vadd.f32 %v5169, %v7130
        %v7221 = vadd.f32 %v5170, %v7133
        %v7222 = vadd.f32 %v5171, %v7138
        %v7223 = vadd.f32 %v5172, %v7141
        %v7224 = vadd.f32 %v5173, %v7146
        %v7225 = vadd.f32 %v5174, %v7149
        %v7226 = vadd.f32 %v5175, %v7154
        %v7227 = vadd.f32 %v5176, %v7157
        %v7228 = vadd.f32 %v5177, %v7162
        %v7229 = vadd.f32 %v5178, %v7165
        %v7230 = vadd.f32 %v5179, %v7170
        %v7231 = vadd.f32 %v5180, %v7173
        %v7232 = vadd.f32 %v5181, %v7178
        %v7233 = vadd.f32 %v5182, %v7181
        %v7234 = vadd.f32 %v5183, %v7186
        %v7235 = vadd.f32 %v5184, %v7189
        %v7236 = vadd.f32 %v5185, %v7194
        %v7237 = vadd.f32 %v5186, %v7197
        %v7238 = vadd.f32 %v5187, %v7202
        %v7239 = vadd.f32 %v5188, %v7205
        %v7240 = vld [vmem:[#allocation29] sm:$0x1]
        %v7242 = vlaneseq
        %v7243 = vshrl.u32 %v7242, 7
        %v7244 = vsub.s32 0, %v7243
        %v7245 = vrot.slane %v7240, %v7244
        %v7247 = vadd.f32 %v7208, %v7245
        %v7248 = vadd.f32 %v7209, %v7245
        %v7249 = vadd.f32 %v7210, %v7245
        %v7250 = vadd.f32 %v7211, %v7245
        %v7251 = vadd.f32 %v7212, %v7245
        %v7252 = vadd.f32 %v7213, %v7245
        %v7253 = vadd.f32 %v7214, %v7245
        %v7254 = vadd.f32 %v7215, %v7245
        %v7255 = vadd.f32 %v7216, %v7245
        %v7256 = vadd.f32 %v7217, %v7245
        %v7257 = vadd.f32 %v7218, %v7245
        %v7258 = vadd.f32 %v7219, %v7245
        %v7259 = vadd.f32 %v7220, %v7245
        %v7260 = vadd.f32 %v7221, %v7245
        %v7261 = vadd.f32 %v7222, %v7245
        %v7262 = vadd.f32 %v7223, %v7245
        %v7263 = vadd.f32 %v7224, %v7245
        %v7264 = vadd.f32 %v7225, %v7245
        %v7265 = vadd.f32 %v7226, %v7245
        %v7266 = vadd.f32 %v7227, %v7245
        %v7267 = vadd.f32 %v7228, %v7245
        %v7268 = vadd.f32 %v7229, %v7245
        %v7269 = vadd.f32 %v7230, %v7245
        %v7270 = vadd.f32 %v7231, %v7245
        %v7271 = vadd.f32 %v7232, %v7245
        %v7272 = vadd.f32 %v7233, %v7245
        %v7273 = vadd.f32 %v7234, %v7245
        %v7274 = vadd.f32 %v7235, %v7245
        %v7275 = vadd.f32 %v7236, %v7245
        %v7276 = vadd.f32 %v7237, %v7245
        %v7277 = vadd.f32 %v7238, %v7245
        %v7278 = vadd.f32 %v7239, %v7245
        %v7279 = vpack.c.bf16 %v7248, %v7247
        %v7280 = vpack.c.bf16 %v7250, %v7249
        %v7281 = vpack.c.bf16 %v7252, %v7251
        %v7282 = vpack.c.bf16 %v7254, %v7253
        %v7283 = vpack.c.bf16 %v7256, %v7255
        %v7284 = vpack.c.bf16 %v7258, %v7257
        %v7285 = vpack.c.bf16 %v7260, %v7259
        %v7286 = vpack.c.bf16 %v7262, %v7261
        %v7287 = vpack.c.bf16 %v7264, %v7263
        %v7288 = vpack.c.bf16 %v7266, %v7265
        %v7289 = vpack.c.bf16 %v7268, %v7267
        %v7290 = vpack.c.bf16 %v7270, %v7269
        %v7291 = vpack.c.bf16 %v7272, %v7271
        %v7292 = vpack.c.bf16 %v7274, %v7273
        %v7293 = vpack.c.bf16 %v7276, %v7275
        %v7294 = vpack.c.bf16 %v7278, %v7277
        %v7311 = vunpack.c.l.b16 %v7279
        %v7312 = vunpack.c.h.b16 %v7279
        %v7313 = vunpack.c.l.b16 %v7280
        %v7314 = vunpack.c.h.b16 %v7280
        %v7315 = vunpack.c.l.b16 %v7281
        %v7316 = vunpack.c.h.b16 %v7281
        %v7317 = vunpack.c.l.b16 %v7282
        %v7318 = vunpack.c.h.b16 %v7282
        %v7319 = vunpack.c.l.b16 %v7283
        %v7320 = vunpack.c.h.b16 %v7283
        %v7321 = vunpack.c.l.b16 %v7284
        %v7322 = vunpack.c.h.b16 %v7284
        %v7323 = vunpack.c.l.b16 %v7285
        %v7324 = vunpack.c.h.b16 %v7285
        %v7325 = vunpack.c.l.b16 %v7286
        %v7326 = vunpack.c.h.b16 %v7286
        %v7327 = vunpack.c.l.b16 %v7287
        %v7328 = vunpack.c.h.b16 %v7287
        %v7329 = vunpack.c.l.b16 %v7288
        %v7330 = vunpack.c.h.b16 %v7288
        %v7331 = vunpack.c.l.b16 %v7289
        %v7332 = vunpack.c.h.b16 %v7289
        %v7333 = vunpack.c.l.b16 %v7290
        %v7334 = vunpack.c.h.b16 %v7290
        %v7335 = vunpack.c.l.b16 %v7291
        %v7336 = vunpack.c.h.b16 %v7291
        %v7337 = vunpack.c.l.b16 %v7292
        %v7338 = vunpack.c.h.b16 %v7292
        %v7339 = vunpack.c.l.b16 %v7293
        %v7340 = vunpack.c.h.b16 %v7293
        %v7341 = vunpack.c.l.b16 %v7294
        %v7342 = vunpack.c.h.b16 %v7294
        %v7343 = vpack.c.b16 %v7311, %v7311
        %v7344 = vpack.c.b16 %v7312, %v7312
        %v7345 = vpack.c.b16 %v7313, %v7313
        %v7346 = vpack.c.b16 %v7314, %v7314
        %v7347 = vpack.c.b16 %v7315, %v7315
        %v7348 = vpack.c.b16 %v7316, %v7316
        %v7349 = vpack.c.b16 %v7317, %v7317
        %v7350 = vpack.c.b16 %v7318, %v7318
        %v7351 = vpack.c.b16 %v7319, %v7319
        %v7352 = vpack.c.b16 %v7320, %v7320
        %v7353 = vpack.c.b16 %v7321, %v7321
        %v7354 = vpack.c.b16 %v7322, %v7322
        %v7355 = vpack.c.b16 %v7323, %v7323
        %v7356 = vpack.c.b16 %v7324, %v7324
        %v7357 = vpack.c.b16 %v7325, %v7325
        %v7358 = vpack.c.b16 %v7326, %v7326
        %v7359 = vpack.c.b16 %v7327, %v7327
        %v7360 = vpack.c.b16 %v7328, %v7328
        %v7361 = vpack.c.b16 %v7329, %v7329
        %v7362 = vpack.c.b16 %v7330, %v7330
        %v7363 = vpack.c.b16 %v7331, %v7331
        %v7364 = vpack.c.b16 %v7332, %v7332
        %v7365 = vpack.c.b16 %v7333, %v7333
        %v7366 = vpack.c.b16 %v7334, %v7334
        %v7367 = vpack.c.b16 %v7335, %v7335
        %v7368 = vpack.c.b16 %v7336, %v7336
        %v7369 = vpack.c.b16 %v7337, %v7337
        %v7370 = vpack.c.b16 %v7338, %v7338
        %v7371 = vpack.c.b16 %v7339, %v7339
        %v7372 = vpack.c.b16 %v7340, %v7340
        %v7373 = vpack.c.b16 %v7341, %v7341
        %v7374 = vpack.c.b16 %v7342, %v7342
        %vm7407 = vcmask 519168
        %7408 = vst.msk [vmem:[%s876] sm:$0xf] %vm7407, %v7343
        %7409 = vst.msk [vmem:[%s876 + $0x4] sm:$0xf] %vm7407, %v7344
        %7410 = vst.msk [vmem:[%s876 + $0x8] sm:$0xf] %vm7407, %v7345
        %7411 = vst.msk [vmem:[%s876 + $0xc] sm:$0xf] %vm7407, %v7346
        %7412 = vst.msk [vmem:[%s876 + $0x10] sm:$0xf] %vm7407, %v7347
        %7413 = vst.msk [vmem:[%s876 + $0x14] sm:$0xf] %vm7407, %v7348
        %7414 = vst.msk [vmem:[%s876 + $0x18] sm:$0xf] %vm7407, %v7349
        %7415 = vst.msk [vmem:[%s876 + $0x1c] sm:$0xf] %vm7407, %v7350
        %7416 = vst.msk [vmem:[%s876 + $0x20] sm:$0xf] %vm7407, %v7351
        %7417 = vst.msk [vmem:[%s876 + $0x24] sm:$0xf] %vm7407, %v7352
        %7418 = vst.msk [vmem:[%s876 + $0x28] sm:$0xf] %vm7407, %v7353
        %7419 = vst.msk [vmem:[%s876 + $0x2c] sm:$0xf] %vm7407, %v7354
        %7420 = vst.msk [vmem:[%s876 + $0x30] sm:$0xf] %vm7407, %v7355
        %7421 = vst.msk [vmem:[%s876 + $0x34] sm:$0xf] %vm7407, %v7356
        %7422 = vst.msk [vmem:[%s876 + $0x38] sm:$0xf] %vm7407, %v7357
        %7423 = vst.msk [vmem:[%s876 + $0x3c] sm:$0xf] %vm7407, %v7358
        %7424 = vst.msk [vmem:[%s876 + $0x40] sm:$0xf] %vm7407, %v7359
        %7425 = vst.msk [vmem:[%s876 + $0x44] sm:$0xf] %vm7407, %v7360
        %7426 = vst.msk [vmem:[%s876 + $0x48] sm:$0xf] %vm7407, %v7361
        %7427 = vst.msk [vmem:[%s876 + $0x4c] sm:$0xf] %vm7407, %v7362
        %7428 = vst.msk [vmem:[%s876 + $0x50] sm:$0xf] %vm7407, %v7363
        %7429 = vst.msk [vmem:[%s876 + $0x54] sm:$0xf] %vm7407, %v7364
        %7430 = vst.msk [vmem:[%s876 + $0x58] sm:$0xf] %vm7407, %v7365
        %7431 = vst.msk [vmem:[%s876 + $0x5c] sm:$0xf] %vm7407, %v7366
        %7432 = vst.msk [vmem:[%s876 + $0x60] sm:$0xf] %vm7407, %v7367
        %7433 = vst.msk [vmem:[%s876 + $0x64] sm:$0xf] %vm7407, %v7368
        %7434 = vst.msk [vmem:[%s876 + $0x68] sm:$0xf] %vm7407, %v7369
        %7435 = vst.msk [vmem:[%s876 + $0x6c] sm:$0xf] %vm7407, %v7370
        %7436 = vst.msk [vmem:[%s876 + $0x70] sm:$0xf] %vm7407, %v7371
        %7437 = vst.msk [vmem:[%s876 + $0x74] sm:$0xf] %vm7407, %v7372
        %7438 = vst.msk [vmem:[%s876 + $0x78] sm:$0xf] %vm7407, %v7373
        %7439 = vst.msk [vmem:[%s876 + $0x7c] sm:$0xf] %vm7407, %v7374
        %s7440 = sand.u32 %s442, 1
        %s7441 = scalar_lea.sflag [#allocation4], %s7440
        %s7442 = sand.u32 %s442, 1
        %s7443 = smul.addr %s7442, 128
        %s7444 = scalar_lea.vmem [#allocation31], %s7443
        // Predicated region
        $region165: #{tpu_custom_call.1} parent=91 // pred_check
          %p7445 = pneg %p452
        $region166: #{tpu_custom_call.1} parent=91 // pred_check_branch
          %7447 = sbr.rel (%p7445) target = $region168
        $region167: #{tpu_custom_call.1} parent=91 // pred_region
          %s7448 = smul.u32 32, %s46
          %s7450 = ssub.s32 2048, 2048
          %7451 = vsyncadd %s7441, %s7450
          %s7452 = smul.addr %s7448, 64
          %s7453 = scalar_lea.hbm %s18, %s7452
          %s7454 = sshll.u32 %s7444, 4
          %s7455 = int_to_ptr.vmem [resolvable:$true] %s7454
          %7460 = dma.vmem_to_hbm [thread:$0]  %s7455, 2048, %s7453, %s7441, 64, 64, 4
        $region168: #{tpu_custom_call.1} parent=91 // pred_fallthru
          _
      $region92: #{tpu_custom_call.1} parent=5 // pred_fallthru
        _
      %p7461 = scmp.le.s32.totalorder 2, %s41
      // Predicated region
      $region169: #{tpu_custom_call.1} parent=5 // pred_check
        %p7462 = pneg %p7461
      $region170: #{tpu_custom_call.1} parent=5 // pred_check_branch
        %7464 = sbr.rel (%p7462) target = $region172
      $region171: #{tpu_custom_call.1} parent=5 // pred_region
        %s7465 = ssub.s32 %s41, 2
        // Predicated region
        $region173: #{tpu_custom_call.1} parent=171 // pred_check
          %p7466 = pneg %p458
        $region174: #{tpu_custom_call.1} parent=171 // pred_check_branch
          %7468 = sbr.rel (%p7466) target = $region176
        $region175: #{tpu_custom_call.1} parent=171 // pred_region
          %s7469 = sand.u32 %s443, 1
          %s7470 = scalar_lea.sflag [#allocation4], %s7469
          %s7471 = sand.u32 %s443, 1
          %s7472 = smul.addr %s7471, 128
          %s7473 = scalar_lea.vmem [#allocation31], %s7472
          %7474 = dma.done %s7470, 2048
        $region176: #{tpu_custom_call.1} parent=171 // pred_fallthru
          _
      $region172: #{tpu_custom_call.1} parent=5 // pred_fallthru
        _
    $region6: #{tpu_custom_call.1} parent=1 // loop_footer
      %s45 = sadd.s32 1, %s41
    $region7: #{tpu_custom_call.1} parent=1 // loop_footer_branch
      %40 = sbr.rel target = $region3
    $region8: #{tpu_custom_call.1} parent=1 // loop_exit
      _
    %7475 = vsyncpa [#allocation3], 1
    %s7476 = scalar_lea.sflag [#allocation3], 1
    %7477 = vsyncpa %s7476, 1
    %7478 = vsyncpa [#allocation6], 1
    %s7479 = scalar_lea.sflag [#allocation6], 1
    %7480 = vsyncpa %s7479, 1
    %7481 = vsyncpa [#allocation9], 1
    %7482 = vsyncpa [#allocation12], 1
    %7483 = vsyncpa [#allocation15], 1
    %7484 = vsyncpa [#allocation18], 1
    %7485 = vsyncpa [#allocation21], 1
    %7486 = vsyncpa [#allocation24], 1
    %7487 = vsyncpa [#allocation27], 1
    %7488 = vsyncpa [#allocation30], 1
    %7489 = vsyncpa [#allocation4], 1
    %s7490 = scalar_lea.sflag [#allocation4], 1
    %7491 = vsyncpa %s7490, 1

</llo_original>
